<compile_context>
chip_gen: v7x
topology: tpu7x:2x2x1
jax: 0.10.0
libtpu: 0.0.40
codegen_flags: <defaults>
</compile_context>

<pallas_src>
import functools

import jax
import jax.numpy as jnp
import numpy as np
from jax.experimental import pallas as pl
from jax.experimental.pallas import tpu as pltpu


# ----------------------------- Pallas kernel ---------------------------------
def _gru_recurrence_kernel(gi0_ref, wih_ref, whh_ref, bih_ref, bhh_ref, h0_ref,
                           out_ref, hfinal_ref, *, n_layers, hidden_pad, seq_len):
    """Single invocation: whole stacked-GRU recurrence over the sequence.

    gi0_ref : (S, B, 3*Hp)  precomputed layer-0 input gates (bias folded in)
    wih_ref : (L, Hp, 3*Hp) input->hidden weights (layer 0 slot unused in-kernel)
    whh_ref : (L, Hp, 3*Hp) hidden->hidden weights
    bih_ref : (L, 1, 3*Hp)  input biases   (layer 0 slot unused in-kernel)
    bhh_ref : (L, 1, 3*Hp)  hidden biases
    h0_ref  : (L, B, Hp)    initial hidden
    out_ref : (S, B, Hp)    top-layer hidden per timestep
    hfinal_ref: (L, B, Hp)  final hidden
    """
    Hp = hidden_pad

    # Tiny per-layer constants hoisted out of the recurrence into vregs.
    bih = [bih_ref[l] for l in range(n_layers)]          # each (1, 3Hp)
    bhh = [bhh_ref[l] for l in range(n_layers)]          # each (1, 3Hp)

    def step(t, hs):
        # Layer 0: input->hidden projection was hoisted out of the recurrence,
        # so only the recurrent hidden->hidden matmul remains in the loop.
        gi = gi0_ref[t]                                  # (B, 3*Hp)
        new_hs = []
        x = None
        for l in range(n_layers):                        # small static layer count -> unrolled
            h_prev = hs[l]                               # (B, Hp), lives in vregs
            if l > 0:
                gi = jnp.dot(x, wih_ref[l],
                             preferred_element_type=jnp.float32) + bih[l]
            gh = jnp.dot(h_prev, whh_ref[l],
                         preferred_element_type=jnp.float32) + bhh[l]

            # Lane-aligned gate slices (Hp is a multiple of 128). Gate order r, z, n.
            r = jax.nn.sigmoid(gi[:, 0:Hp] + gh[:, 0:Hp])
            z = jax.nn.sigmoid(gi[:, Hp:2 * Hp] + gh[:, Hp:2 * Hp])
            n = jnp.tanh(gi[:, 2 * Hp:3 * Hp] + r * gh[:, 2 * Hp:3 * Hp])
            h_new = (1.0 - z) * n + z * h_prev

            new_hs.append(h_new)
            x = h_new                                    # input to next layer

        out_ref[t] = x                                   # top-layer output for this step
        return tuple(new_hs)

    hs0 = tuple(h0_ref[l] for l in range(n_layers))
    hs_final = jax.lax.fori_loop(0, seq_len, step, hs0, unroll=True)

    for l in range(n_layers):
        hfinal_ref[l] = hs_final[l]


# ------------------------------ host wrapper ---------------------------------
def recipe_rnn_forward(tokens, h0, params):
    """tokens: (B, S) int32, h0: (L, B, H) f32.  Returns (logits (B,S,O), hidden (L,B,H)).

    Assumes input_size == hidden_size (as in the module's usage) so GRU layer weights stack.
    """
    emb = params["embedding"]          # (V, E)
    w_ih = params["w_ih"]              # (L, 3H, E)
    w_hh = params["w_hh"]              # (L, 3H, H)
    b_ih = params["b_ih"]              # (L, 3H)
    b_hh = params["b_hh"]              # (L, 3H)
    w_dec = params["w_dec"]            # (O, H)
    b_dec = params["b_dec"]            # (O,)

    B, S = tokens.shape
    L, H3, E = w_ih.shape
    H = H3 // 3
    Hp = max(128, ((H + 127) // 128) * 128)    # lane-aligned padded hidden size
    G = 3 * Hp
    f32 = jnp.float32

    def pad_gate_w(w, in_dim):
        # (L, 3H, I) -> (L, Hp, 3*Hp): transpose to (in, out) and zero-pad both the
        # contraction dim and each gate's H block to Hp (gates stay in r|z|n order).
        w = w.reshape(L, 3, H, in_dim)
        w = jnp.transpose(w, (0, 3, 1, 2))                                 # (L, I, 3, H)
        w = jnp.pad(w, ((0, 0), (0, Hp - in_dim), (0, 0), (0, Hp - H)))
        return w.reshape(L, Hp, G).astype(f32)

    def pad_gate_b(b):
        b = b.reshape(L, 3, H)
        b = jnp.pad(b, ((0, 0), (0, 0), (0, Hp - H)))
        return b.reshape(L, 1, G).astype(f32)

    wih_p = pad_gate_w(w_ih, E)                                            # (L, Hp, 3Hp)
    whh_p = pad_gate_w(w_hh, H)                                            # (L, Hp, 3Hp)
    bih_p = pad_gate_b(b_ih)                                               # (L, 1, 3Hp)
    bhh_p = pad_gate_b(b_hh)                                               # (L, 1, 3Hp)
    h0_p = jnp.pad(h0.astype(f32), ((0, 0), (0, 0), (0, Hp - H)))          # (L, B, Hp)

    # Glue that is NOT part of the serialized recurrence stays in plain XLA:
    # embedding gather (+ dropout p=0 identity) and the hoisted layer-0 input
    # projection for the whole sequence, emitted directly in (S, B, 3Hp) layout.
    x_emb = jnp.take(emb, tokens, axis=0).astype(f32)                      # (B, S, E)
    gi0 = jnp.einsum("bse,eg->sbg", x_emb, wih_p[0, :E, :]) + bih_p[0]     # (S, B, 3Hp)

    kernel = functools.partial(_gru_recurrence_kernel,
                               n_layers=L, hidden_pad=Hp, seq_len=S)

    full = lambda shape: pl.BlockSpec(shape, lambda i: (0,) * len(shape))

    out_top, h_final = pl.pallas_call(
        kernel,
        out_shape=(
            jax.ShapeDtypeStruct((S, B, Hp), f32),   # top-layer hidden per timestep
            jax.ShapeDtypeStruct((L, B, Hp), f32),   # final hidden
        ),
        grid_spec=pltpu.PrefetchScalarGridSpec(
            num_scalar_prefetch=0,
            grid=(1,),                               # recurrence folded into in-kernel loop
            in_specs=[
                full((S, B, G)),     # gi0
                full((L, Hp, G)),    # wih
                full((L, Hp, G)),    # whh
                full((L, 1, G)),     # bih
                full((L, 1, G)),     # bhh
                full((L, B, Hp)),    # h0
            ],
            out_specs=[
                full((S, B, Hp)),
                full((L, B, Hp)),
            ],
        ),
        compiler_params=pltpu.CompilerParams(
            dimension_semantics=("arbitrary",),
        ),
    )(gi0, wih_p, whh_p, bih_p, bhh_p, h0_p)

    # Decoder: ONE matmul over all timesteps (pulled out of the per-step loop);
    # einsum output layout gives batch_first logits directly (no standalone transpose).
    logits = jnp.einsum("sbh,oh->bso", out_top[..., :H], w_dec.astype(f32)) + b_dec
    hidden = h_final[..., :H]
    return logits, hidden


# --------------------------- pure-JAX reference -------------------------------
def recipe_rnn_reference(tokens, h0, params):
    emb, w_ih, w_hh = params["embedding"], params["w_ih"], params["w_hh"]
    b_ih, b_hh, w_dec, b_dec = params["b_ih"], params["b_hh"], params["w_dec"], params["b_dec"]
    L, H3, _ = w_ih.shape
    H = H3 // 3
    x = jnp.take(emb, tokens, axis=0)  # (B, S, E)
    B, S, _ = x.shape
    h = h0
    outs = []
    for t in range(S):
        inp = x[:, t, :]
        new_h = []
        for l in range(L):
            gi = inp @ w_ih[l].T + b_ih[l]
            gh = h[l] @ w_hh[l].T + b_hh[l]
            r = jax.nn.sigmoid(gi[:, :H] + gh[:, :H])
            z = jax.nn.sigmoid(gi[:, H:2 * H] + gh[:, H:2 * H])
            n = jnp.tanh(gi[:, 2 * H:] + r * gh[:, 2 * H:])
            hn = (1.0 - z) * n + z * h[l]
            new_h.append(hn)
            inp = hn
        h = jnp.stack(new_h, axis=0)
        outs.append(inp)
    out = jnp.stack(outs, axis=1)                     # (B, S, H)
    logits = out @ w_dec.T + b_dec[None, None, :]     # (B, S, O)
    return logits, h


# ---------------------------------- main --------------------------------------
if __name__ == "__main__":
    # Small shapes consistent with the module: input_size == hidden_size = 32,
    # vocab == output_size = 50, n_layers = 2, batch = 2, seq = 8.
    B, S = 2, 8
    E = H = 32
    L = 2
    V = O = 50

    key = jax.random.PRNGKey(0)
    keys = jax.random.split(key, 8)
    scale = 1.0 / np.sqrt(H)
    params = {
        "embedding": jax.random.normal(keys[0], (V, E), jnp.float32) * 0.1,
        "w_ih": jax.random.uniform(keys[1], (L, 3 * H, E), jnp.float32, -scale, scale),
        "w_hh": jax.random.uniform(keys[2], (L, 3 * H, H), jnp.float32, -scale, scale),
        "b_ih": jax.random.uniform(keys[3], (L, 3 * H), jnp.float32, -scale, scale),
        "b_hh": jax.random.uniform(keys[4], (L, 3 * H), jnp.float32, -scale, scale),
        "w_dec": jax.random.uniform(keys[5], (O, H), jnp.float32, -scale, scale),
        "b_dec": jax.random.uniform(keys[6], (O,), jnp.float32, -scale, scale),
    }

    tokens = jax.random.randint(keys[7], (B, S), 0, V, dtype=jnp.int32)
    h0 = jnp.zeros((L, B, H), jnp.float32)  # recipeRNN.init_hidden

    logits, hidden = jax.jit(recipe_rnn_forward)(tokens, h0, params)
    jax.block_until_ready((logits, hidden))

    # Sanity check against a pure-JAX reference of the same math.
    ref_logits, ref_hidden = recipe_rnn_reference(tokens, h0, params)
    np.testing.assert_allclose(np.asarray(logits), np.asarray(ref_logits), atol=1e-4, rtol=1e-4)
    np.testing.assert_allclose(np.asarray(hidden), np.asarray(ref_hidden), atol=1e-4, rtol=1e-4)

    assert logits.shape == (B, S, O) and hidden.shape == (L, B, H)
    print("KERNEL_OK")
</pallas_src>

<mosaic_0001>
module attributes {stable_mosaic.version = 11 : i64} {
  func.func @_gru_recurrence_kernel(%arg0: i32, %arg1: memref<8x2x384xf32, #tpu.memory_space<vmem>>, %arg2: memref<2x128x384xf32, #tpu.memory_space<vmem>>, %arg3: memref<2x128x384xf32, #tpu.memory_space<vmem>>, %arg4: memref<2x1x384xf32, #tpu.memory_space<vmem>>, %arg5: memref<2x1x384xf32, #tpu.memory_space<vmem>>, %arg6: memref<2x2x128xf32, #tpu.memory_space<vmem>>, %arg7: memref<8x2x128xf32, #tpu.memory_space<vmem>>, %arg8: memref<2x2x128xf32, #tpu.memory_space<vmem>>) attributes {dimension_semantics = [#tpu.dimension_semantics<arbitrary>], iteration_bounds = array<i64: 1>, scalar_prefetch = 0 : i64, scratch_operands = 0 : i64, tpu.core_type = #tpu.core_type<tc>, window_params = [{pipeline_mode = #tpu.pipeline_mode<synchronous>, transform_indices = @transform_0, window_bounds = array<i64: 8, 2, 384>}, {pipeline_mode = #tpu.pipeline_mode<synchronous>, transform_indices = @transform_1, window_bounds = array<i64: 2, 128, 384>}, {pipeline_mode = #tpu.pipeline_mode<synchronous>, transform_indices = @transform_2, window_bounds = array<i64: 2, 128, 384>}, {pipeline_mode = #tpu.pipeline_mode<synchronous>, transform_indices = @transform_3, window_bounds = array<i64: 2, 1, 384>}, {pipeline_mode = #tpu.pipeline_mode<synchronous>, transform_indices = @transform_4, window_bounds = array<i64: 2, 1, 384>}, {pipeline_mode = #tpu.pipeline_mode<synchronous>, transform_indices = @transform_5, window_bounds = array<i64: 2, 2, 128>}, {pipeline_mode = #tpu.pipeline_mode<synchronous>, transform_indices = @transform_6, window_bounds = array<i64: 8, 2, 128>}, {pipeline_mode = #tpu.pipeline_mode<synchronous>, transform_indices = @transform_7, window_bounds = array<i64: 2, 2, 128>}]} {
    %c1 = arith.constant 1 : index
    %c0 = arith.constant 0 : index
    %c0_0 = arith.constant 0 : index
    %0 = vector.load %arg4[%c1, %c0, %c0_0] : memref<2x1x384xf32, #tpu.memory_space<vmem>>, vector<1x1x384xf32>
    %1 = vector.shape_cast %0 : vector<1x1x384xf32> to vector<1x384xf32>
    %c0_1 = arith.constant 0 : index
    %c0_2 = arith.constant 0 : index
    %c0_3 = arith.constant 0 : index
    %2 = vector.load %arg5[%c0_1, %c0_2, %c0_3] : memref<2x1x384xf32, #tpu.memory_space<vmem>>, vector<1x1x384xf32>
    %3 = vector.shape_cast %2 : vector<1x1x384xf32> to vector<1x384xf32>
    %c1_4 = arith.constant 1 : index
    %c0_5 = arith.constant 0 : index
    %c0_6 = arith.constant 0 : index
    %4 = vector.load %arg5[%c1_4, %c0_5, %c0_6] : memref<2x1x384xf32, #tpu.memory_space<vmem>>, vector<1x1x384xf32>
    %5 = vector.shape_cast %4 : vector<1x1x384xf32> to vector<1x384xf32>
    %c0_7 = arith.constant 0 : index
    %c0_8 = arith.constant 0 : index
    %c0_9 = arith.constant 0 : index
    %6 = vector.load %arg6[%c0_7, %c0_8, %c0_9] : memref<2x2x128xf32, #tpu.memory_space<vmem>>, vector<1x2x128xf32>
    %7 = vector.shape_cast %6 : vector<1x2x128xf32> to vector<2x128xf32>
    %c1_10 = arith.constant 1 : index
    %c0_11 = arith.constant 0 : index
    %c0_12 = arith.constant 0 : index
    %8 = vector.load %arg6[%c1_10, %c0_11, %c0_12] : memref<2x2x128xf32, #tpu.memory_space<vmem>>, vector<1x2x128xf32>
    %9 = vector.shape_cast %8 : vector<1x2x128xf32> to vector<2x128xf32>
    %c0_i32 = arith.constant 0 : i32
    %10 = arith.index_cast %c0_i32 : i32 to index
    %c0_13 = arith.constant 0 : index
    %c0_14 = arith.constant 0 : index
    %11 = vector.load %arg1[%10, %c0_13, %c0_14] : memref<8x2x384xf32, #tpu.memory_space<vmem>>, vector<1x2x384xf32>
    %12 = vector.shape_cast %11 : vector<1x2x384xf32> to vector<2x384xf32>
    %c0_15 = arith.constant 0 : index
    %c0_16 = arith.constant 0 : index
    %c0_17 = arith.constant 0 : index
    %13 = vector.load %arg3[%c0_15, %c0_16, %c0_17] : memref<2x128x384xf32, #tpu.memory_space<vmem>>, vector<1x128x384xf32>
    %14 = vector.shape_cast %13 : vector<1x128x384xf32> to vector<128x384xf32>
    %cst = arith.constant dense<0.000000e+00> : vector<2x384xf32>
    %15 = tpu.matmul %7, %14, %cst {dimension_numbers = #tpu.dot_dimension_numbers<[1], [0], [0], [1], [0, 0, 1, 1], [], []>} : vector<2x128xf32>, vector<128x384xf32>, vector<2x384xf32> -> vector<2x384xf32>
    %16 = vector.broadcast %3 : vector<1x384xf32> to vector<2x384xf32>
    %17 = arith.addf %15, %16 : vector<2x384xf32>
    %18 = vector.extract_strided_slice %12 {offsets = [0, 0], sizes = [2, 128], strides = [1, 1]} : vector<2x384xf32> to vector<2x128xf32>
    %19 = vector.extract_strided_slice %17 {offsets = [0, 0], sizes = [2, 128], strides = [1, 1]} : vector<2x384xf32> to vector<2x128xf32>
    %20 = arith.addf %18, %19 : vector<2x128xf32>
    %21 = arith.negf %20 : vector<2x128xf32>
    %22 = math.exp %21 : vector<2x128xf32>
    %cst_18 = arith.constant 1.000000e+00 : f32
    %23 = vector.broadcast %cst_18 : f32 to vector<2x128xf32>
    %24 = arith.addf %23, %22 : vector<2x128xf32>
    %25 = arith.divf %23, %24 : vector<2x128xf32>
    %26 = vector.extract_strided_slice %12 {offsets = [0, 128], sizes = [2, 128], strides = [1, 1]} : vector<2x384xf32> to vector<2x128xf32>
    %27 = vector.extract_strided_slice %17 {offsets = [0, 128], sizes = [2, 128], strides = [1, 1]} : vector<2x384xf32> to vector<2x128xf32>
    %28 = arith.addf %26, %27 : vector<2x128xf32>
    %29 = arith.negf %28 : vector<2x128xf32>
    %30 = math.exp %29 : vector<2x128xf32>
    %cst_19 = arith.constant 1.000000e+00 : f32
    %31 = vector.broadcast %cst_19 : f32 to vector<2x128xf32>
    %32 = arith.addf %31, %30 : vector<2x128xf32>
    %33 = arith.divf %31, %32 : vector<2x128xf32>
    %34 = vector.extract_strided_slice %12 {offsets = [0, 256], sizes = [2, 128], strides = [1, 1]} : vector<2x384xf32> to vector<2x128xf32>
    %35 = vector.extract_strided_slice %17 {offsets = [0, 256], sizes = [2, 128], strides = [1, 1]} : vector<2x384xf32> to vector<2x128xf32>
    %36 = arith.mulf %25, %35 : vector<2x128xf32>
    %37 = arith.addf %34, %36 : vector<2x128xf32>
    %38 = math.tanh %37 : vector<2x128xf32>
    %cst_20 = arith.constant 1.000000e+00 : f32
    %39 = vector.broadcast %cst_20 : f32 to vector<2x128xf32>
    %40 = arith.subf %39, %33 : vector<2x128xf32>
    %41 = arith.mulf %40, %38 : vector<2x128xf32>
    %42 = arith.mulf %33, %7 : vector<2x128xf32>
    %43 = arith.addf %41, %42 : vector<2x128xf32>
    %c1_21 = arith.constant 1 : index
    %c0_22 = arith.constant 0 : index
    %c0_23 = arith.constant 0 : index
    %44 = vector.load %arg2[%c1_21, %c0_22, %c0_23] : memref<2x128x384xf32, #tpu.memory_space<vmem>>, vector<1x128x384xf32>
    %45 = vector.shape_cast %44 : vector<1x128x384xf32> to vector<128x384xf32>
    %cst_24 = arith.constant dense<0.000000e+00> : vector<2x384xf32>
    %46 = tpu.matmul %43, %45, %cst_24 {dimension_numbers = #tpu.dot_dimension_numbers<[1], [0], [0], [1], [0, 0, 1, 1], [], []>} : vector<2x128xf32>, vector<128x384xf32>, vector<2x384xf32> -> vector<2x384xf32>
    %47 = vector.broadcast %1 : vector<1x384xf32> to vector<2x384xf32>
    %48 = arith.addf %46, %47 : vector<2x384xf32>
    %c1_25 = arith.constant 1 : index
    %c0_26 = arith.constant 0 : index
    %c0_27 = arith.constant 0 : index
    %49 = vector.load %arg3[%c1_25, %c0_26, %c0_27] : memref<2x128x384xf32, #tpu.memory_space<vmem>>, vector<1x128x384xf32>
    %50 = vector.shape_cast %49 : vector<1x128x384xf32> to vector<128x384xf32>
    %cst_28 = arith.constant dense<0.000000e+00> : vector<2x384xf32>
    %51 = tpu.matmul %9, %50, %cst_28 {dimension_numbers = #tpu.dot_dimension_numbers<[1], [0], [0], [1], [0, 0, 1, 1], [], []>} : vector<2x128xf32>, vector<128x384xf32>, vector<2x384xf32> -> vector<2x384xf32>
    %52 = vector.broadcast %5 : vector<1x384xf32> to vector<2x384xf32>
    %53 = arith.addf %51, %52 : vector<2x384xf32>
    %54 = vector.extract_strided_slice %48 {offsets = [0, 0], sizes = [2, 128], strides = [1, 1]} : vector<2x384xf32> to vector<2x128xf32>
    %55 = vector.extract_strided_slice %53 {offsets = [0, 0], sizes = [2, 128], strides = [1, 1]} : vector<2x384xf32> to vector<2x128xf32>
    %56 = arith.addf %54, %55 : vector<2x128xf32>
    %57 = arith.negf %56 : vector<2x128xf32>
    %58 = math.exp %57 : vector<2x128xf32>
    %cst_29 = arith.constant 1.000000e+00 : f32
    %59 = vector.broadcast %cst_29 : f32 to vector<2x128xf32>
    %60 = arith.addf %59, %58 : vector<2x128xf32>
    %61 = arith.divf %59, %60 : vector<2x128xf32>
    %62 = vector.extract_strided_slice %48 {offsets = [0, 128], sizes = [2, 128], strides = [1, 1]} : vector<2x384xf32> to vector<2x128xf32>
    %63 = vector.extract_strided_slice %53 {offsets = [0, 128], sizes = [2, 128], strides = [1, 1]} : vector<2x384xf32> to vector<2x128xf32>
    %64 = arith.addf %62, %63 : vector<2x128xf32>
    %65 = arith.negf %64 : vector<2x128xf32>
    %66 = math.exp %65 : vector<2x128xf32>
    %cst_30 = arith.constant 1.000000e+00 : f32
    %67 = vector.broadcast %cst_30 : f32 to vector<2x128xf32>
    %68 = arith.addf %67, %66 : vector<2x128xf32>
    %69 = arith.divf %67, %68 : vector<2x128xf32>
    %70 = vector.extract_strided_slice %48 {offsets = [0, 256], sizes = [2, 128], strides = [1, 1]} : vector<2x384xf32> to vector<2x128xf32>
    %71 = vector.extract_strided_slice %53 {offsets = [0, 256], sizes = [2, 128], strides = [1, 1]} : vector<2x384xf32> to vector<2x128xf32>
    %72 = arith.mulf %61, %71 : vector<2x128xf32>
    %73 = arith.addf %70, %72 : vector<2x128xf32>
    %74 = math.tanh %73 : vector<2x128xf32>
    %cst_31 = arith.constant 1.000000e+00 : f32
    %75 = vector.broadcast %cst_31 : f32 to vector<2x128xf32>
    %76 = arith.subf %75, %69 : vector<2x128xf32>
    %77 = arith.mulf %76, %74 : vector<2x128xf32>
    %78 = arith.mulf %69, %9 : vector<2x128xf32>
    %79 = arith.addf %77, %78 : vector<2x128xf32>
    %80 = arith.index_cast %c0_i32 : i32 to index
    %c0_32 = arith.constant 0 : index
    %c0_33 = arith.constant 0 : index
    %81 = vector.load %arg7[%80, %c0_32, %c0_33] : memref<8x2x128xf32, #tpu.memory_space<vmem>>, vector<1x2x128xf32>
    %82 = vector.shape_cast %81 : vector<1x2x128xf32> to vector<2x128xf32>
    %83 = vector.shape_cast %79 : vector<2x128xf32> to vector<1x2x128xf32>
    tpu.vector_store %arg7[%80, %c0_32, %c0_33], %83 {strides = array<i32>} : memref<8x2x128xf32, #tpu.memory_space<vmem>>, vector<1x2x128xf32>,
    %c1_i32 = arith.constant 1 : i32
    %84 = arith.index_cast %c1_i32 : i32 to index
    %c0_34 = arith.constant 0 : index
    %c0_35 = arith.constant 0 : index
    %85 = vector.load %arg1[%84, %c0_34, %c0_35] : memref<8x2x384xf32, #tpu.memory_space<vmem>>, vector<1x2x384xf32>
    %86 = vector.shape_cast %85 : vector<1x2x384xf32> to vector<2x384xf32>
    %c0_36 = arith.constant 0 : index
    %c0_37 = arith.constant 0 : index
    %c0_38 = arith.constant 0 : index
    %87 = vector.load %arg3[%c0_36, %c0_37, %c0_38] : memref<2x128x384xf32, #tpu.memory_space<vmem>>, vector<1x128x384xf32>
    %88 = vector.shape_cast %87 : vector<1x128x384xf32> to vector<128x384xf32>
    %cst_39 = arith.constant dense<0.000000e+00> : vector<2x384xf32>
    %89 = tpu.matmul %43, %88, %cst_39 {dimension_numbers = #tpu.dot_dimension_numbers<[1], [0], [0], [1], [0, 0, 1, 1], [], []>} : vector<2x128xf32>, vector<128x384xf32>, vector<2x384xf32> -> vector<2x384xf32>
    %90 = vector.broadcast %3 : vector<1x384xf32> to vector<2x384xf32>
    %91 = arith.addf %89, %90 : vector<2x384xf32>
    %92 = vector.extract_strided_slice %86 {offsets = [0, 0], sizes = [2, 128], strides = [1, 1]} : vector<2x384xf32> to vector<2x128xf32>
    %93 = vector.extract_strided_slice %91 {offsets = [0, 0], sizes = [2, 128], strides = [1, 1]} : vector<2x384xf32> to vector<2x128xf32>
    %94 = arith.addf %92, %93 : vector<2x128xf32>
    %95 = arith.negf %94 : vector<2x128xf32>
    %96 = math.exp %95 : vector<2x128xf32>
    %cst_40 = arith.constant 1.000000e+00 : f32
    %97 = vector.broadcast %cst_40 : f32 to vector<2x128xf32>
    %98 = arith.addf %97, %96 : vector<2x128xf32>
    %99 = arith.divf %97, %98 : vector<2x128xf32>
    %100 = vector.extract_strided_slice %86 {offsets = [0, 128], sizes = [2, 128], strides = [1, 1]} : vector<2x384xf32> to vector<2x128xf32>
    %101 = vector.extract_strided_slice %91 {offsets = [0, 128], sizes = [2, 128], strides = [1, 1]} : vector<2x384xf32> to vector<2x128xf32>
    %102 = arith.addf %100, %101 : vector<2x128xf32>
    %103 = arith.negf %102 : vector<2x128xf32>
    %104 = math.exp %103 : vector<2x128xf32>
    %cst_41 = arith.constant 1.000000e+00 : f32
    %105 = vector.broadcast %cst_41 : f32 to vector<2x128xf32>
    %106 = arith.addf %105, %104 : vector<2x128xf32>
    %107 = arith.divf %105, %106 : vector<2x128xf32>
    %108 = vector.extract_strided_slice %86 {offsets = [0, 256], sizes = [2, 128], strides = [1, 1]} : vector<2x384xf32> to vector<2x128xf32>
    %109 = vector.extract_strided_slice %91 {offsets = [0, 256], sizes = [2, 128], strides = [1, 1]} : vector<2x384xf32> to vector<2x128xf32>
    %110 = arith.mulf %99, %109 : vector<2x128xf32>
    %111 = arith.addf %108, %110 : vector<2x128xf32>
    %112 = math.tanh %111 : vector<2x128xf32>
    %cst_42 = arith.constant 1.000000e+00 : f32
    %113 = vector.broadcast %cst_42 : f32 to vector<2x128xf32>
    %114 = arith.subf %113, %107 : vector<2x128xf32>
    %115 = arith.mulf %114, %112 : vector<2x128xf32>
    %116 = arith.mulf %107, %43 : vector<2x128xf32>
    %117 = arith.addf %115, %116 : vector<2x128xf32>
    %c1_43 = arith.constant 1 : index
    %c0_44 = arith.constant 0 : index
    %c0_45 = arith.constant 0 : index
    %118 = vector.load %arg2[%c1_43, %c0_44, %c0_45] : memref<2x128x384xf32, #tpu.memory_space<vmem>>, vector<1x128x384xf32>
    %119 = vector.shape_cast %118 : vector<1x128x384xf32> to vector<128x384xf32>
    %cst_46 = arith.constant dense<0.000000e+00> : vector<2x384xf32>
    %120 = tpu.matmul %117, %119, %cst_46 {dimension_numbers = #tpu.dot_dimension_numbers<[1], [0], [0], [1], [0, 0, 1, 1], [], []>} : vector<2x128xf32>, vector<128x384xf32>, vector<2x384xf32> -> vector<2x384xf32>
    %121 = vector.broadcast %1 : vector<1x384xf32> to vector<2x384xf32>
    %122 = arith.addf %120, %121 : vector<2x384xf32>
    %c1_47 = arith.constant 1 : index
    %c0_48 = arith.constant 0 : index
    %c0_49 = arith.constant 0 : index
    %123 = vector.load %arg3[%c1_47, %c0_48, %c0_49] : memref<2x128x384xf32, #tpu.memory_space<vmem>>, vector<1x128x384xf32>
    %124 = vector.shape_cast %123 : vector<1x128x384xf32> to vector<128x384xf32>
    %cst_50 = arith.constant dense<0.000000e+00> : vector<2x384xf32>
    %125 = tpu.matmul %79, %124, %cst_50 {dimension_numbers = #tpu.dot_dimension_numbers<[1], [0], [0], [1], [0, 0, 1, 1], [], []>} : vector<2x128xf32>, vector<128x384xf32>, vector<2x384xf32> -> vector<2x384xf32>
    %126 = vector.broadcast %5 : vector<1x384xf32> to vector<2x384xf32>
    %127 = arith.addf %125, %126 : vector<2x384xf32>
    %128 = vector.extract_strided_slice %122 {offsets = [0, 0], sizes = [2, 128], strides = [1, 1]} : vector<2x384xf32> to vector<2x128xf32>
    %129 = vector.extract_strided_slice %127 {offsets = [0, 0], sizes = [2, 128], strides = [1, 1]} : vector<2x384xf32> to vector<2x128xf32>
    %130 = arith.addf %128, %129 : vector<2x128xf32>
    %131 = arith.negf %130 : vector<2x128xf32>
    %132 = math.exp %131 : vector<2x128xf32>
    %cst_51 = arith.constant 1.000000e+00 : f32
    %133 = vector.broadcast %cst_51 : f32 to vector<2x128xf32>
    %134 = arith.addf %133, %132 : vector<2x128xf32>
    %135 = arith.divf %133, %134 : vector<2x128xf32>
    %136 = vector.extract_strided_slice %122 {offsets = [0, 128], sizes = [2, 128], strides = [1, 1]} : vector<2x384xf32> to vector<2x128xf32>
    %137 = vector.extract_strided_slice %127 {offsets = [0, 128], sizes = [2, 128], strides = [1, 1]} : vector<2x384xf32> to vector<2x128xf32>
    %138 = arith.addf %136, %137 : vector<2x128xf32>
    %139 = arith.negf %138 : vector<2x128xf32>
    %140 = math.exp %139 : vector<2x128xf32>
    %cst_52 = arith.constant 1.000000e+00 : f32
    %141 = vector.broadcast %cst_52 : f32 to vector<2x128xf32>
    %142 = arith.addf %141, %140 : vector<2x128xf32>
    %143 = arith.divf %141, %142 : vector<2x128xf32>
    %144 = vector.extract_strided_slice %122 {offsets = [0, 256], sizes = [2, 128], strides = [1, 1]} : vector<2x384xf32> to vector<2x128xf32>
    %145 = vector.extract_strided_slice %127 {offsets = [0, 256], sizes = [2, 128], strides = [1, 1]} : vector<2x384xf32> to vector<2x128xf32>
    %146 = arith.mulf %135, %145 : vector<2x128xf32>
    %147 = arith.addf %144, %146 : vector<2x128xf32>
    %148 = math.tanh %147 : vector<2x128xf32>
    %cst_53 = arith.constant 1.000000e+00 : f32
    %149 = vector.broadcast %cst_53 : f32 to vector<2x128xf32>
    %150 = arith.subf %149, %143 : vector<2x128xf32>
    %151 = arith.mulf %150, %148 : vector<2x128xf32>
    %152 = arith.mulf %143, %79 : vector<2x128xf32>
    %153 = arith.addf %151, %152 : vector<2x128xf32>
    %154 = arith.index_cast %c1_i32 : i32 to index
    %c0_54 = arith.constant 0 : index
    %c0_55 = arith.constant 0 : index
    %155 = vector.load %arg7[%154, %c0_54, %c0_55] : memref<8x2x128xf32, #tpu.memory_space<vmem>>, vector<1x2x128xf32>
    %156 = vector.shape_cast %155 : vector<1x2x128xf32> to vector<2x128xf32>
    %157 = vector.shape_cast %153 : vector<2x128xf32> to vector<1x2x128xf32>
    tpu.vector_store %arg7[%154, %c0_54, %c0_55], %157 {strides = array<i32>} : memref<8x2x128xf32, #tpu.memory_space<vmem>>, vector<1x2x128xf32>,
    %c2_i32 = arith.constant 2 : i32
    %158 = arith.index_cast %c2_i32 : i32 to index
    %c0_56 = arith.constant 0 : index
    %c0_57 = arith.constant 0 : index
    %159 = vector.load %arg1[%158, %c0_56, %c0_57] : memref<8x2x384xf32, #tpu.memory_space<vmem>>, vector<1x2x384xf32>
    %160 = vector.shape_cast %159 : vector<1x2x384xf32> to vector<2x384xf32>
    %c0_58 = arith.constant 0 : index
    %c0_59 = arith.constant 0 : index
    %c0_60 = arith.constant 0 : index
    %161 = vector.load %arg3[%c0_58, %c0_59, %c0_60] : memref<2x128x384xf32, #tpu.memory_space<vmem>>, vector<1x128x384xf32>
    %162 = vector.shape_cast %161 : vector<1x128x384xf32> to vector<128x384xf32>
    %cst_61 = arith.constant dense<0.000000e+00> : vector<2x384xf32>
    %163 = tpu.matmul %117, %162, %cst_61 {dimension_numbers = #tpu.dot_dimension_numbers<[1], [0], [0], [1], [0, 0, 1, 1], [], []>} : vector<2x128xf32>, vector<128x384xf32>, vector<2x384xf32> -> vector<2x384xf32>
    %164 = vector.broadcast %3 : vector<1x384xf32> to vector<2x384xf32>
    %165 = arith.addf %163, %164 : vector<2x384xf32>
    %166 = vector.extract_strided_slice %160 {offsets = [0, 0], sizes = [2, 128], strides = [1, 1]} : vector<2x384xf32> to vector<2x128xf32>
    %167 = vector.extract_strided_slice %165 {offsets = [0, 0], sizes = [2, 128], strides = [1, 1]} : vector<2x384xf32> to vector<2x128xf32>
    %168 = arith.addf %166, %167 : vector<2x128xf32>
    %169 = arith.negf %168 : vector<2x128xf32>
    %170 = math.exp %169 : vector<2x128xf32>
    %cst_62 = arith.constant 1.000000e+00 : f32
    %171 = vector.broadcast %cst_62 : f32 to vector<2x128xf32>
    %172 = arith.addf %171, %170 : vector<2x128xf32>
    %173 = arith.divf %171, %172 : vector<2x128xf32>
    %174 = vector.extract_strided_slice %160 {offsets = [0, 128], sizes = [2, 128], strides = [1, 1]} : vector<2x384xf32> to vector<2x128xf32>
    %175 = vector.extract_strided_slice %165 {offsets = [0, 128], sizes = [2, 128], strides = [1, 1]} : vector<2x384xf32> to vector<2x128xf32>
    %176 = arith.addf %174, %175 : vector<2x128xf32>
    %177 = arith.negf %176 : vector<2x128xf32>
    %178 = math.exp %177 : vector<2x128xf32>
    %cst_63 = arith.constant 1.000000e+00 : f32
    %179 = vector.broadcast %cst_63 : f32 to vector<2x128xf32>
    %180 = arith.addf %179, %178 : vector<2x128xf32>
    %181 = arith.divf %179, %180 : vector<2x128xf32>
    %182 = vector.extract_strided_slice %160 {offsets = [0, 256], sizes = [2, 128], strides = [1, 1]} : vector<2x384xf32> to vector<2x128xf32>
    %183 = vector.extract_strided_slice %165 {offsets = [0, 256], sizes = [2, 128], strides = [1, 1]} : vector<2x384xf32> to vector<2x128xf32>
    %184 = arith.mulf %173, %183 : vector<2x128xf32>
    %185 = arith.addf %182, %184 : vector<2x128xf32>
    %186 = math.tanh %185 : vector<2x128xf32>
    %cst_64 = arith.constant 1.000000e+00 : f32
    %187 = vector.broadcast %cst_64 : f32 to vector<2x128xf32>
    %188 = arith.subf %187, %181 : vector<2x128xf32>
    %189 = arith.mulf %188, %186 : vector<2x128xf32>
    %190 = arith.mulf %181, %117 : vector<2x128xf32>
    %191 = arith.addf %189, %190 : vector<2x128xf32>
    %c1_65 = arith.constant 1 : index
    %c0_66 = arith.constant 0 : index
    %c0_67 = arith.constant 0 : index
    %192 = vector.load %arg2[%c1_65, %c0_66, %c0_67] : memref<2x128x384xf32, #tpu.memory_space<vmem>>, vector<1x128x384xf32>
    %193 = vector.shape_cast %192 : vector<1x128x384xf32> to vector<128x384xf32>
    %cst_68 = arith.constant dense<0.000000e+00> : vector<2x384xf32>
    %194 = tpu.matmul %191, %193, %cst_68 {dimension_numbers = #tpu.dot_dimension_numbers<[1], [0], [0], [1], [0, 0, 1, 1], [], []>} : vector<2x128xf32>, vector<128x384xf32>, vector<2x384xf32> -> vector<2x384xf32>
    %195 = vector.broadcast %1 : vector<1x384xf32> to vector<2x384xf32>
    %196 = arith.addf %194, %195 : vector<2x384xf32>
    %c1_69 = arith.constant 1 : index
    %c0_70 = arith.constant 0 : index
    %c0_71 = arith.constant 0 : index
    %197 = vector.load %arg3[%c1_69, %c0_70, %c0_71] : memref<2x128x384xf32, #tpu.memory_space<vmem>>, vector<1x128x384xf32>
    %198 = vector.shape_cast %197 : vector<1x128x384xf32> to vector<128x384xf32>
    %cst_72 = arith.constant dense<0.000000e+00> : vector<2x384xf32>
    %199 = tpu.matmul %153, %198, %cst_72 {dimension_numbers = #tpu.dot_dimension_numbers<[1], [0], [0], [1], [0, 0, 1, 1], [], []>} : vector<2x128xf32>, vector<128x384xf32>, vector<2x384xf32> -> vector<2x384xf32>
    %200 = vector.broadcast %5 : vector<1x384xf32> to vector<2x384xf32>
    %201 = arith.addf %199, %200 : vector<2x384xf32>
    %202 = vector.extract_strided_slice %196 {offsets = [0, 0], sizes = [2, 128], strides = [1, 1]} : vector<2x384xf32> to vector<2x128xf32>
    %203 = vector.extract_strided_slice %201 {offsets = [0, 0], sizes = [2, 128], strides = [1, 1]} : vector<2x384xf32> to vector<2x128xf32>
    %204 = arith.addf %202, %203 : vector<2x128xf32>
    %205 = arith.negf %204 : vector<2x128xf32>
    %206 = math.exp %205 : vector<2x128xf32>
    %cst_73 = arith.constant 1.000000e+00 : f32
    %207 = vector.broadcast %cst_73 : f32 to vector<2x128xf32>
    %208 = arith.addf %207, %206 : vector<2x128xf32>
    %209 = arith.divf %207, %208 : vector<2x128xf32>
    %210 = vector.extract_strided_slice %196 {offsets = [0, 128], sizes = [2, 128], strides = [1, 1]} : vector<2x384xf32> to vector<2x128xf32>
    %211 = vector.extract_strided_slice %201 {offsets = [0, 128], sizes = [2, 128], strides = [1, 1]} : vector<2x384xf32> to vector<2x128xf32>
    %212 = arith.addf %210, %211 : vector<2x128xf32>
    %213 = arith.negf %212 : vector<2x128xf32>
    %214 = math.exp %213 : vector<2x128xf32>
    %cst_74 = arith.constant 1.000000e+00 : f32
    %215 = vector.broadcast %cst_74 : f32 to vector<2x128xf32>
    %216 = arith.addf %215, %214 : vector<2x128xf32>
    %217 = arith.divf %215, %216 : vector<2x128xf32>
    %218 = vector.extract_strided_slice %196 {offsets = [0, 256], sizes = [2, 128], strides = [1, 1]} : vector<2x384xf32> to vector<2x128xf32>
    %219 = vector.extract_strided_slice %201 {offsets = [0, 256], sizes = [2, 128], strides = [1, 1]} : vector<2x384xf32> to vector<2x128xf32>
    %220 = arith.mulf %209, %219 : vector<2x128xf32>
    %221 = arith.addf %218, %220 : vector<2x128xf32>
    %222 = math.tanh %221 : vector<2x128xf32>
    %cst_75 = arith.constant 1.000000e+00 : f32
    %223 = vector.broadcast %cst_75 : f32 to vector<2x128xf32>
    %224 = arith.subf %223, %217 : vector<2x128xf32>
    %225 = arith.mulf %224, %222 : vector<2x128xf32>
    %226 = arith.mulf %217, %153 : vector<2x128xf32>
    %227 = arith.addf %225, %226 : vector<2x128xf32>
    %228 = arith.index_cast %c2_i32 : i32 to index
    %c0_76 = arith.constant 0 : index
    %c0_77 = arith.constant 0 : index
    %229 = vector.load %arg7[%228, %c0_76, %c0_77] : memref<8x2x128xf32, #tpu.memory_space<vmem>>, vector<1x2x128xf32>
    %230 = vector.shape_cast %229 : vector<1x2x128xf32> to vector<2x128xf32>
    %231 = vector.shape_cast %227 : vector<2x128xf32> to vector<1x2x128xf32>
    tpu.vector_store %arg7[%228, %c0_76, %c0_77], %231 {strides = array<i32>} : memref<8x2x128xf32, #tpu.memory_space<vmem>>, vector<1x2x128xf32>,
    %c3_i32 = arith.constant 3 : i32
    %232 = arith.index_cast %c3_i32 : i32 to index
    %c0_78 = arith.constant 0 : index
    %c0_79 = arith.constant 0 : index
    %233 = vector.load %arg1[%232, %c0_78, %c0_79] : memref<8x2x384xf32, #tpu.memory_space<vmem>>, vector<1x2x384xf32>
    %234 = vector.shape_cast %233 : vector<1x2x384xf32> to vector<2x384xf32>
    %c0_80 = arith.constant 0 : index
    %c0_81 = arith.constant 0 : index
    %c0_82 = arith.constant 0 : index
    %235 = vector.load %arg3[%c0_80, %c0_81, %c0_82] : memref<2x128x384xf32, #tpu.memory_space<vmem>>, vector<1x128x384xf32>
    %236 = vector.shape_cast %235 : vector<1x128x384xf32> to vector<128x384xf32>
    %cst_83 = arith.constant dense<0.000000e+00> : vector<2x384xf32>
    %237 = tpu.matmul %191, %236, %cst_83 {dimension_numbers = #tpu.dot_dimension_numbers<[1], [0], [0], [1], [0, 0, 1, 1], [], []>} : vector<2x128xf32>, vector<128x384xf32>, vector<2x384xf32> -> vector<2x384xf32>
    %238 = vector.broadcast %3 : vector<1x384xf32> to vector<2x384xf32>
    %239 = arith.addf %237, %238 : vector<2x384xf32>
    %240 = vector.extract_strided_slice %234 {offsets = [0, 0], sizes = [2, 128], strides = [1, 1]} : vector<2x384xf32> to vector<2x128xf32>
    %241 = vector.extract_strided_slice %239 {offsets = [0, 0], sizes = [2, 128], strides = [1, 1]} : vector<2x384xf32> to vector<2x128xf32>
    %242 = arith.addf %240, %241 : vector<2x128xf32>
    %243 = arith.negf %242 : vector<2x128xf32>
    %244 = math.exp %243 : vector<2x128xf32>
    %cst_84 = arith.constant 1.000000e+00 : f32
    %245 = vector.broadcast %cst_84 : f32 to vector<2x128xf32>
    %246 = arith.addf %245, %244 : vector<2x128xf32>
    %247 = arith.divf %245, %246 : vector<2x128xf32>
    %248 = vector.extract_strided_slice %234 {offsets = [0, 128], sizes = [2, 128], strides = [1, 1]} : vector<2x384xf32> to vector<2x128xf32>
    %249 = vector.extract_strided_slice %239 {offsets = [0, 128], sizes = [2, 128], strides = [1, 1]} : vector<2x384xf32> to vector<2x128xf32>
    %250 = arith.addf %248, %249 : vector<2x128xf32>
    %251 = arith.negf %250 : vector<2x128xf32>
    %252 = math.exp %251 : vector<2x128xf32>
    %cst_85 = arith.constant 1.000000e+00 : f32
    %253 = vector.broadcast %cst_85 : f32 to vector<2x128xf32>
    %254 = arith.addf %253, %252 : vector<2x128xf32>
    %255 = arith.divf %253, %254 : vector<2x128xf32>
    %256 = vector.extract_strided_slice %234 {offsets = [0, 256], sizes = [2, 128], strides = [1, 1]} : vector<2x384xf32> to vector<2x128xf32>
    %257 = vector.extract_strided_slice %239 {offsets = [0, 256], sizes = [2, 128], strides = [1, 1]} : vector<2x384xf32> to vector<2x128xf32>
    %258 = arith.mulf %247, %257 : vector<2x128xf32>
    %259 = arith.addf %256, %258 : vector<2x128xf32>
    %260 = math.tanh %259 : vector<2x128xf32>
    %cst_86 = arith.constant 1.000000e+00 : f32
    %261 = vector.broadcast %cst_86 : f32 to vector<2x128xf32>
    %262 = arith.subf %261, %255 : vector<2x128xf32>
    %263 = arith.mulf %262, %260 : vector<2x128xf32>
    %264 = arith.mulf %255, %191 : vector<2x128xf32>
    %265 = arith.addf %263, %264 : vector<2x128xf32>
    %c1_87 = arith.constant 1 : index
    %c0_88 = arith.constant 0 : index
    %c0_89 = arith.constant 0 : index
    %266 = vector.load %arg2[%c1_87, %c0_88, %c0_89] : memref<2x128x384xf32, #tpu.memory_space<vmem>>, vector<1x128x384xf32>
    %267 = vector.shape_cast %266 : vector<1x128x384xf32> to vector<128x384xf32>
    %cst_90 = arith.constant dense<0.000000e+00> : vector<2x384xf32>
    %268 = tpu.matmul %265, %267, %cst_90 {dimension_numbers = #tpu.dot_dimension_numbers<[1], [0], [0], [1], [0, 0, 1, 1], [], []>} : vector<2x128xf32>, vector<128x384xf32>, vector<2x384xf32> -> vector<2x384xf32>
    %269 = vector.broadcast %1 : vector<1x384xf32> to vector<2x384xf32>
    %270 = arith.addf %268, %269 : vector<2x384xf32>
    %c1_91 = arith.constant 1 : index
    %c0_92 = arith.constant 0 : index
    %c0_93 = arith.constant 0 : index
    %271 = vector.load %arg3[%c1_91, %c0_92, %c0_93] : memref<2x128x384xf32, #tpu.memory_space<vmem>>, vector<1x128x384xf32>
    %272 = vector.shape_cast %271 : vector<1x128x384xf32> to vector<128x384xf32>
    %cst_94 = arith.constant dense<0.000000e+00> : vector<2x384xf32>
    %273 = tpu.matmul %227, %272, %cst_94 {dimension_numbers = #tpu.dot_dimension_numbers<[1], [0], [0], [1], [0, 0, 1, 1], [], []>} : vector<2x128xf32>, vector<128x384xf32>, vector<2x384xf32> -> vector<2x384xf32>
    %274 = vector.broadcast %5 : vector<1x384xf32> to vector<2x384xf32>
    %275 = arith.addf %273, %274 : vector<2x384xf32>
    %276 = vector.extract_strided_slice %270 {offsets = [0, 0], sizes = [2, 128], strides = [1, 1]} : vector<2x384xf32> to vector<2x128xf32>
    %277 = vector.extract_strided_slice %275 {offsets = [0, 0], sizes = [2, 128], strides = [1, 1]} : vector<2x384xf32> to vector<2x128xf32>
    %278 = arith.addf %276, %277 : vector<2x128xf32>
    %279 = arith.negf %278 : vector<2x128xf32>
    %280 = math.exp %279 : vector<2x128xf32>
    %cst_95 = arith.constant 1.000000e+00 : f32
    %281 = vector.broadcast %cst_95 : f32 to vector<2x128xf32>
    %282 = arith.addf %281, %280 : vector<2x128xf32>
    %283 = arith.divf %281, %282 : vector<2x128xf32>
    %284 = vector.extract_strided_slice %270 {offsets = [0, 128], sizes = [2, 128], strides = [1, 1]} : vector<2x384xf32> to vector<2x128xf32>
    %285 = vector.extract_strided_slice %275 {offsets = [0, 128], sizes = [2, 128], strides = [1, 1]} : vector<2x384xf32> to vector<2x128xf32>
    %286 = arith.addf %284, %285 : vector<2x128xf32>
    %287 = arith.negf %286 : vector<2x128xf32>
    %288 = math.exp %287 : vector<2x128xf32>
    %cst_96 = arith.constant 1.000000e+00 : f32
    %289 = vector.broadcast %cst_96 : f32 to vector<2x128xf32>
    %290 = arith.addf %289, %288 : vector<2x128xf32>
    %291 = arith.divf %289, %290 : vector<2x128xf32>
    %292 = vector.extract_strided_slice %270 {offsets = [0, 256], sizes = [2, 128], strides = [1, 1]} : vector<2x384xf32> to vector<2x128xf32>
    %293 = vector.extract_strided_slice %275 {offsets = [0, 256], sizes = [2, 128], strides = [1, 1]} : vector<2x384xf32> to vector<2x128xf32>
    %294 = arith.mulf %283, %293 : vector<2x128xf32>
    %295 = arith.addf %292, %294 : vector<2x128xf32>
    %296 = math.tanh %295 : vector<2x128xf32>
    %cst_97 = arith.constant 1.000000e+00 : f32
    %297 = vector.broadcast %cst_97 : f32 to vector<2x128xf32>
    %298 = arith.subf %297, %291 : vector<2x128xf32>
    %299 = arith.mulf %298, %296 : vector<2x128xf32>
    %300 = arith.mulf %291, %227 : vector<2x128xf32>
    %301 = arith.addf %299, %300 : vector<2x128xf32>
    %302 = arith.index_cast %c3_i32 : i32 to index
    %c0_98 = arith.constant 0 : index
    %c0_99 = arith.constant 0 : index
    %303 = vector.load %arg7[%302, %c0_98, %c0_99] : memref<8x2x128xf32, #tpu.memory_space<vmem>>, vector<1x2x128xf32>
    %304 = vector.shape_cast %303 : vector<1x2x128xf32> to vector<2x128xf32>
    %305 = vector.shape_cast %301 : vector<2x128xf32> to vector<1x2x128xf32>
    tpu.vector_store %arg7[%302, %c0_98, %c0_99], %305 {strides = array<i32>} : memref<8x2x128xf32, #tpu.memory_space<vmem>>, vector<1x2x128xf32>,
    %c4_i32 = arith.constant 4 : i32
    %306 = arith.index_cast %c4_i32 : i32 to index
    %c0_100 = arith.constant 0 : index
    %c0_101 = arith.constant 0 : index
    %307 = vector.load %arg1[%306, %c0_100, %c0_101] : memref<8x2x384xf32, #tpu.memory_space<vmem>>, vector<1x2x384xf32>
    %308 = vector.shape_cast %307 : vector<1x2x384xf32> to vector<2x384xf32>
    %c0_102 = arith.constant 0 : index
    %c0_103 = arith.constant 0 : index
    %c0_104 = arith.constant 0 : index
    %309 = vector.load %arg3[%c0_102, %c0_103, %c0_104] : memref<2x128x384xf32, #tpu.memory_space<vmem>>, vector<1x128x384xf32>
    %310 = vector.shape_cast %309 : vector<1x128x384xf32> to vector<128x384xf32>
    %cst_105 = arith.constant dense<0.000000e+00> : vector<2x384xf32>
    %311 = tpu.matmul %265, %310, %cst_105 {dimension_numbers = #tpu.dot_dimension_numbers<[1], [0], [0], [1], [0, 0, 1, 1], [], []>} : vector<2x128xf32>, vector<128x384xf32>, vector<2x384xf32> -> vector<2x384xf32>
    %312 = vector.broadcast %3 : vector<1x384xf32> to vector<2x384xf32>
    %313 = arith.addf %311, %312 : vector<2x384xf32>
    %314 = vector.extract_strided_slice %308 {offsets = [0, 0], sizes = [2, 128], strides = [1, 1]} : vector<2x384xf32> to vector<2x128xf32>
    %315 = vector.extract_strided_slice %313 {offsets = [0, 0], sizes = [2, 128], strides = [1, 1]} : vector<2x384xf32> to vector<2x128xf32>
    %316 = arith.addf %314, %315 : vector<2x128xf32>
    %317 = arith.negf %316 : vector<2x128xf32>
    %318 = math.exp %317 : vector<2x128xf32>
    %cst_106 = arith.constant 1.000000e+00 : f32
    %319 = vector.broadcast %cst_106 : f32 to vector<2x128xf32>
    %320 = arith.addf %319, %318 : vector<2x128xf32>
    %321 = arith.divf %319, %320 : vector<2x128xf32>
    %322 = vector.extract_strided_slice %308 {offsets = [0, 128], sizes = [2, 128], strides = [1, 1]} : vector<2x384xf32> to vector<2x128xf32>
    %323 = vector.extract_strided_slice %313 {offsets = [0, 128], sizes = [2, 128], strides = [1, 1]} : vector<2x384xf32> to vector<2x128xf32>
    %324 = arith.addf %322, %323 : vector<2x128xf32>
    %325 = arith.negf %324 : vector<2x128xf32>
    %326 = math.exp %325 : vector<2x128xf32>
    %cst_107 = arith.constant 1.000000e+00 : f32
    %327 = vector.broadcast %cst_107 : f32 to vector<2x128xf32>
    %328 = arith.addf %327, %326 : vector<2x128xf32>
    %329 = arith.divf %327, %328 : vector<2x128xf32>
    %330 = vector.extract_strided_slice %308 {offsets = [0, 256], sizes = [2, 128], strides = [1, 1]} : vector<2x384xf32> to vector<2x128xf32>
    %331 = vector.extract_strided_slice %313 {offsets = [0, 256], sizes = [2, 128], strides = [1, 1]} : vector<2x384xf32> to vector<2x128xf32>
    %332 = arith.mulf %321, %331 : vector<2x128xf32>
    %333 = arith.addf %330, %332 : vector<2x128xf32>
    %334 = math.tanh %333 : vector<2x128xf32>
    %cst_108 = arith.constant 1.000000e+00 : f32
    %335 = vector.broadcast %cst_108 : f32 to vector<2x128xf32>
    %336 = arith.subf %335, %329 : vector<2x128xf32>
    %337 = arith.mulf %336, %334 : vector<2x128xf32>
    %338 = arith.mulf %329, %265 : vector<2x128xf32>
    %339 = arith.addf %337, %338 : vector<2x128xf32>
    %c1_109 = arith.constant 1 : index
    %c0_110 = arith.constant 0 : index
    %c0_111 = arith.constant 0 : index
    %340 = vector.load %arg2[%c1_109, %c0_110, %c0_111] : memref<2x128x384xf32, #tpu.memory_space<vmem>>, vector<1x128x384xf32>
    %341 = vector.shape_cast %340 : vector<1x128x384xf32> to vector<128x384xf32>
    %cst_112 = arith.constant dense<0.000000e+00> : vector<2x384xf32>
    %342 = tpu.matmul %339, %341, %cst_112 {dimension_numbers = #tpu.dot_dimension_numbers<[1], [0], [0], [1], [0, 0, 1, 1], [], []>} : vector<2x128xf32>, vector<128x384xf32>, vector<2x384xf32> -> vector<2x384xf32>
    %343 = vector.broadcast %1 : vector<1x384xf32> to vector<2x384xf32>
    %344 = arith.addf %342, %343 : vector<2x384xf32>
    %c1_113 = arith.constant 1 : index
    %c0_114 = arith.constant 0 : index
    %c0_115 = arith.constant 0 : index
    %345 = vector.load %arg3[%c1_113, %c0_114, %c0_115] : memref<2x128x384xf32, #tpu.memory_space<vmem>>, vector<1x128x384xf32>
    %346 = vector.shape_cast %345 : vector<1x128x384xf32> to vector<128x384xf32>
    %cst_116 = arith.constant dense<0.000000e+00> : vector<2x384xf32>
    %347 = tpu.matmul %301, %346, %cst_116 {dimension_numbers = #tpu.dot_dimension_numbers<[1], [0], [0], [1], [0, 0, 1, 1], [], []>} : vector<2x128xf32>, vector<128x384xf32>, vector<2x384xf32> -> vector<2x384xf32>
    %348 = vector.broadcast %5 : vector<1x384xf32> to vector<2x384xf32>
    %349 = arith.addf %347, %348 : vector<2x384xf32>
    %350 = vector.extract_strided_slice %344 {offsets = [0, 0], sizes = [2, 128], strides = [1, 1]} : vector<2x384xf32> to vector<2x128xf32>
    %351 = vector.extract_strided_slice %349 {offsets = [0, 0], sizes = [2, 128], strides = [1, 1]} : vector<2x384xf32> to vector<2x128xf32>
    %352 = arith.addf %350, %351 : vector<2x128xf32>
    %353 = arith.negf %352 : vector<2x128xf32>
    %354 = math.exp %353 : vector<2x128xf32>
    %cst_117 = arith.constant 1.000000e+00 : f32
    %355 = vector.broadcast %cst_117 : f32 to vector<2x128xf32>
    %356 = arith.addf %355, %354 : vector<2x128xf32>
    %357 = arith.divf %355, %356 : vector<2x128xf32>
    %358 = vector.extract_strided_slice %344 {offsets = [0, 128], sizes = [2, 128], strides = [1, 1]} : vector<2x384xf32> to vector<2x128xf32>
    %359 = vector.extract_strided_slice %349 {offsets = [0, 128], sizes = [2, 128], strides = [1, 1]} : vector<2x384xf32> to vector<2x128xf32>
    %360 = arith.addf %358, %359 : vector<2x128xf32>
    %361 = arith.negf %360 : vector<2x128xf32>
    %362 = math.exp %361 : vector<2x128xf32>
    %cst_118 = arith.constant 1.000000e+00 : f32
    %363 = vector.broadcast %cst_118 : f32 to vector<2x128xf32>
    %364 = arith.addf %363, %362 : vector<2x128xf32>
    %365 = arith.divf %363, %364 : vector<2x128xf32>
    %366 = vector.extract_strided_slice %344 {offsets = [0, 256], sizes = [2, 128], strides = [1, 1]} : vector<2x384xf32> to vector<2x128xf32>
    %367 = vector.extract_strided_slice %349 {offsets = [0, 256], sizes = [2, 128], strides = [1, 1]} : vector<2x384xf32> to vector<2x128xf32>
    %368 = arith.mulf %357, %367 : vector<2x128xf32>
    %369 = arith.addf %366, %368 : vector<2x128xf32>
    %370 = math.tanh %369 : vector<2x128xf32>
    %cst_119 = arith.constant 1.000000e+00 : f32
    %371 = vector.broadcast %cst_119 : f32 to vector<2x128xf32>
    %372 = arith.subf %371, %365 : vector<2x128xf32>
    %373 = arith.mulf %372, %370 : vector<2x128xf32>
    %374 = arith.mulf %365, %301 : vector<2x128xf32>
    %375 = arith.addf %373, %374 : vector<2x128xf32>
    %376 = arith.index_cast %c4_i32 : i32 to index
    %c0_120 = arith.constant 0 : index
    %c0_121 = arith.constant 0 : index
    %377 = vector.load %arg7[%376, %c0_120, %c0_121] : memref<8x2x128xf32, #tpu.memory_space<vmem>>, vector<1x2x128xf32>
    %378 = vector.shape_cast %377 : vector<1x2x128xf32> to vector<2x128xf32>
    %379 = vector.shape_cast %375 : vector<2x128xf32> to vector<1x2x128xf32>
    tpu.vector_store %arg7[%376, %c0_120, %c0_121], %379 {strides = array<i32>} : memref<8x2x128xf32, #tpu.memory_space<vmem>>, vector<1x2x128xf32>,
    %c5_i32 = arith.constant 5 : i32
    %380 = arith.index_cast %c5_i32 : i32 to index
    %c0_122 = arith.constant 0 : index
    %c0_123 = arith.constant 0 : index
    %381 = vector.load %arg1[%380, %c0_122, %c0_123] : memref<8x2x384xf32, #tpu.memory_space<vmem>>, vector<1x2x384xf32>
    %382 = vector.shape_cast %381 : vector<1x2x384xf32> to vector<2x384xf32>
    %c0_124 = arith.constant 0 : index
    %c0_125 = arith.constant 0 : index
    %c0_126 = arith.constant 0 : index
    %383 = vector.load %arg3[%c0_124, %c0_125, %c0_126] : memref<2x128x384xf32, #tpu.memory_space<vmem>>, vector<1x128x384xf32>
    %384 = vector.shape_cast %383 : vector<1x128x384xf32> to vector<128x384xf32>
    %cst_127 = arith.constant dense<0.000000e+00> : vector<2x384xf32>
    %385 = tpu.matmul %339, %384, %cst_127 {dimension_numbers = #tpu.dot_dimension_numbers<[1], [0], [0], [1], [0, 0, 1, 1], [], []>} : vector<2x128xf32>, vector<128x384xf32>, vector<2x384xf32> -> vector<2x384xf32>
    %386 = vector.broadcast %3 : vector<1x384xf32> to vector<2x384xf32>
    %387 = arith.addf %385, %386 : vector<2x384xf32>
    %388 = vector.extract_strided_slice %382 {offsets = [0, 0], sizes = [2, 128], strides = [1, 1]} : vector<2x384xf32> to vector<2x128xf32>
    %389 = vector.extract_strided_slice %387 {offsets = [0, 0], sizes = [2, 128], strides = [1, 1]} : vector<2x384xf32> to vector<2x128xf32>
    %390 = arith.addf %388, %389 : vector<2x128xf32>
    %391 = arith.negf %390 : vector<2x128xf32>
    %392 = math.exp %391 : vector<2x128xf32>
    %cst_128 = arith.constant 1.000000e+00 : f32
    %393 = vector.broadcast %cst_128 : f32 to vector<2x128xf32>
    %394 = arith.addf %393, %392 : vector<2x128xf32>
    %395 = arith.divf %393, %394 : vector<2x128xf32>
    %396 = vector.extract_strided_slice %382 {offsets = [0, 128], sizes = [2, 128], strides = [1, 1]} : vector<2x384xf32> to vector<2x128xf32>
    %397 = vector.extract_strided_slice %387 {offsets = [0, 128], sizes = [2, 128], strides = [1, 1]} : vector<2x384xf32> to vector<2x128xf32>
    %398 = arith.addf %396, %397 : vector<2x128xf32>
    %399 = arith.negf %398 : vector<2x128xf32>
    %400 = math.exp %399 : vector<2x128xf32>
    %cst_129 = arith.constant 1.000000e+00 : f32
    %401 = vector.broadcast %cst_129 : f32 to vector<2x128xf32>
    %402 = arith.addf %401, %400 : vector<2x128xf32>
    %403 = arith.divf %401, %402 : vector<2x128xf32>
    %404 = vector.extract_strided_slice %382 {offsets = [0, 256], sizes = [2, 128], strides = [1, 1]} : vector<2x384xf32> to vector<2x128xf32>
    %405 = vector.extract_strided_slice %387 {offsets = [0, 256], sizes = [2, 128], strides = [1, 1]} : vector<2x384xf32> to vector<2x128xf32>
    %406 = arith.mulf %395, %405 : vector<2x128xf32>
    %407 = arith.addf %404, %406 : vector<2x128xf32>
    %408 = math.tanh %407 : vector<2x128xf32>
    %cst_130 = arith.constant 1.000000e+00 : f32
    %409 = vector.broadcast %cst_130 : f32 to vector<2x128xf32>
    %410 = arith.subf %409, %403 : vector<2x128xf32>
    %411 = arith.mulf %410, %408 : vector<2x128xf32>
    %412 = arith.mulf %403, %339 : vector<2x128xf32>
    %413 = arith.addf %411, %412 : vector<2x128xf32>
    %c1_131 = arith.constant 1 : index
    %c0_132 = arith.constant 0 : index
    %c0_133 = arith.constant 0 : index
    %414 = vector.load %arg2[%c1_131, %c0_132, %c0_133] : memref<2x128x384xf32, #tpu.memory_space<vmem>>, vector<1x128x384xf32>
    %415 = vector.shape_cast %414 : vector<1x128x384xf32> to vector<128x384xf32>
    %cst_134 = arith.constant dense<0.000000e+00> : vector<2x384xf32>
    %416 = tpu.matmul %413, %415, %cst_134 {dimension_numbers = #tpu.dot_dimension_numbers<[1], [0], [0], [1], [0, 0, 1, 1], [], []>} : vector<2x128xf32>, vector<128x384xf32>, vector<2x384xf32> -> vector<2x384xf32>
    %417 = vector.broadcast %1 : vector<1x384xf32> to vector<2x384xf32>
    %418 = arith.addf %416, %417 : vector<2x384xf32>
    %c1_135 = arith.constant 1 : index
    %c0_136 = arith.constant 0 : index
    %c0_137 = arith.constant 0 : index
    %419 = vector.load %arg3[%c1_135, %c0_136, %c0_137] : memref<2x128x384xf32, #tpu.memory_space<vmem>>, vector<1x128x384xf32>
    %420 = vector.shape_cast %419 : vector<1x128x384xf32> to vector<128x384xf32>
    %cst_138 = arith.constant dense<0.000000e+00> : vector<2x384xf32>
    %421 = tpu.matmul %375, %420, %cst_138 {dimension_numbers = #tpu.dot_dimension_numbers<[1], [0], [0], [1], [0, 0, 1, 1], [], []>} : vector<2x128xf32>, vector<128x384xf32>, vector<2x384xf32> -> vector<2x384xf32>
    %422 = vector.broadcast %5 : vector<1x384xf32> to vector<2x384xf32>
    %423 = arith.addf %421, %422 : vector<2x384xf32>
    %424 = vector.extract_strided_slice %418 {offsets = [0, 0], sizes = [2, 128], strides = [1, 1]} : vector<2x384xf32> to vector<2x128xf32>
    %425 = vector.extract_strided_slice %423 {offsets = [0, 0], sizes = [2, 128], strides = [1, 1]} : vector<2x384xf32> to vector<2x128xf32>
    %426 = arith.addf %424, %425 : vector<2x128xf32>
    %427 = arith.negf %426 : vector<2x128xf32>
    %428 = math.exp %427 : vector<2x128xf32>
    %cst_139 = arith.constant 1.000000e+00 : f32
    %429 = vector.broadcast %cst_139 : f32 to vector<2x128xf32>
    %430 = arith.addf %429, %428 : vector<2x128xf32>
    %431 = arith.divf %429, %430 : vector<2x128xf32>
    %432 = vector.extract_strided_slice %418 {offsets = [0, 128], sizes = [2, 128], strides = [1, 1]} : vector<2x384xf32> to vector<2x128xf32>
    %433 = vector.extract_strided_slice %423 {offsets = [0, 128], sizes = [2, 128], strides = [1, 1]} : vector<2x384xf32> to vector<2x128xf32>
    %434 = arith.addf %432, %433 : vector<2x128xf32>
    %435 = arith.negf %434 : vector<2x128xf32>
    %436 = math.exp %435 : vector<2x128xf32>
    %cst_140 = arith.constant 1.000000e+00 : f32
    %437 = vector.broadcast %cst_140 : f32 to vector<2x128xf32>
    %438 = arith.addf %437, %436 : vector<2x128xf32>
    %439 = arith.divf %437, %438 : vector<2x128xf32>
    %440 = vector.extract_strided_slice %418 {offsets = [0, 256], sizes = [2, 128], strides = [1, 1]} : vector<2x384xf32> to vector<2x128xf32>
    %441 = vector.extract_strided_slice %423 {offsets = [0, 256], sizes = [2, 128], strides = [1, 1]} : vector<2x384xf32> to vector<2x128xf32>
    %442 = arith.mulf %431, %441 : vector<2x128xf32>
    %443 = arith.addf %440, %442 : vector<2x128xf32>
    %444 = math.tanh %443 : vector<2x128xf32>
    %cst_141 = arith.constant 1.000000e+00 : f32
    %445 = vector.broadcast %cst_141 : f32 to vector<2x128xf32>
    %446 = arith.subf %445, %439 : vector<2x128xf32>
    %447 = arith.mulf %446, %444 : vector<2x128xf32>
    %448 = arith.mulf %439, %375 : vector<2x128xf32>
    %449 = arith.addf %447, %448 : vector<2x128xf32>
    %450 = arith.index_cast %c5_i32 : i32 to index
    %c0_142 = arith.constant 0 : index
    %c0_143 = arith.constant 0 : index
    %451 = vector.load %arg7[%450, %c0_142, %c0_143] : memref<8x2x128xf32, #tpu.memory_space<vmem>>, vector<1x2x128xf32>
    %452 = vector.shape_cast %451 : vector<1x2x128xf32> to vector<2x128xf32>
    %453 = vector.shape_cast %449 : vector<2x128xf32> to vector<1x2x128xf32>
    tpu.vector_store %arg7[%450, %c0_142, %c0_143], %453 {strides = array<i32>} : memref<8x2x128xf32, #tpu.memory_space<vmem>>, vector<1x2x128xf32>,
    %c6_i32 = arith.constant 6 : i32
    %454 = arith.index_cast %c6_i32 : i32 to index
    %c0_144 = arith.constant 0 : index
    %c0_145 = arith.constant 0 : index
    %455 = vector.load %arg1[%454, %c0_144, %c0_145] : memref<8x2x384xf32, #tpu.memory_space<vmem>>, vector<1x2x384xf32>
    %456 = vector.shape_cast %455 : vector<1x2x384xf32> to vector<2x384xf32>
    %c0_146 = arith.constant 0 : index
    %c0_147 = arith.constant 0 : index
    %c0_148 = arith.constant 0 : index
    %457 = vector.load %arg3[%c0_146, %c0_147, %c0_148] : memref<2x128x384xf32, #tpu.memory_space<vmem>>, vector<1x128x384xf32>
    %458 = vector.shape_cast %457 : vector<1x128x384xf32> to vector<128x384xf32>
    %cst_149 = arith.constant dense<0.000000e+00> : vector<2x384xf32>
    %459 = tpu.matmul %413, %458, %cst_149 {dimension_numbers = #tpu.dot_dimension_numbers<[1], [0], [0], [1], [0, 0, 1, 1], [], []>} : vector<2x128xf32>, vector<128x384xf32>, vector<2x384xf32> -> vector<2x384xf32>
    %460 = vector.broadcast %3 : vector<1x384xf32> to vector<2x384xf32>
    %461 = arith.addf %459, %460 : vector<2x384xf32>
    %462 = vector.extract_strided_slice %456 {offsets = [0, 0], sizes = [2, 128], strides = [1, 1]} : vector<2x384xf32> to vector<2x128xf32>
    %463 = vector.extract_strided_slice %461 {offsets = [0, 0], sizes = [2, 128], strides = [1, 1]} : vector<2x384xf32> to vector<2x128xf32>
    %464 = arith.addf %462, %463 : vector<2x128xf32>
    %465 = arith.negf %464 : vector<2x128xf32>
    %466 = math.exp %465 : vector<2x128xf32>
    %cst_150 = arith.constant 1.000000e+00 : f32
    %467 = vector.broadcast %cst_150 : f32 to vector<2x128xf32>
    %468 = arith.addf %467, %466 : vector<2x128xf32>
    %469 = arith.divf %467, %468 : vector<2x128xf32>
    %470 = vector.extract_strided_slice %456 {offsets = [0, 128], sizes = [2, 128], strides = [1, 1]} : vector<2x384xf32> to vector<2x128xf32>
    %471 = vector.extract_strided_slice %461 {offsets = [0, 128], sizes = [2, 128], strides = [1, 1]} : vector<2x384xf32> to vector<2x128xf32>
    %472 = arith.addf %470, %471 : vector<2x128xf32>
    %473 = arith.negf %472 : vector<2x128xf32>
    %474 = math.exp %473 : vector<2x128xf32>
    %cst_151 = arith.constant 1.000000e+00 : f32
    %475 = vector.broadcast %cst_151 : f32 to vector<2x128xf32>
    %476 = arith.addf %475, %474 : vector<2x128xf32>
    %477 = arith.divf %475, %476 : vector<2x128xf32>
    %478 = vector.extract_strided_slice %456 {offsets = [0, 256], sizes = [2, 128], strides = [1, 1]} : vector<2x384xf32> to vector<2x128xf32>
    %479 = vector.extract_strided_slice %461 {offsets = [0, 256], sizes = [2, 128], strides = [1, 1]} : vector<2x384xf32> to vector<2x128xf32>
    %480 = arith.mulf %469, %479 : vector<2x128xf32>
    %481 = arith.addf %478, %480 : vector<2x128xf32>
    %482 = math.tanh %481 : vector<2x128xf32>
    %cst_152 = arith.constant 1.000000e+00 : f32
    %483 = vector.broadcast %cst_152 : f32 to vector<2x128xf32>
    %484 = arith.subf %483, %477 : vector<2x128xf32>
    %485 = arith.mulf %484, %482 : vector<2x128xf32>
    %486 = arith.mulf %477, %413 : vector<2x128xf32>
    %487 = arith.addf %485, %486 : vector<2x128xf32>
    %c1_153 = arith.constant 1 : index
    %c0_154 = arith.constant 0 : index
    %c0_155 = arith.constant 0 : index
    %488 = vector.load %arg2[%c1_153, %c0_154, %c0_155] : memref<2x128x384xf32, #tpu.memory_space<vmem>>, vector<1x128x384xf32>
    %489 = vector.shape_cast %488 : vector<1x128x384xf32> to vector<128x384xf32>
    %cst_156 = arith.constant dense<0.000000e+00> : vector<2x384xf32>
    %490 = tpu.matmul %487, %489, %cst_156 {dimension_numbers = #tpu.dot_dimension_numbers<[1], [0], [0], [1], [0, 0, 1, 1], [], []>} : vector<2x128xf32>, vector<128x384xf32>, vector<2x384xf32> -> vector<2x384xf32>
    %491 = vector.broadcast %1 : vector<1x384xf32> to vector<2x384xf32>
    %492 = arith.addf %490, %491 : vector<2x384xf32>
    %c1_157 = arith.constant 1 : index
    %c0_158 = arith.constant 0 : index
    %c0_159 = arith.constant 0 : index
    %493 = vector.load %arg3[%c1_157, %c0_158, %c0_159] : memref<2x128x384xf32, #tpu.memory_space<vmem>>, vector<1x128x384xf32>
    %494 = vector.shape_cast %493 : vector<1x128x384xf32> to vector<128x384xf32>
    %cst_160 = arith.constant dense<0.000000e+00> : vector<2x384xf32>
    %495 = tpu.matmul %449, %494, %cst_160 {dimension_numbers = #tpu.dot_dimension_numbers<[1], [0], [0], [1], [0, 0, 1, 1], [], []>} : vector<2x128xf32>, vector<128x384xf32>, vector<2x384xf32> -> vector<2x384xf32>
    %496 = vector.broadcast %5 : vector<1x384xf32> to vector<2x384xf32>
    %497 = arith.addf %495, %496 : vector<2x384xf32>
    %498 = vector.extract_strided_slice %492 {offsets = [0, 0], sizes = [2, 128], strides = [1, 1]} : vector<2x384xf32> to vector<2x128xf32>
    %499 = vector.extract_strided_slice %497 {offsets = [0, 0], sizes = [2, 128], strides = [1, 1]} : vector<2x384xf32> to vector<2x128xf32>
    %500 = arith.addf %498, %499 : vector<2x128xf32>
    %501 = arith.negf %500 : vector<2x128xf32>
    %502 = math.exp %501 : vector<2x128xf32>
    %cst_161 = arith.constant 1.000000e+00 : f32
    %503 = vector.broadcast %cst_161 : f32 to vector<2x128xf32>
    %504 = arith.addf %503, %502 : vector<2x128xf32>
    %505 = arith.divf %503, %504 : vector<2x128xf32>
    %506 = vector.extract_strided_slice %492 {offsets = [0, 128], sizes = [2, 128], strides = [1, 1]} : vector<2x384xf32> to vector<2x128xf32>
    %507 = vector.extract_strided_slice %497 {offsets = [0, 128], sizes = [2, 128], strides = [1, 1]} : vector<2x384xf32> to vector<2x128xf32>
    %508 = arith.addf %506, %507 : vector<2x128xf32>
    %509 = arith.negf %508 : vector<2x128xf32>
    %510 = math.exp %509 : vector<2x128xf32>
    %cst_162 = arith.constant 1.000000e+00 : f32
    %511 = vector.broadcast %cst_162 : f32 to vector<2x128xf32>
    %512 = arith.addf %511, %510 : vector<2x128xf32>
    %513 = arith.divf %511, %512 : vector<2x128xf32>
    %514 = vector.extract_strided_slice %492 {offsets = [0, 256], sizes = [2, 128], strides = [1, 1]} : vector<2x384xf32> to vector<2x128xf32>
    %515 = vector.extract_strided_slice %497 {offsets = [0, 256], sizes = [2, 128], strides = [1, 1]} : vector<2x384xf32> to vector<2x128xf32>
    %516 = arith.mulf %505, %515 : vector<2x128xf32>
    %517 = arith.addf %514, %516 : vector<2x128xf32>
    %518 = math.tanh %517 : vector<2x128xf32>
    %cst_163 = arith.constant 1.000000e+00 : f32
    %519 = vector.broadcast %cst_163 : f32 to vector<2x128xf32>
    %520 = arith.subf %519, %513 : vector<2x128xf32>
    %521 = arith.mulf %520, %518 : vector<2x128xf32>
    %522 = arith.mulf %513, %449 : vector<2x128xf32>
    %523 = arith.addf %521, %522 : vector<2x128xf32>
    %524 = arith.index_cast %c6_i32 : i32 to index
    %c0_164 = arith.constant 0 : index
    %c0_165 = arith.constant 0 : index
    %525 = vector.load %arg7[%524, %c0_164, %c0_165] : memref<8x2x128xf32, #tpu.memory_space<vmem>>, vector<1x2x128xf32>
    %526 = vector.shape_cast %525 : vector<1x2x128xf32> to vector<2x128xf32>
    %527 = vector.shape_cast %523 : vector<2x128xf32> to vector<1x2x128xf32>
    tpu.vector_store %arg7[%524, %c0_164, %c0_165], %527 {strides = array<i32>} : memref<8x2x128xf32, #tpu.memory_space<vmem>>, vector<1x2x128xf32>,
    %c7_i32 = arith.constant 7 : i32
    %528 = arith.index_cast %c7_i32 : i32 to index
    %c0_166 = arith.constant 0 : index
    %c0_167 = arith.constant 0 : index
    %529 = vector.load %arg1[%528, %c0_166, %c0_167] : memref<8x2x384xf32, #tpu.memory_space<vmem>>, vector<1x2x384xf32>
    %530 = vector.shape_cast %529 : vector<1x2x384xf32> to vector<2x384xf32>
    %c0_168 = arith.constant 0 : index
    %c0_169 = arith.constant 0 : index
    %c0_170 = arith.constant 0 : index
    %531 = vector.load %arg3[%c0_168, %c0_169, %c0_170] : memref<2x128x384xf32, #tpu.memory_space<vmem>>, vector<1x128x384xf32>
    %532 = vector.shape_cast %531 : vector<1x128x384xf32> to vector<128x384xf32>
    %cst_171 = arith.constant dense<0.000000e+00> : vector<2x384xf32>
    %533 = tpu.matmul %487, %532, %cst_171 {dimension_numbers = #tpu.dot_dimension_numbers<[1], [0], [0], [1], [0, 0, 1, 1], [], []>} : vector<2x128xf32>, vector<128x384xf32>, vector<2x384xf32> -> vector<2x384xf32>
    %534 = vector.broadcast %3 : vector<1x384xf32> to vector<2x384xf32>
    %535 = arith.addf %533, %534 : vector<2x384xf32>
    %536 = vector.extract_strided_slice %530 {offsets = [0, 0], sizes = [2, 128], strides = [1, 1]} : vector<2x384xf32> to vector<2x128xf32>
    %537 = vector.extract_strided_slice %535 {offsets = [0, 0], sizes = [2, 128], strides = [1, 1]} : vector<2x384xf32> to vector<2x128xf32>
    %538 = arith.addf %536, %537 : vector<2x128xf32>
    %539 = arith.negf %538 : vector<2x128xf32>
    %540 = math.exp %539 : vector<2x128xf32>
    %cst_172 = arith.constant 1.000000e+00 : f32
    %541 = vector.broadcast %cst_172 : f32 to vector<2x128xf32>
    %542 = arith.addf %541, %540 : vector<2x128xf32>
    %543 = arith.divf %541, %542 : vector<2x128xf32>
    %544 = vector.extract_strided_slice %530 {offsets = [0, 128], sizes = [2, 128], strides = [1, 1]} : vector<2x384xf32> to vector<2x128xf32>
    %545 = vector.extract_strided_slice %535 {offsets = [0, 128], sizes = [2, 128], strides = [1, 1]} : vector<2x384xf32> to vector<2x128xf32>
    %546 = arith.addf %544, %545 : vector<2x128xf32>
    %547 = arith.negf %546 : vector<2x128xf32>
    %548 = math.exp %547 : vector<2x128xf32>
    %cst_173 = arith.constant 1.000000e+00 : f32
    %549 = vector.broadcast %cst_173 : f32 to vector<2x128xf32>
    %550 = arith.addf %549, %548 : vector<2x128xf32>
    %551 = arith.divf %549, %550 : vector<2x128xf32>
    %552 = vector.extract_strided_slice %530 {offsets = [0, 256], sizes = [2, 128], strides = [1, 1]} : vector<2x384xf32> to vector<2x128xf32>
    %553 = vector.extract_strided_slice %535 {offsets = [0, 256], sizes = [2, 128], strides = [1, 1]} : vector<2x384xf32> to vector<2x128xf32>
    %554 = arith.mulf %543, %553 : vector<2x128xf32>
    %555 = arith.addf %552, %554 : vector<2x128xf32>
    %556 = math.tanh %555 : vector<2x128xf32>
    %cst_174 = arith.constant 1.000000e+00 : f32
    %557 = vector.broadcast %cst_174 : f32 to vector<2x128xf32>
    %558 = arith.subf %557, %551 : vector<2x128xf32>
    %559 = arith.mulf %558, %556 : vector<2x128xf32>
    %560 = arith.mulf %551, %487 : vector<2x128xf32>
    %561 = arith.addf %559, %560 : vector<2x128xf32>
    %c1_175 = arith.constant 1 : index
    %c0_176 = arith.constant 0 : index
    %c0_177 = arith.constant 0 : index
    %562 = vector.load %arg2[%c1_175, %c0_176, %c0_177] : memref<2x128x384xf32, #tpu.memory_space<vmem>>, vector<1x128x384xf32>
    %563 = vector.shape_cast %562 : vector<1x128x384xf32> to vector<128x384xf32>
    %cst_178 = arith.constant dense<0.000000e+00> : vector<2x384xf32>
    %564 = tpu.matmul %561, %563, %cst_178 {dimension_numbers = #tpu.dot_dimension_numbers<[1], [0], [0], [1], [0, 0, 1, 1], [], []>} : vector<2x128xf32>, vector<128x384xf32>, vector<2x384xf32> -> vector<2x384xf32>
    %565 = vector.broadcast %1 : vector<1x384xf32> to vector<2x384xf32>
    %566 = arith.addf %564, %565 : vector<2x384xf32>
    %c1_179 = arith.constant 1 : index
    %c0_180 = arith.constant 0 : index
    %c0_181 = arith.constant 0 : index
    %567 = vector.load %arg3[%c1_179, %c0_180, %c0_181] : memref<2x128x384xf32, #tpu.memory_space<vmem>>, vector<1x128x384xf32>
    %568 = vector.shape_cast %567 : vector<1x128x384xf32> to vector<128x384xf32>
    %cst_182 = arith.constant dense<0.000000e+00> : vector<2x384xf32>
    %569 = tpu.matmul %523, %568, %cst_182 {dimension_numbers = #tpu.dot_dimension_numbers<[1], [0], [0], [1], [0, 0, 1, 1], [], []>} : vector<2x128xf32>, vector<128x384xf32>, vector<2x384xf32> -> vector<2x384xf32>
    %570 = vector.broadcast %5 : vector<1x384xf32> to vector<2x384xf32>
    %571 = arith.addf %569, %570 : vector<2x384xf32>
    %572 = vector.extract_strided_slice %566 {offsets = [0, 0], sizes = [2, 128], strides = [1, 1]} : vector<2x384xf32> to vector<2x128xf32>
    %573 = vector.extract_strided_slice %571 {offsets = [0, 0], sizes = [2, 128], strides = [1, 1]} : vector<2x384xf32> to vector<2x128xf32>
    %574 = arith.addf %572, %573 : vector<2x128xf32>
    %575 = arith.negf %574 : vector<2x128xf32>
    %576 = math.exp %575 : vector<2x128xf32>
    %cst_183 = arith.constant 1.000000e+00 : f32
    %577 = vector.broadcast %cst_183 : f32 to vector<2x128xf32>
    %578 = arith.addf %577, %576 : vector<2x128xf32>
    %579 = arith.divf %577, %578 : vector<2x128xf32>
    %580 = vector.extract_strided_slice %566 {offsets = [0, 128], sizes = [2, 128], strides = [1, 1]} : vector<2x384xf32> to vector<2x128xf32>
    %581 = vector.extract_strided_slice %571 {offsets = [0, 128], sizes = [2, 128], strides = [1, 1]} : vector<2x384xf32> to vector<2x128xf32>
    %582 = arith.addf %580, %581 : vector<2x128xf32>
    %583 = arith.negf %582 : vector<2x128xf32>
    %584 = math.exp %583 : vector<2x128xf32>
    %cst_184 = arith.constant 1.000000e+00 : f32
    %585 = vector.broadcast %cst_184 : f32 to vector<2x128xf32>
    %586 = arith.addf %585, %584 : vector<2x128xf32>
    %587 = arith.divf %585, %586 : vector<2x128xf32>
    %588 = vector.extract_strided_slice %566 {offsets = [0, 256], sizes = [2, 128], strides = [1, 1]} : vector<2x384xf32> to vector<2x128xf32>
    %589 = vector.extract_strided_slice %571 {offsets = [0, 256], sizes = [2, 128], strides = [1, 1]} : vector<2x384xf32> to vector<2x128xf32>
    %590 = arith.mulf %579, %589 : vector<2x128xf32>
    %591 = arith.addf %588, %590 : vector<2x128xf32>
    %592 = math.tanh %591 : vector<2x128xf32>
    %cst_185 = arith.constant 1.000000e+00 : f32
    %593 = vector.broadcast %cst_185 : f32 to vector<2x128xf32>
    %594 = arith.subf %593, %587 : vector<2x128xf32>
    %595 = arith.mulf %594, %592 : vector<2x128xf32>
    %596 = arith.mulf %587, %523 : vector<2x128xf32>
    %597 = arith.addf %595, %596 : vector<2x128xf32>
    %598 = arith.index_cast %c7_i32 : i32 to index
    %c0_186 = arith.constant 0 : index
    %c0_187 = arith.constant 0 : index
    %599 = vector.load %arg7[%598, %c0_186, %c0_187] : memref<8x2x128xf32, #tpu.memory_space<vmem>>, vector<1x2x128xf32>
    %600 = vector.shape_cast %599 : vector<1x2x128xf32> to vector<2x128xf32>
    %601 = vector.shape_cast %597 : vector<2x128xf32> to vector<1x2x128xf32>
    tpu.vector_store %arg7[%598, %c0_186, %c0_187], %601 {strides = array<i32>} : memref<8x2x128xf32, #tpu.memory_space<vmem>>, vector<1x2x128xf32>,
    %c8_i32 = arith.constant 8 : i32
    %c0_188 = arith.constant 0 : index
    %c0_189 = arith.constant 0 : index
    %c0_190 = arith.constant 0 : index
    %602 = vector.load %arg8[%c0_188, %c0_189, %c0_190] : memref<2x2x128xf32, #tpu.memory_space<vmem>>, vector<1x2x128xf32>
    %603 = vector.shape_cast %602 : vector<1x2x128xf32> to vector<2x128xf32>
    %604 = vector.shape_cast %561 : vector<2x128xf32> to vector<1x2x128xf32>
    tpu.vector_store %arg8[%c0_188, %c0_189, %c0_190], %604 {strides = array<i32>} : memref<2x2x128xf32, #tpu.memory_space<vmem>>, vector<1x2x128xf32>,
    %c1_191 = arith.constant 1 : index
    %c0_192 = arith.constant 0 : index
    %c0_193 = arith.constant 0 : index
    %605 = vector.load %arg8[%c1_191, %c0_192, %c0_193] : memref<2x2x128xf32, #tpu.memory_space<vmem>>, vector<1x2x128xf32>
    %606 = vector.shape_cast %605 : vector<1x2x128xf32> to vector<2x128xf32>
    %607 = vector.shape_cast %597 : vector<2x128xf32> to vector<1x2x128xf32>
    tpu.vector_store %arg8[%c1_191, %c0_192, %c0_193], %607 {strides = array<i32>} : memref<2x2x128xf32, #tpu.memory_space<vmem>>, vector<1x2x128xf32>,
    return
  }
  func.func @transform_0(%arg0: i32) -> (i32, i32, i32) {
    %c0_i32 = arith.constant 0 : i32
    %c0_i32_0 = arith.constant 0 : i32
    %c0_i32_1 = arith.constant 0 : i32
    %c0_i32_2 = arith.constant 0 : i32
    return %c0_i32, %c0_i32_0, %c0_i32_1 : i32, i32, i32
  }
  func.func @transform_1(%arg0: i32) -> (i32, i32, i32) {
    %c0_i32 = arith.constant 0 : i32
    %c0_i32_0 = arith.constant 0 : i32
    %c0_i32_1 = arith.constant 0 : i32
    %c0_i32_2 = arith.constant 0 : i32
    return %c0_i32, %c0_i32_0, %c0_i32_1 : i32, i32, i32
  }
  func.func @transform_2(%arg0: i32) -> (i32, i32, i32) {
    %c0_i32 = arith.constant 0 : i32
    %c0_i32_0 = arith.constant 0 : i32
    %c0_i32_1 = arith.constant 0 : i32
    %c0_i32_2 = arith.constant 0 : i32
    return %c0_i32, %c0_i32_0, %c0_i32_1 : i32, i32, i32
  }
  func.func @transform_3(%arg0: i32) -> (i32, i32, i32) {
    %c0_i32 = arith.constant 0 : i32
    %c0_i32_0 = arith.constant 0 : i32
    %c0_i32_1 = arith.constant 0 : i32
    %c0_i32_2 = arith.constant 0 : i32
    return %c0_i32, %c0_i32_0, %c0_i32_1 : i32, i32, i32
  }
  func.func @transform_4(%arg0: i32) -> (i32, i32, i32) {
    %c0_i32 = arith.constant 0 : i32
    %c0_i32_0 = arith.constant 0 : i32
    %c0_i32_1 = arith.constant 0 : i32
    %c0_i32_2 = arith.constant 0 : i32
    return %c0_i32, %c0_i32_0, %c0_i32_1 : i32, i32, i32
  }
  func.func @transform_5(%arg0: i32) -> (i32, i32, i32) {
    %c0_i32 = arith.constant 0 : i32
    %c0_i32_0 = arith.constant 0 : i32
    %c0_i32_1 = arith.constant 0 : i32
    %c0_i32_2 = arith.constant 0 : i32
    return %c0_i32, %c0_i32_0, %c0_i32_1 : i32, i32, i32
  }
  func.func @transform_6(%arg0: i32) -> (i32, i32, i32) {
    %c0_i32 = arith.constant 0 : i32
    %c0_i32_0 = arith.constant 0 : i32
    %c0_i32_1 = arith.constant 0 : i32
    %c0_i32_2 = arith.constant 0 : i32
    return %c0_i32, %c0_i32_0, %c0_i32_1 : i32, i32, i32
  }
  func.func @transform_7(%arg0: i32) -> (i32, i32, i32) {
    %c0_i32 = arith.constant 0 : i32
    %c0_i32_0 = arith.constant 0 : i32
    %c0_i32_1 = arith.constant 0 : i32
    %c0_i32_2 = arith.constant 0 : i32
    return %c0_i32, %c0_i32_0, %c0_i32_1 : i32, i32, i32
  }
}

</mosaic_0001>

<llo_original>
// kernel: recipe_rnn_forward.1
$region0: #{recipe_rnn_forward.1}
  #allocation0 [shape = 'u32[]', space=smem, size = 0x4, offset = 0x4, fixed_abs, tag = 'smem constant byte address 0x4 - core index']
  #allocation1 [shape = 'u32[144,128]{1,0:T(1,128)}', space=vmem, size = 0x12000, scoped, tag = 'internal scratch']
  %s0 = inlined_call_operand.vmem [shape: f32[8,2,384], index: 0, kind: input, shape index: {}]
  %s1 = inlined_call_operand.vmem [shape: f32[2,128,384], index: 1, kind: input, shape index: {}]
  %s2 = inlined_call_operand.vmem [shape: f32[2,128,384], index: 2, kind: input, shape index: {}]
  %s3 = inlined_call_operand.vmem [shape: f32[2,1,384], index: 3, kind: input, shape index: {}]
  %s4 = inlined_call_operand.vmem [shape: f32[2,1,384], index: 4, kind: input, shape index: {}]
  %s5 = inlined_call_operand.vmem [shape: f32[2,2,128], index: 5, kind: input, shape index: {}]
  %s6 = inlined_call_operand.vmem [shape: f32[8,2,128], index: 6, kind: output, shape index: {0}]
  %s7 = inlined_call_operand.hbm [shape: f32[2,2,128], index: 7, kind: output, shape index: {1}]
  %8 = xla_tuple %s6, %s7
  %s9 = sld [smem:[#allocation0]]
  $region42: #{recipe_rnn_forward.1} parent=0
    _
  %s11 = ssub.s32 1, %s9
  %s12 = scalar_select 0, %s11, %s9
  $region1: #{recipe_rnn_forward.1} parent=0
    #allocation2 [shape = 'u8[2048]{0}', space=vmem, size = 0x800, scoped, tag = 'output window, operand 1, single buffered']
    #allocation3 [shape = 's32[1]{0}', space=sflag, size = 0x4, scoped, tag = 'scoped memory for recipe_rnn_forward.1']
    %13 = vsyncpa [#allocation3], 0
    // Predicated region
    $region2: #{recipe_rnn_forward.1} parent=1 // pred_check
      _
    $region3: #{recipe_rnn_forward.1} parent=1 // pred_check_branch
      %15 = sbr.rel (0) target = $region5
    $region4: #{recipe_rnn_forward.1} parent=1 // pred_region
      _
    $region5: #{recipe_rnn_forward.1} parent=1 // pred_fallthru
      _
    // Predicated region
    $region6: #{recipe_rnn_forward.1} parent=1 // pred_check
      _
    $region7: #{recipe_rnn_forward.1} parent=1 // pred_check_branch
      %17 = sbr.rel (0) target = $region9
    $region8: #{recipe_rnn_forward.1} parent=1 // pred_region
      _
    $region9: #{recipe_rnn_forward.1} parent=1 // pred_fallthru
      _
    // Predicated region
    $region10: #{recipe_rnn_forward.1} parent=1 // pred_check
      _
    $region11: #{recipe_rnn_forward.1} parent=1 // pred_check_branch
      %19 = sbr.rel (0) target = $region13
    $region12: #{recipe_rnn_forward.1} parent=1 // pred_region
      _
    $region13: #{recipe_rnn_forward.1} parent=1 // pred_fallthru
      _
    // Predicated region
    $region14: #{recipe_rnn_forward.1} parent=1 // pred_check
      _
    $region15: #{recipe_rnn_forward.1} parent=1 // pred_check_branch
      %21 = sbr.rel (0) target = $region17
    $region16: #{recipe_rnn_forward.1} parent=1 // pred_region
      _
    $region17: #{recipe_rnn_forward.1} parent=1 // pred_fallthru
      _
    // Predicated region
    $region18: #{recipe_rnn_forward.1} parent=1 // pred_check
      _
    $region19: #{recipe_rnn_forward.1} parent=1 // pred_check_branch
      %23 = sbr.rel (0) target = $region21
    $region20: #{recipe_rnn_forward.1} parent=1 // pred_region
      _
    $region21: #{recipe_rnn_forward.1} parent=1 // pred_fallthru
      _
    // Predicated region
    $region22: #{recipe_rnn_forward.1} parent=1 // pred_check
      _
    $region23: #{recipe_rnn_forward.1} parent=1 // pred_check_branch
      %25 = sbr.rel (0) target = $region25
    $region24: #{recipe_rnn_forward.1} parent=1 // pred_region
      _
    $region25: #{recipe_rnn_forward.1} parent=1 // pred_fallthru
      _
    %s26 = scalar_lea.vmem %s3, 3
    %v27 = vld [vmem:[%s26] sm:$0x7]
    %v28 = vld [vmem:[%s4] sm:$0x7]
    %s29 = scalar_lea.vmem %s4, 3
    %v30 = vld [vmem:[%s29] sm:$0x7]
    %v31 = vld [vmem:[%s5] sm:$0x3]
    %s32 = scalar_lea.vmem %s5, 2
    %v33 = vld [vmem:[%s32] sm:$0x3]
    %v34 = vld [vmem:[%s0] sm:$0x3f]
    %v35 = vld [vmem:[%s2] sm:$0xff]
    %v36 = vld [vmem:[%s2 + $0x8] sm:$0xff]
    %v37 = vld [vmem:[%s2 + $0x10] sm:$0xff]
    %v38 = vld [vmem:[%s2 + $0x18] sm:$0xff]
    %v39 = vld [vmem:[%s2 + $0x20] sm:$0xff]
    %v40 = vld [vmem:[%s2 + $0x28] sm:$0xff]
    %v41 = vld [vmem:[%s2 + $0x30] sm:$0xff]
    %v42 = vld [vmem:[%s2 + $0x38] sm:$0xff]
    %v43 = vld [vmem:[%s2 + $0x40] sm:$0xff]
    %v44 = vld [vmem:[%s2 + $0x48] sm:$0xff]
    %v45 = vld [vmem:[%s2 + $0x50] sm:$0xff]
    %v46 = vld [vmem:[%s2 + $0x58] sm:$0xff]
    %v47 = vld [vmem:[%s2 + $0x60] sm:$0xff]
    %v48 = vld [vmem:[%s2 + $0x68] sm:$0xff]
    %v49 = vld [vmem:[%s2 + $0x70] sm:$0xff]
    %v50 = vld [vmem:[%s2 + $0x78] sm:$0xff]
    %v51 = vld [vmem:[%s2 + $0x80] sm:$0xff]
    %v52 = vld [vmem:[%s2 + $0x88] sm:$0xff]
    %v53 = vld [vmem:[%s2 + $0x90] sm:$0xff]
    %v54 = vld [vmem:[%s2 + $0x98] sm:$0xff]
    %v55 = vld [vmem:[%s2 + $0xa0] sm:$0xff]
    %v56 = vld [vmem:[%s2 + $0xa8] sm:$0xff]
    %v57 = vld [vmem:[%s2 + $0xb0] sm:$0xff]
    %v58 = vld [vmem:[%s2 + $0xb8] sm:$0xff]
    %v59 = vld [vmem:[%s2 + $0xc0] sm:$0xff]
    %v60 = vld [vmem:[%s2 + $0xc8] sm:$0xff]
    %v61 = vld [vmem:[%s2 + $0xd0] sm:$0xff]
    %v62 = vld [vmem:[%s2 + $0xd8] sm:$0xff]
    %v63 = vld [vmem:[%s2 + $0xe0] sm:$0xff]
    %v64 = vld [vmem:[%s2 + $0xe8] sm:$0xff]
    %v65 = vld [vmem:[%s2 + $0xf0] sm:$0xff]
    %v66 = vld [vmem:[%s2 + $0xf8] sm:$0xff]
    %v67 = vld [vmem:[%s2 + $0x100] sm:$0xff]
    %v68 = vld [vmem:[%s2 + $0x108] sm:$0xff]
    %v69 = vld [vmem:[%s2 + $0x110] sm:$0xff]
    %v70 = vld [vmem:[%s2 + $0x118] sm:$0xff]
    %v71 = vld [vmem:[%s2 + $0x120] sm:$0xff]
    %v72 = vld [vmem:[%s2 + $0x128] sm:$0xff]
    %v73 = vld [vmem:[%s2 + $0x130] sm:$0xff]
    %v74 = vld [vmem:[%s2 + $0x138] sm:$0xff]
    %v75 = vld [vmem:[%s2 + $0x140] sm:$0xff]
    %v76 = vld [vmem:[%s2 + $0x148] sm:$0xff]
    %v77 = vld [vmem:[%s2 + $0x150] sm:$0xff]
    %v78 = vld [vmem:[%s2 + $0x158] sm:$0xff]
    %v79 = vld [vmem:[%s2 + $0x160] sm:$0xff]
    %v80 = vld [vmem:[%s2 + $0x168] sm:$0xff]
    %v81 = vld [vmem:[%s2 + $0x170] sm:$0xff]
    %v82 = vld [vmem:[%s2 + $0x178] sm:$0xff]
    %v84 = vlaneseq
    %v85 = vshrl.u32 %v84, 7
    %v86 = vsub.s32 0, %v85
    %v87 = vrot.slane %v28, %v86
    %v88 = vlaneseq
    %v89 = vshrl.u32 %v88, 7
    %v90 = vsub.s32 1, %v89
    %v91 = vrot.slane %v28, %v90
    %v92 = vlaneseq
    %v93 = vshrl.u32 %v92, 7
    %v94 = vsub.s32 2, %v93
    %v95 = vrot.slane %v28, %v94
    %99 = vmatprep.subr.mxu0 %v36
    %100 = vmatpush1.msra.mxu0 %v35
    %101 = vmatprep.subr.mxu0 %v39
    %102 = vmatpush1.msra.mxu0 %v38
    %103 = vmatprep.subr.mxu0 %v42
    %104 = vmatpush1.msra.mxu0 %v41
    %105 = vmatprep.subr.mxu0 %v45
    %106 = vmatpush1.msra.mxu0 %v44
    %107 = vmatprep.subr.mxu0 %v48
    %108 = vmatpush1.msra.mxu0 %v47
    %109 = vmatprep.subr.mxu0 %v51
    %110 = vmatpush1.msra.mxu0 %v50
    %111 = vmatprep.subr.mxu0 %v54
    %112 = vmatpush1.msra.mxu0 %v53
    %113 = vmatprep.subr.mxu0 %v57
    %114 = vmatpush1.msra.mxu0 %v56
    %115 = vmatprep.subr.mxu0 %v60
    %116 = vmatpush1.msra.mxu0 %v59
    %117 = vmatprep.subr.mxu0 %v63
    %118 = vmatpush1.msra.mxu0 %v62
    %119 = vmatprep.subr.mxu0 %v66
    %120 = vmatpush1.msra.mxu0 %v65
    %121 = vmatprep.subr.mxu0 %v69
    %122 = vmatpush1.msra.mxu0 %v68
    %123 = vmatprep.subr.mxu0 %v72
    %124 = vmatpush1.msra.mxu0 %v71
    %125 = vmatprep.subr.mxu0 %v75
    %126 = vmatpush1.msra.mxu0 %v74
    %127 = vmatprep.subr.mxu0 %v78
    %128 = vmatpush1.msra.mxu0 %v77
    %129 = vmatprep.subr.mxu0 %v81
    %130 = vmatpush1.msra.mxu0 %v80
    %131 = vmatprep.subr.mxu0 0.0
    %132 = vmatpush1.msra.mxu0 0.0
    %133 = vmatprep.subr.mxu0 0.0
    %134 = vmatpush1.msra.mxu0 0.0
    %135 = vmatprep.subr.mxu0 0.0
    %136 = vmatpush1.msra.mxu0 0.0
    %137 = vmatprep.subr.mxu0 0.0
    %138 = vmatpush1.msra.mxu0 0.0
    %139 = vmatprep.subr.mxu0 0.0
    %140 = vmatpush1.msra.mxu0 0.0
    %141 = vmatprep.subr.mxu0 0.0
    %142 = vmatpush1.msra.mxu0 0.0
    %143 = vmatprep.subr.mxu0 0.0
    %144 = vmatpush1.msra.mxu0 0.0
    %145 = vmatprep.subr.mxu0 0.0
    %146 = vmatpush1.msra.mxu0 0.0
    %147 = vmatprep.subr.mxu0 0.0
    %148 = vmatpush1.msra.mxu0 0.0
    %149 = vmatprep.subr.mxu0 0.0
    %150 = vmatpush1.msra.mxu0 0.0
    %151 = vmatprep.subr.mxu0 0.0
    %152 = vmatpush1.msra.mxu0 0.0
    %153 = vmatprep.subr.mxu0 0.0
    %154 = vmatpush1.msra.mxu0 0.0
    %155 = vmatprep.subr.mxu0 0.0
    %156 = vmatpush1.msra.mxu0 0.0
    %157 = vmatprep.subr.mxu0 0.0
    %158 = vmatpush1.msra.mxu0 0.0
    %159 = vmatprep.subr.mxu0 0.0
    %160 = vmatpush1.msra.mxu0 0.0
    %161 = vmatprep.subr.mxu0 0.0
    %162 = vmatpush1.msra.mxu0 0.0
    %163 = vmatprep.mubr.f32.mxu0 0.0
    %164 = vmatmul.mubr.f32.gmra.mrb[0].mxu0 %v31
    %v165 = vpop.f32.mrb[0].mxu0
    %v166 = vadd.f32 %v87, %v165
    %v167 = vpop.f32.mrb[0].mxu0
    %v168 = vadd.f32 %v91, %v167
    %169 = vdwg.mxu0
    %170 = vmatprep.subr.mxu0 0.0
    %171 = vmatpush1.msra.mxu0 %v37
    %172 = vmatprep.subr.mxu0 0.0
    %173 = vmatpush1.msra.mxu0 %v40
    %174 = vmatprep.subr.mxu0 0.0
    %175 = vmatpush1.msra.mxu0 %v43
    %176 = vmatprep.subr.mxu0 0.0
    %177 = vmatpush1.msra.mxu0 %v46
    %178 = vmatprep.subr.mxu0 0.0
    %179 = vmatpush1.msra.mxu0 %v49
    %180 = vmatprep.subr.mxu0 0.0
    %181 = vmatpush1.msra.mxu0 %v52
    %182 = vmatprep.subr.mxu0 0.0
    %183 = vmatpush1.msra.mxu0 %v55
    %184 = vmatprep.subr.mxu0 0.0
    %185 = vmatpush1.msra.mxu0 %v58
    %186 = vmatprep.subr.mxu0 0.0
    %187 = vmatpush1.msra.mxu0 %v61
    %188 = vmatprep.subr.mxu0 0.0
    %189 = vmatpush1.msra.mxu0 %v64
    %190 = vmatprep.subr.mxu0 0.0
    %191 = vmatpush1.msra.mxu0 %v67
    %192 = vmatprep.subr.mxu0 0.0
    %193 = vmatpush1.msra.mxu0 %v70
    %194 = vmatprep.subr.mxu0 0.0
    %195 = vmatpush1.msra.mxu0 %v73
    %196 = vmatprep.subr.mxu0 0.0
    %197 = vmatpush1.msra.mxu0 %v76
    %198 = vmatprep.subr.mxu0 0.0
    %199 = vmatpush1.msra.mxu0 %v79
    %200 = vmatprep.subr.mxu0 0.0
    %201 = vmatpush1.msra.mxu0 %v82
    %202 = vmatprep.subr.mxu0 0.0
    %203 = vmatpush1.msra.mxu0 0.0
    %204 = vmatprep.subr.mxu0 0.0
    %205 = vmatpush1.msra.mxu0 0.0
    %206 = vmatprep.subr.mxu0 0.0
    %207 = vmatpush1.msra.mxu0 0.0
    %208 = vmatprep.subr.mxu0 0.0
    %209 = vmatpush1.msra.mxu0 0.0
    %210 = vmatprep.subr.mxu0 0.0
    %211 = vmatpush1.msra.mxu0 0.0
    %212 = vmatprep.subr.mxu0 0.0
    %213 = vmatpush1.msra.mxu0 0.0
    %214 = vmatprep.subr.mxu0 0.0
    %215 = vmatpush1.msra.mxu0 0.0
    %216 = vmatprep.subr.mxu0 0.0
    %217 = vmatpush1.msra.mxu0 0.0
    %218 = vmatprep.subr.mxu0 0.0
    %219 = vmatpush1.msra.mxu0 0.0
    %220 = vmatprep.subr.mxu0 0.0
    %221 = vmatpush1.msra.mxu0 0.0
    %222 = vmatprep.subr.mxu0 0.0
    %223 = vmatpush1.msra.mxu0 0.0
    %224 = vmatprep.subr.mxu0 0.0
    %225 = vmatpush1.msra.mxu0 0.0
    %226 = vmatprep.subr.mxu0 0.0
    %227 = vmatpush1.msra.mxu0 0.0
    %228 = vmatprep.subr.mxu0 0.0
    %229 = vmatpush1.msra.mxu0 0.0
    %230 = vmatprep.subr.mxu0 0.0
    %231 = vmatpush1.msra.mxu0 0.0
    %232 = vmatprep.subr.mxu0 0.0
    %233 = vmatpush1.msra.mxu0 0.0
    %234 = vmatprep.mubr.f32.mxu0 0.0
    %235 = vmatmul.mubr.f32.gmra.mrb[0].mxu0 %v31
    %v236 = vpop.f32.mrb[0].mxu0
    %v237 = vadd.f32 %v95, %v236
    %v238 = vpop.f32.mrb[0].mxu0
    %239 = vdwg.mxu0
    %v240 = vadd.f32 %v34, %v166
    %v241 = vxor.u32 %v240, 2147483648
    %v242 = vmul.f32 %v241, 1.442695
    %v243 = vpow.pop %v242
    %v244 = vadd.f32 %v243, 1.0
    %v245 = vrcp.pop %v244
    %v246 = vmul.f32 1.0, %v245
    %v248 = vrot.slane %v34, 2
    %v250 = vadd.f32 %v248, %v168
    %v251 = vxor.u32 %v250, 2147483648
    %v252 = vmul.f32 %v251, 1.442695
    %v253 = vpow.pop %v252
    %v254 = vadd.f32 %v253, 1.0
    %v255 = vrcp.pop %v254
    %v256 = vmul.f32 1.0, %v255
    %v257 = vmul.f32 %v246, %v237
    %v258 = vrot.slane %v34, 4
    %v260 = vadd.f32 %v258, %v257
    %v261 = vtanh.pop %v260
    %v262 = vsub.f32 1.0, %v256
    %v263 = vmul.f32 %v262, %v261
    %v264 = vmul.f32 %v256, %v31
    %v265 = vadd.f32 %v263, %v264
    %s266 = scalar_lea.vmem %s1, 384
    %v267 = vld [vmem:[%s266] sm:$0xff]
    %v268 = vld [vmem:[%s266 + $0x8] sm:$0xff]
    %v269 = vld [vmem:[%s266 + $0x10] sm:$0xff]
    %v270 = vld [vmem:[%s266 + $0x18] sm:$0xff]
    %v271 = vld [vmem:[%s266 + $0x20] sm:$0xff]
    %v272 = vld [vmem:[%s266 + $0x28] sm:$0xff]
    %v273 = vld [vmem:[%s266 + $0x30] sm:$0xff]
    %v274 = vld [vmem:[%s266 + $0x38] sm:$0xff]
    %v275 = vld [vmem:[%s266 + $0x40] sm:$0xff]
    %v276 = vld [vmem:[%s266 + $0x48] sm:$0xff]
    %v277 = vld [vmem:[%s266 + $0x50] sm:$0xff]
    %v278 = vld [vmem:[%s266 + $0x58] sm:$0xff]
    %v279 = vld [vmem:[%s266 + $0x60] sm:$0xff]
    %v280 = vld [vmem:[%s266 + $0x68] sm:$0xff]
    %v281 = vld [vmem:[%s266 + $0x70] sm:$0xff]
    %v282 = vld [vmem:[%s266 + $0x78] sm:$0xff]
    %v283 = vld [vmem:[%s266 + $0x80] sm:$0xff]
    %v284 = vld [vmem:[%s266 + $0x88] sm:$0xff]
    %v285 = vld [vmem:[%s266 + $0x90] sm:$0xff]
    %v286 = vld [vmem:[%s266 + $0x98] sm:$0xff]
    %v287 = vld [vmem:[%s266 + $0xa0] sm:$0xff]
    %v288 = vld [vmem:[%s266 + $0xa8] sm:$0xff]
    %v289 = vld [vmem:[%s266 + $0xb0] sm:$0xff]
    %v290 = vld [vmem:[%s266 + $0xb8] sm:$0xff]
    %v291 = vld [vmem:[%s266 + $0xc0] sm:$0xff]
    %v292 = vld [vmem:[%s266 + $0xc8] sm:$0xff]
    %v293 = vld [vmem:[%s266 + $0xd0] sm:$0xff]
    %v294 = vld [vmem:[%s266 + $0xd8] sm:$0xff]
    %v295 = vld [vmem:[%s266 + $0xe0] sm:$0xff]
    %v296 = vld [vmem:[%s266 + $0xe8] sm:$0xff]
    %v297 = vld [vmem:[%s266 + $0xf0] sm:$0xff]
    %v298 = vld [vmem:[%s266 + $0xf8] sm:$0xff]
    %v299 = vld [vmem:[%s266 + $0x100] sm:$0xff]
    %v300 = vld [vmem:[%s266 + $0x108] sm:$0xff]
    %v301 = vld [vmem:[%s266 + $0x110] sm:$0xff]
    %v302 = vld [vmem:[%s266 + $0x118] sm:$0xff]
    %v303 = vld [vmem:[%s266 + $0x120] sm:$0xff]
    %v304 = vld [vmem:[%s266 + $0x128] sm:$0xff]
    %v305 = vld [vmem:[%s266 + $0x130] sm:$0xff]
    %v306 = vld [vmem:[%s266 + $0x138] sm:$0xff]
    %v307 = vld [vmem:[%s266 + $0x140] sm:$0xff]
    %v308 = vld [vmem:[%s266 + $0x148] sm:$0xff]
    %v309 = vld [vmem:[%s266 + $0x150] sm:$0xff]
    %v310 = vld [vmem:[%s266 + $0x158] sm:$0xff]
    %v311 = vld [vmem:[%s266 + $0x160] sm:$0xff]
    %v312 = vld [vmem:[%s266 + $0x168] sm:$0xff]
    %v313 = vld [vmem:[%s266 + $0x170] sm:$0xff]
    %v314 = vld [vmem:[%s266 + $0x178] sm:$0xff]
    %v316 = vlaneseq
    %v317 = vshrl.u32 %v316, 7
    %v318 = vsub.s32 0, %v317
    %v319 = vrot.slane %v27, %v318
    %v320 = vlaneseq
    %v321 = vshrl.u32 %v320, 7
    %v322 = vsub.s32 1, %v321
    %v323 = vrot.slane %v27, %v322
    %v324 = vlaneseq
    %v325 = vshrl.u32 %v324, 7
    %v326 = vsub.s32 2, %v325
    %v327 = vrot.slane %v27, %v326
    %331 = vmatprep.subr.mxu0 %v268
    %332 = vmatpush1.msra.mxu0 %v267
    %333 = vmatprep.subr.mxu0 %v271
    %334 = vmatpush1.msra.mxu0 %v270
    %335 = vmatprep.subr.mxu0 %v274
    %336 = vmatpush1.msra.mxu0 %v273
    %337 = vmatprep.subr.mxu0 %v277
    %338 = vmatpush1.msra.mxu0 %v276
    %339 = vmatprep.subr.mxu0 %v280
    %340 = vmatpush1.msra.mxu0 %v279
    %341 = vmatprep.subr.mxu0 %v283
    %342 = vmatpush1.msra.mxu0 %v282
    %343 = vmatprep.subr.mxu0 %v286
    %344 = vmatpush1.msra.mxu0 %v285
    %345 = vmatprep.subr.mxu0 %v289
    %346 = vmatpush1.msra.mxu0 %v288
    %347 = vmatprep.subr.mxu0 %v292
    %348 = vmatpush1.msra.mxu0 %v291
    %349 = vmatprep.subr.mxu0 %v295
    %350 = vmatpush1.msra.mxu0 %v294
    %351 = vmatprep.subr.mxu0 %v298
    %352 = vmatpush1.msra.mxu0 %v297
    %353 = vmatprep.subr.mxu0 %v301
    %354 = vmatpush1.msra.mxu0 %v300
    %355 = vmatprep.subr.mxu0 %v304
    %356 = vmatpush1.msra.mxu0 %v303
    %357 = vmatprep.subr.mxu0 %v307
    %358 = vmatpush1.msra.mxu0 %v306
    %359 = vmatprep.subr.mxu0 %v310
    %360 = vmatpush1.msra.mxu0 %v309
    %361 = vmatprep.subr.mxu0 %v313
    %362 = vmatpush1.msra.mxu0 %v312
    %363 = vmatprep.subr.mxu0 0.0
    %364 = vmatpush1.msra.mxu0 0.0
    %365 = vmatprep.subr.mxu0 0.0
    %366 = vmatpush1.msra.mxu0 0.0
    %367 = vmatprep.subr.mxu0 0.0
    %368 = vmatpush1.msra.mxu0 0.0
    %369 = vmatprep.subr.mxu0 0.0
    %370 = vmatpush1.msra.mxu0 0.0
    %371 = vmatprep.subr.mxu0 0.0
    %372 = vmatpush1.msra.mxu0 0.0
    %373 = vmatprep.subr.mxu0 0.0
    %374 = vmatpush1.msra.mxu0 0.0
    %375 = vmatprep.subr.mxu0 0.0
    %376 = vmatpush1.msra.mxu0 0.0
    %377 = vmatprep.subr.mxu0 0.0
    %378 = vmatpush1.msra.mxu0 0.0
    %379 = vmatprep.subr.mxu0 0.0
    %380 = vmatpush1.msra.mxu0 0.0
    %381 = vmatprep.subr.mxu0 0.0
    %382 = vmatpush1.msra.mxu0 0.0
    %383 = vmatprep.subr.mxu0 0.0
    %384 = vmatpush1.msra.mxu0 0.0
    %385 = vmatprep.subr.mxu0 0.0
    %386 = vmatpush1.msra.mxu0 0.0
    %387 = vmatprep.subr.mxu0 0.0
    %388 = vmatpush1.msra.mxu0 0.0
    %389 = vmatprep.subr.mxu0 0.0
    %390 = vmatpush1.msra.mxu0 0.0
    %391 = vmatprep.subr.mxu0 0.0
    %392 = vmatpush1.msra.mxu0 0.0
    %393 = vmatprep.subr.mxu0 0.0
    %394 = vmatpush1.msra.mxu0 0.0
    %395 = vmatprep.mubr.f32.mxu0 0.0
    %396 = vmatmul.mubr.f32.gmra.mrb[0].mxu0 %v265
    %v397 = vpop.f32.mrb[0].mxu0
    %v398 = vadd.f32 %v319, %v397
    %v399 = vpop.f32.mrb[0].mxu0
    %v400 = vadd.f32 %v323, %v399
    %401 = vdwg.mxu0
    %402 = vmatprep.subr.mxu0 0.0
    %403 = vmatpush1.msra.mxu0 %v269
    %404 = vmatprep.subr.mxu0 0.0
    %405 = vmatpush1.msra.mxu0 %v272
    %406 = vmatprep.subr.mxu0 0.0
    %407 = vmatpush1.msra.mxu0 %v275
    %408 = vmatprep.subr.mxu0 0.0
    %409 = vmatpush1.msra.mxu0 %v278
    %410 = vmatprep.subr.mxu0 0.0
    %411 = vmatpush1.msra.mxu0 %v281
    %412 = vmatprep.subr.mxu0 0.0
    %413 = vmatpush1.msra.mxu0 %v284
    %414 = vmatprep.subr.mxu0 0.0
    %415 = vmatpush1.msra.mxu0 %v287
    %416 = vmatprep.subr.mxu0 0.0
    %417 = vmatpush1.msra.mxu0 %v290
    %418 = vmatprep.subr.mxu0 0.0
    %419 = vmatpush1.msra.mxu0 %v293
    %420 = vmatprep.subr.mxu0 0.0
    %421 = vmatpush1.msra.mxu0 %v296
    %422 = vmatprep.subr.mxu0 0.0
    %423 = vmatpush1.msra.mxu0 %v299
    %424 = vmatprep.subr.mxu0 0.0
    %425 = vmatpush1.msra.mxu0 %v302
    %426 = vmatprep.subr.mxu0 0.0
    %427 = vmatpush1.msra.mxu0 %v305
    %428 = vmatprep.subr.mxu0 0.0
    %429 = vmatpush1.msra.mxu0 %v308
    %430 = vmatprep.subr.mxu0 0.0
    %431 = vmatpush1.msra.mxu0 %v311
    %432 = vmatprep.subr.mxu0 0.0
    %433 = vmatpush1.msra.mxu0 %v314
    %434 = vmatprep.subr.mxu0 0.0
    %435 = vmatpush1.msra.mxu0 0.0
    %436 = vmatprep.subr.mxu0 0.0
    %437 = vmatpush1.msra.mxu0 0.0
    %438 = vmatprep.subr.mxu0 0.0
    %439 = vmatpush1.msra.mxu0 0.0
    %440 = vmatprep.subr.mxu0 0.0
    %441 = vmatpush1.msra.mxu0 0.0
    %442 = vmatprep.subr.mxu0 0.0
    %443 = vmatpush1.msra.mxu0 0.0
    %444 = vmatprep.subr.mxu0 0.0
    %445 = vmatpush1.msra.mxu0 0.0
    %446 = vmatprep.subr.mxu0 0.0
    %447 = vmatpush1.msra.mxu0 0.0
    %448 = vmatprep.subr.mxu0 0.0
    %449 = vmatpush1.msra.mxu0 0.0
    %450 = vmatprep.subr.mxu0 0.0
    %451 = vmatpush1.msra.mxu0 0.0
    %452 = vmatprep.subr.mxu0 0.0
    %453 = vmatpush1.msra.mxu0 0.0
    %454 = vmatprep.subr.mxu0 0.0
    %455 = vmatpush1.msra.mxu0 0.0
    %456 = vmatprep.subr.mxu0 0.0
    %457 = vmatpush1.msra.mxu0 0.0
    %458 = vmatprep.subr.mxu0 0.0
    %459 = vmatpush1.msra.mxu0 0.0
    %460 = vmatprep.subr.mxu0 0.0
    %461 = vmatpush1.msra.mxu0 0.0
    %462 = vmatprep.subr.mxu0 0.0
    %463 = vmatpush1.msra.mxu0 0.0
    %464 = vmatprep.subr.mxu0 0.0
    %465 = vmatpush1.msra.mxu0 0.0
    %466 = vmatprep.mubr.f32.mxu0 0.0
    %467 = vmatmul.mubr.f32.gmra.mrb[0].mxu0 %v265
    %v468 = vpop.f32.mrb[0].mxu0
    %v469 = vadd.f32 %v327, %v468
    %v470 = vpop.f32.mrb[0].mxu0
    %471 = vdwg.mxu0
    %s472 = scalar_lea.vmem %s2, 384
    %v473 = vld [vmem:[%s472] sm:$0xff]
    %v474 = vld [vmem:[%s472 + $0x8] sm:$0xff]
    %v475 = vld [vmem:[%s472 + $0x10] sm:$0xff]
    %v476 = vld [vmem:[%s472 + $0x18] sm:$0xff]
    %v477 = vld [vmem:[%s472 + $0x20] sm:$0xff]
    %v478 = vld [vmem:[%s472 + $0x28] sm:$0xff]
    %v479 = vld [vmem:[%s472 + $0x30] sm:$0xff]
    %v480 = vld [vmem:[%s472 + $0x38] sm:$0xff]
    %v481 = vld [vmem:[%s472 + $0x40] sm:$0xff]
    %v482 = vld [vmem:[%s472 + $0x48] sm:$0xff]
    %v483 = vld [vmem:[%s472 + $0x50] sm:$0xff]
    %v484 = vld [vmem:[%s472 + $0x58] sm:$0xff]
    %v485 = vld [vmem:[%s472 + $0x60] sm:$0xff]
    %v486 = vld [vmem:[%s472 + $0x68] sm:$0xff]
    %v487 = vld [vmem:[%s472 + $0x70] sm:$0xff]
    %v488 = vld [vmem:[%s472 + $0x78] sm:$0xff]
    %v489 = vld [vmem:[%s472 + $0x80] sm:$0xff]
    %v490 = vld [vmem:[%s472 + $0x88] sm:$0xff]
    %v491 = vld [vmem:[%s472 + $0x90] sm:$0xff]
    %v492 = vld [vmem:[%s472 + $0x98] sm:$0xff]
    %v493 = vld [vmem:[%s472 + $0xa0] sm:$0xff]
    %v494 = vld [vmem:[%s472 + $0xa8] sm:$0xff]
    %v495 = vld [vmem:[%s472 + $0xb0] sm:$0xff]
    %v496 = vld [vmem:[%s472 + $0xb8] sm:$0xff]
    %v497 = vld [vmem:[%s472 + $0xc0] sm:$0xff]
    %v498 = vld [vmem:[%s472 + $0xc8] sm:$0xff]
    %v499 = vld [vmem:[%s472 + $0xd0] sm:$0xff]
    %v500 = vld [vmem:[%s472 + $0xd8] sm:$0xff]
    %v501 = vld [vmem:[%s472 + $0xe0] sm:$0xff]
    %v502 = vld [vmem:[%s472 + $0xe8] sm:$0xff]
    %v503 = vld [vmem:[%s472 + $0xf0] sm:$0xff]
    %v504 = vld [vmem:[%s472 + $0xf8] sm:$0xff]
    %v505 = vld [vmem:[%s472 + $0x100] sm:$0xff]
    %v506 = vld [vmem:[%s472 + $0x108] sm:$0xff]
    %v507 = vld [vmem:[%s472 + $0x110] sm:$0xff]
    %v508 = vld [vmem:[%s472 + $0x118] sm:$0xff]
    %v509 = vld [vmem:[%s472 + $0x120] sm:$0xff]
    %v510 = vld [vmem:[%s472 + $0x128] sm:$0xff]
    %v511 = vld [vmem:[%s472 + $0x130] sm:$0xff]
    %v512 = vld [vmem:[%s472 + $0x138] sm:$0xff]
    %v513 = vld [vmem:[%s472 + $0x140] sm:$0xff]
    %v514 = vld [vmem:[%s472 + $0x148] sm:$0xff]
    %v515 = vld [vmem:[%s472 + $0x150] sm:$0xff]
    %v516 = vld [vmem:[%s472 + $0x158] sm:$0xff]
    %v517 = vld [vmem:[%s472 + $0x160] sm:$0xff]
    %v518 = vld [vmem:[%s472 + $0x168] sm:$0xff]
    %v519 = vld [vmem:[%s472 + $0x170] sm:$0xff]
    %v520 = vld [vmem:[%s472 + $0x178] sm:$0xff]
    %v522 = vlaneseq
    %v523 = vshrl.u32 %v522, 7
    %v524 = vsub.s32 0, %v523
    %v525 = vrot.slane %v30, %v524
    %v526 = vlaneseq
    %v527 = vshrl.u32 %v526, 7
    %v528 = vsub.s32 1, %v527
    %v529 = vrot.slane %v30, %v528
    %v530 = vlaneseq
    %v531 = vshrl.u32 %v530, 7
    %v532 = vsub.s32 2, %v531
    %v533 = vrot.slane %v30, %v532
    %537 = vmatprep.subr.mxu0 %v474
    %538 = vmatpush1.msra.mxu0 %v473
    %539 = vmatprep.subr.mxu0 %v477
    %540 = vmatpush1.msra.mxu0 %v476
    %541 = vmatprep.subr.mxu0 %v480
    %542 = vmatpush1.msra.mxu0 %v479
    %543 = vmatprep.subr.mxu0 %v483
    %544 = vmatpush1.msra.mxu0 %v482
    %545 = vmatprep.subr.mxu0 %v486
    %546 = vmatpush1.msra.mxu0 %v485
    %547 = vmatprep.subr.mxu0 %v489
    %548 = vmatpush1.msra.mxu0 %v488
    %549 = vmatprep.subr.mxu0 %v492
    %550 = vmatpush1.msra.mxu0 %v491
    %551 = vmatprep.subr.mxu0 %v495
    %552 = vmatpush1.msra.mxu0 %v494
    %553 = vmatprep.subr.mxu0 %v498
    %554 = vmatpush1.msra.mxu0 %v497
    %555 = vmatprep.subr.mxu0 %v501
    %556 = vmatpush1.msra.mxu0 %v500
    %557 = vmatprep.subr.mxu0 %v504
    %558 = vmatpush1.msra.mxu0 %v503
    %559 = vmatprep.subr.mxu0 %v507
    %560 = vmatpush1.msra.mxu0 %v506
    %561 = vmatprep.subr.mxu0 %v510
    %562 = vmatpush1.msra.mxu0 %v509
    %563 = vmatprep.subr.mxu0 %v513
    %564 = vmatpush1.msra.mxu0 %v512
    %565 = vmatprep.subr.mxu0 %v516
    %566 = vmatpush1.msra.mxu0 %v515
    %567 = vmatprep.subr.mxu0 %v519
    %568 = vmatpush1.msra.mxu0 %v518
    %569 = vmatprep.subr.mxu0 0.0
    %570 = vmatpush1.msra.mxu0 0.0
    %571 = vmatprep.subr.mxu0 0.0
    %572 = vmatpush1.msra.mxu0 0.0
    %573 = vmatprep.subr.mxu0 0.0
    %574 = vmatpush1.msra.mxu0 0.0
    %575 = vmatprep.subr.mxu0 0.0
    %576 = vmatpush1.msra.mxu0 0.0
    %577 = vmatprep.subr.mxu0 0.0
    %578 = vmatpush1.msra.mxu0 0.0
    %579 = vmatprep.subr.mxu0 0.0
    %580 = vmatpush1.msra.mxu0 0.0
    %581 = vmatprep.subr.mxu0 0.0
    %582 = vmatpush1.msra.mxu0 0.0
    %583 = vmatprep.subr.mxu0 0.0
    %584 = vmatpush1.msra.mxu0 0.0
    %585 = vmatprep.subr.mxu0 0.0
    %586 = vmatpush1.msra.mxu0 0.0
    %587 = vmatprep.subr.mxu0 0.0
    %588 = vmatpush1.msra.mxu0 0.0
    %589 = vmatprep.subr.mxu0 0.0
    %590 = vmatpush1.msra.mxu0 0.0
    %591 = vmatprep.subr.mxu0 0.0
    %592 = vmatpush1.msra.mxu0 0.0
    %593 = vmatprep.subr.mxu0 0.0
    %594 = vmatpush1.msra.mxu0 0.0
    %595 = vmatprep.subr.mxu0 0.0
    %596 = vmatpush1.msra.mxu0 0.0
    %597 = vmatprep.subr.mxu0 0.0
    %598 = vmatpush1.msra.mxu0 0.0
    %599 = vmatprep.subr.mxu0 0.0
    %600 = vmatpush1.msra.mxu0 0.0
    %601 = vmatprep.mubr.f32.mxu0 0.0
    %602 = vmatmul.mubr.f32.gmra.mrb[0].mxu0 %v33
    %v603 = vpop.f32.mrb[0].mxu0
    %v604 = vadd.f32 %v525, %v603
    %v605 = vpop.f32.mrb[0].mxu0
    %v606 = vadd.f32 %v529, %v605
    %607 = vdwg.mxu0
    %608 = vmatprep.subr.mxu0 0.0
    %609 = vmatpush1.msra.mxu0 %v475
    %610 = vmatprep.subr.mxu0 0.0
    %611 = vmatpush1.msra.mxu0 %v478
    %612 = vmatprep.subr.mxu0 0.0
    %613 = vmatpush1.msra.mxu0 %v481
    %614 = vmatprep.subr.mxu0 0.0
    %615 = vmatpush1.msra.mxu0 %v484
    %616 = vmatprep.subr.mxu0 0.0
    %617 = vmatpush1.msra.mxu0 %v487
    %618 = vmatprep.subr.mxu0 0.0
    %619 = vmatpush1.msra.mxu0 %v490
    %620 = vmatprep.subr.mxu0 0.0
    %621 = vmatpush1.msra.mxu0 %v493
    %622 = vmatprep.subr.mxu0 0.0
    %623 = vmatpush1.msra.mxu0 %v496
    %624 = vmatprep.subr.mxu0 0.0
    %625 = vmatpush1.msra.mxu0 %v499
    %626 = vmatprep.subr.mxu0 0.0
    %627 = vmatpush1.msra.mxu0 %v502
    %628 = vmatprep.subr.mxu0 0.0
    %629 = vmatpush1.msra.mxu0 %v505
    %630 = vmatprep.subr.mxu0 0.0
    %631 = vmatpush1.msra.mxu0 %v508
    %632 = vmatprep.subr.mxu0 0.0
    %633 = vmatpush1.msra.mxu0 %v511
    %634 = vmatprep.subr.mxu0 0.0
    %635 = vmatpush1.msra.mxu0 %v514
    %636 = vmatprep.subr.mxu0 0.0
    %637 = vmatpush1.msra.mxu0 %v517
    %638 = vmatprep.subr.mxu0 0.0
    %639 = vmatpush1.msra.mxu0 %v520
    %640 = vmatprep.subr.mxu0 0.0
    %641 = vmatpush1.msra.mxu0 0.0
    %642 = vmatprep.subr.mxu0 0.0
    %643 = vmatpush1.msra.mxu0 0.0
    %644 = vmatprep.subr.mxu0 0.0
    %645 = vmatpush1.msra.mxu0 0.0
    %646 = vmatprep.subr.mxu0 0.0
    %647 = vmatpush1.msra.mxu0 0.0
    %648 = vmatprep.subr.mxu0 0.0
    %649 = vmatpush1.msra.mxu0 0.0
    %650 = vmatprep.subr.mxu0 0.0
    %651 = vmatpush1.msra.mxu0 0.0
    %652 = vmatprep.subr.mxu0 0.0
    %653 = vmatpush1.msra.mxu0 0.0
    %654 = vmatprep.subr.mxu0 0.0
    %655 = vmatpush1.msra.mxu0 0.0
    %656 = vmatprep.subr.mxu0 0.0
    %657 = vmatpush1.msra.mxu0 0.0
    %658 = vmatprep.subr.mxu0 0.0
    %659 = vmatpush1.msra.mxu0 0.0
    %660 = vmatprep.subr.mxu0 0.0
    %661 = vmatpush1.msra.mxu0 0.0
    %662 = vmatprep.subr.mxu0 0.0
    %663 = vmatpush1.msra.mxu0 0.0
    %664 = vmatprep.subr.mxu0 0.0
    %665 = vmatpush1.msra.mxu0 0.0
    %666 = vmatprep.subr.mxu0 0.0
    %667 = vmatpush1.msra.mxu0 0.0
    %668 = vmatprep.subr.mxu0 0.0
    %669 = vmatpush1.msra.mxu0 0.0
    %670 = vmatprep.subr.mxu0 0.0
    %671 = vmatpush1.msra.mxu0 0.0
    %672 = vmatprep.mubr.f32.mxu0 0.0
    %673 = vmatmul.mubr.f32.gmra.mrb[0].mxu0 %v33
    %v674 = vpop.f32.mrb[0].mxu0
    %v675 = vadd.f32 %v533, %v674
    %v676 = vpop.f32.mrb[0].mxu0
    %677 = vdwg.mxu0
    %v678 = vadd.f32 %v398, %v604
    %v679 = vxor.u32 %v678, 2147483648
    %v680 = vmul.f32 %v679, 1.442695
    %v681 = vpow.pop %v680
    %v682 = vadd.f32 %v681, 1.0
    %v683 = vrcp.pop %v682
    %v684 = vmul.f32 1.0, %v683
    %v685 = vadd.f32 %v400, %v606
    %v686 = vxor.u32 %v685, 2147483648
    %v687 = vmul.f32 %v686, 1.442695
    %v688 = vpow.pop %v687
    %v689 = vadd.f32 %v688, 1.0
    %v690 = vrcp.pop %v689
    %v691 = vmul.f32 1.0, %v690
    %v692 = vmul.f32 %v684, %v675
    %v693 = vadd.f32 %v469, %v692
    %v694 = vtanh.pop %v693
    %v695 = vsub.f32 1.0, %v691
    %v696 = vmul.f32 %v695, %v694
    %v697 = vmul.f32 %v691, %v33
    %v698 = vadd.f32 %v696, %v697
    %699 = vst [vmem:[%s6] sm:$0x3] %v698
    %s700 = scalar_lea.vmem %s0, 6
    %v701 = vld [vmem:[%s700] sm:$0x3f]
    %v702 = vld [vmem:[%s2] sm:$0xff]
    %v703 = vld [vmem:[%s2 + $0x8] sm:$0xff]
    %v704 = vld [vmem:[%s2 + $0x10] sm:$0xff]
    %v705 = vld [vmem:[%s2 + $0x18] sm:$0xff]
    %v706 = vld [vmem:[%s2 + $0x20] sm:$0xff]
    %v707 = vld [vmem:[%s2 + $0x28] sm:$0xff]
    %v708 = vld [vmem:[%s2 + $0x30] sm:$0xff]
    %v709 = vld [vmem:[%s2 + $0x38] sm:$0xff]
    %v710 = vld [vmem:[%s2 + $0x40] sm:$0xff]
    %v711 = vld [vmem:[%s2 + $0x48] sm:$0xff]
    %v712 = vld [vmem:[%s2 + $0x50] sm:$0xff]
    %v713 = vld [vmem:[%s2 + $0x58] sm:$0xff]
    %v714 = vld [vmem:[%s2 + $0x60] sm:$0xff]
    %v715 = vld [vmem:[%s2 + $0x68] sm:$0xff]
    %v716 = vld [vmem:[%s2 + $0x70] sm:$0xff]
    %v717 = vld [vmem:[%s2 + $0x78] sm:$0xff]
    %v718 = vld [vmem:[%s2 + $0x80] sm:$0xff]
    %v719 = vld [vmem:[%s2 + $0x88] sm:$0xff]
    %v720 = vld [vmem:[%s2 + $0x90] sm:$0xff]
    %v721 = vld [vmem:[%s2 + $0x98] sm:$0xff]
    %v722 = vld [vmem:[%s2 + $0xa0] sm:$0xff]
    %v723 = vld [vmem:[%s2 + $0xa8] sm:$0xff]
    %v724 = vld [vmem:[%s2 + $0xb0] sm:$0xff]
    %v725 = vld [vmem:[%s2 + $0xb8] sm:$0xff]
    %v726 = vld [vmem:[%s2 + $0xc0] sm:$0xff]
    %v727 = vld [vmem:[%s2 + $0xc8] sm:$0xff]
    %v728 = vld [vmem:[%s2 + $0xd0] sm:$0xff]
    %v729 = vld [vmem:[%s2 + $0xd8] sm:$0xff]
    %v730 = vld [vmem:[%s2 + $0xe0] sm:$0xff]
    %v731 = vld [vmem:[%s2 + $0xe8] sm:$0xff]
    %v732 = vld [vmem:[%s2 + $0xf0] sm:$0xff]
    %v733 = vld [vmem:[%s2 + $0xf8] sm:$0xff]
    %v734 = vld [vmem:[%s2 + $0x100] sm:$0xff]
    %v735 = vld [vmem:[%s2 + $0x108] sm:$0xff]
    %v736 = vld [vmem:[%s2 + $0x110] sm:$0xff]
    %v737 = vld [vmem:[%s2 + $0x118] sm:$0xff]
    %v738 = vld [vmem:[%s2 + $0x120] sm:$0xff]
    %v739 = vld [vmem:[%s2 + $0x128] sm:$0xff]
    %v740 = vld [vmem:[%s2 + $0x130] sm:$0xff]
    %v741 = vld [vmem:[%s2 + $0x138] sm:$0xff]
    %v742 = vld [vmem:[%s2 + $0x140] sm:$0xff]
    %v743 = vld [vmem:[%s2 + $0x148] sm:$0xff]
    %v744 = vld [vmem:[%s2 + $0x150] sm:$0xff]
    %v745 = vld [vmem:[%s2 + $0x158] sm:$0xff]
    %v746 = vld [vmem:[%s2 + $0x160] sm:$0xff]
    %v747 = vld [vmem:[%s2 + $0x168] sm:$0xff]
    %v748 = vld [vmem:[%s2 + $0x170] sm:$0xff]
    %v749 = vld [vmem:[%s2 + $0x178] sm:$0xff]
    %750 = vmatprep.subr.mxu0 %v703
    %751 = vmatpush1.msra.mxu0 %v702
    %752 = vmatprep.subr.mxu0 %v706
    %753 = vmatpush1.msra.mxu0 %v705
    %754 = vmatprep.subr.mxu0 %v709
    %755 = vmatpush1.msra.mxu0 %v708
    %756 = vmatprep.subr.mxu0 %v712
    %757 = vmatpush1.msra.mxu0 %v711
    %758 = vmatprep.subr.mxu0 %v715
    %759 = vmatpush1.msra.mxu0 %v714
    %760 = vmatprep.subr.mxu0 %v718
    %761 = vmatpush1.msra.mxu0 %v717
    %762 = vmatprep.subr.mxu0 %v721
    %763 = vmatpush1.msra.mxu0 %v720
    %764 = vmatprep.subr.mxu0 %v724
    %765 = vmatpush1.msra.mxu0 %v723
    %766 = vmatprep.subr.mxu0 %v727
    %767 = vmatpush1.msra.mxu0 %v726
    %768 = vmatprep.subr.mxu0 %v730
    %769 = vmatpush1.msra.mxu0 %v729
    %770 = vmatprep.subr.mxu0 %v733
    %771 = vmatpush1.msra.mxu0 %v732
    %772 = vmatprep.subr.mxu0 %v736
    %773 = vmatpush1.msra.mxu0 %v735
    %774 = vmatprep.subr.mxu0 %v739
    %775 = vmatpush1.msra.mxu0 %v738
    %776 = vmatprep.subr.mxu0 %v742
    %777 = vmatpush1.msra.mxu0 %v741
    %778 = vmatprep.subr.mxu0 %v745
    %779 = vmatpush1.msra.mxu0 %v744
    %780 = vmatprep.subr.mxu0 %v748
    %781 = vmatpush1.msra.mxu0 %v747
    %782 = vmatprep.subr.mxu0 0.0
    %783 = vmatpush1.msra.mxu0 0.0
    %784 = vmatprep.subr.mxu0 0.0
    %785 = vmatpush1.msra.mxu0 0.0
    %786 = vmatprep.subr.mxu0 0.0
    %787 = vmatpush1.msra.mxu0 0.0
    %788 = vmatprep.subr.mxu0 0.0
    %789 = vmatpush1.msra.mxu0 0.0
    %790 = vmatprep.subr.mxu0 0.0
    %791 = vmatpush1.msra.mxu0 0.0
    %792 = vmatprep.subr.mxu0 0.0
    %793 = vmatpush1.msra.mxu0 0.0
    %794 = vmatprep.subr.mxu0 0.0
    %795 = vmatpush1.msra.mxu0 0.0
    %796 = vmatprep.subr.mxu0 0.0
    %797 = vmatpush1.msra.mxu0 0.0
    %798 = vmatprep.subr.mxu0 0.0
    %799 = vmatpush1.msra.mxu0 0.0
    %800 = vmatprep.subr.mxu0 0.0
    %801 = vmatpush1.msra.mxu0 0.0
    %802 = vmatprep.subr.mxu0 0.0
    %803 = vmatpush1.msra.mxu0 0.0
    %804 = vmatprep.subr.mxu0 0.0
    %805 = vmatpush1.msra.mxu0 0.0
    %806 = vmatprep.subr.mxu0 0.0
    %807 = vmatpush1.msra.mxu0 0.0
    %808 = vmatprep.subr.mxu0 0.0
    %809 = vmatpush1.msra.mxu0 0.0
    %810 = vmatprep.subr.mxu0 0.0
    %811 = vmatpush1.msra.mxu0 0.0
    %812 = vmatprep.subr.mxu0 0.0
    %813 = vmatpush1.msra.mxu0 0.0
    %814 = vmatprep.mubr.f32.mxu0 0.0
    %815 = vmatmul.mubr.f32.gmra.mrb[0].mxu0 %v265
    %v816 = vpop.f32.mrb[0].mxu0
    %v817 = vadd.f32 %v87, %v816
    %v818 = vpop.f32.mrb[0].mxu0
    %v819 = vadd.f32 %v91, %v818
    %820 = vdwg.mxu0
    %821 = vmatprep.subr.mxu0 0.0
    %822 = vmatpush1.msra.mxu0 %v704
    %823 = vmatprep.subr.mxu0 0.0
    %824 = vmatpush1.msra.mxu0 %v707
    %825 = vmatprep.subr.mxu0 0.0
    %826 = vmatpush1.msra.mxu0 %v710
    %827 = vmatprep.subr.mxu0 0.0
    %828 = vmatpush1.msra.mxu0 %v713
    %829 = vmatprep.subr.mxu0 0.0
    %830 = vmatpush1.msra.mxu0 %v716
    %831 = vmatprep.subr.mxu0 0.0
    %832 = vmatpush1.msra.mxu0 %v719
    %833 = vmatprep.subr.mxu0 0.0
    %834 = vmatpush1.msra.mxu0 %v722
    %835 = vmatprep.subr.mxu0 0.0
    %836 = vmatpush1.msra.mxu0 %v725
    %837 = vmatprep.subr.mxu0 0.0
    %838 = vmatpush1.msra.mxu0 %v728
    %839 = vmatprep.subr.mxu0 0.0
    %840 = vmatpush1.msra.mxu0 %v731
    %841 = vmatprep.subr.mxu0 0.0
    %842 = vmatpush1.msra.mxu0 %v734
    %843 = vmatprep.subr.mxu0 0.0
    %844 = vmatpush1.msra.mxu0 %v737
    %845 = vmatprep.subr.mxu0 0.0
    %846 = vmatpush1.msra.mxu0 %v740
    %847 = vmatprep.subr.mxu0 0.0
    %848 = vmatpush1.msra.mxu0 %v743
    %849 = vmatprep.subr.mxu0 0.0
    %850 = vmatpush1.msra.mxu0 %v746
    %851 = vmatprep.subr.mxu0 0.0
    %852 = vmatpush1.msra.mxu0 %v749
    %853 = vmatprep.subr.mxu0 0.0
    %854 = vmatpush1.msra.mxu0 0.0
    %855 = vmatprep.subr.mxu0 0.0
    %856 = vmatpush1.msra.mxu0 0.0
    %857 = vmatprep.subr.mxu0 0.0
    %858 = vmatpush1.msra.mxu0 0.0
    %859 = vmatprep.subr.mxu0 0.0
    %860 = vmatpush1.msra.mxu0 0.0
    %861 = vmatprep.subr.mxu0 0.0
    %862 = vmatpush1.msra.mxu0 0.0
    %863 = vmatprep.subr.mxu0 0.0
    %864 = vmatpush1.msra.mxu0 0.0
    %865 = vmatprep.subr.mxu0 0.0
    %866 = vmatpush1.msra.mxu0 0.0
    %867 = vmatprep.subr.mxu0 0.0
    %868 = vmatpush1.msra.mxu0 0.0
    %869 = vmatprep.subr.mxu0 0.0
    %870 = vmatpush1.msra.mxu0 0.0
    %871 = vmatprep.subr.mxu0 0.0
    %872 = vmatpush1.msra.mxu0 0.0
    %873 = vmatprep.subr.mxu0 0.0
    %874 = vmatpush1.msra.mxu0 0.0
    %875 = vmatprep.subr.mxu0 0.0
    %876 = vmatpush1.msra.mxu0 0.0
    %877 = vmatprep.subr.mxu0 0.0
    %878 = vmatpush1.msra.mxu0 0.0
    %879 = vmatprep.subr.mxu0 0.0
    %880 = vmatpush1.msra.mxu0 0.0
    %881 = vmatprep.subr.mxu0 0.0
    %882 = vmatpush1.msra.mxu0 0.0
    %883 = vmatprep.subr.mxu0 0.0
    %884 = vmatpush1.msra.mxu0 0.0
    %885 = vmatprep.mubr.f32.mxu0 0.0
    %886 = vmatmul.mubr.f32.gmra.mrb[0].mxu0 %v265
    %v887 = vpop.f32.mrb[0].mxu0
    %v888 = vadd.f32 %v95, %v887
    %v889 = vpop.f32.mrb[0].mxu0
    %890 = vdwg.mxu0
    %v891 = vadd.f32 %v701, %v817
    %v892 = vxor.u32 %v891, 2147483648
    %v893 = vmul.f32 %v892, 1.442695
    %v894 = vpow.pop %v893
    %v895 = vadd.f32 %v894, 1.0
    %v896 = vrcp.pop %v895
    %v897 = vmul.f32 1.0, %v896
    %v899 = vrot.slane %v701, 2
    %v901 = vadd.f32 %v899, %v819
    %v902 = vxor.u32 %v901, 2147483648
    %v903 = vmul.f32 %v902, 1.442695
    %v904 = vpow.pop %v903
    %v905 = vadd.f32 %v904, 1.0
    %v906 = vrcp.pop %v905
    %v907 = vmul.f32 1.0, %v906
    %v908 = vmul.f32 %v897, %v888
    %v909 = vrot.slane %v701, 4
    %v911 = vadd.f32 %v909, %v908
    %v912 = vtanh.pop %v911
    %v913 = vsub.f32 1.0, %v907
    %v914 = vmul.f32 %v913, %v912
    %v915 = vmul.f32 %v907, %v265
    %v916 = vadd.f32 %v914, %v915
    %v917 = vld [vmem:[%s266] sm:$0xff]
    %v918 = vld [vmem:[%s266 + $0x8] sm:$0xff]
    %v919 = vld [vmem:[%s266 + $0x10] sm:$0xff]
    %v920 = vld [vmem:[%s266 + $0x18] sm:$0xff]
    %v921 = vld [vmem:[%s266 + $0x20] sm:$0xff]
    %v922 = vld [vmem:[%s266 + $0x28] sm:$0xff]
    %v923 = vld [vmem:[%s266 + $0x30] sm:$0xff]
    %v924 = vld [vmem:[%s266 + $0x38] sm:$0xff]
    %v925 = vld [vmem:[%s266 + $0x40] sm:$0xff]
    %v926 = vld [vmem:[%s266 + $0x48] sm:$0xff]
    %v927 = vld [vmem:[%s266 + $0x50] sm:$0xff]
    %v928 = vld [vmem:[%s266 + $0x58] sm:$0xff]
    %v929 = vld [vmem:[%s266 + $0x60] sm:$0xff]
    %v930 = vld [vmem:[%s266 + $0x68] sm:$0xff]
    %v931 = vld [vmem:[%s266 + $0x70] sm:$0xff]
    %v932 = vld [vmem:[%s266 + $0x78] sm:$0xff]
    %v933 = vld [vmem:[%s266 + $0x80] sm:$0xff]
    %v934 = vld [vmem:[%s266 + $0x88] sm:$0xff]
    %v935 = vld [vmem:[%s266 + $0x90] sm:$0xff]
    %v936 = vld [vmem:[%s266 + $0x98] sm:$0xff]
    %v937 = vld [vmem:[%s266 + $0xa0] sm:$0xff]
    %v938 = vld [vmem:[%s266 + $0xa8] sm:$0xff]
    %v939 = vld [vmem:[%s266 + $0xb0] sm:$0xff]
    %v940 = vld [vmem:[%s266 + $0xb8] sm:$0xff]
    %v941 = vld [vmem:[%s266 + $0xc0] sm:$0xff]
    %v942 = vld [vmem:[%s266 + $0xc8] sm:$0xff]
    %v943 = vld [vmem:[%s266 + $0xd0] sm:$0xff]
    %v944 = vld [vmem:[%s266 + $0xd8] sm:$0xff]
    %v945 = vld [vmem:[%s266 + $0xe0] sm:$0xff]
    %v946 = vld [vmem:[%s266 + $0xe8] sm:$0xff]
    %v947 = vld [vmem:[%s266 + $0xf0] sm:$0xff]
    %v948 = vld [vmem:[%s266 + $0xf8] sm:$0xff]
    %v949 = vld [vmem:[%s266 + $0x100] sm:$0xff]
    %v950 = vld [vmem:[%s266 + $0x108] sm:$0xff]
    %v951 = vld [vmem:[%s266 + $0x110] sm:$0xff]
    %v952 = vld [vmem:[%s266 + $0x118] sm:$0xff]
    %v953 = vld [vmem:[%s266 + $0x120] sm:$0xff]
    %v954 = vld [vmem:[%s266 + $0x128] sm:$0xff]
    %v955 = vld [vmem:[%s266 + $0x130] sm:$0xff]
    %v956 = vld [vmem:[%s266 + $0x138] sm:$0xff]
    %v957 = vld [vmem:[%s266 + $0x140] sm:$0xff]
    %v958 = vld [vmem:[%s266 + $0x148] sm:$0xff]
    %v959 = vld [vmem:[%s266 + $0x150] sm:$0xff]
    %v960 = vld [vmem:[%s266 + $0x158] sm:$0xff]
    %v961 = vld [vmem:[%s266 + $0x160] sm:$0xff]
    %v962 = vld [vmem:[%s266 + $0x168] sm:$0xff]
    %v963 = vld [vmem:[%s266 + $0x170] sm:$0xff]
    %v964 = vld [vmem:[%s266 + $0x178] sm:$0xff]
    %965 = vmatprep.subr.mxu0 %v918
    %966 = vmatpush1.msra.mxu0 %v917
    %967 = vmatprep.subr.mxu0 %v921
    %968 = vmatpush1.msra.mxu0 %v920
    %969 = vmatprep.subr.mxu0 %v924
    %970 = vmatpush1.msra.mxu0 %v923
    %971 = vmatprep.subr.mxu0 %v927
    %972 = vmatpush1.msra.mxu0 %v926
    %973 = vmatprep.subr.mxu0 %v930
    %974 = vmatpush1.msra.mxu0 %v929
    %975 = vmatprep.subr.mxu0 %v933
    %976 = vmatpush1.msra.mxu0 %v932
    %977 = vmatprep.subr.mxu0 %v936
    %978 = vmatpush1.msra.mxu0 %v935
    %979 = vmatprep.subr.mxu0 %v939
    %980 = vmatpush1.msra.mxu0 %v938
    %981 = vmatprep.subr.mxu0 %v942
    %982 = vmatpush1.msra.mxu0 %v941
    %983 = vmatprep.subr.mxu0 %v945
    %984 = vmatpush1.msra.mxu0 %v944
    %985 = vmatprep.subr.mxu0 %v948
    %986 = vmatpush1.msra.mxu0 %v947
    %987 = vmatprep.subr.mxu0 %v951
    %988 = vmatpush1.msra.mxu0 %v950
    %989 = vmatprep.subr.mxu0 %v954
    %990 = vmatpush1.msra.mxu0 %v953
    %991 = vmatprep.subr.mxu0 %v957
    %992 = vmatpush1.msra.mxu0 %v956
    %993 = vmatprep.subr.mxu0 %v960
    %994 = vmatpush1.msra.mxu0 %v959
    %995 = vmatprep.subr.mxu0 %v963
    %996 = vmatpush1.msra.mxu0 %v962
    %997 = vmatprep.subr.mxu0 0.0
    %998 = vmatpush1.msra.mxu0 0.0
    %999 = vmatprep.subr.mxu0 0.0
    %1000 = vmatpush1.msra.mxu0 0.0
    %1001 = vmatprep.subr.mxu0 0.0
    %1002 = vmatpush1.msra.mxu0 0.0
    %1003 = vmatprep.subr.mxu0 0.0
    %1004 = vmatpush1.msra.mxu0 0.0
    %1005 = vmatprep.subr.mxu0 0.0
    %1006 = vmatpush1.msra.mxu0 0.0
    %1007 = vmatprep.subr.mxu0 0.0
    %1008 = vmatpush1.msra.mxu0 0.0
    %1009 = vmatprep.subr.mxu0 0.0
    %1010 = vmatpush1.msra.mxu0 0.0
    %1011 = vmatprep.subr.mxu0 0.0
    %1012 = vmatpush1.msra.mxu0 0.0
    %1013 = vmatprep.subr.mxu0 0.0
    %1014 = vmatpush1.msra.mxu0 0.0
    %1015 = vmatprep.subr.mxu0 0.0
    %1016 = vmatpush1.msra.mxu0 0.0
    %1017 = vmatprep.subr.mxu0 0.0
    %1018 = vmatpush1.msra.mxu0 0.0
    %1019 = vmatprep.subr.mxu0 0.0
    %1020 = vmatpush1.msra.mxu0 0.0
    %1021 = vmatprep.subr.mxu0 0.0
    %1022 = vmatpush1.msra.mxu0 0.0
    %1023 = vmatprep.subr.mxu0 0.0
    %1024 = vmatpush1.msra.mxu0 0.0
    %1025 = vmatprep.subr.mxu0 0.0
    %1026 = vmatpush1.msra.mxu0 0.0
    %1027 = vmatprep.subr.mxu0 0.0
    %1028 = vmatpush1.msra.mxu0 0.0
    %1029 = vmatprep.mubr.f32.mxu0 0.0
    %1030 = vmatmul.mubr.f32.gmra.mrb[0].mxu0 %v916
    %v1031 = vpop.f32.mrb[0].mxu0
    %v1032 = vadd.f32 %v319, %v1031
    %v1033 = vpop.f32.mrb[0].mxu0
    %v1034 = vadd.f32 %v323, %v1033
    %1035 = vdwg.mxu0
    %1036 = vmatprep.subr.mxu0 0.0
    %1037 = vmatpush1.msra.mxu0 %v919
    %1038 = vmatprep.subr.mxu0 0.0
    %1039 = vmatpush1.msra.mxu0 %v922
    %1040 = vmatprep.subr.mxu0 0.0
    %1041 = vmatpush1.msra.mxu0 %v925
    %1042 = vmatprep.subr.mxu0 0.0
    %1043 = vmatpush1.msra.mxu0 %v928
    %1044 = vmatprep.subr.mxu0 0.0
    %1045 = vmatpush1.msra.mxu0 %v931
    %1046 = vmatprep.subr.mxu0 0.0
    %1047 = vmatpush1.msra.mxu0 %v934
    %1048 = vmatprep.subr.mxu0 0.0
    %1049 = vmatpush1.msra.mxu0 %v937
    %1050 = vmatprep.subr.mxu0 0.0
    %1051 = vmatpush1.msra.mxu0 %v940
    %1052 = vmatprep.subr.mxu0 0.0
    %1053 = vmatpush1.msra.mxu0 %v943
    %1054 = vmatprep.subr.mxu0 0.0
    %1055 = vmatpush1.msra.mxu0 %v946
    %1056 = vmatprep.subr.mxu0 0.0
    %1057 = vmatpush1.msra.mxu0 %v949
    %1058 = vmatprep.subr.mxu0 0.0
    %1059 = vmatpush1.msra.mxu0 %v952
    %1060 = vmatprep.subr.mxu0 0.0
    %1061 = vmatpush1.msra.mxu0 %v955
    %1062 = vmatprep.subr.mxu0 0.0
    %1063 = vmatpush1.msra.mxu0 %v958
    %1064 = vmatprep.subr.mxu0 0.0
    %1065 = vmatpush1.msra.mxu0 %v961
    %1066 = vmatprep.subr.mxu0 0.0
    %1067 = vmatpush1.msra.mxu0 %v964
    %1068 = vmatprep.subr.mxu0 0.0
    %1069 = vmatpush1.msra.mxu0 0.0
    %1070 = vmatprep.subr.mxu0 0.0
    %1071 = vmatpush1.msra.mxu0 0.0
    %1072 = vmatprep.subr.mxu0 0.0
    %1073 = vmatpush1.msra.mxu0 0.0
    %1074 = vmatprep.subr.mxu0 0.0
    %1075 = vmatpush1.msra.mxu0 0.0
    %1076 = vmatprep.subr.mxu0 0.0
    %1077 = vmatpush1.msra.mxu0 0.0
    %1078 = vmatprep.subr.mxu0 0.0
    %1079 = vmatpush1.msra.mxu0 0.0
    %1080 = vmatprep.subr.mxu0 0.0
    %1081 = vmatpush1.msra.mxu0 0.0
    %1082 = vmatprep.subr.mxu0 0.0
    %1083 = vmatpush1.msra.mxu0 0.0
    %1084 = vmatprep.subr.mxu0 0.0
    %1085 = vmatpush1.msra.mxu0 0.0
    %1086 = vmatprep.subr.mxu0 0.0
    %1087 = vmatpush1.msra.mxu0 0.0
    %1088 = vmatprep.subr.mxu0 0.0
    %1089 = vmatpush1.msra.mxu0 0.0
    %1090 = vmatprep.subr.mxu0 0.0
    %1091 = vmatpush1.msra.mxu0 0.0
    %1092 = vmatprep.subr.mxu0 0.0
    %1093 = vmatpush1.msra.mxu0 0.0
    %1094 = vmatprep.subr.mxu0 0.0
    %1095 = vmatpush1.msra.mxu0 0.0
    %1096 = vmatprep.subr.mxu0 0.0
    %1097 = vmatpush1.msra.mxu0 0.0
    %1098 = vmatprep.subr.mxu0 0.0
    %1099 = vmatpush1.msra.mxu0 0.0
    %1100 = vmatprep.mubr.f32.mxu0 0.0
    %1101 = vmatmul.mubr.f32.gmra.mrb[0].mxu0 %v916
    %v1102 = vpop.f32.mrb[0].mxu0
    %v1103 = vadd.f32 %v327, %v1102
    %v1104 = vpop.f32.mrb[0].mxu0
    %1105 = vdwg.mxu0
    %v1106 = vld [vmem:[%s472] sm:$0xff]
    %v1107 = vld [vmem:[%s472 + $0x8] sm:$0xff]
    %v1108 = vld [vmem:[%s472 + $0x10] sm:$0xff]
    %v1109 = vld [vmem:[%s472 + $0x18] sm:$0xff]
    %v1110 = vld [vmem:[%s472 + $0x20] sm:$0xff]
    %v1111 = vld [vmem:[%s472 + $0x28] sm:$0xff]
    %v1112 = vld [vmem:[%s472 + $0x30] sm:$0xff]
    %v1113 = vld [vmem:[%s472 + $0x38] sm:$0xff]
    %v1114 = vld [vmem:[%s472 + $0x40] sm:$0xff]
    %v1115 = vld [vmem:[%s472 + $0x48] sm:$0xff]
    %v1116 = vld [vmem:[%s472 + $0x50] sm:$0xff]
    %v1117 = vld [vmem:[%s472 + $0x58] sm:$0xff]
    %v1118 = vld [vmem:[%s472 + $0x60] sm:$0xff]
    %v1119 = vld [vmem:[%s472 + $0x68] sm:$0xff]
    %v1120 = vld [vmem:[%s472 + $0x70] sm:$0xff]
    %v1121 = vld [vmem:[%s472 + $0x78] sm:$0xff]
    %v1122 = vld [vmem:[%s472 + $0x80] sm:$0xff]
    %v1123 = vld [vmem:[%s472 + $0x88] sm:$0xff]
    %v1124 = vld [vmem:[%s472 + $0x90] sm:$0xff]
    %v1125 = vld [vmem:[%s472 + $0x98] sm:$0xff]
    %v1126 = vld [vmem:[%s472 + $0xa0] sm:$0xff]
    %v1127 = vld [vmem:[%s472 + $0xa8] sm:$0xff]
    %v1128 = vld [vmem:[%s472 + $0xb0] sm:$0xff]
    %v1129 = vld [vmem:[%s472 + $0xb8] sm:$0xff]
    %v1130 = vld [vmem:[%s472 + $0xc0] sm:$0xff]
    %v1131 = vld [vmem:[%s472 + $0xc8] sm:$0xff]
    %v1132 = vld [vmem:[%s472 + $0xd0] sm:$0xff]
    %v1133 = vld [vmem:[%s472 + $0xd8] sm:$0xff]
    %v1134 = vld [vmem:[%s472 + $0xe0] sm:$0xff]
    %v1135 = vld [vmem:[%s472 + $0xe8] sm:$0xff]
    %v1136 = vld [vmem:[%s472 + $0xf0] sm:$0xff]
    %v1137 = vld [vmem:[%s472 + $0xf8] sm:$0xff]
    %v1138 = vld [vmem:[%s472 + $0x100] sm:$0xff]
    %v1139 = vld [vmem:[%s472 + $0x108] sm:$0xff]
    %v1140 = vld [vmem:[%s472 + $0x110] sm:$0xff]
    %v1141 = vld [vmem:[%s472 + $0x118] sm:$0xff]
    %v1142 = vld [vmem:[%s472 + $0x120] sm:$0xff]
    %v1143 = vld [vmem:[%s472 + $0x128] sm:$0xff]
    %v1144 = vld [vmem:[%s472 + $0x130] sm:$0xff]
    %v1145 = vld [vmem:[%s472 + $0x138] sm:$0xff]
    %v1146 = vld [vmem:[%s472 + $0x140] sm:$0xff]
    %v1147 = vld [vmem:[%s472 + $0x148] sm:$0xff]
    %v1148 = vld [vmem:[%s472 + $0x150] sm:$0xff]
    %v1149 = vld [vmem:[%s472 + $0x158] sm:$0xff]
    %v1150 = vld [vmem:[%s472 + $0x160] sm:$0xff]
    %v1151 = vld [vmem:[%s472 + $0x168] sm:$0xff]
    %v1152 = vld [vmem:[%s472 + $0x170] sm:$0xff]
    %v1153 = vld [vmem:[%s472 + $0x178] sm:$0xff]
    %1154 = vmatprep.subr.mxu0 %v1107
    %1155 = vmatpush1.msra.mxu0 %v1106
    %1156 = vmatprep.subr.mxu0 %v1110
    %1157 = vmatpush1.msra.mxu0 %v1109
    %1158 = vmatprep.subr.mxu0 %v1113
    %1159 = vmatpush1.msra.mxu0 %v1112
    %1160 = vmatprep.subr.mxu0 %v1116
    %1161 = vmatpush1.msra.mxu0 %v1115
    %1162 = vmatprep.subr.mxu0 %v1119
    %1163 = vmatpush1.msra.mxu0 %v1118
    %1164 = vmatprep.subr.mxu0 %v1122
    %1165 = vmatpush1.msra.mxu0 %v1121
    %1166 = vmatprep.subr.mxu0 %v1125
    %1167 = vmatpush1.msra.mxu0 %v1124
    %1168 = vmatprep.subr.mxu0 %v1128
    %1169 = vmatpush1.msra.mxu0 %v1127
    %1170 = vmatprep.subr.mxu0 %v1131
    %1171 = vmatpush1.msra.mxu0 %v1130
    %1172 = vmatprep.subr.mxu0 %v1134
    %1173 = vmatpush1.msra.mxu0 %v1133
    %1174 = vmatprep.subr.mxu0 %v1137
    %1175 = vmatpush1.msra.mxu0 %v1136
    %1176 = vmatprep.subr.mxu0 %v1140
    %1177 = vmatpush1.msra.mxu0 %v1139
    %1178 = vmatprep.subr.mxu0 %v1143
    %1179 = vmatpush1.msra.mxu0 %v1142
    %1180 = vmatprep.subr.mxu0 %v1146
    %1181 = vmatpush1.msra.mxu0 %v1145
    %1182 = vmatprep.subr.mxu0 %v1149
    %1183 = vmatpush1.msra.mxu0 %v1148
    %1184 = vmatprep.subr.mxu0 %v1152
    %1185 = vmatpush1.msra.mxu0 %v1151
    %1186 = vmatprep.subr.mxu0 0.0
    %1187 = vmatpush1.msra.mxu0 0.0
    %1188 = vmatprep.subr.mxu0 0.0
    %1189 = vmatpush1.msra.mxu0 0.0
    %1190 = vmatprep.subr.mxu0 0.0
    %1191 = vmatpush1.msra.mxu0 0.0
    %1192 = vmatprep.subr.mxu0 0.0
    %1193 = vmatpush1.msra.mxu0 0.0
    %1194 = vmatprep.subr.mxu0 0.0
    %1195 = vmatpush1.msra.mxu0 0.0
    %1196 = vmatprep.subr.mxu0 0.0
    %1197 = vmatpush1.msra.mxu0 0.0
    %1198 = vmatprep.subr.mxu0 0.0
    %1199 = vmatpush1.msra.mxu0 0.0
    %1200 = vmatprep.subr.mxu0 0.0
    %1201 = vmatpush1.msra.mxu0 0.0
    %1202 = vmatprep.subr.mxu0 0.0
    %1203 = vmatpush1.msra.mxu0 0.0
    %1204 = vmatprep.subr.mxu0 0.0
    %1205 = vmatpush1.msra.mxu0 0.0
    %1206 = vmatprep.subr.mxu0 0.0
    %1207 = vmatpush1.msra.mxu0 0.0
    %1208 = vmatprep.subr.mxu0 0.0
    %1209 = vmatpush1.msra.mxu0 0.0
    %1210 = vmatprep.subr.mxu0 0.0
    %1211 = vmatpush1.msra.mxu0 0.0
    %1212 = vmatprep.subr.mxu0 0.0
    %1213 = vmatpush1.msra.mxu0 0.0
    %1214 = vmatprep.subr.mxu0 0.0
    %1215 = vmatpush1.msra.mxu0 0.0
    %1216 = vmatprep.subr.mxu0 0.0
    %1217 = vmatpush1.msra.mxu0 0.0
    %1218 = vmatprep.mubr.f32.mxu0 0.0
    %1219 = vmatmul.mubr.f32.gmra.mrb[0].mxu0 %v698
    %v1220 = vpop.f32.mrb[0].mxu0
    %v1221 = vadd.f32 %v525, %v1220
    %v1222 = vpop.f32.mrb[0].mxu0
    %v1223 = vadd.f32 %v529, %v1222
    %1224 = vdwg.mxu0
    %1225 = vmatprep.subr.mxu0 0.0
    %1226 = vmatpush1.msra.mxu0 %v1108
    %1227 = vmatprep.subr.mxu0 0.0
    %1228 = vmatpush1.msra.mxu0 %v1111
    %1229 = vmatprep.subr.mxu0 0.0
    %1230 = vmatpush1.msra.mxu0 %v1114
    %1231 = vmatprep.subr.mxu0 0.0
    %1232 = vmatpush1.msra.mxu0 %v1117
    %1233 = vmatprep.subr.mxu0 0.0
    %1234 = vmatpush1.msra.mxu0 %v1120
    %1235 = vmatprep.subr.mxu0 0.0
    %1236 = vmatpush1.msra.mxu0 %v1123
    %1237 = vmatprep.subr.mxu0 0.0
    %1238 = vmatpush1.msra.mxu0 %v1126
    %1239 = vmatprep.subr.mxu0 0.0
    %1240 = vmatpush1.msra.mxu0 %v1129
    %1241 = vmatprep.subr.mxu0 0.0
    %1242 = vmatpush1.msra.mxu0 %v1132
    %1243 = vmatprep.subr.mxu0 0.0
    %1244 = vmatpush1.msra.mxu0 %v1135
    %1245 = vmatprep.subr.mxu0 0.0
    %1246 = vmatpush1.msra.mxu0 %v1138
    %1247 = vmatprep.subr.mxu0 0.0
    %1248 = vmatpush1.msra.mxu0 %v1141
    %1249 = vmatprep.subr.mxu0 0.0
    %1250 = vmatpush1.msra.mxu0 %v1144
    %1251 = vmatprep.subr.mxu0 0.0
    %1252 = vmatpush1.msra.mxu0 %v1147
    %1253 = vmatprep.subr.mxu0 0.0
    %1254 = vmatpush1.msra.mxu0 %v1150
    %1255 = vmatprep.subr.mxu0 0.0
    %1256 = vmatpush1.msra.mxu0 %v1153
    %1257 = vmatprep.subr.mxu0 0.0
    %1258 = vmatpush1.msra.mxu0 0.0
    %1259 = vmatprep.subr.mxu0 0.0
    %1260 = vmatpush1.msra.mxu0 0.0
    %1261 = vmatprep.subr.mxu0 0.0
    %1262 = vmatpush1.msra.mxu0 0.0
    %1263 = vmatprep.subr.mxu0 0.0
    %1264 = vmatpush1.msra.mxu0 0.0
    %1265 = vmatprep.subr.mxu0 0.0
    %1266 = vmatpush1.msra.mxu0 0.0
    %1267 = vmatprep.subr.mxu0 0.0
    %1268 = vmatpush1.msra.mxu0 0.0
    %1269 = vmatprep.subr.mxu0 0.0
    %1270 = vmatpush1.msra.mxu0 0.0
    %1271 = vmatprep.subr.mxu0 0.0
    %1272 = vmatpush1.msra.mxu0 0.0
    %1273 = vmatprep.subr.mxu0 0.0
    %1274 = vmatpush1.msra.mxu0 0.0
    %1275 = vmatprep.subr.mxu0 0.0
    %1276 = vmatpush1.msra.mxu0 0.0
    %1277 = vmatprep.subr.mxu0 0.0
    %1278 = vmatpush1.msra.mxu0 0.0
    %1279 = vmatprep.subr.mxu0 0.0
    %1280 = vmatpush1.msra.mxu0 0.0
    %1281 = vmatprep.subr.mxu0 0.0
    %1282 = vmatpush1.msra.mxu0 0.0
    %1283 = vmatprep.subr.mxu0 0.0
    %1284 = vmatpush1.msra.mxu0 0.0
    %1285 = vmatprep.subr.mxu0 0.0
    %1286 = vmatpush1.msra.mxu0 0.0
    %1287 = vmatprep.subr.mxu0 0.0
    %1288 = vmatpush1.msra.mxu0 0.0
    %1289 = vmatprep.mubr.f32.mxu0 0.0
    %1290 = vmatmul.mubr.f32.gmra.mrb[0].mxu0 %v698
    %v1291 = vpop.f32.mrb[0].mxu0
    %v1292 = vadd.f32 %v533, %v1291
    %v1293 = vpop.f32.mrb[0].mxu0
    %1294 = vdwg.mxu0
    %v1295 = vadd.f32 %v1032, %v1221
    %v1296 = vxor.u32 %v1295, 2147483648
    %v1297 = vmul.f32 %v1296, 1.442695
    %v1298 = vpow.pop %v1297
    %v1299 = vadd.f32 %v1298, 1.0
    %v1300 = vrcp.pop %v1299
    %v1301 = vmul.f32 1.0, %v1300
    %v1302 = vadd.f32 %v1034, %v1223
    %v1303 = vxor.u32 %v1302, 2147483648
    %v1304 = vmul.f32 %v1303, 1.442695
    %v1305 = vpow.pop %v1304
    %v1306 = vadd.f32 %v1305, 1.0
    %v1307 = vrcp.pop %v1306
    %v1308 = vmul.f32 1.0, %v1307
    %v1309 = vmul.f32 %v1301, %v1292
    %v1310 = vadd.f32 %v1103, %v1309
    %v1311 = vtanh.pop %v1310
    %v1312 = vsub.f32 1.0, %v1308
    %v1313 = vmul.f32 %v1312, %v1311
    %v1314 = vmul.f32 %v1308, %v698
    %v1315 = vadd.f32 %v1313, %v1314
    %s1316 = scalar_lea.vmem %s6, 2
    %1317 = vst [vmem:[%s1316] sm:$0x3] %v1315
    %s1318 = scalar_lea.vmem %s0, 12
    %v1319 = vld [vmem:[%s1318] sm:$0x3f]
    %v1320 = vld [vmem:[%s2] sm:$0xff]
    %v1321 = vld [vmem:[%s2 + $0x8] sm:$0xff]
    %v1322 = vld [vmem:[%s2 + $0x10] sm:$0xff]
    %v1323 = vld [vmem:[%s2 + $0x18] sm:$0xff]
    %v1324 = vld [vmem:[%s2 + $0x20] sm:$0xff]
    %v1325 = vld [vmem:[%s2 + $0x28] sm:$0xff]
    %v1326 = vld [vmem:[%s2 + $0x30] sm:$0xff]
    %v1327 = vld [vmem:[%s2 + $0x38] sm:$0xff]
    %v1328 = vld [vmem:[%s2 + $0x40] sm:$0xff]
    %v1329 = vld [vmem:[%s2 + $0x48] sm:$0xff]
    %v1330 = vld [vmem:[%s2 + $0x50] sm:$0xff]
    %v1331 = vld [vmem:[%s2 + $0x58] sm:$0xff]
    %v1332 = vld [vmem:[%s2 + $0x60] sm:$0xff]
    %v1333 = vld [vmem:[%s2 + $0x68] sm:$0xff]
    %v1334 = vld [vmem:[%s2 + $0x70] sm:$0xff]
    %v1335 = vld [vmem:[%s2 + $0x78] sm:$0xff]
    %v1336 = vld [vmem:[%s2 + $0x80] sm:$0xff]
    %v1337 = vld [vmem:[%s2 + $0x88] sm:$0xff]
    %v1338 = vld [vmem:[%s2 + $0x90] sm:$0xff]
    %v1339 = vld [vmem:[%s2 + $0x98] sm:$0xff]
    %v1340 = vld [vmem:[%s2 + $0xa0] sm:$0xff]
    %v1341 = vld [vmem:[%s2 + $0xa8] sm:$0xff]
    %v1342 = vld [vmem:[%s2 + $0xb0] sm:$0xff]
    %v1343 = vld [vmem:[%s2 + $0xb8] sm:$0xff]
    %v1344 = vld [vmem:[%s2 + $0xc0] sm:$0xff]
    %v1345 = vld [vmem:[%s2 + $0xc8] sm:$0xff]
    %v1346 = vld [vmem:[%s2 + $0xd0] sm:$0xff]
    %v1347 = vld [vmem:[%s2 + $0xd8] sm:$0xff]
    %v1348 = vld [vmem:[%s2 + $0xe0] sm:$0xff]
    %v1349 = vld [vmem:[%s2 + $0xe8] sm:$0xff]
    %v1350 = vld [vmem:[%s2 + $0xf0] sm:$0xff]
    %v1351 = vld [vmem:[%s2 + $0xf8] sm:$0xff]
    %v1352 = vld [vmem:[%s2 + $0x100] sm:$0xff]
    %v1353 = vld [vmem:[%s2 + $0x108] sm:$0xff]
    %v1354 = vld [vmem:[%s2 + $0x110] sm:$0xff]
    %v1355 = vld [vmem:[%s2 + $0x118] sm:$0xff]
    %v1356 = vld [vmem:[%s2 + $0x120] sm:$0xff]
    %v1357 = vld [vmem:[%s2 + $0x128] sm:$0xff]
    %v1358 = vld [vmem:[%s2 + $0x130] sm:$0xff]
    %v1359 = vld [vmem:[%s2 + $0x138] sm:$0xff]
    %v1360 = vld [vmem:[%s2 + $0x140] sm:$0xff]
    %v1361 = vld [vmem:[%s2 + $0x148] sm:$0xff]
    %v1362 = vld [vmem:[%s2 + $0x150] sm:$0xff]
    %v1363 = vld [vmem:[%s2 + $0x158] sm:$0xff]
    %v1364 = vld [vmem:[%s2 + $0x160] sm:$0xff]
    %v1365 = vld [vmem:[%s2 + $0x168] sm:$0xff]
    %v1366 = vld [vmem:[%s2 + $0x170] sm:$0xff]
    %v1367 = vld [vmem:[%s2 + $0x178] sm:$0xff]
    %1368 = vmatprep.subr.mxu0 %v1321
    %1369 = vmatpush1.msra.mxu0 %v1320
    %1370 = vmatprep.subr.mxu0 %v1324
    %1371 = vmatpush1.msra.mxu0 %v1323
    %1372 = vmatprep.subr.mxu0 %v1327
    %1373 = vmatpush1.msra.mxu0 %v1326
    %1374 = vmatprep.subr.mxu0 %v1330
    %1375 = vmatpush1.msra.mxu0 %v1329
    %1376 = vmatprep.subr.mxu0 %v1333
    %1377 = vmatpush1.msra.mxu0 %v1332
    %1378 = vmatprep.subr.mxu0 %v1336
    %1379 = vmatpush1.msra.mxu0 %v1335
    %1380 = vmatprep.subr.mxu0 %v1339
    %1381 = vmatpush1.msra.mxu0 %v1338
    %1382 = vmatprep.subr.mxu0 %v1342
    %1383 = vmatpush1.msra.mxu0 %v1341
    %1384 = vmatprep.subr.mxu0 %v1345
    %1385 = vmatpush1.msra.mxu0 %v1344
    %1386 = vmatprep.subr.mxu0 %v1348
    %1387 = vmatpush1.msra.mxu0 %v1347
    %1388 = vmatprep.subr.mxu0 %v1351
    %1389 = vmatpush1.msra.mxu0 %v1350
    %1390 = vmatprep.subr.mxu0 %v1354
    %1391 = vmatpush1.msra.mxu0 %v1353
    %1392 = vmatprep.subr.mxu0 %v1357
    %1393 = vmatpush1.msra.mxu0 %v1356
    %1394 = vmatprep.subr.mxu0 %v1360
    %1395 = vmatpush1.msra.mxu0 %v1359
    %1396 = vmatprep.subr.mxu0 %v1363
    %1397 = vmatpush1.msra.mxu0 %v1362
    %1398 = vmatprep.subr.mxu0 %v1366
    %1399 = vmatpush1.msra.mxu0 %v1365
    %1400 = vmatprep.subr.mxu0 0.0
    %1401 = vmatpush1.msra.mxu0 0.0
    %1402 = vmatprep.subr.mxu0 0.0
    %1403 = vmatpush1.msra.mxu0 0.0
    %1404 = vmatprep.subr.mxu0 0.0
    %1405 = vmatpush1.msra.mxu0 0.0
    %1406 = vmatprep.subr.mxu0 0.0
    %1407 = vmatpush1.msra.mxu0 0.0
    %1408 = vmatprep.subr.mxu0 0.0
    %1409 = vmatpush1.msra.mxu0 0.0
    %1410 = vmatprep.subr.mxu0 0.0
    %1411 = vmatpush1.msra.mxu0 0.0
    %1412 = vmatprep.subr.mxu0 0.0
    %1413 = vmatpush1.msra.mxu0 0.0
    %1414 = vmatprep.subr.mxu0 0.0
    %1415 = vmatpush1.msra.mxu0 0.0
    %1416 = vmatprep.subr.mxu0 0.0
    %1417 = vmatpush1.msra.mxu0 0.0
    %1418 = vmatprep.subr.mxu0 0.0
    %1419 = vmatpush1.msra.mxu0 0.0
    %1420 = vmatprep.subr.mxu0 0.0
    %1421 = vmatpush1.msra.mxu0 0.0
    %1422 = vmatprep.subr.mxu0 0.0
    %1423 = vmatpush1.msra.mxu0 0.0
    %1424 = vmatprep.subr.mxu0 0.0
    %1425 = vmatpush1.msra.mxu0 0.0
    %1426 = vmatprep.subr.mxu0 0.0
    %1427 = vmatpush1.msra.mxu0 0.0
    %1428 = vmatprep.subr.mxu0 0.0
    %1429 = vmatpush1.msra.mxu0 0.0
    %1430 = vmatprep.subr.mxu0 0.0
    %1431 = vmatpush1.msra.mxu0 0.0
    %1432 = vmatprep.mubr.f32.mxu0 0.0
    %1433 = vmatmul.mubr.f32.gmra.mrb[0].mxu0 %v916
    %v1434 = vpop.f32.mrb[0].mxu0
    %v1435 = vadd.f32 %v87, %v1434
    %v1436 = vpop.f32.mrb[0].mxu0
    %v1437 = vadd.f32 %v91, %v1436
    %1438 = vdwg.mxu0
    %1439 = vmatprep.subr.mxu0 0.0
    %1440 = vmatpush1.msra.mxu0 %v1322
    %1441 = vmatprep.subr.mxu0 0.0
    %1442 = vmatpush1.msra.mxu0 %v1325
    %1443 = vmatprep.subr.mxu0 0.0
    %1444 = vmatpush1.msra.mxu0 %v1328
    %1445 = vmatprep.subr.mxu0 0.0
    %1446 = vmatpush1.msra.mxu0 %v1331
    %1447 = vmatprep.subr.mxu0 0.0
    %1448 = vmatpush1.msra.mxu0 %v1334
    %1449 = vmatprep.subr.mxu0 0.0
    %1450 = vmatpush1.msra.mxu0 %v1337
    %1451 = vmatprep.subr.mxu0 0.0
    %1452 = vmatpush1.msra.mxu0 %v1340
    %1453 = vmatprep.subr.mxu0 0.0
    %1454 = vmatpush1.msra.mxu0 %v1343
    %1455 = vmatprep.subr.mxu0 0.0
    %1456 = vmatpush1.msra.mxu0 %v1346
    %1457 = vmatprep.subr.mxu0 0.0
    %1458 = vmatpush1.msra.mxu0 %v1349
    %1459 = vmatprep.subr.mxu0 0.0
    %1460 = vmatpush1.msra.mxu0 %v1352
    %1461 = vmatprep.subr.mxu0 0.0
    %1462 = vmatpush1.msra.mxu0 %v1355
    %1463 = vmatprep.subr.mxu0 0.0
    %1464 = vmatpush1.msra.mxu0 %v1358
    %1465 = vmatprep.subr.mxu0 0.0
    %1466 = vmatpush1.msra.mxu0 %v1361
    %1467 = vmatprep.subr.mxu0 0.0
    %1468 = vmatpush1.msra.mxu0 %v1364
    %1469 = vmatprep.subr.mxu0 0.0
    %1470 = vmatpush1.msra.mxu0 %v1367
    %1471 = vmatprep.subr.mxu0 0.0
    %1472 = vmatpush1.msra.mxu0 0.0
    %1473 = vmatprep.subr.mxu0 0.0
    %1474 = vmatpush1.msra.mxu0 0.0
    %1475 = vmatprep.subr.mxu0 0.0
    %1476 = vmatpush1.msra.mxu0 0.0
    %1477 = vmatprep.subr.mxu0 0.0
    %1478 = vmatpush1.msra.mxu0 0.0
    %1479 = vmatprep.subr.mxu0 0.0
    %1480 = vmatpush1.msra.mxu0 0.0
    %1481 = vmatprep.subr.mxu0 0.0
    %1482 = vmatpush1.msra.mxu0 0.0
    %1483 = vmatprep.subr.mxu0 0.0
    %1484 = vmatpush1.msra.mxu0 0.0
    %1485 = vmatprep.subr.mxu0 0.0
    %1486 = vmatpush1.msra.mxu0 0.0
    %1487 = vmatprep.subr.mxu0 0.0
    %1488 = vmatpush1.msra.mxu0 0.0
    %1489 = vmatprep.subr.mxu0 0.0
    %1490 = vmatpush1.msra.mxu0 0.0
    %1491 = vmatprep.subr.mxu0 0.0
    %1492 = vmatpush1.msra.mxu0 0.0
    %1493 = vmatprep.subr.mxu0 0.0
    %1494 = vmatpush1.msra.mxu0 0.0
    %1495 = vmatprep.subr.mxu0 0.0
    %1496 = vmatpush1.msra.mxu0 0.0
    %1497 = vmatprep.subr.mxu0 0.0
    %1498 = vmatpush1.msra.mxu0 0.0
    %1499 = vmatprep.subr.mxu0 0.0
    %1500 = vmatpush1.msra.mxu0 0.0
    %1501 = vmatprep.subr.mxu0 0.0
    %1502 = vmatpush1.msra.mxu0 0.0
    %1503 = vmatprep.mubr.f32.mxu0 0.0
    %1504 = vmatmul.mubr.f32.gmra.mrb[0].mxu0 %v916
    %v1505 = vpop.f32.mrb[0].mxu0
    %v1506 = vadd.f32 %v95, %v1505
    %v1507 = vpop.f32.mrb[0].mxu0
    %1508 = vdwg.mxu0
    %v1509 = vadd.f32 %v1319, %v1435
    %v1510 = vxor.u32 %v1509, 2147483648
    %v1511 = vmul.f32 %v1510, 1.442695
    %v1512 = vpow.pop %v1511
    %v1513 = vadd.f32 %v1512, 1.0
    %v1514 = vrcp.pop %v1513
    %v1515 = vmul.f32 1.0, %v1514
    %v1517 = vrot.slane %v1319, 2
    %v1519 = vadd.f32 %v1517, %v1437
    %v1520 = vxor.u32 %v1519, 2147483648
    %v1521 = vmul.f32 %v1520, 1.442695
    %v1522 = vpow.pop %v1521
    %v1523 = vadd.f32 %v1522, 1.0
    %v1524 = vrcp.pop %v1523
    %v1525 = vmul.f32 1.0, %v1524
    %v1526 = vmul.f32 %v1515, %v1506
    %v1527 = vrot.slane %v1319, 4
    %v1529 = vadd.f32 %v1527, %v1526
    %v1530 = vtanh.pop %v1529
    %v1531 = vsub.f32 1.0, %v1525
    %v1532 = vmul.f32 %v1531, %v1530
    %v1533 = vmul.f32 %v1525, %v916
    %v1534 = vadd.f32 %v1532, %v1533
    %v1535 = vld [vmem:[%s266] sm:$0xff]
    %v1536 = vld [vmem:[%s266 + $0x8] sm:$0xff]
    %v1537 = vld [vmem:[%s266 + $0x10] sm:$0xff]
    %v1538 = vld [vmem:[%s266 + $0x18] sm:$0xff]
    %v1539 = vld [vmem:[%s266 + $0x20] sm:$0xff]
    %v1540 = vld [vmem:[%s266 + $0x28] sm:$0xff]
    %v1541 = vld [vmem:[%s266 + $0x30] sm:$0xff]
    %v1542 = vld [vmem:[%s266 + $0x38] sm:$0xff]
    %v1543 = vld [vmem:[%s266 + $0x40] sm:$0xff]
    %v1544 = vld [vmem:[%s266 + $0x48] sm:$0xff]
    %v1545 = vld [vmem:[%s266 + $0x50] sm:$0xff]
    %v1546 = vld [vmem:[%s266 + $0x58] sm:$0xff]
    %v1547 = vld [vmem:[%s266 + $0x60] sm:$0xff]
    %v1548 = vld [vmem:[%s266 + $0x68] sm:$0xff]
    %v1549 = vld [vmem:[%s266 + $0x70] sm:$0xff]
    %v1550 = vld [vmem:[%s266 + $0x78] sm:$0xff]
    %v1551 = vld [vmem:[%s266 + $0x80] sm:$0xff]
    %v1552 = vld [vmem:[%s266 + $0x88] sm:$0xff]
    %v1553 = vld [vmem:[%s266 + $0x90] sm:$0xff]
    %v1554 = vld [vmem:[%s266 + $0x98] sm:$0xff]
    %v1555 = vld [vmem:[%s266 + $0xa0] sm:$0xff]
    %v1556 = vld [vmem:[%s266 + $0xa8] sm:$0xff]
    %v1557 = vld [vmem:[%s266 + $0xb0] sm:$0xff]
    %v1558 = vld [vmem:[%s266 + $0xb8] sm:$0xff]
    %v1559 = vld [vmem:[%s266 + $0xc0] sm:$0xff]
    %v1560 = vld [vmem:[%s266 + $0xc8] sm:$0xff]
    %v1561 = vld [vmem:[%s266 + $0xd0] sm:$0xff]
    %v1562 = vld [vmem:[%s266 + $0xd8] sm:$0xff]
    %v1563 = vld [vmem:[%s266 + $0xe0] sm:$0xff]
    %v1564 = vld [vmem:[%s266 + $0xe8] sm:$0xff]
    %v1565 = vld [vmem:[%s266 + $0xf0] sm:$0xff]
    %v1566 = vld [vmem:[%s266 + $0xf8] sm:$0xff]
    %v1567 = vld [vmem:[%s266 + $0x100] sm:$0xff]
    %v1568 = vld [vmem:[%s266 + $0x108] sm:$0xff]
    %v1569 = vld [vmem:[%s266 + $0x110] sm:$0xff]
    %v1570 = vld [vmem:[%s266 + $0x118] sm:$0xff]
    %v1571 = vld [vmem:[%s266 + $0x120] sm:$0xff]
    %v1572 = vld [vmem:[%s266 + $0x128] sm:$0xff]
    %v1573 = vld [vmem:[%s266 + $0x130] sm:$0xff]
    %v1574 = vld [vmem:[%s266 + $0x138] sm:$0xff]
    %v1575 = vld [vmem:[%s266 + $0x140] sm:$0xff]
    %v1576 = vld [vmem:[%s266 + $0x148] sm:$0xff]
    %v1577 = vld [vmem:[%s266 + $0x150] sm:$0xff]
    %v1578 = vld [vmem:[%s266 + $0x158] sm:$0xff]
    %v1579 = vld [vmem:[%s266 + $0x160] sm:$0xff]
    %v1580 = vld [vmem:[%s266 + $0x168] sm:$0xff]
    %v1581 = vld [vmem:[%s266 + $0x170] sm:$0xff]
    %v1582 = vld [vmem:[%s266 + $0x178] sm:$0xff]
    %1583 = vmatprep.subr.mxu0 %v1536
    %1584 = vmatpush1.msra.mxu0 %v1535
    %1585 = vmatprep.subr.mxu0 %v1539
    %1586 = vmatpush1.msra.mxu0 %v1538
    %1587 = vmatprep.subr.mxu0 %v1542
    %1588 = vmatpush1.msra.mxu0 %v1541
    %1589 = vmatprep.subr.mxu0 %v1545
    %1590 = vmatpush1.msra.mxu0 %v1544
    %1591 = vmatprep.subr.mxu0 %v1548
    %1592 = vmatpush1.msra.mxu0 %v1547
    %1593 = vmatprep.subr.mxu0 %v1551
    %1594 = vmatpush1.msra.mxu0 %v1550
    %1595 = vmatprep.subr.mxu0 %v1554
    %1596 = vmatpush1.msra.mxu0 %v1553
    %1597 = vmatprep.subr.mxu0 %v1557
    %1598 = vmatpush1.msra.mxu0 %v1556
    %1599 = vmatprep.subr.mxu0 %v1560
    %1600 = vmatpush1.msra.mxu0 %v1559
    %1601 = vmatprep.subr.mxu0 %v1563
    %1602 = vmatpush1.msra.mxu0 %v1562
    %1603 = vmatprep.subr.mxu0 %v1566
    %1604 = vmatpush1.msra.mxu0 %v1565
    %1605 = vmatprep.subr.mxu0 %v1569
    %1606 = vmatpush1.msra.mxu0 %v1568
    %1607 = vmatprep.subr.mxu0 %v1572
    %1608 = vmatpush1.msra.mxu0 %v1571
    %1609 = vmatprep.subr.mxu0 %v1575
    %1610 = vmatpush1.msra.mxu0 %v1574
    %1611 = vmatprep.subr.mxu0 %v1578
    %1612 = vmatpush1.msra.mxu0 %v1577
    %1613 = vmatprep.subr.mxu0 %v1581
    %1614 = vmatpush1.msra.mxu0 %v1580
    %1615 = vmatprep.subr.mxu0 0.0
    %1616 = vmatpush1.msra.mxu0 0.0
    %1617 = vmatprep.subr.mxu0 0.0
    %1618 = vmatpush1.msra.mxu0 0.0
    %1619 = vmatprep.subr.mxu0 0.0
    %1620 = vmatpush1.msra.mxu0 0.0
    %1621 = vmatprep.subr.mxu0 0.0
    %1622 = vmatpush1.msra.mxu0 0.0
    %1623 = vmatprep.subr.mxu0 0.0
    %1624 = vmatpush1.msra.mxu0 0.0
    %1625 = vmatprep.subr.mxu0 0.0
    %1626 = vmatpush1.msra.mxu0 0.0
    %1627 = vmatprep.subr.mxu0 0.0
    %1628 = vmatpush1.msra.mxu0 0.0
    %1629 = vmatprep.subr.mxu0 0.0
    %1630 = vmatpush1.msra.mxu0 0.0
    %1631 = vmatprep.subr.mxu0 0.0
    %1632 = vmatpush1.msra.mxu0 0.0
    %1633 = vmatprep.subr.mxu0 0.0
    %1634 = vmatpush1.msra.mxu0 0.0
    %1635 = vmatprep.subr.mxu0 0.0
    %1636 = vmatpush1.msra.mxu0 0.0
    %1637 = vmatprep.subr.mxu0 0.0
    %1638 = vmatpush1.msra.mxu0 0.0
    %1639 = vmatprep.subr.mxu0 0.0
    %1640 = vmatpush1.msra.mxu0 0.0
    %1641 = vmatprep.subr.mxu0 0.0
    %1642 = vmatpush1.msra.mxu0 0.0
    %1643 = vmatprep.subr.mxu0 0.0
    %1644 = vmatpush1.msra.mxu0 0.0
    %1645 = vmatprep.subr.mxu0 0.0
    %1646 = vmatpush1.msra.mxu0 0.0
    %1647 = vmatprep.mubr.f32.mxu0 0.0
    %1648 = vmatmul.mubr.f32.gmra.mrb[0].mxu0 %v1534
    %v1649 = vpop.f32.mrb[0].mxu0
    %v1650 = vadd.f32 %v319, %v1649
    %v1651 = vpop.f32.mrb[0].mxu0
    %v1652 = vadd.f32 %v323, %v1651
    %1653 = vdwg.mxu0
    %1654 = vmatprep.subr.mxu0 0.0
    %1655 = vmatpush1.msra.mxu0 %v1537
    %1656 = vmatprep.subr.mxu0 0.0
    %1657 = vmatpush1.msra.mxu0 %v1540
    %1658 = vmatprep.subr.mxu0 0.0
    %1659 = vmatpush1.msra.mxu0 %v1543
    %1660 = vmatprep.subr.mxu0 0.0
    %1661 = vmatpush1.msra.mxu0 %v1546
    %1662 = vmatprep.subr.mxu0 0.0
    %1663 = vmatpush1.msra.mxu0 %v1549
    %1664 = vmatprep.subr.mxu0 0.0
    %1665 = vmatpush1.msra.mxu0 %v1552
    %1666 = vmatprep.subr.mxu0 0.0
    %1667 = vmatpush1.msra.mxu0 %v1555
    %1668 = vmatprep.subr.mxu0 0.0
    %1669 = vmatpush1.msra.mxu0 %v1558
    %1670 = vmatprep.subr.mxu0 0.0
    %1671 = vmatpush1.msra.mxu0 %v1561
    %1672 = vmatprep.subr.mxu0 0.0
    %1673 = vmatpush1.msra.mxu0 %v1564
    %1674 = vmatprep.subr.mxu0 0.0
    %1675 = vmatpush1.msra.mxu0 %v1567
    %1676 = vmatprep.subr.mxu0 0.0
    %1677 = vmatpush1.msra.mxu0 %v1570
    %1678 = vmatprep.subr.mxu0 0.0
    %1679 = vmatpush1.msra.mxu0 %v1573
    %1680 = vmatprep.subr.mxu0 0.0
    %1681 = vmatpush1.msra.mxu0 %v1576
    %1682 = vmatprep.subr.mxu0 0.0
    %1683 = vmatpush1.msra.mxu0 %v1579
    %1684 = vmatprep.subr.mxu0 0.0
    %1685 = vmatpush1.msra.mxu0 %v1582
    %1686 = vmatprep.subr.mxu0 0.0
    %1687 = vmatpush1.msra.mxu0 0.0
    %1688 = vmatprep.subr.mxu0 0.0
    %1689 = vmatpush1.msra.mxu0 0.0
    %1690 = vmatprep.subr.mxu0 0.0
    %1691 = vmatpush1.msra.mxu0 0.0
    %1692 = vmatprep.subr.mxu0 0.0
    %1693 = vmatpush1.msra.mxu0 0.0
    %1694 = vmatprep.subr.mxu0 0.0
    %1695 = vmatpush1.msra.mxu0 0.0
    %1696 = vmatprep.subr.mxu0 0.0
    %1697 = vmatpush1.msra.mxu0 0.0
    %1698 = vmatprep.subr.mxu0 0.0
    %1699 = vmatpush1.msra.mxu0 0.0
    %1700 = vmatprep.subr.mxu0 0.0
    %1701 = vmatpush1.msra.mxu0 0.0
    %1702 = vmatprep.subr.mxu0 0.0
    %1703 = vmatpush1.msra.mxu0 0.0
    %1704 = vmatprep.subr.mxu0 0.0
    %1705 = vmatpush1.msra.mxu0 0.0
    %1706 = vmatprep.subr.mxu0 0.0
    %1707 = vmatpush1.msra.mxu0 0.0
    %1708 = vmatprep.subr.mxu0 0.0
    %1709 = vmatpush1.msra.mxu0 0.0
    %1710 = vmatprep.subr.mxu0 0.0
    %1711 = vmatpush1.msra.mxu0 0.0
    %1712 = vmatprep.subr.mxu0 0.0
    %1713 = vmatpush1.msra.mxu0 0.0
    %1714 = vmatprep.subr.mxu0 0.0
    %1715 = vmatpush1.msra.mxu0 0.0
    %1716 = vmatprep.subr.mxu0 0.0
    %1717 = vmatpush1.msra.mxu0 0.0
    %1718 = vmatprep.mubr.f32.mxu0 0.0
    %1719 = vmatmul.mubr.f32.gmra.mrb[0].mxu0 %v1534
    %v1720 = vpop.f32.mrb[0].mxu0
    %v1721 = vadd.f32 %v327, %v1720
    %v1722 = vpop.f32.mrb[0].mxu0
    %1723 = vdwg.mxu0
    %v1724 = vld [vmem:[%s472] sm:$0xff]
    %v1725 = vld [vmem:[%s472 + $0x8] sm:$0xff]
    %v1726 = vld [vmem:[%s472 + $0x10] sm:$0xff]
    %v1727 = vld [vmem:[%s472 + $0x18] sm:$0xff]
    %v1728 = vld [vmem:[%s472 + $0x20] sm:$0xff]
    %v1729 = vld [vmem:[%s472 + $0x28] sm:$0xff]
    %v1730 = vld [vmem:[%s472 + $0x30] sm:$0xff]
    %v1731 = vld [vmem:[%s472 + $0x38] sm:$0xff]
    %v1732 = vld [vmem:[%s472 + $0x40] sm:$0xff]
    %v1733 = vld [vmem:[%s472 + $0x48] sm:$0xff]
    %v1734 = vld [vmem:[%s472 + $0x50] sm:$0xff]
    %v1735 = vld [vmem:[%s472 + $0x58] sm:$0xff]
    %v1736 = vld [vmem:[%s472 + $0x60] sm:$0xff]
    %v1737 = vld [vmem:[%s472 + $0x68] sm:$0xff]
    %v1738 = vld [vmem:[%s472 + $0x70] sm:$0xff]
    %v1739 = vld [vmem:[%s472 + $0x78] sm:$0xff]
    %v1740 = vld [vmem:[%s472 + $0x80] sm:$0xff]
    %v1741 = vld [vmem:[%s472 + $0x88] sm:$0xff]
    %v1742 = vld [vmem:[%s472 + $0x90] sm:$0xff]
    %v1743 = vld [vmem:[%s472 + $0x98] sm:$0xff]
    %v1744 = vld [vmem:[%s472 + $0xa0] sm:$0xff]
    %v1745 = vld [vmem:[%s472 + $0xa8] sm:$0xff]
    %v1746 = vld [vmem:[%s472 + $0xb0] sm:$0xff]
    %v1747 = vld [vmem:[%s472 + $0xb8] sm:$0xff]
    %v1748 = vld [vmem:[%s472 + $0xc0] sm:$0xff]
    %v1749 = vld [vmem:[%s472 + $0xc8] sm:$0xff]
    %v1750 = vld [vmem:[%s472 + $0xd0] sm:$0xff]
    %v1751 = vld [vmem:[%s472 + $0xd8] sm:$0xff]
    %v1752 = vld [vmem:[%s472 + $0xe0] sm:$0xff]
    %v1753 = vld [vmem:[%s472 + $0xe8] sm:$0xff]
    %v1754 = vld [vmem:[%s472 + $0xf0] sm:$0xff]
    %v1755 = vld [vmem:[%s472 + $0xf8] sm:$0xff]
    %v1756 = vld [vmem:[%s472 + $0x100] sm:$0xff]
    %v1757 = vld [vmem:[%s472 + $0x108] sm:$0xff]
    %v1758 = vld [vmem:[%s472 + $0x110] sm:$0xff]
    %v1759 = vld [vmem:[%s472 + $0x118] sm:$0xff]
    %v1760 = vld [vmem:[%s472 + $0x120] sm:$0xff]
    %v1761 = vld [vmem:[%s472 + $0x128] sm:$0xff]
    %v1762 = vld [vmem:[%s472 + $0x130] sm:$0xff]
    %v1763 = vld [vmem:[%s472 + $0x138] sm:$0xff]
    %v1764 = vld [vmem:[%s472 + $0x140] sm:$0xff]
    %v1765 = vld [vmem:[%s472 + $0x148] sm:$0xff]
    %v1766 = vld [vmem:[%s472 + $0x150] sm:$0xff]
    %v1767 = vld [vmem:[%s472 + $0x158] sm:$0xff]
    %v1768 = vld [vmem:[%s472 + $0x160] sm:$0xff]
    %v1769 = vld [vmem:[%s472 + $0x168] sm:$0xff]
    %v1770 = vld [vmem:[%s472 + $0x170] sm:$0xff]
    %v1771 = vld [vmem:[%s472 + $0x178] sm:$0xff]
    %1772 = vmatprep.subr.mxu0 %v1725
    %1773 = vmatpush1.msra.mxu0 %v1724
    %1774 = vmatprep.subr.mxu0 %v1728
    %1775 = vmatpush1.msra.mxu0 %v1727
    %1776 = vmatprep.subr.mxu0 %v1731
    %1777 = vmatpush1.msra.mxu0 %v1730
    %1778 = vmatprep.subr.mxu0 %v1734
    %1779 = vmatpush1.msra.mxu0 %v1733
    %1780 = vmatprep.subr.mxu0 %v1737
    %1781 = vmatpush1.msra.mxu0 %v1736
    %1782 = vmatprep.subr.mxu0 %v1740
    %1783 = vmatpush1.msra.mxu0 %v1739
    %1784 = vmatprep.subr.mxu0 %v1743
    %1785 = vmatpush1.msra.mxu0 %v1742
    %1786 = vmatprep.subr.mxu0 %v1746
    %1787 = vmatpush1.msra.mxu0 %v1745
    %1788 = vmatprep.subr.mxu0 %v1749
    %1789 = vmatpush1.msra.mxu0 %v1748
    %1790 = vmatprep.subr.mxu0 %v1752
    %1791 = vmatpush1.msra.mxu0 %v1751
    %1792 = vmatprep.subr.mxu0 %v1755
    %1793 = vmatpush1.msra.mxu0 %v1754
    %1794 = vmatprep.subr.mxu0 %v1758
    %1795 = vmatpush1.msra.mxu0 %v1757
    %1796 = vmatprep.subr.mxu0 %v1761
    %1797 = vmatpush1.msra.mxu0 %v1760
    %1798 = vmatprep.subr.mxu0 %v1764
    %1799 = vmatpush1.msra.mxu0 %v1763
    %1800 = vmatprep.subr.mxu0 %v1767
    %1801 = vmatpush1.msra.mxu0 %v1766
    %1802 = vmatprep.subr.mxu0 %v1770
    %1803 = vmatpush1.msra.mxu0 %v1769
    %1804 = vmatprep.subr.mxu0 0.0
    %1805 = vmatpush1.msra.mxu0 0.0
    %1806 = vmatprep.subr.mxu0 0.0
    %1807 = vmatpush1.msra.mxu0 0.0
    %1808 = vmatprep.subr.mxu0 0.0
    %1809 = vmatpush1.msra.mxu0 0.0
    %1810 = vmatprep.subr.mxu0 0.0
    %1811 = vmatpush1.msra.mxu0 0.0
    %1812 = vmatprep.subr.mxu0 0.0
    %1813 = vmatpush1.msra.mxu0 0.0
    %1814 = vmatprep.subr.mxu0 0.0
    %1815 = vmatpush1.msra.mxu0 0.0
    %1816 = vmatprep.subr.mxu0 0.0
    %1817 = vmatpush1.msra.mxu0 0.0
    %1818 = vmatprep.subr.mxu0 0.0
    %1819 = vmatpush1.msra.mxu0 0.0
    %1820 = vmatprep.subr.mxu0 0.0
    %1821 = vmatpush1.msra.mxu0 0.0
    %1822 = vmatprep.subr.mxu0 0.0
    %1823 = vmatpush1.msra.mxu0 0.0
    %1824 = vmatprep.subr.mxu0 0.0
    %1825 = vmatpush1.msra.mxu0 0.0
    %1826 = vmatprep.subr.mxu0 0.0
    %1827 = vmatpush1.msra.mxu0 0.0
    %1828 = vmatprep.subr.mxu0 0.0
    %1829 = vmatpush1.msra.mxu0 0.0
    %1830 = vmatprep.subr.mxu0 0.0
    %1831 = vmatpush1.msra.mxu0 0.0
    %1832 = vmatprep.subr.mxu0 0.0
    %1833 = vmatpush1.msra.mxu0 0.0
    %1834 = vmatprep.subr.mxu0 0.0
    %1835 = vmatpush1.msra.mxu0 0.0
    %1836 = vmatprep.mubr.f32.mxu0 0.0
    %1837 = vmatmul.mubr.f32.gmra.mrb[0].mxu0 %v1315
    %v1838 = vpop.f32.mrb[0].mxu0
    %v1839 = vadd.f32 %v525, %v1838
    %v1840 = vpop.f32.mrb[0].mxu0
    %v1841 = vadd.f32 %v529, %v1840
    %1842 = vdwg.mxu0
    %1843 = vmatprep.subr.mxu0 0.0
    %1844 = vmatpush1.msra.mxu0 %v1726
    %1845 = vmatprep.subr.mxu0 0.0
    %1846 = vmatpush1.msra.mxu0 %v1729
    %1847 = vmatprep.subr.mxu0 0.0
    %1848 = vmatpush1.msra.mxu0 %v1732
    %1849 = vmatprep.subr.mxu0 0.0
    %1850 = vmatpush1.msra.mxu0 %v1735
    %1851 = vmatprep.subr.mxu0 0.0
    %1852 = vmatpush1.msra.mxu0 %v1738
    %1853 = vmatprep.subr.mxu0 0.0
    %1854 = vmatpush1.msra.mxu0 %v1741
    %1855 = vmatprep.subr.mxu0 0.0
    %1856 = vmatpush1.msra.mxu0 %v1744
    %1857 = vmatprep.subr.mxu0 0.0
    %1858 = vmatpush1.msra.mxu0 %v1747
    %1859 = vmatprep.subr.mxu0 0.0
    %1860 = vmatpush1.msra.mxu0 %v1750
    %1861 = vmatprep.subr.mxu0 0.0
    %1862 = vmatpush1.msra.mxu0 %v1753
    %1863 = vmatprep.subr.mxu0 0.0
    %1864 = vmatpush1.msra.mxu0 %v1756
    %1865 = vmatprep.subr.mxu0 0.0
    %1866 = vmatpush1.msra.mxu0 %v1759
    %1867 = vmatprep.subr.mxu0 0.0
    %1868 = vmatpush1.msra.mxu0 %v1762
    %1869 = vmatprep.subr.mxu0 0.0
    %1870 = vmatpush1.msra.mxu0 %v1765
    %1871 = vmatprep.subr.mxu0 0.0
    %1872 = vmatpush1.msra.mxu0 %v1768
    %1873 = vmatprep.subr.mxu0 0.0
    %1874 = vmatpush1.msra.mxu0 %v1771
    %1875 = vmatprep.subr.mxu0 0.0
    %1876 = vmatpush1.msra.mxu0 0.0
    %1877 = vmatprep.subr.mxu0 0.0
    %1878 = vmatpush1.msra.mxu0 0.0
    %1879 = vmatprep.subr.mxu0 0.0
    %1880 = vmatpush1.msra.mxu0 0.0
    %1881 = vmatprep.subr.mxu0 0.0
    %1882 = vmatpush1.msra.mxu0 0.0
    %1883 = vmatprep.subr.mxu0 0.0
    %1884 = vmatpush1.msra.mxu0 0.0
    %1885 = vmatprep.subr.mxu0 0.0
    %1886 = vmatpush1.msra.mxu0 0.0
    %1887 = vmatprep.subr.mxu0 0.0
    %1888 = vmatpush1.msra.mxu0 0.0
    %1889 = vmatprep.subr.mxu0 0.0
    %1890 = vmatpush1.msra.mxu0 0.0
    %1891 = vmatprep.subr.mxu0 0.0
    %1892 = vmatpush1.msra.mxu0 0.0
    %1893 = vmatprep.subr.mxu0 0.0
    %1894 = vmatpush1.msra.mxu0 0.0
    %1895 = vmatprep.subr.mxu0 0.0
    %1896 = vmatpush1.msra.mxu0 0.0
    %1897 = vmatprep.subr.mxu0 0.0
    %1898 = vmatpush1.msra.mxu0 0.0
    %1899 = vmatprep.subr.mxu0 0.0
    %1900 = vmatpush1.msra.mxu0 0.0
    %1901 = vmatprep.subr.mxu0 0.0
    %1902 = vmatpush1.msra.mxu0 0.0
    %1903 = vmatprep.subr.mxu0 0.0
    %1904 = vmatpush1.msra.mxu0 0.0
    %1905 = vmatprep.subr.mxu0 0.0
    %1906 = vmatpush1.msra.mxu0 0.0
    %1907 = vmatprep.mubr.f32.mxu0 0.0
    %1908 = vmatmul.mubr.f32.gmra.mrb[0].mxu0 %v1315
    %v1909 = vpop.f32.mrb[0].mxu0
    %v1910 = vadd.f32 %v533, %v1909
    %v1911 = vpop.f32.mrb[0].mxu0
    %1912 = vdwg.mxu0
    %v1913 = vadd.f32 %v1650, %v1839
    %v1914 = vxor.u32 %v1913, 2147483648
    %v1915 = vmul.f32 %v1914, 1.442695
    %v1916 = vpow.pop %v1915
    %v1917 = vadd.f32 %v1916, 1.0
    %v1918 = vrcp.pop %v1917
    %v1919 = vmul.f32 1.0, %v1918
    %v1920 = vadd.f32 %v1652, %v1841
    %v1921 = vxor.u32 %v1920, 2147483648
    %v1922 = vmul.f32 %v1921, 1.442695
    %v1923 = vpow.pop %v1922
    %v1924 = vadd.f32 %v1923, 1.0
    %v1925 = vrcp.pop %v1924
    %v1926 = vmul.f32 1.0, %v1925
    %v1927 = vmul.f32 %v1919, %v1910
    %v1928 = vadd.f32 %v1721, %v1927
    %v1929 = vtanh.pop %v1928
    %v1930 = vsub.f32 1.0, %v1926
    %v1931 = vmul.f32 %v1930, %v1929
    %v1932 = vmul.f32 %v1926, %v1315
    %v1933 = vadd.f32 %v1931, %v1932
    %s1934 = scalar_lea.vmem %s6, 4
    %1935 = vst [vmem:[%s1934] sm:$0x3] %v1933
    %s1936 = scalar_lea.vmem %s0, 18
    %v1937 = vld [vmem:[%s1936] sm:$0x3f]
    %v1938 = vld [vmem:[%s2] sm:$0xff]
    %v1939 = vld [vmem:[%s2 + $0x8] sm:$0xff]
    %v1940 = vld [vmem:[%s2 + $0x10] sm:$0xff]
    %v1941 = vld [vmem:[%s2 + $0x18] sm:$0xff]
    %v1942 = vld [vmem:[%s2 + $0x20] sm:$0xff]
    %v1943 = vld [vmem:[%s2 + $0x28] sm:$0xff]
    %v1944 = vld [vmem:[%s2 + $0x30] sm:$0xff]
    %v1945 = vld [vmem:[%s2 + $0x38] sm:$0xff]
    %v1946 = vld [vmem:[%s2 + $0x40] sm:$0xff]
    %v1947 = vld [vmem:[%s2 + $0x48] sm:$0xff]
    %v1948 = vld [vmem:[%s2 + $0x50] sm:$0xff]
    %v1949 = vld [vmem:[%s2 + $0x58] sm:$0xff]
    %v1950 = vld [vmem:[%s2 + $0x60] sm:$0xff]
    %v1951 = vld [vmem:[%s2 + $0x68] sm:$0xff]
    %v1952 = vld [vmem:[%s2 + $0x70] sm:$0xff]
    %v1953 = vld [vmem:[%s2 + $0x78] sm:$0xff]
    %v1954 = vld [vmem:[%s2 + $0x80] sm:$0xff]
    %v1955 = vld [vmem:[%s2 + $0x88] sm:$0xff]
    %v1956 = vld [vmem:[%s2 + $0x90] sm:$0xff]
    %v1957 = vld [vmem:[%s2 + $0x98] sm:$0xff]
    %v1958 = vld [vmem:[%s2 + $0xa0] sm:$0xff]
    %v1959 = vld [vmem:[%s2 + $0xa8] sm:$0xff]
    %v1960 = vld [vmem:[%s2 + $0xb0] sm:$0xff]
    %v1961 = vld [vmem:[%s2 + $0xb8] sm:$0xff]
    %v1962 = vld [vmem:[%s2 + $0xc0] sm:$0xff]
    %v1963 = vld [vmem:[%s2 + $0xc8] sm:$0xff]
    %v1964 = vld [vmem:[%s2 + $0xd0] sm:$0xff]
    %v1965 = vld [vmem:[%s2 + $0xd8] sm:$0xff]
    %v1966 = vld [vmem:[%s2 + $0xe0] sm:$0xff]
    %v1967 = vld [vmem:[%s2 + $0xe8] sm:$0xff]
    %v1968 = vld [vmem:[%s2 + $0xf0] sm:$0xff]
    %v1969 = vld [vmem:[%s2 + $0xf8] sm:$0xff]
    %v1970 = vld [vmem:[%s2 + $0x100] sm:$0xff]
    %v1971 = vld [vmem:[%s2 + $0x108] sm:$0xff]
    %v1972 = vld [vmem:[%s2 + $0x110] sm:$0xff]
    %v1973 = vld [vmem:[%s2 + $0x118] sm:$0xff]
    %v1974 = vld [vmem:[%s2 + $0x120] sm:$0xff]
    %v1975 = vld [vmem:[%s2 + $0x128] sm:$0xff]
    %v1976 = vld [vmem:[%s2 + $0x130] sm:$0xff]
    %v1977 = vld [vmem:[%s2 + $0x138] sm:$0xff]
    %v1978 = vld [vmem:[%s2 + $0x140] sm:$0xff]
    %v1979 = vld [vmem:[%s2 + $0x148] sm:$0xff]
    %v1980 = vld [vmem:[%s2 + $0x150] sm:$0xff]
    %v1981 = vld [vmem:[%s2 + $0x158] sm:$0xff]
    %v1982 = vld [vmem:[%s2 + $0x160] sm:$0xff]
    %v1983 = vld [vmem:[%s2 + $0x168] sm:$0xff]
    %v1984 = vld [vmem:[%s2 + $0x170] sm:$0xff]
    %v1985 = vld [vmem:[%s2 + $0x178] sm:$0xff]
    %1986 = vmatprep.subr.mxu0 %v1939
    %1987 = vmatpush1.msra.mxu0 %v1938
    %1988 = vmatprep.subr.mxu0 %v1942
    %1989 = vmatpush1.msra.mxu0 %v1941
    %1990 = vmatprep.subr.mxu0 %v1945
    %1991 = vmatpush1.msra.mxu0 %v1944
    %1992 = vmatprep.subr.mxu0 %v1948
    %1993 = vmatpush1.msra.mxu0 %v1947
    %1994 = vmatprep.subr.mxu0 %v1951
    %1995 = vmatpush1.msra.mxu0 %v1950
    %1996 = vmatprep.subr.mxu0 %v1954
    %1997 = vmatpush1.msra.mxu0 %v1953
    %1998 = vmatprep.subr.mxu0 %v1957
    %1999 = vmatpush1.msra.mxu0 %v1956
    %2000 = vmatprep.subr.mxu0 %v1960
    %2001 = vmatpush1.msra.mxu0 %v1959
    %2002 = vmatprep.subr.mxu0 %v1963
    %2003 = vmatpush1.msra.mxu0 %v1962
    %2004 = vmatprep.subr.mxu0 %v1966
    %2005 = vmatpush1.msra.mxu0 %v1965
    %2006 = vmatprep.subr.mxu0 %v1969
    %2007 = vmatpush1.msra.mxu0 %v1968
    %2008 = vmatprep.subr.mxu0 %v1972
    %2009 = vmatpush1.msra.mxu0 %v1971
    %2010 = vmatprep.subr.mxu0 %v1975
    %2011 = vmatpush1.msra.mxu0 %v1974
    %2012 = vmatprep.subr.mxu0 %v1978
    %2013 = vmatpush1.msra.mxu0 %v1977
    %2014 = vmatprep.subr.mxu0 %v1981
    %2015 = vmatpush1.msra.mxu0 %v1980
    %2016 = vmatprep.subr.mxu0 %v1984
    %2017 = vmatpush1.msra.mxu0 %v1983
    %2018 = vmatprep.subr.mxu0 0.0
    %2019 = vmatpush1.msra.mxu0 0.0
    %2020 = vmatprep.subr.mxu0 0.0
    %2021 = vmatpush1.msra.mxu0 0.0
    %2022 = vmatprep.subr.mxu0 0.0
    %2023 = vmatpush1.msra.mxu0 0.0
    %2024 = vmatprep.subr.mxu0 0.0
    %2025 = vmatpush1.msra.mxu0 0.0
    %2026 = vmatprep.subr.mxu0 0.0
    %2027 = vmatpush1.msra.mxu0 0.0
    %2028 = vmatprep.subr.mxu0 0.0
    %2029 = vmatpush1.msra.mxu0 0.0
    %2030 = vmatprep.subr.mxu0 0.0
    %2031 = vmatpush1.msra.mxu0 0.0
    %2032 = vmatprep.subr.mxu0 0.0
    %2033 = vmatpush1.msra.mxu0 0.0
    %2034 = vmatprep.subr.mxu0 0.0
    %2035 = vmatpush1.msra.mxu0 0.0
    %2036 = vmatprep.subr.mxu0 0.0
    %2037 = vmatpush1.msra.mxu0 0.0
    %2038 = vmatprep.subr.mxu0 0.0
    %2039 = vmatpush1.msra.mxu0 0.0
    %2040 = vmatprep.subr.mxu0 0.0
    %2041 = vmatpush1.msra.mxu0 0.0
    %2042 = vmatprep.subr.mxu0 0.0
    %2043 = vmatpush1.msra.mxu0 0.0
    %2044 = vmatprep.subr.mxu0 0.0
    %2045 = vmatpush1.msra.mxu0 0.0
    %2046 = vmatprep.subr.mxu0 0.0
    %2047 = vmatpush1.msra.mxu0 0.0
    %2048 = vmatprep.subr.mxu0 0.0
    %2049 = vmatpush1.msra.mxu0 0.0
    %2050 = vmatprep.mubr.f32.mxu0 0.0
    %2051 = vmatmul.mubr.f32.gmra.mrb[0].mxu0 %v1534
    %v2052 = vpop.f32.mrb[0].mxu0
    %v2053 = vadd.f32 %v87, %v2052
    %v2054 = vpop.f32.mrb[0].mxu0
    %v2055 = vadd.f32 %v91, %v2054
    %2056 = vdwg.mxu0
    %2057 = vmatprep.subr.mxu0 0.0
    %2058 = vmatpush1.msra.mxu0 %v1940
    %2059 = vmatprep.subr.mxu0 0.0
    %2060 = vmatpush1.msra.mxu0 %v1943
    %2061 = vmatprep.subr.mxu0 0.0
    %2062 = vmatpush1.msra.mxu0 %v1946
    %2063 = vmatprep.subr.mxu0 0.0
    %2064 = vmatpush1.msra.mxu0 %v1949
    %2065 = vmatprep.subr.mxu0 0.0
    %2066 = vmatpush1.msra.mxu0 %v1952
    %2067 = vmatprep.subr.mxu0 0.0
    %2068 = vmatpush1.msra.mxu0 %v1955
    %2069 = vmatprep.subr.mxu0 0.0
    %2070 = vmatpush1.msra.mxu0 %v1958
    %2071 = vmatprep.subr.mxu0 0.0
    %2072 = vmatpush1.msra.mxu0 %v1961
    %2073 = vmatprep.subr.mxu0 0.0
    %2074 = vmatpush1.msra.mxu0 %v1964
    %2075 = vmatprep.subr.mxu0 0.0
    %2076 = vmatpush1.msra.mxu0 %v1967
    %2077 = vmatprep.subr.mxu0 0.0
    %2078 = vmatpush1.msra.mxu0 %v1970
    %2079 = vmatprep.subr.mxu0 0.0
    %2080 = vmatpush1.msra.mxu0 %v1973
    %2081 = vmatprep.subr.mxu0 0.0
    %2082 = vmatpush1.msra.mxu0 %v1976
    %2083 = vmatprep.subr.mxu0 0.0
    %2084 = vmatpush1.msra.mxu0 %v1979
    %2085 = vmatprep.subr.mxu0 0.0
    %2086 = vmatpush1.msra.mxu0 %v1982
    %2087 = vmatprep.subr.mxu0 0.0
    %2088 = vmatpush1.msra.mxu0 %v1985
    %2089 = vmatprep.subr.mxu0 0.0
    %2090 = vmatpush1.msra.mxu0 0.0
    %2091 = vmatprep.subr.mxu0 0.0
    %2092 = vmatpush1.msra.mxu0 0.0
    %2093 = vmatprep.subr.mxu0 0.0
    %2094 = vmatpush1.msra.mxu0 0.0
    %2095 = vmatprep.subr.mxu0 0.0
    %2096 = vmatpush1.msra.mxu0 0.0
    %2097 = vmatprep.subr.mxu0 0.0
    %2098 = vmatpush1.msra.mxu0 0.0
    %2099 = vmatprep.subr.mxu0 0.0
    %2100 = vmatpush1.msra.mxu0 0.0
    %2101 = vmatprep.subr.mxu0 0.0
    %2102 = vmatpush1.msra.mxu0 0.0
    %2103 = vmatprep.subr.mxu0 0.0
    %2104 = vmatpush1.msra.mxu0 0.0
    %2105 = vmatprep.subr.mxu0 0.0
    %2106 = vmatpush1.msra.mxu0 0.0
    %2107 = vmatprep.subr.mxu0 0.0
    %2108 = vmatpush1.msra.mxu0 0.0
    %2109 = vmatprep.subr.mxu0 0.0
    %2110 = vmatpush1.msra.mxu0 0.0
    %2111 = vmatprep.subr.mxu0 0.0
    %2112 = vmatpush1.msra.mxu0 0.0
    %2113 = vmatprep.subr.mxu0 0.0
    %2114 = vmatpush1.msra.mxu0 0.0
    %2115 = vmatprep.subr.mxu0 0.0
    %2116 = vmatpush1.msra.mxu0 0.0
    %2117 = vmatprep.subr.mxu0 0.0
    %2118 = vmatpush1.msra.mxu0 0.0
    %2119 = vmatprep.subr.mxu0 0.0
    %2120 = vmatpush1.msra.mxu0 0.0
    %2121 = vmatprep.mubr.f32.mxu0 0.0
    %2122 = vmatmul.mubr.f32.gmra.mrb[0].mxu0 %v1534
    %v2123 = vpop.f32.mrb[0].mxu0
    %v2124 = vadd.f32 %v95, %v2123
    %v2125 = vpop.f32.mrb[0].mxu0
    %2126 = vdwg.mxu0
    %v2127 = vadd.f32 %v1937, %v2053
    %v2128 = vxor.u32 %v2127, 2147483648
    %v2129 = vmul.f32 %v2128, 1.442695
    %v2130 = vpow.pop %v2129
    %v2131 = vadd.f32 %v2130, 1.0
    %v2132 = vrcp.pop %v2131
    %v2133 = vmul.f32 1.0, %v2132
    %v2135 = vrot.slane %v1937, 2
    %v2137 = vadd.f32 %v2135, %v2055
    %v2138 = vxor.u32 %v2137, 2147483648
    %v2139 = vmul.f32 %v2138, 1.442695
    %v2140 = vpow.pop %v2139
    %v2141 = vadd.f32 %v2140, 1.0
    %v2142 = vrcp.pop %v2141
    %v2143 = vmul.f32 1.0, %v2142
    %v2144 = vmul.f32 %v2133, %v2124
    %v2145 = vrot.slane %v1937, 4
    %v2147 = vadd.f32 %v2145, %v2144
    %v2148 = vtanh.pop %v2147
    %v2149 = vsub.f32 1.0, %v2143
    %v2150 = vmul.f32 %v2149, %v2148
    %v2151 = vmul.f32 %v2143, %v1534
    %v2152 = vadd.f32 %v2150, %v2151
    %v2153 = vld [vmem:[%s266] sm:$0xff]
    %v2154 = vld [vmem:[%s266 + $0x8] sm:$0xff]
    %v2155 = vld [vmem:[%s266 + $0x10] sm:$0xff]
    %v2156 = vld [vmem:[%s266 + $0x18] sm:$0xff]
    %v2157 = vld [vmem:[%s266 + $0x20] sm:$0xff]
    %v2158 = vld [vmem:[%s266 + $0x28] sm:$0xff]
    %v2159 = vld [vmem:[%s266 + $0x30] sm:$0xff]
    %v2160 = vld [vmem:[%s266 + $0x38] sm:$0xff]
    %v2161 = vld [vmem:[%s266 + $0x40] sm:$0xff]
    %v2162 = vld [vmem:[%s266 + $0x48] sm:$0xff]
    %v2163 = vld [vmem:[%s266 + $0x50] sm:$0xff]
    %v2164 = vld [vmem:[%s266 + $0x58] sm:$0xff]
    %v2165 = vld [vmem:[%s266 + $0x60] sm:$0xff]
    %v2166 = vld [vmem:[%s266 + $0x68] sm:$0xff]
    %v2167 = vld [vmem:[%s266 + $0x70] sm:$0xff]
    %v2168 = vld [vmem:[%s266 + $0x78] sm:$0xff]
    %v2169 = vld [vmem:[%s266 + $0x80] sm:$0xff]
    %v2170 = vld [vmem:[%s266 + $0x88] sm:$0xff]
    %v2171 = vld [vmem:[%s266 + $0x90] sm:$0xff]
    %v2172 = vld [vmem:[%s266 + $0x98] sm:$0xff]
    %v2173 = vld [vmem:[%s266 + $0xa0] sm:$0xff]
    %v2174 = vld [vmem:[%s266 + $0xa8] sm:$0xff]
    %v2175 = vld [vmem:[%s266 + $0xb0] sm:$0xff]
    %v2176 = vld [vmem:[%s266 + $0xb8] sm:$0xff]
    %v2177 = vld [vmem:[%s266 + $0xc0] sm:$0xff]
    %v2178 = vld [vmem:[%s266 + $0xc8] sm:$0xff]
    %v2179 = vld [vmem:[%s266 + $0xd0] sm:$0xff]
    %v2180 = vld [vmem:[%s266 + $0xd8] sm:$0xff]
    %v2181 = vld [vmem:[%s266 + $0xe0] sm:$0xff]
    %v2182 = vld [vmem:[%s266 + $0xe8] sm:$0xff]
    %v2183 = vld [vmem:[%s266 + $0xf0] sm:$0xff]
    %v2184 = vld [vmem:[%s266 + $0xf8] sm:$0xff]
    %v2185 = vld [vmem:[%s266 + $0x100] sm:$0xff]
    %v2186 = vld [vmem:[%s266 + $0x108] sm:$0xff]
    %v2187 = vld [vmem:[%s266 + $0x110] sm:$0xff]
    %v2188 = vld [vmem:[%s266 + $0x118] sm:$0xff]
    %v2189 = vld [vmem:[%s266 + $0x120] sm:$0xff]
    %v2190 = vld [vmem:[%s266 + $0x128] sm:$0xff]
    %v2191 = vld [vmem:[%s266 + $0x130] sm:$0xff]
    %v2192 = vld [vmem:[%s266 + $0x138] sm:$0xff]
    %v2193 = vld [vmem:[%s266 + $0x140] sm:$0xff]
    %v2194 = vld [vmem:[%s266 + $0x148] sm:$0xff]
    %v2195 = vld [vmem:[%s266 + $0x150] sm:$0xff]
    %v2196 = vld [vmem:[%s266 + $0x158] sm:$0xff]
    %v2197 = vld [vmem:[%s266 + $0x160] sm:$0xff]
    %v2198 = vld [vmem:[%s266 + $0x168] sm:$0xff]
    %v2199 = vld [vmem:[%s266 + $0x170] sm:$0xff]
    %v2200 = vld [vmem:[%s266 + $0x178] sm:$0xff]
    %2201 = vmatprep.subr.mxu0 %v2154
    %2202 = vmatpush1.msra.mxu0 %v2153
    %2203 = vmatprep.subr.mxu0 %v2157
    %2204 = vmatpush1.msra.mxu0 %v2156
    %2205 = vmatprep.subr.mxu0 %v2160
    %2206 = vmatpush1.msra.mxu0 %v2159
    %2207 = vmatprep.subr.mxu0 %v2163
    %2208 = vmatpush1.msra.mxu0 %v2162
    %2209 = vmatprep.subr.mxu0 %v2166
    %2210 = vmatpush1.msra.mxu0 %v2165
    %2211 = vmatprep.subr.mxu0 %v2169
    %2212 = vmatpush1.msra.mxu0 %v2168
    %2213 = vmatprep.subr.mxu0 %v2172
    %2214 = vmatpush1.msra.mxu0 %v2171
    %2215 = vmatprep.subr.mxu0 %v2175
    %2216 = vmatpush1.msra.mxu0 %v2174
    %2217 = vmatprep.subr.mxu0 %v2178
    %2218 = vmatpush1.msra.mxu0 %v2177
    %2219 = vmatprep.subr.mxu0 %v2181
    %2220 = vmatpush1.msra.mxu0 %v2180
    %2221 = vmatprep.subr.mxu0 %v2184
    %2222 = vmatpush1.msra.mxu0 %v2183
    %2223 = vmatprep.subr.mxu0 %v2187
    %2224 = vmatpush1.msra.mxu0 %v2186
    %2225 = vmatprep.subr.mxu0 %v2190
    %2226 = vmatpush1.msra.mxu0 %v2189
    %2227 = vmatprep.subr.mxu0 %v2193
    %2228 = vmatpush1.msra.mxu0 %v2192
    %2229 = vmatprep.subr.mxu0 %v2196
    %2230 = vmatpush1.msra.mxu0 %v2195
    %2231 = vmatprep.subr.mxu0 %v2199
    %2232 = vmatpush1.msra.mxu0 %v2198
    %2233 = vmatprep.subr.mxu0 0.0
    %2234 = vmatpush1.msra.mxu0 0.0
    %2235 = vmatprep.subr.mxu0 0.0
    %2236 = vmatpush1.msra.mxu0 0.0
    %2237 = vmatprep.subr.mxu0 0.0
    %2238 = vmatpush1.msra.mxu0 0.0
    %2239 = vmatprep.subr.mxu0 0.0
    %2240 = vmatpush1.msra.mxu0 0.0
    %2241 = vmatprep.subr.mxu0 0.0
    %2242 = vmatpush1.msra.mxu0 0.0
    %2243 = vmatprep.subr.mxu0 0.0
    %2244 = vmatpush1.msra.mxu0 0.0
    %2245 = vmatprep.subr.mxu0 0.0
    %2246 = vmatpush1.msra.mxu0 0.0
    %2247 = vmatprep.subr.mxu0 0.0
    %2248 = vmatpush1.msra.mxu0 0.0
    %2249 = vmatprep.subr.mxu0 0.0
    %2250 = vmatpush1.msra.mxu0 0.0
    %2251 = vmatprep.subr.mxu0 0.0
    %2252 = vmatpush1.msra.mxu0 0.0
    %2253 = vmatprep.subr.mxu0 0.0
    %2254 = vmatpush1.msra.mxu0 0.0
    %2255 = vmatprep.subr.mxu0 0.0
    %2256 = vmatpush1.msra.mxu0 0.0
    %2257 = vmatprep.subr.mxu0 0.0
    %2258 = vmatpush1.msra.mxu0 0.0
    %2259 = vmatprep.subr.mxu0 0.0
    %2260 = vmatpush1.msra.mxu0 0.0
    %2261 = vmatprep.subr.mxu0 0.0
    %2262 = vmatpush1.msra.mxu0 0.0
    %2263 = vmatprep.subr.mxu0 0.0
    %2264 = vmatpush1.msra.mxu0 0.0
    %2265 = vmatprep.mubr.f32.mxu0 0.0
    %2266 = vmatmul.mubr.f32.gmra.mrb[0].mxu0 %v2152
    %v2267 = vpop.f32.mrb[0].mxu0
    %v2268 = vadd.f32 %v319, %v2267
    %v2269 = vpop.f32.mrb[0].mxu0
    %v2270 = vadd.f32 %v323, %v2269
    %2271 = vdwg.mxu0
    %2272 = vmatprep.subr.mxu0 0.0
    %2273 = vmatpush1.msra.mxu0 %v2155
    %2274 = vmatprep.subr.mxu0 0.0
    %2275 = vmatpush1.msra.mxu0 %v2158
    %2276 = vmatprep.subr.mxu0 0.0
    %2277 = vmatpush1.msra.mxu0 %v2161
    %2278 = vmatprep.subr.mxu0 0.0
    %2279 = vmatpush1.msra.mxu0 %v2164
    %2280 = vmatprep.subr.mxu0 0.0
    %2281 = vmatpush1.msra.mxu0 %v2167
    %2282 = vmatprep.subr.mxu0 0.0
    %2283 = vmatpush1.msra.mxu0 %v2170
    %2284 = vmatprep.subr.mxu0 0.0
    %2285 = vmatpush1.msra.mxu0 %v2173
    %2286 = vmatprep.subr.mxu0 0.0
    %2287 = vmatpush1.msra.mxu0 %v2176
    %2288 = vmatprep.subr.mxu0 0.0
    %2289 = vmatpush1.msra.mxu0 %v2179
    %2290 = vmatprep.subr.mxu0 0.0
    %2291 = vmatpush1.msra.mxu0 %v2182
    %2292 = vmatprep.subr.mxu0 0.0
    %2293 = vmatpush1.msra.mxu0 %v2185
    %2294 = vmatprep.subr.mxu0 0.0
    %2295 = vmatpush1.msra.mxu0 %v2188
    %2296 = vmatprep.subr.mxu0 0.0
    %2297 = vmatpush1.msra.mxu0 %v2191
    %2298 = vmatprep.subr.mxu0 0.0
    %2299 = vmatpush1.msra.mxu0 %v2194
    %2300 = vmatprep.subr.mxu0 0.0
    %2301 = vmatpush1.msra.mxu0 %v2197
    %2302 = vmatprep.subr.mxu0 0.0
    %2303 = vmatpush1.msra.mxu0 %v2200
    %2304 = vmatprep.subr.mxu0 0.0
    %2305 = vmatpush1.msra.mxu0 0.0
    %2306 = vmatprep.subr.mxu0 0.0
    %2307 = vmatpush1.msra.mxu0 0.0
    %2308 = vmatprep.subr.mxu0 0.0
    %2309 = vmatpush1.msra.mxu0 0.0
    %2310 = vmatprep.subr.mxu0 0.0
    %2311 = vmatpush1.msra.mxu0 0.0
    %2312 = vmatprep.subr.mxu0 0.0
    %2313 = vmatpush1.msra.mxu0 0.0
    %2314 = vmatprep.subr.mxu0 0.0
    %2315 = vmatpush1.msra.mxu0 0.0
    %2316 = vmatprep.subr.mxu0 0.0
    %2317 = vmatpush1.msra.mxu0 0.0
    %2318 = vmatprep.subr.mxu0 0.0
    %2319 = vmatpush1.msra.mxu0 0.0
    %2320 = vmatprep.subr.mxu0 0.0
    %2321 = vmatpush1.msra.mxu0 0.0
    %2322 = vmatprep.subr.mxu0 0.0
    %2323 = vmatpush1.msra.mxu0 0.0
    %2324 = vmatprep.subr.mxu0 0.0
    %2325 = vmatpush1.msra.mxu0 0.0
    %2326 = vmatprep.subr.mxu0 0.0
    %2327 = vmatpush1.msra.mxu0 0.0
    %2328 = vmatprep.subr.mxu0 0.0
    %2329 = vmatpush1.msra.mxu0 0.0
    %2330 = vmatprep.subr.mxu0 0.0
    %2331 = vmatpush1.msra.mxu0 0.0
    %2332 = vmatprep.subr.mxu0 0.0
    %2333 = vmatpush1.msra.mxu0 0.0
    %2334 = vmatprep.subr.mxu0 0.0
    %2335 = vmatpush1.msra.mxu0 0.0
    %2336 = vmatprep.mubr.f32.mxu0 0.0
    %2337 = vmatmul.mubr.f32.gmra.mrb[0].mxu0 %v2152
    %v2338 = vpop.f32.mrb[0].mxu0
    %v2339 = vadd.f32 %v327, %v2338
    %v2340 = vpop.f32.mrb[0].mxu0
    %2341 = vdwg.mxu0
    %v2342 = vld [vmem:[%s472] sm:$0xff]
    %v2343 = vld [vmem:[%s472 + $0x8] sm:$0xff]
    %v2344 = vld [vmem:[%s472 + $0x10] sm:$0xff]
    %v2345 = vld [vmem:[%s472 + $0x18] sm:$0xff]
    %v2346 = vld [vmem:[%s472 + $0x20] sm:$0xff]
    %v2347 = vld [vmem:[%s472 + $0x28] sm:$0xff]
    %v2348 = vld [vmem:[%s472 + $0x30] sm:$0xff]
    %v2349 = vld [vmem:[%s472 + $0x38] sm:$0xff]
    %v2350 = vld [vmem:[%s472 + $0x40] sm:$0xff]
    %v2351 = vld [vmem:[%s472 + $0x48] sm:$0xff]
    %v2352 = vld [vmem:[%s472 + $0x50] sm:$0xff]
    %v2353 = vld [vmem:[%s472 + $0x58] sm:$0xff]
    %v2354 = vld [vmem:[%s472 + $0x60] sm:$0xff]
    %v2355 = vld [vmem:[%s472 + $0x68] sm:$0xff]
    %v2356 = vld [vmem:[%s472 + $0x70] sm:$0xff]
    %v2357 = vld [vmem:[%s472 + $0x78] sm:$0xff]
    %v2358 = vld [vmem:[%s472 + $0x80] sm:$0xff]
    %v2359 = vld [vmem:[%s472 + $0x88] sm:$0xff]
    %v2360 = vld [vmem:[%s472 + $0x90] sm:$0xff]
    %v2361 = vld [vmem:[%s472 + $0x98] sm:$0xff]
    %v2362 = vld [vmem:[%s472 + $0xa0] sm:$0xff]
    %v2363 = vld [vmem:[%s472 + $0xa8] sm:$0xff]
    %v2364 = vld [vmem:[%s472 + $0xb0] sm:$0xff]
    %v2365 = vld [vmem:[%s472 + $0xb8] sm:$0xff]
    %v2366 = vld [vmem:[%s472 + $0xc0] sm:$0xff]
    %v2367 = vld [vmem:[%s472 + $0xc8] sm:$0xff]
    %v2368 = vld [vmem:[%s472 + $0xd0] sm:$0xff]
    %v2369 = vld [vmem:[%s472 + $0xd8] sm:$0xff]
    %v2370 = vld [vmem:[%s472 + $0xe0] sm:$0xff]
    %v2371 = vld [vmem:[%s472 + $0xe8] sm:$0xff]
    %v2372 = vld [vmem:[%s472 + $0xf0] sm:$0xff]
    %v2373 = vld [vmem:[%s472 + $0xf8] sm:$0xff]
    %v2374 = vld [vmem:[%s472 + $0x100] sm:$0xff]
    %v2375 = vld [vmem:[%s472 + $0x108] sm:$0xff]
    %v2376 = vld [vmem:[%s472 + $0x110] sm:$0xff]
    %v2377 = vld [vmem:[%s472 + $0x118] sm:$0xff]
    %v2378 = vld [vmem:[%s472 + $0x120] sm:$0xff]
    %v2379 = vld [vmem:[%s472 + $0x128] sm:$0xff]
    %v2380 = vld [vmem:[%s472 + $0x130] sm:$0xff]
    %v2381 = vld [vmem:[%s472 + $0x138] sm:$0xff]
    %v2382 = vld [vmem:[%s472 + $0x140] sm:$0xff]
    %v2383 = vld [vmem:[%s472 + $0x148] sm:$0xff]
    %v2384 = vld [vmem:[%s472 + $0x150] sm:$0xff]
    %v2385 = vld [vmem:[%s472 + $0x158] sm:$0xff]
    %v2386 = vld [vmem:[%s472 + $0x160] sm:$0xff]
    %v2387 = vld [vmem:[%s472 + $0x168] sm:$0xff]
    %v2388 = vld [vmem:[%s472 + $0x170] sm:$0xff]
    %v2389 = vld [vmem:[%s472 + $0x178] sm:$0xff]
    %2390 = vmatprep.subr.mxu0 %v2343
    %2391 = vmatpush1.msra.mxu0 %v2342
    %2392 = vmatprep.subr.mxu0 %v2346
    %2393 = vmatpush1.msra.mxu0 %v2345
    %2394 = vmatprep.subr.mxu0 %v2349
    %2395 = vmatpush1.msra.mxu0 %v2348
    %2396 = vmatprep.subr.mxu0 %v2352
    %2397 = vmatpush1.msra.mxu0 %v2351
    %2398 = vmatprep.subr.mxu0 %v2355
    %2399 = vmatpush1.msra.mxu0 %v2354
    %2400 = vmatprep.subr.mxu0 %v2358
    %2401 = vmatpush1.msra.mxu0 %v2357
    %2402 = vmatprep.subr.mxu0 %v2361
    %2403 = vmatpush1.msra.mxu0 %v2360
    %2404 = vmatprep.subr.mxu0 %v2364
    %2405 = vmatpush1.msra.mxu0 %v2363
    %2406 = vmatprep.subr.mxu0 %v2367
    %2407 = vmatpush1.msra.mxu0 %v2366
    %2408 = vmatprep.subr.mxu0 %v2370
    %2409 = vmatpush1.msra.mxu0 %v2369
    %2410 = vmatprep.subr.mxu0 %v2373
    %2411 = vmatpush1.msra.mxu0 %v2372
    %2412 = vmatprep.subr.mxu0 %v2376
    %2413 = vmatpush1.msra.mxu0 %v2375
    %2414 = vmatprep.subr.mxu0 %v2379
    %2415 = vmatpush1.msra.mxu0 %v2378
    %2416 = vmatprep.subr.mxu0 %v2382
    %2417 = vmatpush1.msra.mxu0 %v2381
    %2418 = vmatprep.subr.mxu0 %v2385
    %2419 = vmatpush1.msra.mxu0 %v2384
    %2420 = vmatprep.subr.mxu0 %v2388
    %2421 = vmatpush1.msra.mxu0 %v2387
    %2422 = vmatprep.subr.mxu0 0.0
    %2423 = vmatpush1.msra.mxu0 0.0
    %2424 = vmatprep.subr.mxu0 0.0
    %2425 = vmatpush1.msra.mxu0 0.0
    %2426 = vmatprep.subr.mxu0 0.0
    %2427 = vmatpush1.msra.mxu0 0.0
    %2428 = vmatprep.subr.mxu0 0.0
    %2429 = vmatpush1.msra.mxu0 0.0
    %2430 = vmatprep.subr.mxu0 0.0
    %2431 = vmatpush1.msra.mxu0 0.0
    %2432 = vmatprep.subr.mxu0 0.0
    %2433 = vmatpush1.msra.mxu0 0.0
    %2434 = vmatprep.subr.mxu0 0.0
    %2435 = vmatpush1.msra.mxu0 0.0
    %2436 = vmatprep.subr.mxu0 0.0
    %2437 = vmatpush1.msra.mxu0 0.0
    %2438 = vmatprep.subr.mxu0 0.0
    %2439 = vmatpush1.msra.mxu0 0.0
    %2440 = vmatprep.subr.mxu0 0.0
    %2441 = vmatpush1.msra.mxu0 0.0
    %2442 = vmatprep.subr.mxu0 0.0
    %2443 = vmatpush1.msra.mxu0 0.0
    %2444 = vmatprep.subr.mxu0 0.0
    %2445 = vmatpush1.msra.mxu0 0.0
    %2446 = vmatprep.subr.mxu0 0.0
    %2447 = vmatpush1.msra.mxu0 0.0
    %2448 = vmatprep.subr.mxu0 0.0
    %2449 = vmatpush1.msra.mxu0 0.0
    %2450 = vmatprep.subr.mxu0 0.0
    %2451 = vmatpush1.msra.mxu0 0.0
    %2452 = vmatprep.subr.mxu0 0.0
    %2453 = vmatpush1.msra.mxu0 0.0
    %2454 = vmatprep.mubr.f32.mxu0 0.0
    %2455 = vmatmul.mubr.f32.gmra.mrb[0].mxu0 %v1933
    %v2456 = vpop.f32.mrb[0].mxu0
    %v2457 = vadd.f32 %v525, %v2456
    %v2458 = vpop.f32.mrb[0].mxu0
    %v2459 = vadd.f32 %v529, %v2458
    %2460 = vdwg.mxu0
    %2461 = vmatprep.subr.mxu0 0.0
    %2462 = vmatpush1.msra.mxu0 %v2344
    %2463 = vmatprep.subr.mxu0 0.0
    %2464 = vmatpush1.msra.mxu0 %v2347
    %2465 = vmatprep.subr.mxu0 0.0
    %2466 = vmatpush1.msra.mxu0 %v2350
    %2467 = vmatprep.subr.mxu0 0.0
    %2468 = vmatpush1.msra.mxu0 %v2353
    %2469 = vmatprep.subr.mxu0 0.0
    %2470 = vmatpush1.msra.mxu0 %v2356
    %2471 = vmatprep.subr.mxu0 0.0
    %2472 = vmatpush1.msra.mxu0 %v2359
    %2473 = vmatprep.subr.mxu0 0.0
    %2474 = vmatpush1.msra.mxu0 %v2362
    %2475 = vmatprep.subr.mxu0 0.0
    %2476 = vmatpush1.msra.mxu0 %v2365
    %2477 = vmatprep.subr.mxu0 0.0
    %2478 = vmatpush1.msra.mxu0 %v2368
    %2479 = vmatprep.subr.mxu0 0.0
    %2480 = vmatpush1.msra.mxu0 %v2371
    %2481 = vmatprep.subr.mxu0 0.0
    %2482 = vmatpush1.msra.mxu0 %v2374
    %2483 = vmatprep.subr.mxu0 0.0
    %2484 = vmatpush1.msra.mxu0 %v2377
    %2485 = vmatprep.subr.mxu0 0.0
    %2486 = vmatpush1.msra.mxu0 %v2380
    %2487 = vmatprep.subr.mxu0 0.0
    %2488 = vmatpush1.msra.mxu0 %v2383
    %2489 = vmatprep.subr.mxu0 0.0
    %2490 = vmatpush1.msra.mxu0 %v2386
    %2491 = vmatprep.subr.mxu0 0.0
    %2492 = vmatpush1.msra.mxu0 %v2389
    %2493 = vmatprep.subr.mxu0 0.0
    %2494 = vmatpush1.msra.mxu0 0.0
    %2495 = vmatprep.subr.mxu0 0.0
    %2496 = vmatpush1.msra.mxu0 0.0
    %2497 = vmatprep.subr.mxu0 0.0
    %2498 = vmatpush1.msra.mxu0 0.0
    %2499 = vmatprep.subr.mxu0 0.0
    %2500 = vmatpush1.msra.mxu0 0.0
    %2501 = vmatprep.subr.mxu0 0.0
    %2502 = vmatpush1.msra.mxu0 0.0
    %2503 = vmatprep.subr.mxu0 0.0
    %2504 = vmatpush1.msra.mxu0 0.0
    %2505 = vmatprep.subr.mxu0 0.0
    %2506 = vmatpush1.msra.mxu0 0.0
    %2507 = vmatprep.subr.mxu0 0.0
    %2508 = vmatpush1.msra.mxu0 0.0
    %2509 = vmatprep.subr.mxu0 0.0
    %2510 = vmatpush1.msra.mxu0 0.0
    %2511 = vmatprep.subr.mxu0 0.0
    %2512 = vmatpush1.msra.mxu0 0.0
    %2513 = vmatprep.subr.mxu0 0.0
    %2514 = vmatpush1.msra.mxu0 0.0
    %2515 = vmatprep.subr.mxu0 0.0
    %2516 = vmatpush1.msra.mxu0 0.0
    %2517 = vmatprep.subr.mxu0 0.0
    %2518 = vmatpush1.msra.mxu0 0.0
    %2519 = vmatprep.subr.mxu0 0.0
    %2520 = vmatpush1.msra.mxu0 0.0
    %2521 = vmatprep.subr.mxu0 0.0
    %2522 = vmatpush1.msra.mxu0 0.0
    %2523 = vmatprep.subr.mxu0 0.0
    %2524 = vmatpush1.msra.mxu0 0.0
    %2525 = vmatprep.mubr.f32.mxu0 0.0
    %2526 = vmatmul.mubr.f32.gmra.mrb[0].mxu0 %v1933
    %v2527 = vpop.f32.mrb[0].mxu0
    %v2528 = vadd.f32 %v533, %v2527
    %v2529 = vpop.f32.mrb[0].mxu0
    %2530 = vdwg.mxu0
    %v2531 = vadd.f32 %v2268, %v2457
    %v2532 = vxor.u32 %v2531, 2147483648
    %v2533 = vmul.f32 %v2532, 1.442695
    %v2534 = vpow.pop %v2533
    %v2535 = vadd.f32 %v2534, 1.0
    %v2536 = vrcp.pop %v2535
    %v2537 = vmul.f32 1.0, %v2536
    %v2538 = vadd.f32 %v2270, %v2459
    %v2539 = vxor.u32 %v2538, 2147483648
    %v2540 = vmul.f32 %v2539, 1.442695
    %v2541 = vpow.pop %v2540
    %v2542 = vadd.f32 %v2541, 1.0
    %v2543 = vrcp.pop %v2542
    %v2544 = vmul.f32 1.0, %v2543
    %v2545 = vmul.f32 %v2537, %v2528
    %v2546 = vadd.f32 %v2339, %v2545
    %v2547 = vtanh.pop %v2546
    %v2548 = vsub.f32 1.0, %v2544
    %v2549 = vmul.f32 %v2548, %v2547
    %v2550 = vmul.f32 %v2544, %v1933
    %v2551 = vadd.f32 %v2549, %v2550
    %s2552 = scalar_lea.vmem %s6, 6
    %2553 = vst [vmem:[%s2552] sm:$0x3] %v2551
    %s2554 = scalar_lea.vmem %s0, 24
    %v2555 = vld [vmem:[%s2554] sm:$0x3f]
    %v2556 = vld [vmem:[%s2] sm:$0xff]
    %v2557 = vld [vmem:[%s2 + $0x8] sm:$0xff]
    %v2558 = vld [vmem:[%s2 + $0x10] sm:$0xff]
    %v2559 = vld [vmem:[%s2 + $0x18] sm:$0xff]
    %v2560 = vld [vmem:[%s2 + $0x20] sm:$0xff]
    %v2561 = vld [vmem:[%s2 + $0x28] sm:$0xff]
    %v2562 = vld [vmem:[%s2 + $0x30] sm:$0xff]
    %v2563 = vld [vmem:[%s2 + $0x38] sm:$0xff]
    %v2564 = vld [vmem:[%s2 + $0x40] sm:$0xff]
    %v2565 = vld [vmem:[%s2 + $0x48] sm:$0xff]
    %v2566 = vld [vmem:[%s2 + $0x50] sm:$0xff]
    %v2567 = vld [vmem:[%s2 + $0x58] sm:$0xff]
    %v2568 = vld [vmem:[%s2 + $0x60] sm:$0xff]
    %v2569 = vld [vmem:[%s2 + $0x68] sm:$0xff]
    %v2570 = vld [vmem:[%s2 + $0x70] sm:$0xff]
    %v2571 = vld [vmem:[%s2 + $0x78] sm:$0xff]
    %v2572 = vld [vmem:[%s2 + $0x80] sm:$0xff]
    %v2573 = vld [vmem:[%s2 + $0x88] sm:$0xff]
    %v2574 = vld [vmem:[%s2 + $0x90] sm:$0xff]
    %v2575 = vld [vmem:[%s2 + $0x98] sm:$0xff]
    %v2576 = vld [vmem:[%s2 + $0xa0] sm:$0xff]
    %v2577 = vld [vmem:[%s2 + $0xa8] sm:$0xff]
    %v2578 = vld [vmem:[%s2 + $0xb0] sm:$0xff]
    %v2579 = vld [vmem:[%s2 + $0xb8] sm:$0xff]
    %v2580 = vld [vmem:[%s2 + $0xc0] sm:$0xff]
    %v2581 = vld [vmem:[%s2 + $0xc8] sm:$0xff]
    %v2582 = vld [vmem:[%s2 + $0xd0] sm:$0xff]
    %v2583 = vld [vmem:[%s2 + $0xd8] sm:$0xff]
    %v2584 = vld [vmem:[%s2 + $0xe0] sm:$0xff]
    %v2585 = vld [vmem:[%s2 + $0xe8] sm:$0xff]
    %v2586 = vld [vmem:[%s2 + $0xf0] sm:$0xff]
    %v2587 = vld [vmem:[%s2 + $0xf8] sm:$0xff]
    %v2588 = vld [vmem:[%s2 + $0x100] sm:$0xff]
    %v2589 = vld [vmem:[%s2 + $0x108] sm:$0xff]
    %v2590 = vld [vmem:[%s2 + $0x110] sm:$0xff]
    %v2591 = vld [vmem:[%s2 + $0x118] sm:$0xff]
    %v2592 = vld [vmem:[%s2 + $0x120] sm:$0xff]
    %v2593 = vld [vmem:[%s2 + $0x128] sm:$0xff]
    %v2594 = vld [vmem:[%s2 + $0x130] sm:$0xff]
    %v2595 = vld [vmem:[%s2 + $0x138] sm:$0xff]
    %v2596 = vld [vmem:[%s2 + $0x140] sm:$0xff]
    %v2597 = vld [vmem:[%s2 + $0x148] sm:$0xff]
    %v2598 = vld [vmem:[%s2 + $0x150] sm:$0xff]
    %v2599 = vld [vmem:[%s2 + $0x158] sm:$0xff]
    %v2600 = vld [vmem:[%s2 + $0x160] sm:$0xff]
    %v2601 = vld [vmem:[%s2 + $0x168] sm:$0xff]
    %v2602 = vld [vmem:[%s2 + $0x170] sm:$0xff]
    %v2603 = vld [vmem:[%s2 + $0x178] sm:$0xff]
    %2604 = vmatprep.subr.mxu0 %v2557
    %2605 = vmatpush1.msra.mxu0 %v2556
    %2606 = vmatprep.subr.mxu0 %v2560
    %2607 = vmatpush1.msra.mxu0 %v2559
    %2608 = vmatprep.subr.mxu0 %v2563
    %2609 = vmatpush1.msra.mxu0 %v2562
    %2610 = vmatprep.subr.mxu0 %v2566
    %2611 = vmatpush1.msra.mxu0 %v2565
    %2612 = vmatprep.subr.mxu0 %v2569
    %2613 = vmatpush1.msra.mxu0 %v2568
    %2614 = vmatprep.subr.mxu0 %v2572
    %2615 = vmatpush1.msra.mxu0 %v2571
    %2616 = vmatprep.subr.mxu0 %v2575
    %2617 = vmatpush1.msra.mxu0 %v2574
    %2618 = vmatprep.subr.mxu0 %v2578
    %2619 = vmatpush1.msra.mxu0 %v2577
    %2620 = vmatprep.subr.mxu0 %v2581
    %2621 = vmatpush1.msra.mxu0 %v2580
    %2622 = vmatprep.subr.mxu0 %v2584
    %2623 = vmatpush1.msra.mxu0 %v2583
    %2624 = vmatprep.subr.mxu0 %v2587
    %2625 = vmatpush1.msra.mxu0 %v2586
    %2626 = vmatprep.subr.mxu0 %v2590
    %2627 = vmatpush1.msra.mxu0 %v2589
    %2628 = vmatprep.subr.mxu0 %v2593
    %2629 = vmatpush1.msra.mxu0 %v2592
    %2630 = vmatprep.subr.mxu0 %v2596
    %2631 = vmatpush1.msra.mxu0 %v2595
    %2632 = vmatprep.subr.mxu0 %v2599
    %2633 = vmatpush1.msra.mxu0 %v2598
    %2634 = vmatprep.subr.mxu0 %v2602
    %2635 = vmatpush1.msra.mxu0 %v2601
    %2636 = vmatprep.subr.mxu0 0.0
    %2637 = vmatpush1.msra.mxu0 0.0
    %2638 = vmatprep.subr.mxu0 0.0
    %2639 = vmatpush1.msra.mxu0 0.0
    %2640 = vmatprep.subr.mxu0 0.0
    %2641 = vmatpush1.msra.mxu0 0.0
    %2642 = vmatprep.subr.mxu0 0.0
    %2643 = vmatpush1.msra.mxu0 0.0
    %2644 = vmatprep.subr.mxu0 0.0
    %2645 = vmatpush1.msra.mxu0 0.0
    %2646 = vmatprep.subr.mxu0 0.0
    %2647 = vmatpush1.msra.mxu0 0.0
    %2648 = vmatprep.subr.mxu0 0.0
    %2649 = vmatpush1.msra.mxu0 0.0
    %2650 = vmatprep.subr.mxu0 0.0
    %2651 = vmatpush1.msra.mxu0 0.0
    %2652 = vmatprep.subr.mxu0 0.0
    %2653 = vmatpush1.msra.mxu0 0.0
    %2654 = vmatprep.subr.mxu0 0.0
    %2655 = vmatpush1.msra.mxu0 0.0
    %2656 = vmatprep.subr.mxu0 0.0
    %2657 = vmatpush1.msra.mxu0 0.0
    %2658 = vmatprep.subr.mxu0 0.0
    %2659 = vmatpush1.msra.mxu0 0.0
    %2660 = vmatprep.subr.mxu0 0.0
    %2661 = vmatpush1.msra.mxu0 0.0
    %2662 = vmatprep.subr.mxu0 0.0
    %2663 = vmatpush1.msra.mxu0 0.0
    %2664 = vmatprep.subr.mxu0 0.0
    %2665 = vmatpush1.msra.mxu0 0.0
    %2666 = vmatprep.subr.mxu0 0.0
    %2667 = vmatpush1.msra.mxu0 0.0
    %2668 = vmatprep.mubr.f32.mxu0 0.0
    %2669 = vmatmul.mubr.f32.gmra.mrb[0].mxu0 %v2152
    %v2670 = vpop.f32.mrb[0].mxu0
    %v2671 = vadd.f32 %v87, %v2670
    %v2672 = vpop.f32.mrb[0].mxu0
    %v2673 = vadd.f32 %v91, %v2672
    %2674 = vdwg.mxu0
    %2675 = vmatprep.subr.mxu0 0.0
    %2676 = vmatpush1.msra.mxu0 %v2558
    %2677 = vmatprep.subr.mxu0 0.0
    %2678 = vmatpush1.msra.mxu0 %v2561
    %2679 = vmatprep.subr.mxu0 0.0
    %2680 = vmatpush1.msra.mxu0 %v2564
    %2681 = vmatprep.subr.mxu0 0.0
    %2682 = vmatpush1.msra.mxu0 %v2567
    %2683 = vmatprep.subr.mxu0 0.0
    %2684 = vmatpush1.msra.mxu0 %v2570
    %2685 = vmatprep.subr.mxu0 0.0
    %2686 = vmatpush1.msra.mxu0 %v2573
    %2687 = vmatprep.subr.mxu0 0.0
    %2688 = vmatpush1.msra.mxu0 %v2576
    %2689 = vmatprep.subr.mxu0 0.0
    %2690 = vmatpush1.msra.mxu0 %v2579
    %2691 = vmatprep.subr.mxu0 0.0
    %2692 = vmatpush1.msra.mxu0 %v2582
    %2693 = vmatprep.subr.mxu0 0.0
    %2694 = vmatpush1.msra.mxu0 %v2585
    %2695 = vmatprep.subr.mxu0 0.0
    %2696 = vmatpush1.msra.mxu0 %v2588
    %2697 = vmatprep.subr.mxu0 0.0
    %2698 = vmatpush1.msra.mxu0 %v2591
    %2699 = vmatprep.subr.mxu0 0.0
    %2700 = vmatpush1.msra.mxu0 %v2594
    %2701 = vmatprep.subr.mxu0 0.0
    %2702 = vmatpush1.msra.mxu0 %v2597
    %2703 = vmatprep.subr.mxu0 0.0
    %2704 = vmatpush1.msra.mxu0 %v2600
    %2705 = vmatprep.subr.mxu0 0.0
    %2706 = vmatpush1.msra.mxu0 %v2603
    %2707 = vmatprep.subr.mxu0 0.0
    %2708 = vmatpush1.msra.mxu0 0.0
    %2709 = vmatprep.subr.mxu0 0.0
    %2710 = vmatpush1.msra.mxu0 0.0
    %2711 = vmatprep.subr.mxu0 0.0
    %2712 = vmatpush1.msra.mxu0 0.0
    %2713 = vmatprep.subr.mxu0 0.0
    %2714 = vmatpush1.msra.mxu0 0.0
    %2715 = vmatprep.subr.mxu0 0.0
    %2716 = vmatpush1.msra.mxu0 0.0
    %2717 = vmatprep.subr.mxu0 0.0
    %2718 = vmatpush1.msra.mxu0 0.0
    %2719 = vmatprep.subr.mxu0 0.0
    %2720 = vmatpush1.msra.mxu0 0.0
    %2721 = vmatprep.subr.mxu0 0.0
    %2722 = vmatpush1.msra.mxu0 0.0
    %2723 = vmatprep.subr.mxu0 0.0
    %2724 = vmatpush1.msra.mxu0 0.0
    %2725 = vmatprep.subr.mxu0 0.0
    %2726 = vmatpush1.msra.mxu0 0.0
    %2727 = vmatprep.subr.mxu0 0.0
    %2728 = vmatpush1.msra.mxu0 0.0
    %2729 = vmatprep.subr.mxu0 0.0
    %2730 = vmatpush1.msra.mxu0 0.0
    %2731 = vmatprep.subr.mxu0 0.0
    %2732 = vmatpush1.msra.mxu0 0.0
    %2733 = vmatprep.subr.mxu0 0.0
    %2734 = vmatpush1.msra.mxu0 0.0
    %2735 = vmatprep.subr.mxu0 0.0
    %2736 = vmatpush1.msra.mxu0 0.0
    %2737 = vmatprep.subr.mxu0 0.0
    %2738 = vmatpush1.msra.mxu0 0.0
    %2739 = vmatprep.mubr.f32.mxu0 0.0
    %2740 = vmatmul.mubr.f32.gmra.mrb[0].mxu0 %v2152
    %v2741 = vpop.f32.mrb[0].mxu0
    %v2742 = vadd.f32 %v95, %v2741
    %v2743 = vpop.f32.mrb[0].mxu0
    %2744 = vdwg.mxu0
    %v2745 = vadd.f32 %v2555, %v2671
    %v2746 = vxor.u32 %v2745, 2147483648
    %v2747 = vmul.f32 %v2746, 1.442695
    %v2748 = vpow.pop %v2747
    %v2749 = vadd.f32 %v2748, 1.0
    %v2750 = vrcp.pop %v2749
    %v2751 = vmul.f32 1.0, %v2750
    %v2753 = vrot.slane %v2555, 2
    %v2755 = vadd.f32 %v2753, %v2673
    %v2756 = vxor.u32 %v2755, 2147483648
    %v2757 = vmul.f32 %v2756, 1.442695
    %v2758 = vpow.pop %v2757
    %v2759 = vadd.f32 %v2758, 1.0
    %v2760 = vrcp.pop %v2759
    %v2761 = vmul.f32 1.0, %v2760
    %v2762 = vmul.f32 %v2751, %v2742
    %v2763 = vrot.slane %v2555, 4
    %v2765 = vadd.f32 %v2763, %v2762
    %v2766 = vtanh.pop %v2765
    %v2767 = vsub.f32 1.0, %v2761
    %v2768 = vmul.f32 %v2767, %v2766
    %v2769 = vmul.f32 %v2761, %v2152
    %v2770 = vadd.f32 %v2768, %v2769
    %v2771 = vld [vmem:[%s266] sm:$0xff]
    %v2772 = vld [vmem:[%s266 + $0x8] sm:$0xff]
    %v2773 = vld [vmem:[%s266 + $0x10] sm:$0xff]
    %v2774 = vld [vmem:[%s266 + $0x18] sm:$0xff]
    %v2775 = vld [vmem:[%s266 + $0x20] sm:$0xff]
    %v2776 = vld [vmem:[%s266 + $0x28] sm:$0xff]
    %v2777 = vld [vmem:[%s266 + $0x30] sm:$0xff]
    %v2778 = vld [vmem:[%s266 + $0x38] sm:$0xff]
    %v2779 = vld [vmem:[%s266 + $0x40] sm:$0xff]
    %v2780 = vld [vmem:[%s266 + $0x48] sm:$0xff]
    %v2781 = vld [vmem:[%s266 + $0x50] sm:$0xff]
    %v2782 = vld [vmem:[%s266 + $0x58] sm:$0xff]
    %v2783 = vld [vmem:[%s266 + $0x60] sm:$0xff]
    %v2784 = vld [vmem:[%s266 + $0x68] sm:$0xff]
    %v2785 = vld [vmem:[%s266 + $0x70] sm:$0xff]
    %v2786 = vld [vmem:[%s266 + $0x78] sm:$0xff]
    %v2787 = vld [vmem:[%s266 + $0x80] sm:$0xff]
    %v2788 = vld [vmem:[%s266 + $0x88] sm:$0xff]
    %v2789 = vld [vmem:[%s266 + $0x90] sm:$0xff]
    %v2790 = vld [vmem:[%s266 + $0x98] sm:$0xff]
    %v2791 = vld [vmem:[%s266 + $0xa0] sm:$0xff]
    %v2792 = vld [vmem:[%s266 + $0xa8] sm:$0xff]
    %v2793 = vld [vmem:[%s266 + $0xb0] sm:$0xff]
    %v2794 = vld [vmem:[%s266 + $0xb8] sm:$0xff]
    %v2795 = vld [vmem:[%s266 + $0xc0] sm:$0xff]
    %v2796 = vld [vmem:[%s266 + $0xc8] sm:$0xff]
    %v2797 = vld [vmem:[%s266 + $0xd0] sm:$0xff]
    %v2798 = vld [vmem:[%s266 + $0xd8] sm:$0xff]
    %v2799 = vld [vmem:[%s266 + $0xe0] sm:$0xff]
    %v2800 = vld [vmem:[%s266 + $0xe8] sm:$0xff]
    %v2801 = vld [vmem:[%s266 + $0xf0] sm:$0xff]
    %v2802 = vld [vmem:[%s266 + $0xf8] sm:$0xff]
    %v2803 = vld [vmem:[%s266 + $0x100] sm:$0xff]
    %v2804 = vld [vmem:[%s266 + $0x108] sm:$0xff]
    %v2805 = vld [vmem:[%s266 + $0x110] sm:$0xff]
    %v2806 = vld [vmem:[%s266 + $0x118] sm:$0xff]
    %v2807 = vld [vmem:[%s266 + $0x120] sm:$0xff]
    %v2808 = vld [vmem:[%s266 + $0x128] sm:$0xff]
    %v2809 = vld [vmem:[%s266 + $0x130] sm:$0xff]
    %v2810 = vld [vmem:[%s266 + $0x138] sm:$0xff]
    %v2811 = vld [vmem:[%s266 + $0x140] sm:$0xff]
    %v2812 = vld [vmem:[%s266 + $0x148] sm:$0xff]
    %v2813 = vld [vmem:[%s266 + $0x150] sm:$0xff]
    %v2814 = vld [vmem:[%s266 + $0x158] sm:$0xff]
    %v2815 = vld [vmem:[%s266 + $0x160] sm:$0xff]
    %v2816 = vld [vmem:[%s266 + $0x168] sm:$0xff]
    %v2817 = vld [vmem:[%s266 + $0x170] sm:$0xff]
    %v2818 = vld [vmem:[%s266 + $0x178] sm:$0xff]
    %2819 = vmatprep.subr.mxu0 %v2772
    %2820 = vmatpush1.msra.mxu0 %v2771
    %2821 = vmatprep.subr.mxu0 %v2775
    %2822 = vmatpush1.msra.mxu0 %v2774
    %2823 = vmatprep.subr.mxu0 %v2778
    %2824 = vmatpush1.msra.mxu0 %v2777
    %2825 = vmatprep.subr.mxu0 %v2781
    %2826 = vmatpush1.msra.mxu0 %v2780
    %2827 = vmatprep.subr.mxu0 %v2784
    %2828 = vmatpush1.msra.mxu0 %v2783
    %2829 = vmatprep.subr.mxu0 %v2787
    %2830 = vmatpush1.msra.mxu0 %v2786
    %2831 = vmatprep.subr.mxu0 %v2790
    %2832 = vmatpush1.msra.mxu0 %v2789
    %2833 = vmatprep.subr.mxu0 %v2793
    %2834 = vmatpush1.msra.mxu0 %v2792
    %2835 = vmatprep.subr.mxu0 %v2796
    %2836 = vmatpush1.msra.mxu0 %v2795
    %2837 = vmatprep.subr.mxu0 %v2799
    %2838 = vmatpush1.msra.mxu0 %v2798
    %2839 = vmatprep.subr.mxu0 %v2802
    %2840 = vmatpush1.msra.mxu0 %v2801
    %2841 = vmatprep.subr.mxu0 %v2805
    %2842 = vmatpush1.msra.mxu0 %v2804
    %2843 = vmatprep.subr.mxu0 %v2808
    %2844 = vmatpush1.msra.mxu0 %v2807
    %2845 = vmatprep.subr.mxu0 %v2811
    %2846 = vmatpush1.msra.mxu0 %v2810
    %2847 = vmatprep.subr.mxu0 %v2814
    %2848 = vmatpush1.msra.mxu0 %v2813
    %2849 = vmatprep.subr.mxu0 %v2817
    %2850 = vmatpush1.msra.mxu0 %v2816
    %2851 = vmatprep.subr.mxu0 0.0
    %2852 = vmatpush1.msra.mxu0 0.0
    %2853 = vmatprep.subr.mxu0 0.0
    %2854 = vmatpush1.msra.mxu0 0.0
    %2855 = vmatprep.subr.mxu0 0.0
    %2856 = vmatpush1.msra.mxu0 0.0
    %2857 = vmatprep.subr.mxu0 0.0
    %2858 = vmatpush1.msra.mxu0 0.0
    %2859 = vmatprep.subr.mxu0 0.0
    %2860 = vmatpush1.msra.mxu0 0.0
    %2861 = vmatprep.subr.mxu0 0.0
    %2862 = vmatpush1.msra.mxu0 0.0
    %2863 = vmatprep.subr.mxu0 0.0
    %2864 = vmatpush1.msra.mxu0 0.0
    %2865 = vmatprep.subr.mxu0 0.0
    %2866 = vmatpush1.msra.mxu0 0.0
    %2867 = vmatprep.subr.mxu0 0.0
    %2868 = vmatpush1.msra.mxu0 0.0
    %2869 = vmatprep.subr.mxu0 0.0
    %2870 = vmatpush1.msra.mxu0 0.0
    %2871 = vmatprep.subr.mxu0 0.0
    %2872 = vmatpush1.msra.mxu0 0.0
    %2873 = vmatprep.subr.mxu0 0.0
    %2874 = vmatpush1.msra.mxu0 0.0
    %2875 = vmatprep.subr.mxu0 0.0
    %2876 = vmatpush1.msra.mxu0 0.0
    %2877 = vmatprep.subr.mxu0 0.0
    %2878 = vmatpush1.msra.mxu0 0.0
    %2879 = vmatprep.subr.mxu0 0.0
    %2880 = vmatpush1.msra.mxu0 0.0
    %2881 = vmatprep.subr.mxu0 0.0
    %2882 = vmatpush1.msra.mxu0 0.0
    %2883 = vmatprep.mubr.f32.mxu0 0.0
    %2884 = vmatmul.mubr.f32.gmra.mrb[0].mxu0 %v2770
    %v2885 = vpop.f32.mrb[0].mxu0
    %v2886 = vadd.f32 %v319, %v2885
    %v2887 = vpop.f32.mrb[0].mxu0
    %v2888 = vadd.f32 %v323, %v2887
    %2889 = vdwg.mxu0
    %2890 = vmatprep.subr.mxu0 0.0
    %2891 = vmatpush1.msra.mxu0 %v2773
    %2892 = vmatprep.subr.mxu0 0.0
    %2893 = vmatpush1.msra.mxu0 %v2776
    %2894 = vmatprep.subr.mxu0 0.0
    %2895 = vmatpush1.msra.mxu0 %v2779
    %2896 = vmatprep.subr.mxu0 0.0
    %2897 = vmatpush1.msra.mxu0 %v2782
    %2898 = vmatprep.subr.mxu0 0.0
    %2899 = vmatpush1.msra.mxu0 %v2785
    %2900 = vmatprep.subr.mxu0 0.0
    %2901 = vmatpush1.msra.mxu0 %v2788
    %2902 = vmatprep.subr.mxu0 0.0
    %2903 = vmatpush1.msra.mxu0 %v2791
    %2904 = vmatprep.subr.mxu0 0.0
    %2905 = vmatpush1.msra.mxu0 %v2794
    %2906 = vmatprep.subr.mxu0 0.0
    %2907 = vmatpush1.msra.mxu0 %v2797
    %2908 = vmatprep.subr.mxu0 0.0
    %2909 = vmatpush1.msra.mxu0 %v2800
    %2910 = vmatprep.subr.mxu0 0.0
    %2911 = vmatpush1.msra.mxu0 %v2803
    %2912 = vmatprep.subr.mxu0 0.0
    %2913 = vmatpush1.msra.mxu0 %v2806
    %2914 = vmatprep.subr.mxu0 0.0
    %2915 = vmatpush1.msra.mxu0 %v2809
    %2916 = vmatprep.subr.mxu0 0.0
    %2917 = vmatpush1.msra.mxu0 %v2812
    %2918 = vmatprep.subr.mxu0 0.0
    %2919 = vmatpush1.msra.mxu0 %v2815
    %2920 = vmatprep.subr.mxu0 0.0
    %2921 = vmatpush1.msra.mxu0 %v2818
    %2922 = vmatprep.subr.mxu0 0.0
    %2923 = vmatpush1.msra.mxu0 0.0
    %2924 = vmatprep.subr.mxu0 0.0
    %2925 = vmatpush1.msra.mxu0 0.0
    %2926 = vmatprep.subr.mxu0 0.0
    %2927 = vmatpush1.msra.mxu0 0.0
    %2928 = vmatprep.subr.mxu0 0.0
    %2929 = vmatpush1.msra.mxu0 0.0
    %2930 = vmatprep.subr.mxu0 0.0
    %2931 = vmatpush1.msra.mxu0 0.0
    %2932 = vmatprep.subr.mxu0 0.0
    %2933 = vmatpush1.msra.mxu0 0.0
    %2934 = vmatprep.subr.mxu0 0.0
    %2935 = vmatpush1.msra.mxu0 0.0
    %2936 = vmatprep.subr.mxu0 0.0
    %2937 = vmatpush1.msra.mxu0 0.0
    %2938 = vmatprep.subr.mxu0 0.0
    %2939 = vmatpush1.msra.mxu0 0.0
    %2940 = vmatprep.subr.mxu0 0.0
    %2941 = vmatpush1.msra.mxu0 0.0
    %2942 = vmatprep.subr.mxu0 0.0
    %2943 = vmatpush1.msra.mxu0 0.0
    %2944 = vmatprep.subr.mxu0 0.0
    %2945 = vmatpush1.msra.mxu0 0.0
    %2946 = vmatprep.subr.mxu0 0.0
    %2947 = vmatpush1.msra.mxu0 0.0
    %2948 = vmatprep.subr.mxu0 0.0
    %2949 = vmatpush1.msra.mxu0 0.0
    %2950 = vmatprep.subr.mxu0 0.0
    %2951 = vmatpush1.msra.mxu0 0.0
    %2952 = vmatprep.subr.mxu0 0.0
    %2953 = vmatpush1.msra.mxu0 0.0
    %2954 = vmatprep.mubr.f32.mxu0 0.0
    %2955 = vmatmul.mubr.f32.gmra.mrb[0].mxu0 %v2770
    %v2956 = vpop.f32.mrb[0].mxu0
    %v2957 = vadd.f32 %v327, %v2956
    %v2958 = vpop.f32.mrb[0].mxu0
    %2959 = vdwg.mxu0
    %v2960 = vld [vmem:[%s472] sm:$0xff]
    %v2961 = vld [vmem:[%s472 + $0x8] sm:$0xff]
    %v2962 = vld [vmem:[%s472 + $0x10] sm:$0xff]
    %v2963 = vld [vmem:[%s472 + $0x18] sm:$0xff]
    %v2964 = vld [vmem:[%s472 + $0x20] sm:$0xff]
    %v2965 = vld [vmem:[%s472 + $0x28] sm:$0xff]
    %v2966 = vld [vmem:[%s472 + $0x30] sm:$0xff]
    %v2967 = vld [vmem:[%s472 + $0x38] sm:$0xff]
    %v2968 = vld [vmem:[%s472 + $0x40] sm:$0xff]
    %v2969 = vld [vmem:[%s472 + $0x48] sm:$0xff]
    %v2970 = vld [vmem:[%s472 + $0x50] sm:$0xff]
    %v2971 = vld [vmem:[%s472 + $0x58] sm:$0xff]
    %v2972 = vld [vmem:[%s472 + $0x60] sm:$0xff]
    %v2973 = vld [vmem:[%s472 + $0x68] sm:$0xff]
    %v2974 = vld [vmem:[%s472 + $0x70] sm:$0xff]
    %v2975 = vld [vmem:[%s472 + $0x78] sm:$0xff]
    %v2976 = vld [vmem:[%s472 + $0x80] sm:$0xff]
    %v2977 = vld [vmem:[%s472 + $0x88] sm:$0xff]
    %v2978 = vld [vmem:[%s472 + $0x90] sm:$0xff]
    %v2979 = vld [vmem:[%s472 + $0x98] sm:$0xff]
    %v2980 = vld [vmem:[%s472 + $0xa0] sm:$0xff]
    %v2981 = vld [vmem:[%s472 + $0xa8] sm:$0xff]
    %v2982 = vld [vmem:[%s472 + $0xb0] sm:$0xff]
    %v2983 = vld [vmem:[%s472 + $0xb8] sm:$0xff]
    %v2984 = vld [vmem:[%s472 + $0xc0] sm:$0xff]
    %v2985 = vld [vmem:[%s472 + $0xc8] sm:$0xff]
    %v2986 = vld [vmem:[%s472 + $0xd0] sm:$0xff]
    %v2987 = vld [vmem:[%s472 + $0xd8] sm:$0xff]
    %v2988 = vld [vmem:[%s472 + $0xe0] sm:$0xff]
    %v2989 = vld [vmem:[%s472 + $0xe8] sm:$0xff]
    %v2990 = vld [vmem:[%s472 + $0xf0] sm:$0xff]
    %v2991 = vld [vmem:[%s472 + $0xf8] sm:$0xff]
    %v2992 = vld [vmem:[%s472 + $0x100] sm:$0xff]
    %v2993 = vld [vmem:[%s472 + $0x108] sm:$0xff]
    %v2994 = vld [vmem:[%s472 + $0x110] sm:$0xff]
    %v2995 = vld [vmem:[%s472 + $0x118] sm:$0xff]
    %v2996 = vld [vmem:[%s472 + $0x120] sm:$0xff]
    %v2997 = vld [vmem:[%s472 + $0x128] sm:$0xff]
    %v2998 = vld [vmem:[%s472 + $0x130] sm:$0xff]
    %v2999 = vld [vmem:[%s472 + $0x138] sm:$0xff]
    %v3000 = vld [vmem:[%s472 + $0x140] sm:$0xff]
    %v3001 = vld [vmem:[%s472 + $0x148] sm:$0xff]
    %v3002 = vld [vmem:[%s472 + $0x150] sm:$0xff]
    %v3003 = vld [vmem:[%s472 + $0x158] sm:$0xff]
    %v3004 = vld [vmem:[%s472 + $0x160] sm:$0xff]
    %v3005 = vld [vmem:[%s472 + $0x168] sm:$0xff]
    %v3006 = vld [vmem:[%s472 + $0x170] sm:$0xff]
    %v3007 = vld [vmem:[%s472 + $0x178] sm:$0xff]
    %3008 = vmatprep.subr.mxu0 %v2961
    %3009 = vmatpush1.msra.mxu0 %v2960
    %3010 = vmatprep.subr.mxu0 %v2964
    %3011 = vmatpush1.msra.mxu0 %v2963
    %3012 = vmatprep.subr.mxu0 %v2967
    %3013 = vmatpush1.msra.mxu0 %v2966
    %3014 = vmatprep.subr.mxu0 %v2970
    %3015 = vmatpush1.msra.mxu0 %v2969
    %3016 = vmatprep.subr.mxu0 %v2973
    %3017 = vmatpush1.msra.mxu0 %v2972
    %3018 = vmatprep.subr.mxu0 %v2976
    %3019 = vmatpush1.msra.mxu0 %v2975
    %3020 = vmatprep.subr.mxu0 %v2979
    %3021 = vmatpush1.msra.mxu0 %v2978
    %3022 = vmatprep.subr.mxu0 %v2982
    %3023 = vmatpush1.msra.mxu0 %v2981
    %3024 = vmatprep.subr.mxu0 %v2985
    %3025 = vmatpush1.msra.mxu0 %v2984
    %3026 = vmatprep.subr.mxu0 %v2988
    %3027 = vmatpush1.msra.mxu0 %v2987
    %3028 = vmatprep.subr.mxu0 %v2991
    %3029 = vmatpush1.msra.mxu0 %v2990
    %3030 = vmatprep.subr.mxu0 %v2994
    %3031 = vmatpush1.msra.mxu0 %v2993
    %3032 = vmatprep.subr.mxu0 %v2997
    %3033 = vmatpush1.msra.mxu0 %v2996
    %3034 = vmatprep.subr.mxu0 %v3000
    %3035 = vmatpush1.msra.mxu0 %v2999
    %3036 = vmatprep.subr.mxu0 %v3003
    %3037 = vmatpush1.msra.mxu0 %v3002
    %3038 = vmatprep.subr.mxu0 %v3006
    %3039 = vmatpush1.msra.mxu0 %v3005
    %3040 = vmatprep.subr.mxu0 0.0
    %3041 = vmatpush1.msra.mxu0 0.0
    %3042 = vmatprep.subr.mxu0 0.0
    %3043 = vmatpush1.msra.mxu0 0.0
    %3044 = vmatprep.subr.mxu0 0.0
    %3045 = vmatpush1.msra.mxu0 0.0
    %3046 = vmatprep.subr.mxu0 0.0
    %3047 = vmatpush1.msra.mxu0 0.0
    %3048 = vmatprep.subr.mxu0 0.0
    %3049 = vmatpush1.msra.mxu0 0.0
    %3050 = vmatprep.subr.mxu0 0.0
    %3051 = vmatpush1.msra.mxu0 0.0
    %3052 = vmatprep.subr.mxu0 0.0
    %3053 = vmatpush1.msra.mxu0 0.0
    %3054 = vmatprep.subr.mxu0 0.0
    %3055 = vmatpush1.msra.mxu0 0.0
    %3056 = vmatprep.subr.mxu0 0.0
    %3057 = vmatpush1.msra.mxu0 0.0
    %3058 = vmatprep.subr.mxu0 0.0
    %3059 = vmatpush1.msra.mxu0 0.0
    %3060 = vmatprep.subr.mxu0 0.0
    %3061 = vmatpush1.msra.mxu0 0.0
    %3062 = vmatprep.subr.mxu0 0.0
    %3063 = vmatpush1.msra.mxu0 0.0
    %3064 = vmatprep.subr.mxu0 0.0
    %3065 = vmatpush1.msra.mxu0 0.0
    %3066 = vmatprep.subr.mxu0 0.0
    %3067 = vmatpush1.msra.mxu0 0.0
    %3068 = vmatprep.subr.mxu0 0.0
    %3069 = vmatpush1.msra.mxu0 0.0
    %3070 = vmatprep.subr.mxu0 0.0
    %3071 = vmatpush1.msra.mxu0 0.0
    %3072 = vmatprep.mubr.f32.mxu0 0.0
    %3073 = vmatmul.mubr.f32.gmra.mrb[0].mxu0 %v2551
    %v3074 = vpop.f32.mrb[0].mxu0
    %v3075 = vadd.f32 %v525, %v3074
    %v3076 = vpop.f32.mrb[0].mxu0
    %v3077 = vadd.f32 %v529, %v3076
    %3078 = vdwg.mxu0
    %3079 = vmatprep.subr.mxu0 0.0
    %3080 = vmatpush1.msra.mxu0 %v2962
    %3081 = vmatprep.subr.mxu0 0.0
    %3082 = vmatpush1.msra.mxu0 %v2965
    %3083 = vmatprep.subr.mxu0 0.0
    %3084 = vmatpush1.msra.mxu0 %v2968
    %3085 = vmatprep.subr.mxu0 0.0
    %3086 = vmatpush1.msra.mxu0 %v2971
    %3087 = vmatprep.subr.mxu0 0.0
    %3088 = vmatpush1.msra.mxu0 %v2974
    %3089 = vmatprep.subr.mxu0 0.0
    %3090 = vmatpush1.msra.mxu0 %v2977
    %3091 = vmatprep.subr.mxu0 0.0
    %3092 = vmatpush1.msra.mxu0 %v2980
    %3093 = vmatprep.subr.mxu0 0.0
    %3094 = vmatpush1.msra.mxu0 %v2983
    %3095 = vmatprep.subr.mxu0 0.0
    %3096 = vmatpush1.msra.mxu0 %v2986
    %3097 = vmatprep.subr.mxu0 0.0
    %3098 = vmatpush1.msra.mxu0 %v2989
    %3099 = vmatprep.subr.mxu0 0.0
    %3100 = vmatpush1.msra.mxu0 %v2992
    %3101 = vmatprep.subr.mxu0 0.0
    %3102 = vmatpush1.msra.mxu0 %v2995
    %3103 = vmatprep.subr.mxu0 0.0
    %3104 = vmatpush1.msra.mxu0 %v2998
    %3105 = vmatprep.subr.mxu0 0.0
    %3106 = vmatpush1.msra.mxu0 %v3001
    %3107 = vmatprep.subr.mxu0 0.0
    %3108 = vmatpush1.msra.mxu0 %v3004
    %3109 = vmatprep.subr.mxu0 0.0
    %3110 = vmatpush1.msra.mxu0 %v3007
    %3111 = vmatprep.subr.mxu0 0.0
    %3112 = vmatpush1.msra.mxu0 0.0
    %3113 = vmatprep.subr.mxu0 0.0
    %3114 = vmatpush1.msra.mxu0 0.0
    %3115 = vmatprep.subr.mxu0 0.0
    %3116 = vmatpush1.msra.mxu0 0.0
    %3117 = vmatprep.subr.mxu0 0.0
    %3118 = vmatpush1.msra.mxu0 0.0
    %3119 = vmatprep.subr.mxu0 0.0
    %3120 = vmatpush1.msra.mxu0 0.0
    %3121 = vmatprep.subr.mxu0 0.0
    %3122 = vmatpush1.msra.mxu0 0.0
    %3123 = vmatprep.subr.mxu0 0.0
    %3124 = vmatpush1.msra.mxu0 0.0
    %3125 = vmatprep.subr.mxu0 0.0
    %3126 = vmatpush1.msra.mxu0 0.0
    %3127 = vmatprep.subr.mxu0 0.0
    %3128 = vmatpush1.msra.mxu0 0.0
    %3129 = vmatprep.subr.mxu0 0.0
    %3130 = vmatpush1.msra.mxu0 0.0
    %3131 = vmatprep.subr.mxu0 0.0
    %3132 = vmatpush1.msra.mxu0 0.0
    %3133 = vmatprep.subr.mxu0 0.0
    %3134 = vmatpush1.msra.mxu0 0.0
    %3135 = vmatprep.subr.mxu0 0.0
    %3136 = vmatpush1.msra.mxu0 0.0
    %3137 = vmatprep.subr.mxu0 0.0
    %3138 = vmatpush1.msra.mxu0 0.0
    %3139 = vmatprep.subr.mxu0 0.0
    %3140 = vmatpush1.msra.mxu0 0.0
    %3141 = vmatprep.subr.mxu0 0.0
    %3142 = vmatpush1.msra.mxu0 0.0
    %3143 = vmatprep.mubr.f32.mxu0 0.0
    %3144 = vmatmul.mubr.f32.gmra.mrb[0].mxu0 %v2551
    %v3145 = vpop.f32.mrb[0].mxu0
    %v3146 = vadd.f32 %v533, %v3145
    %v3147 = vpop.f32.mrb[0].mxu0
    %3148 = vdwg.mxu0
    %v3149 = vadd.f32 %v2886, %v3075
    %v3150 = vxor.u32 %v3149, 2147483648
    %v3151 = vmul.f32 %v3150, 1.442695
    %v3152 = vpow.pop %v3151
    %v3153 = vadd.f32 %v3152, 1.0
    %v3154 = vrcp.pop %v3153
    %v3155 = vmul.f32 1.0, %v3154
    %v3156 = vadd.f32 %v2888, %v3077
    %v3157 = vxor.u32 %v3156, 2147483648
    %v3158 = vmul.f32 %v3157, 1.442695
    %v3159 = vpow.pop %v3158
    %v3160 = vadd.f32 %v3159, 1.0
    %v3161 = vrcp.pop %v3160
    %v3162 = vmul.f32 1.0, %v3161
    %v3163 = vmul.f32 %v3155, %v3146
    %v3164 = vadd.f32 %v2957, %v3163
    %v3165 = vtanh.pop %v3164
    %v3166 = vsub.f32 1.0, %v3162
    %v3167 = vmul.f32 %v3166, %v3165
    %v3168 = vmul.f32 %v3162, %v2551
    %v3169 = vadd.f32 %v3167, %v3168
    %s3170 = scalar_lea.vmem %s6, 8
    %3171 = vst [vmem:[%s3170] sm:$0x3] %v3169
    %s3172 = scalar_lea.vmem %s0, 30
    %v3173 = vld [vmem:[%s3172] sm:$0x3f]
    %v3174 = vld [vmem:[%s2] sm:$0xff]
    %v3175 = vld [vmem:[%s2 + $0x8] sm:$0xff]
    %v3176 = vld [vmem:[%s2 + $0x10] sm:$0xff]
    %v3177 = vld [vmem:[%s2 + $0x18] sm:$0xff]
    %v3178 = vld [vmem:[%s2 + $0x20] sm:$0xff]
    %v3179 = vld [vmem:[%s2 + $0x28] sm:$0xff]
    %v3180 = vld [vmem:[%s2 + $0x30] sm:$0xff]
    %v3181 = vld [vmem:[%s2 + $0x38] sm:$0xff]
    %v3182 = vld [vmem:[%s2 + $0x40] sm:$0xff]
    %v3183 = vld [vmem:[%s2 + $0x48] sm:$0xff]
    %v3184 = vld [vmem:[%s2 + $0x50] sm:$0xff]
    %v3185 = vld [vmem:[%s2 + $0x58] sm:$0xff]
    %v3186 = vld [vmem:[%s2 + $0x60] sm:$0xff]
    %v3187 = vld [vmem:[%s2 + $0x68] sm:$0xff]
    %v3188 = vld [vmem:[%s2 + $0x70] sm:$0xff]
    %v3189 = vld [vmem:[%s2 + $0x78] sm:$0xff]
    %v3190 = vld [vmem:[%s2 + $0x80] sm:$0xff]
    %v3191 = vld [vmem:[%s2 + $0x88] sm:$0xff]
    %v3192 = vld [vmem:[%s2 + $0x90] sm:$0xff]
    %v3193 = vld [vmem:[%s2 + $0x98] sm:$0xff]
    %v3194 = vld [vmem:[%s2 + $0xa0] sm:$0xff]
    %v3195 = vld [vmem:[%s2 + $0xa8] sm:$0xff]
    %v3196 = vld [vmem:[%s2 + $0xb0] sm:$0xff]
    %v3197 = vld [vmem:[%s2 + $0xb8] sm:$0xff]
    %v3198 = vld [vmem:[%s2 + $0xc0] sm:$0xff]
    %v3199 = vld [vmem:[%s2 + $0xc8] sm:$0xff]
    %v3200 = vld [vmem:[%s2 + $0xd0] sm:$0xff]
    %v3201 = vld [vmem:[%s2 + $0xd8] sm:$0xff]
    %v3202 = vld [vmem:[%s2 + $0xe0] sm:$0xff]
    %v3203 = vld [vmem:[%s2 + $0xe8] sm:$0xff]
    %v3204 = vld [vmem:[%s2 + $0xf0] sm:$0xff]
    %v3205 = vld [vmem:[%s2 + $0xf8] sm:$0xff]
    %v3206 = vld [vmem:[%s2 + $0x100] sm:$0xff]
    %v3207 = vld [vmem:[%s2 + $0x108] sm:$0xff]
    %v3208 = vld [vmem:[%s2 + $0x110] sm:$0xff]
    %v3209 = vld [vmem:[%s2 + $0x118] sm:$0xff]
    %v3210 = vld [vmem:[%s2 + $0x120] sm:$0xff]
    %v3211 = vld [vmem:[%s2 + $0x128] sm:$0xff]
    %v3212 = vld [vmem:[%s2 + $0x130] sm:$0xff]
    %v3213 = vld [vmem:[%s2 + $0x138] sm:$0xff]
    %v3214 = vld [vmem:[%s2 + $0x140] sm:$0xff]
    %v3215 = vld [vmem:[%s2 + $0x148] sm:$0xff]
    %v3216 = vld [vmem:[%s2 + $0x150] sm:$0xff]
    %v3217 = vld [vmem:[%s2 + $0x158] sm:$0xff]
    %v3218 = vld [vmem:[%s2 + $0x160] sm:$0xff]
    %v3219 = vld [vmem:[%s2 + $0x168] sm:$0xff]
    %v3220 = vld [vmem:[%s2 + $0x170] sm:$0xff]
    %v3221 = vld [vmem:[%s2 + $0x178] sm:$0xff]
    %3222 = vmatprep.subr.mxu0 %v3175
    %3223 = vmatpush1.msra.mxu0 %v3174
    %3224 = vmatprep.subr.mxu0 %v3178
    %3225 = vmatpush1.msra.mxu0 %v3177
    %3226 = vmatprep.subr.mxu0 %v3181
    %3227 = vmatpush1.msra.mxu0 %v3180
    %3228 = vmatprep.subr.mxu0 %v3184
    %3229 = vmatpush1.msra.mxu0 %v3183
    %3230 = vmatprep.subr.mxu0 %v3187
    %3231 = vmatpush1.msra.mxu0 %v3186
    %3232 = vmatprep.subr.mxu0 %v3190
    %3233 = vmatpush1.msra.mxu0 %v3189
    %3234 = vmatprep.subr.mxu0 %v3193
    %3235 = vmatpush1.msra.mxu0 %v3192
    %3236 = vmatprep.subr.mxu0 %v3196
    %3237 = vmatpush1.msra.mxu0 %v3195
    %3238 = vmatprep.subr.mxu0 %v3199
    %3239 = vmatpush1.msra.mxu0 %v3198
    %3240 = vmatprep.subr.mxu0 %v3202
    %3241 = vmatpush1.msra.mxu0 %v3201
    %3242 = vmatprep.subr.mxu0 %v3205
    %3243 = vmatpush1.msra.mxu0 %v3204
    %3244 = vmatprep.subr.mxu0 %v3208
    %3245 = vmatpush1.msra.mxu0 %v3207
    %3246 = vmatprep.subr.mxu0 %v3211
    %3247 = vmatpush1.msra.mxu0 %v3210
    %3248 = vmatprep.subr.mxu0 %v3214
    %3249 = vmatpush1.msra.mxu0 %v3213
    %3250 = vmatprep.subr.mxu0 %v3217
    %3251 = vmatpush1.msra.mxu0 %v3216
    %3252 = vmatprep.subr.mxu0 %v3220
    %3253 = vmatpush1.msra.mxu0 %v3219
    %3254 = vmatprep.subr.mxu0 0.0
    %3255 = vmatpush1.msra.mxu0 0.0
    %3256 = vmatprep.subr.mxu0 0.0
    %3257 = vmatpush1.msra.mxu0 0.0
    %3258 = vmatprep.subr.mxu0 0.0
    %3259 = vmatpush1.msra.mxu0 0.0
    %3260 = vmatprep.subr.mxu0 0.0
    %3261 = vmatpush1.msra.mxu0 0.0
    %3262 = vmatprep.subr.mxu0 0.0
    %3263 = vmatpush1.msra.mxu0 0.0
    %3264 = vmatprep.subr.mxu0 0.0
    %3265 = vmatpush1.msra.mxu0 0.0
    %3266 = vmatprep.subr.mxu0 0.0
    %3267 = vmatpush1.msra.mxu0 0.0
    %3268 = vmatprep.subr.mxu0 0.0
    %3269 = vmatpush1.msra.mxu0 0.0
    %3270 = vmatprep.subr.mxu0 0.0
    %3271 = vmatpush1.msra.mxu0 0.0
    %3272 = vmatprep.subr.mxu0 0.0
    %3273 = vmatpush1.msra.mxu0 0.0
    %3274 = vmatprep.subr.mxu0 0.0
    %3275 = vmatpush1.msra.mxu0 0.0
    %3276 = vmatprep.subr.mxu0 0.0
    %3277 = vmatpush1.msra.mxu0 0.0
    %3278 = vmatprep.subr.mxu0 0.0
    %3279 = vmatpush1.msra.mxu0 0.0
    %3280 = vmatprep.subr.mxu0 0.0
    %3281 = vmatpush1.msra.mxu0 0.0
    %3282 = vmatprep.subr.mxu0 0.0
    %3283 = vmatpush1.msra.mxu0 0.0
    %3284 = vmatprep.subr.mxu0 0.0
    %3285 = vmatpush1.msra.mxu0 0.0
    %3286 = vmatprep.mubr.f32.mxu0 0.0
    %3287 = vmatmul.mubr.f32.gmra.mrb[0].mxu0 %v2770
    %v3288 = vpop.f32.mrb[0].mxu0
    %v3289 = vadd.f32 %v87, %v3288
    %v3290 = vpop.f32.mrb[0].mxu0
    %v3291 = vadd.f32 %v91, %v3290
    %3292 = vdwg.mxu0
    %3293 = vmatprep.subr.mxu0 0.0
    %3294 = vmatpush1.msra.mxu0 %v3176
    %3295 = vmatprep.subr.mxu0 0.0
    %3296 = vmatpush1.msra.mxu0 %v3179
    %3297 = vmatprep.subr.mxu0 0.0
    %3298 = vmatpush1.msra.mxu0 %v3182
    %3299 = vmatprep.subr.mxu0 0.0
    %3300 = vmatpush1.msra.mxu0 %v3185
    %3301 = vmatprep.subr.mxu0 0.0
    %3302 = vmatpush1.msra.mxu0 %v3188
    %3303 = vmatprep.subr.mxu0 0.0
    %3304 = vmatpush1.msra.mxu0 %v3191
    %3305 = vmatprep.subr.mxu0 0.0
    %3306 = vmatpush1.msra.mxu0 %v3194
    %3307 = vmatprep.subr.mxu0 0.0
    %3308 = vmatpush1.msra.mxu0 %v3197
    %3309 = vmatprep.subr.mxu0 0.0
    %3310 = vmatpush1.msra.mxu0 %v3200
    %3311 = vmatprep.subr.mxu0 0.0
    %3312 = vmatpush1.msra.mxu0 %v3203
    %3313 = vmatprep.subr.mxu0 0.0
    %3314 = vmatpush1.msra.mxu0 %v3206
    %3315 = vmatprep.subr.mxu0 0.0
    %3316 = vmatpush1.msra.mxu0 %v3209
    %3317 = vmatprep.subr.mxu0 0.0
    %3318 = vmatpush1.msra.mxu0 %v3212
    %3319 = vmatprep.subr.mxu0 0.0
    %3320 = vmatpush1.msra.mxu0 %v3215
    %3321 = vmatprep.subr.mxu0 0.0
    %3322 = vmatpush1.msra.mxu0 %v3218
    %3323 = vmatprep.subr.mxu0 0.0
    %3324 = vmatpush1.msra.mxu0 %v3221
    %3325 = vmatprep.subr.mxu0 0.0
    %3326 = vmatpush1.msra.mxu0 0.0
    %3327 = vmatprep.subr.mxu0 0.0
    %3328 = vmatpush1.msra.mxu0 0.0
    %3329 = vmatprep.subr.mxu0 0.0
    %3330 = vmatpush1.msra.mxu0 0.0
    %3331 = vmatprep.subr.mxu0 0.0
    %3332 = vmatpush1.msra.mxu0 0.0
    %3333 = vmatprep.subr.mxu0 0.0
    %3334 = vmatpush1.msra.mxu0 0.0
    %3335 = vmatprep.subr.mxu0 0.0
    %3336 = vmatpush1.msra.mxu0 0.0
    %3337 = vmatprep.subr.mxu0 0.0
    %3338 = vmatpush1.msra.mxu0 0.0
    %3339 = vmatprep.subr.mxu0 0.0
    %3340 = vmatpush1.msra.mxu0 0.0
    %3341 = vmatprep.subr.mxu0 0.0
    %3342 = vmatpush1.msra.mxu0 0.0
    %3343 = vmatprep.subr.mxu0 0.0
    %3344 = vmatpush1.msra.mxu0 0.0
    %3345 = vmatprep.subr.mxu0 0.0
    %3346 = vmatpush1.msra.mxu0 0.0
    %3347 = vmatprep.subr.mxu0 0.0
    %3348 = vmatpush1.msra.mxu0 0.0
    %3349 = vmatprep.subr.mxu0 0.0
    %3350 = vmatpush1.msra.mxu0 0.0
    %3351 = vmatprep.subr.mxu0 0.0
    %3352 = vmatpush1.msra.mxu0 0.0
    %3353 = vmatprep.subr.mxu0 0.0
    %3354 = vmatpush1.msra.mxu0 0.0
    %3355 = vmatprep.subr.mxu0 0.0
    %3356 = vmatpush1.msra.mxu0 0.0
    %3357 = vmatprep.mubr.f32.mxu0 0.0
    %3358 = vmatmul.mubr.f32.gmra.mrb[0].mxu0 %v2770
    %v3359 = vpop.f32.mrb[0].mxu0
    %v3360 = vadd.f32 %v95, %v3359
    %v3361 = vpop.f32.mrb[0].mxu0
    %3362 = vdwg.mxu0
    %v3363 = vadd.f32 %v3173, %v3289
    %v3364 = vxor.u32 %v3363, 2147483648
    %v3365 = vmul.f32 %v3364, 1.442695
    %v3366 = vpow.pop %v3365
    %v3367 = vadd.f32 %v3366, 1.0
    %v3368 = vrcp.pop %v3367
    %v3369 = vmul.f32 1.0, %v3368
    %v3371 = vrot.slane %v3173, 2
    %v3373 = vadd.f32 %v3371, %v3291
    %v3374 = vxor.u32 %v3373, 2147483648
    %v3375 = vmul.f32 %v3374, 1.442695
    %v3376 = vpow.pop %v3375
    %v3377 = vadd.f32 %v3376, 1.0
    %v3378 = vrcp.pop %v3377
    %v3379 = vmul.f32 1.0, %v3378
    %v3380 = vmul.f32 %v3369, %v3360
    %v3381 = vrot.slane %v3173, 4
    %v3383 = vadd.f32 %v3381, %v3380
    %v3384 = vtanh.pop %v3383
    %v3385 = vsub.f32 1.0, %v3379
    %v3386 = vmul.f32 %v3385, %v3384
    %v3387 = vmul.f32 %v3379, %v2770
    %v3388 = vadd.f32 %v3386, %v3387
    %v3389 = vld [vmem:[%s266] sm:$0xff]
    %v3390 = vld [vmem:[%s266 + $0x8] sm:$0xff]
    %v3391 = vld [vmem:[%s266 + $0x10] sm:$0xff]
    %v3392 = vld [vmem:[%s266 + $0x18] sm:$0xff]
    %v3393 = vld [vmem:[%s266 + $0x20] sm:$0xff]
    %v3394 = vld [vmem:[%s266 + $0x28] sm:$0xff]
    %v3395 = vld [vmem:[%s266 + $0x30] sm:$0xff]
    %v3396 = vld [vmem:[%s266 + $0x38] sm:$0xff]
    %v3397 = vld [vmem:[%s266 + $0x40] sm:$0xff]
    %v3398 = vld [vmem:[%s266 + $0x48] sm:$0xff]
    %v3399 = vld [vmem:[%s266 + $0x50] sm:$0xff]
    %v3400 = vld [vmem:[%s266 + $0x58] sm:$0xff]
    %v3401 = vld [vmem:[%s266 + $0x60] sm:$0xff]
    %v3402 = vld [vmem:[%s266 + $0x68] sm:$0xff]
    %v3403 = vld [vmem:[%s266 + $0x70] sm:$0xff]
    %v3404 = vld [vmem:[%s266 + $0x78] sm:$0xff]
    %v3405 = vld [vmem:[%s266 + $0x80] sm:$0xff]
    %v3406 = vld [vmem:[%s266 + $0x88] sm:$0xff]
    %v3407 = vld [vmem:[%s266 + $0x90] sm:$0xff]
    %v3408 = vld [vmem:[%s266 + $0x98] sm:$0xff]
    %v3409 = vld [vmem:[%s266 + $0xa0] sm:$0xff]
    %v3410 = vld [vmem:[%s266 + $0xa8] sm:$0xff]
    %v3411 = vld [vmem:[%s266 + $0xb0] sm:$0xff]
    %v3412 = vld [vmem:[%s266 + $0xb8] sm:$0xff]
    %v3413 = vld [vmem:[%s266 + $0xc0] sm:$0xff]
    %v3414 = vld [vmem:[%s266 + $0xc8] sm:$0xff]
    %v3415 = vld [vmem:[%s266 + $0xd0] sm:$0xff]
    %v3416 = vld [vmem:[%s266 + $0xd8] sm:$0xff]
    %v3417 = vld [vmem:[%s266 + $0xe0] sm:$0xff]
    %v3418 = vld [vmem:[%s266 + $0xe8] sm:$0xff]
    %v3419 = vld [vmem:[%s266 + $0xf0] sm:$0xff]
    %v3420 = vld [vmem:[%s266 + $0xf8] sm:$0xff]
    %v3421 = vld [vmem:[%s266 + $0x100] sm:$0xff]
    %v3422 = vld [vmem:[%s266 + $0x108] sm:$0xff]
    %v3423 = vld [vmem:[%s266 + $0x110] sm:$0xff]
    %v3424 = vld [vmem:[%s266 + $0x118] sm:$0xff]
    %v3425 = vld [vmem:[%s266 + $0x120] sm:$0xff]
    %v3426 = vld [vmem:[%s266 + $0x128] sm:$0xff]
    %v3427 = vld [vmem:[%s266 + $0x130] sm:$0xff]
    %v3428 = vld [vmem:[%s266 + $0x138] sm:$0xff]
    %v3429 = vld [vmem:[%s266 + $0x140] sm:$0xff]
    %v3430 = vld [vmem:[%s266 + $0x148] sm:$0xff]
    %v3431 = vld [vmem:[%s266 + $0x150] sm:$0xff]
    %v3432 = vld [vmem:[%s266 + $0x158] sm:$0xff]
    %v3433 = vld [vmem:[%s266 + $0x160] sm:$0xff]
    %v3434 = vld [vmem:[%s266 + $0x168] sm:$0xff]
    %v3435 = vld [vmem:[%s266 + $0x170] sm:$0xff]
    %v3436 = vld [vmem:[%s266 + $0x178] sm:$0xff]
    %3437 = vmatprep.subr.mxu0 %v3390
    %3438 = vmatpush1.msra.mxu0 %v3389
    %3439 = vmatprep.subr.mxu0 %v3393
    %3440 = vmatpush1.msra.mxu0 %v3392
    %3441 = vmatprep.subr.mxu0 %v3396
    %3442 = vmatpush1.msra.mxu0 %v3395
    %3443 = vmatprep.subr.mxu0 %v3399
    %3444 = vmatpush1.msra.mxu0 %v3398
    %3445 = vmatprep.subr.mxu0 %v3402
    %3446 = vmatpush1.msra.mxu0 %v3401
    %3447 = vmatprep.subr.mxu0 %v3405
    %3448 = vmatpush1.msra.mxu0 %v3404
    %3449 = vmatprep.subr.mxu0 %v3408
    %3450 = vmatpush1.msra.mxu0 %v3407
    %3451 = vmatprep.subr.mxu0 %v3411
    %3452 = vmatpush1.msra.mxu0 %v3410
    %3453 = vmatprep.subr.mxu0 %v3414
    %3454 = vmatpush1.msra.mxu0 %v3413
    %3455 = vmatprep.subr.mxu0 %v3417
    %3456 = vmatpush1.msra.mxu0 %v3416
    %3457 = vmatprep.subr.mxu0 %v3420
    %3458 = vmatpush1.msra.mxu0 %v3419
    %3459 = vmatprep.subr.mxu0 %v3423
    %3460 = vmatpush1.msra.mxu0 %v3422
    %3461 = vmatprep.subr.mxu0 %v3426
    %3462 = vmatpush1.msra.mxu0 %v3425
    %3463 = vmatprep.subr.mxu0 %v3429
    %3464 = vmatpush1.msra.mxu0 %v3428
    %3465 = vmatprep.subr.mxu0 %v3432
    %3466 = vmatpush1.msra.mxu0 %v3431
    %3467 = vmatprep.subr.mxu0 %v3435
    %3468 = vmatpush1.msra.mxu0 %v3434
    %3469 = vmatprep.subr.mxu0 0.0
    %3470 = vmatpush1.msra.mxu0 0.0
    %3471 = vmatprep.subr.mxu0 0.0
    %3472 = vmatpush1.msra.mxu0 0.0
    %3473 = vmatprep.subr.mxu0 0.0
    %3474 = vmatpush1.msra.mxu0 0.0
    %3475 = vmatprep.subr.mxu0 0.0
    %3476 = vmatpush1.msra.mxu0 0.0
    %3477 = vmatprep.subr.mxu0 0.0
    %3478 = vmatpush1.msra.mxu0 0.0
    %3479 = vmatprep.subr.mxu0 0.0
    %3480 = vmatpush1.msra.mxu0 0.0
    %3481 = vmatprep.subr.mxu0 0.0
    %3482 = vmatpush1.msra.mxu0 0.0
    %3483 = vmatprep.subr.mxu0 0.0
    %3484 = vmatpush1.msra.mxu0 0.0
    %3485 = vmatprep.subr.mxu0 0.0
    %3486 = vmatpush1.msra.mxu0 0.0
    %3487 = vmatprep.subr.mxu0 0.0
    %3488 = vmatpush1.msra.mxu0 0.0
    %3489 = vmatprep.subr.mxu0 0.0
    %3490 = vmatpush1.msra.mxu0 0.0
    %3491 = vmatprep.subr.mxu0 0.0
    %3492 = vmatpush1.msra.mxu0 0.0
    %3493 = vmatprep.subr.mxu0 0.0
    %3494 = vmatpush1.msra.mxu0 0.0
    %3495 = vmatprep.subr.mxu0 0.0
    %3496 = vmatpush1.msra.mxu0 0.0
    %3497 = vmatprep.subr.mxu0 0.0
    %3498 = vmatpush1.msra.mxu0 0.0
    %3499 = vmatprep.subr.mxu0 0.0
    %3500 = vmatpush1.msra.mxu0 0.0
    %3501 = vmatprep.mubr.f32.mxu0 0.0
    %3502 = vmatmul.mubr.f32.gmra.mrb[0].mxu0 %v3388
    %v3503 = vpop.f32.mrb[0].mxu0
    %v3504 = vadd.f32 %v319, %v3503
    %v3505 = vpop.f32.mrb[0].mxu0
    %v3506 = vadd.f32 %v323, %v3505
    %3507 = vdwg.mxu0
    %3508 = vmatprep.subr.mxu0 0.0
    %3509 = vmatpush1.msra.mxu0 %v3391
    %3510 = vmatprep.subr.mxu0 0.0
    %3511 = vmatpush1.msra.mxu0 %v3394
    %3512 = vmatprep.subr.mxu0 0.0
    %3513 = vmatpush1.msra.mxu0 %v3397
    %3514 = vmatprep.subr.mxu0 0.0
    %3515 = vmatpush1.msra.mxu0 %v3400
    %3516 = vmatprep.subr.mxu0 0.0
    %3517 = vmatpush1.msra.mxu0 %v3403
    %3518 = vmatprep.subr.mxu0 0.0
    %3519 = vmatpush1.msra.mxu0 %v3406
    %3520 = vmatprep.subr.mxu0 0.0
    %3521 = vmatpush1.msra.mxu0 %v3409
    %3522 = vmatprep.subr.mxu0 0.0
    %3523 = vmatpush1.msra.mxu0 %v3412
    %3524 = vmatprep.subr.mxu0 0.0
    %3525 = vmatpush1.msra.mxu0 %v3415
    %3526 = vmatprep.subr.mxu0 0.0
    %3527 = vmatpush1.msra.mxu0 %v3418
    %3528 = vmatprep.subr.mxu0 0.0
    %3529 = vmatpush1.msra.mxu0 %v3421
    %3530 = vmatprep.subr.mxu0 0.0
    %3531 = vmatpush1.msra.mxu0 %v3424
    %3532 = vmatprep.subr.mxu0 0.0
    %3533 = vmatpush1.msra.mxu0 %v3427
    %3534 = vmatprep.subr.mxu0 0.0
    %3535 = vmatpush1.msra.mxu0 %v3430
    %3536 = vmatprep.subr.mxu0 0.0
    %3537 = vmatpush1.msra.mxu0 %v3433
    %3538 = vmatprep.subr.mxu0 0.0
    %3539 = vmatpush1.msra.mxu0 %v3436
    %3540 = vmatprep.subr.mxu0 0.0
    %3541 = vmatpush1.msra.mxu0 0.0
    %3542 = vmatprep.subr.mxu0 0.0
    %3543 = vmatpush1.msra.mxu0 0.0
    %3544 = vmatprep.subr.mxu0 0.0
    %3545 = vmatpush1.msra.mxu0 0.0
    %3546 = vmatprep.subr.mxu0 0.0
    %3547 = vmatpush1.msra.mxu0 0.0
    %3548 = vmatprep.subr.mxu0 0.0
    %3549 = vmatpush1.msra.mxu0 0.0
    %3550 = vmatprep.subr.mxu0 0.0
    %3551 = vmatpush1.msra.mxu0 0.0
    %3552 = vmatprep.subr.mxu0 0.0
    %3553 = vmatpush1.msra.mxu0 0.0
    %3554 = vmatprep.subr.mxu0 0.0
    %3555 = vmatpush1.msra.mxu0 0.0
    %3556 = vmatprep.subr.mxu0 0.0
    %3557 = vmatpush1.msra.mxu0 0.0
    %3558 = vmatprep.subr.mxu0 0.0
    %3559 = vmatpush1.msra.mxu0 0.0
    %3560 = vmatprep.subr.mxu0 0.0
    %3561 = vmatpush1.msra.mxu0 0.0
    %3562 = vmatprep.subr.mxu0 0.0
    %3563 = vmatpush1.msra.mxu0 0.0
    %3564 = vmatprep.subr.mxu0 0.0
    %3565 = vmatpush1.msra.mxu0 0.0
    %3566 = vmatprep.subr.mxu0 0.0
    %3567 = vmatpush1.msra.mxu0 0.0
    %3568 = vmatprep.subr.mxu0 0.0
    %3569 = vmatpush1.msra.mxu0 0.0
    %3570 = vmatprep.subr.mxu0 0.0
    %3571 = vmatpush1.msra.mxu0 0.0
    %3572 = vmatprep.mubr.f32.mxu0 0.0
    %3573 = vmatmul.mubr.f32.gmra.mrb[0].mxu0 %v3388
    %v3574 = vpop.f32.mrb[0].mxu0
    %v3575 = vadd.f32 %v327, %v3574
    %v3576 = vpop.f32.mrb[0].mxu0
    %3577 = vdwg.mxu0
    %v3578 = vld [vmem:[%s472] sm:$0xff]
    %v3579 = vld [vmem:[%s472 + $0x8] sm:$0xff]
    %v3580 = vld [vmem:[%s472 + $0x10] sm:$0xff]
    %v3581 = vld [vmem:[%s472 + $0x18] sm:$0xff]
    %v3582 = vld [vmem:[%s472 + $0x20] sm:$0xff]
    %v3583 = vld [vmem:[%s472 + $0x28] sm:$0xff]
    %v3584 = vld [vmem:[%s472 + $0x30] sm:$0xff]
    %v3585 = vld [vmem:[%s472 + $0x38] sm:$0xff]
    %v3586 = vld [vmem:[%s472 + $0x40] sm:$0xff]
    %v3587 = vld [vmem:[%s472 + $0x48] sm:$0xff]
    %v3588 = vld [vmem:[%s472 + $0x50] sm:$0xff]
    %v3589 = vld [vmem:[%s472 + $0x58] sm:$0xff]
    %v3590 = vld [vmem:[%s472 + $0x60] sm:$0xff]
    %v3591 = vld [vmem:[%s472 + $0x68] sm:$0xff]
    %v3592 = vld [vmem:[%s472 + $0x70] sm:$0xff]
    %v3593 = vld [vmem:[%s472 + $0x78] sm:$0xff]
    %v3594 = vld [vmem:[%s472 + $0x80] sm:$0xff]
    %v3595 = vld [vmem:[%s472 + $0x88] sm:$0xff]
    %v3596 = vld [vmem:[%s472 + $0x90] sm:$0xff]
    %v3597 = vld [vmem:[%s472 + $0x98] sm:$0xff]
    %v3598 = vld [vmem:[%s472 + $0xa0] sm:$0xff]
    %v3599 = vld [vmem:[%s472 + $0xa8] sm:$0xff]
    %v3600 = vld [vmem:[%s472 + $0xb0] sm:$0xff]
    %v3601 = vld [vmem:[%s472 + $0xb8] sm:$0xff]
    %v3602 = vld [vmem:[%s472 + $0xc0] sm:$0xff]
    %v3603 = vld [vmem:[%s472 + $0xc8] sm:$0xff]
    %v3604 = vld [vmem:[%s472 + $0xd0] sm:$0xff]
    %v3605 = vld [vmem:[%s472 + $0xd8] sm:$0xff]
    %v3606 = vld [vmem:[%s472 + $0xe0] sm:$0xff]
    %v3607 = vld [vmem:[%s472 + $0xe8] sm:$0xff]
    %v3608 = vld [vmem:[%s472 + $0xf0] sm:$0xff]
    %v3609 = vld [vmem:[%s472 + $0xf8] sm:$0xff]
    %v3610 = vld [vmem:[%s472 + $0x100] sm:$0xff]
    %v3611 = vld [vmem:[%s472 + $0x108] sm:$0xff]
    %v3612 = vld [vmem:[%s472 + $0x110] sm:$0xff]
    %v3613 = vld [vmem:[%s472 + $0x118] sm:$0xff]
    %v3614 = vld [vmem:[%s472 + $0x120] sm:$0xff]
    %v3615 = vld [vmem:[%s472 + $0x128] sm:$0xff]
    %v3616 = vld [vmem:[%s472 + $0x130] sm:$0xff]
    %v3617 = vld [vmem:[%s472 + $0x138] sm:$0xff]
    %v3618 = vld [vmem:[%s472 + $0x140] sm:$0xff]
    %v3619 = vld [vmem:[%s472 + $0x148] sm:$0xff]
    %v3620 = vld [vmem:[%s472 + $0x150] sm:$0xff]
    %v3621 = vld [vmem:[%s472 + $0x158] sm:$0xff]
    %v3622 = vld [vmem:[%s472 + $0x160] sm:$0xff]
    %v3623 = vld [vmem:[%s472 + $0x168] sm:$0xff]
    %v3624 = vld [vmem:[%s472 + $0x170] sm:$0xff]
    %v3625 = vld [vmem:[%s472 + $0x178] sm:$0xff]
    %3626 = vmatprep.subr.mxu0 %v3579
    %3627 = vmatpush1.msra.mxu0 %v3578
    %3628 = vmatprep.subr.mxu0 %v3582
    %3629 = vmatpush1.msra.mxu0 %v3581
    %3630 = vmatprep.subr.mxu0 %v3585
    %3631 = vmatpush1.msra.mxu0 %v3584
    %3632 = vmatprep.subr.mxu0 %v3588
    %3633 = vmatpush1.msra.mxu0 %v3587
    %3634 = vmatprep.subr.mxu0 %v3591
    %3635 = vmatpush1.msra.mxu0 %v3590
    %3636 = vmatprep.subr.mxu0 %v3594
    %3637 = vmatpush1.msra.mxu0 %v3593
    %3638 = vmatprep.subr.mxu0 %v3597
    %3639 = vmatpush1.msra.mxu0 %v3596
    %3640 = vmatprep.subr.mxu0 %v3600
    %3641 = vmatpush1.msra.mxu0 %v3599
    %3642 = vmatprep.subr.mxu0 %v3603
    %3643 = vmatpush1.msra.mxu0 %v3602
    %3644 = vmatprep.subr.mxu0 %v3606
    %3645 = vmatpush1.msra.mxu0 %v3605
    %3646 = vmatprep.subr.mxu0 %v3609
    %3647 = vmatpush1.msra.mxu0 %v3608
    %3648 = vmatprep.subr.mxu0 %v3612
    %3649 = vmatpush1.msra.mxu0 %v3611
    %3650 = vmatprep.subr.mxu0 %v3615
    %3651 = vmatpush1.msra.mxu0 %v3614
    %3652 = vmatprep.subr.mxu0 %v3618
    %3653 = vmatpush1.msra.mxu0 %v3617
    %3654 = vmatprep.subr.mxu0 %v3621
    %3655 = vmatpush1.msra.mxu0 %v3620
    %3656 = vmatprep.subr.mxu0 %v3624
    %3657 = vmatpush1.msra.mxu0 %v3623
    %3658 = vmatprep.subr.mxu0 0.0
    %3659 = vmatpush1.msra.mxu0 0.0
    %3660 = vmatprep.subr.mxu0 0.0
    %3661 = vmatpush1.msra.mxu0 0.0
    %3662 = vmatprep.subr.mxu0 0.0
    %3663 = vmatpush1.msra.mxu0 0.0
    %3664 = vmatprep.subr.mxu0 0.0
    %3665 = vmatpush1.msra.mxu0 0.0
    %3666 = vmatprep.subr.mxu0 0.0
    %3667 = vmatpush1.msra.mxu0 0.0
    %3668 = vmatprep.subr.mxu0 0.0
    %3669 = vmatpush1.msra.mxu0 0.0
    %3670 = vmatprep.subr.mxu0 0.0
    %3671 = vmatpush1.msra.mxu0 0.0
    %3672 = vmatprep.subr.mxu0 0.0
    %3673 = vmatpush1.msra.mxu0 0.0
    %3674 = vmatprep.subr.mxu0 0.0
    %3675 = vmatpush1.msra.mxu0 0.0
    %3676 = vmatprep.subr.mxu0 0.0
    %3677 = vmatpush1.msra.mxu0 0.0
    %3678 = vmatprep.subr.mxu0 0.0
    %3679 = vmatpush1.msra.mxu0 0.0
    %3680 = vmatprep.subr.mxu0 0.0
    %3681 = vmatpush1.msra.mxu0 0.0
    %3682 = vmatprep.subr.mxu0 0.0
    %3683 = vmatpush1.msra.mxu0 0.0
    %3684 = vmatprep.subr.mxu0 0.0
    %3685 = vmatpush1.msra.mxu0 0.0
    %3686 = vmatprep.subr.mxu0 0.0
    %3687 = vmatpush1.msra.mxu0 0.0
    %3688 = vmatprep.subr.mxu0 0.0
    %3689 = vmatpush1.msra.mxu0 0.0
    %3690 = vmatprep.mubr.f32.mxu0 0.0
    %3691 = vmatmul.mubr.f32.gmra.mrb[0].mxu0 %v3169
    %v3692 = vpop.f32.mrb[0].mxu0
    %v3693 = vadd.f32 %v525, %v3692
    %v3694 = vpop.f32.mrb[0].mxu0
    %v3695 = vadd.f32 %v529, %v3694
    %3696 = vdwg.mxu0
    %3697 = vmatprep.subr.mxu0 0.0
    %3698 = vmatpush1.msra.mxu0 %v3580
    %3699 = vmatprep.subr.mxu0 0.0
    %3700 = vmatpush1.msra.mxu0 %v3583
    %3701 = vmatprep.subr.mxu0 0.0
    %3702 = vmatpush1.msra.mxu0 %v3586
    %3703 = vmatprep.subr.mxu0 0.0
    %3704 = vmatpush1.msra.mxu0 %v3589
    %3705 = vmatprep.subr.mxu0 0.0
    %3706 = vmatpush1.msra.mxu0 %v3592
    %3707 = vmatprep.subr.mxu0 0.0
    %3708 = vmatpush1.msra.mxu0 %v3595
    %3709 = vmatprep.subr.mxu0 0.0
    %3710 = vmatpush1.msra.mxu0 %v3598
    %3711 = vmatprep.subr.mxu0 0.0
    %3712 = vmatpush1.msra.mxu0 %v3601
    %3713 = vmatprep.subr.mxu0 0.0
    %3714 = vmatpush1.msra.mxu0 %v3604
    %3715 = vmatprep.subr.mxu0 0.0
    %3716 = vmatpush1.msra.mxu0 %v3607
    %3717 = vmatprep.subr.mxu0 0.0
    %3718 = vmatpush1.msra.mxu0 %v3610
    %3719 = vmatprep.subr.mxu0 0.0
    %3720 = vmatpush1.msra.mxu0 %v3613
    %3721 = vmatprep.subr.mxu0 0.0
    %3722 = vmatpush1.msra.mxu0 %v3616
    %3723 = vmatprep.subr.mxu0 0.0
    %3724 = vmatpush1.msra.mxu0 %v3619
    %3725 = vmatprep.subr.mxu0 0.0
    %3726 = vmatpush1.msra.mxu0 %v3622
    %3727 = vmatprep.subr.mxu0 0.0
    %3728 = vmatpush1.msra.mxu0 %v3625
    %3729 = vmatprep.subr.mxu0 0.0
    %3730 = vmatpush1.msra.mxu0 0.0
    %3731 = vmatprep.subr.mxu0 0.0
    %3732 = vmatpush1.msra.mxu0 0.0
    %3733 = vmatprep.subr.mxu0 0.0
    %3734 = vmatpush1.msra.mxu0 0.0
    %3735 = vmatprep.subr.mxu0 0.0
    %3736 = vmatpush1.msra.mxu0 0.0
    %3737 = vmatprep.subr.mxu0 0.0
    %3738 = vmatpush1.msra.mxu0 0.0
    %3739 = vmatprep.subr.mxu0 0.0
    %3740 = vmatpush1.msra.mxu0 0.0
    %3741 = vmatprep.subr.mxu0 0.0
    %3742 = vmatpush1.msra.mxu0 0.0
    %3743 = vmatprep.subr.mxu0 0.0
    %3744 = vmatpush1.msra.mxu0 0.0
    %3745 = vmatprep.subr.mxu0 0.0
    %3746 = vmatpush1.msra.mxu0 0.0
    %3747 = vmatprep.subr.mxu0 0.0
    %3748 = vmatpush1.msra.mxu0 0.0
    %3749 = vmatprep.subr.mxu0 0.0
    %3750 = vmatpush1.msra.mxu0 0.0
    %3751 = vmatprep.subr.mxu0 0.0
    %3752 = vmatpush1.msra.mxu0 0.0
    %3753 = vmatprep.subr.mxu0 0.0
    %3754 = vmatpush1.msra.mxu0 0.0
    %3755 = vmatprep.subr.mxu0 0.0
    %3756 = vmatpush1.msra.mxu0 0.0
    %3757 = vmatprep.subr.mxu0 0.0
    %3758 = vmatpush1.msra.mxu0 0.0
    %3759 = vmatprep.subr.mxu0 0.0
    %3760 = vmatpush1.msra.mxu0 0.0
    %3761 = vmatprep.mubr.f32.mxu0 0.0
    %3762 = vmatmul.mubr.f32.gmra.mrb[0].mxu0 %v3169
    %v3763 = vpop.f32.mrb[0].mxu0
    %v3764 = vadd.f32 %v533, %v3763
    %v3765 = vpop.f32.mrb[0].mxu0
    %3766 = vdwg.mxu0
    %v3767 = vadd.f32 %v3504, %v3693
    %v3768 = vxor.u32 %v3767, 2147483648
    %v3769 = vmul.f32 %v3768, 1.442695
    %v3770 = vpow.pop %v3769
    %v3771 = vadd.f32 %v3770, 1.0
    %v3772 = vrcp.pop %v3771
    %v3773 = vmul.f32 1.0, %v3772
    %v3774 = vadd.f32 %v3506, %v3695
    %v3775 = vxor.u32 %v3774, 2147483648
    %v3776 = vmul.f32 %v3775, 1.442695
    %v3777 = vpow.pop %v3776
    %v3778 = vadd.f32 %v3777, 1.0
    %v3779 = vrcp.pop %v3778
    %v3780 = vmul.f32 1.0, %v3779
    %v3781 = vmul.f32 %v3773, %v3764
    %v3782 = vadd.f32 %v3575, %v3781
    %v3783 = vtanh.pop %v3782
    %v3784 = vsub.f32 1.0, %v3780
    %v3785 = vmul.f32 %v3784, %v3783
    %v3786 = vmul.f32 %v3780, %v3169
    %v3787 = vadd.f32 %v3785, %v3786
    %s3788 = scalar_lea.vmem %s6, 10
    %3789 = vst [vmem:[%s3788] sm:$0x3] %v3787
    %s3790 = scalar_lea.vmem %s0, 36
    %v3791 = vld [vmem:[%s3790] sm:$0x3f]
    %v3792 = vld [vmem:[%s2] sm:$0xff]
    %v3793 = vld [vmem:[%s2 + $0x8] sm:$0xff]
    %v3794 = vld [vmem:[%s2 + $0x10] sm:$0xff]
    %v3795 = vld [vmem:[%s2 + $0x18] sm:$0xff]
    %v3796 = vld [vmem:[%s2 + $0x20] sm:$0xff]
    %v3797 = vld [vmem:[%s2 + $0x28] sm:$0xff]
    %v3798 = vld [vmem:[%s2 + $0x30] sm:$0xff]
    %v3799 = vld [vmem:[%s2 + $0x38] sm:$0xff]
    %v3800 = vld [vmem:[%s2 + $0x40] sm:$0xff]
    %v3801 = vld [vmem:[%s2 + $0x48] sm:$0xff]
    %v3802 = vld [vmem:[%s2 + $0x50] sm:$0xff]
    %v3803 = vld [vmem:[%s2 + $0x58] sm:$0xff]
    %v3804 = vld [vmem:[%s2 + $0x60] sm:$0xff]
    %v3805 = vld [vmem:[%s2 + $0x68] sm:$0xff]
    %v3806 = vld [vmem:[%s2 + $0x70] sm:$0xff]
    %v3807 = vld [vmem:[%s2 + $0x78] sm:$0xff]
    %v3808 = vld [vmem:[%s2 + $0x80] sm:$0xff]
    %v3809 = vld [vmem:[%s2 + $0x88] sm:$0xff]
    %v3810 = vld [vmem:[%s2 + $0x90] sm:$0xff]
    %v3811 = vld [vmem:[%s2 + $0x98] sm:$0xff]
    %v3812 = vld [vmem:[%s2 + $0xa0] sm:$0xff]
    %v3813 = vld [vmem:[%s2 + $0xa8] sm:$0xff]
    %v3814 = vld [vmem:[%s2 + $0xb0] sm:$0xff]
    %v3815 = vld [vmem:[%s2 + $0xb8] sm:$0xff]
    %v3816 = vld [vmem:[%s2 + $0xc0] sm:$0xff]
    %v3817 = vld [vmem:[%s2 + $0xc8] sm:$0xff]
    %v3818 = vld [vmem:[%s2 + $0xd0] sm:$0xff]
    %v3819 = vld [vmem:[%s2 + $0xd8] sm:$0xff]
    %v3820 = vld [vmem:[%s2 + $0xe0] sm:$0xff]
    %v3821 = vld [vmem:[%s2 + $0xe8] sm:$0xff]
    %v3822 = vld [vmem:[%s2 + $0xf0] sm:$0xff]
    %v3823 = vld [vmem:[%s2 + $0xf8] sm:$0xff]
    %v3824 = vld [vmem:[%s2 + $0x100] sm:$0xff]
    %v3825 = vld [vmem:[%s2 + $0x108] sm:$0xff]
    %v3826 = vld [vmem:[%s2 + $0x110] sm:$0xff]
    %v3827 = vld [vmem:[%s2 + $0x118] sm:$0xff]
    %v3828 = vld [vmem:[%s2 + $0x120] sm:$0xff]
    %v3829 = vld [vmem:[%s2 + $0x128] sm:$0xff]
    %v3830 = vld [vmem:[%s2 + $0x130] sm:$0xff]
    %v3831 = vld [vmem:[%s2 + $0x138] sm:$0xff]
    %v3832 = vld [vmem:[%s2 + $0x140] sm:$0xff]
    %v3833 = vld [vmem:[%s2 + $0x148] sm:$0xff]
    %v3834 = vld [vmem:[%s2 + $0x150] sm:$0xff]
    %v3835 = vld [vmem:[%s2 + $0x158] sm:$0xff]
    %v3836 = vld [vmem:[%s2 + $0x160] sm:$0xff]
    %v3837 = vld [vmem:[%s2 + $0x168] sm:$0xff]
    %v3838 = vld [vmem:[%s2 + $0x170] sm:$0xff]
    %v3839 = vld [vmem:[%s2 + $0x178] sm:$0xff]
    %3840 = vmatprep.subr.mxu0 %v3793
    %3841 = vmatpush1.msra.mxu0 %v3792
    %3842 = vmatprep.subr.mxu0 %v3796
    %3843 = vmatpush1.msra.mxu0 %v3795
    %3844 = vmatprep.subr.mxu0 %v3799
    %3845 = vmatpush1.msra.mxu0 %v3798
    %3846 = vmatprep.subr.mxu0 %v3802
    %3847 = vmatpush1.msra.mxu0 %v3801
    %3848 = vmatprep.subr.mxu0 %v3805
    %3849 = vmatpush1.msra.mxu0 %v3804
    %3850 = vmatprep.subr.mxu0 %v3808
    %3851 = vmatpush1.msra.mxu0 %v3807
    %3852 = vmatprep.subr.mxu0 %v3811
    %3853 = vmatpush1.msra.mxu0 %v3810
    %3854 = vmatprep.subr.mxu0 %v3814
    %3855 = vmatpush1.msra.mxu0 %v3813
    %3856 = vmatprep.subr.mxu0 %v3817
    %3857 = vmatpush1.msra.mxu0 %v3816
    %3858 = vmatprep.subr.mxu0 %v3820
    %3859 = vmatpush1.msra.mxu0 %v3819
    %3860 = vmatprep.subr.mxu0 %v3823
    %3861 = vmatpush1.msra.mxu0 %v3822
    %3862 = vmatprep.subr.mxu0 %v3826
    %3863 = vmatpush1.msra.mxu0 %v3825
    %3864 = vmatprep.subr.mxu0 %v3829
    %3865 = vmatpush1.msra.mxu0 %v3828
    %3866 = vmatprep.subr.mxu0 %v3832
    %3867 = vmatpush1.msra.mxu0 %v3831
    %3868 = vmatprep.subr.mxu0 %v3835
    %3869 = vmatpush1.msra.mxu0 %v3834
    %3870 = vmatprep.subr.mxu0 %v3838
    %3871 = vmatpush1.msra.mxu0 %v3837
    %3872 = vmatprep.subr.mxu0 0.0
    %3873 = vmatpush1.msra.mxu0 0.0
    %3874 = vmatprep.subr.mxu0 0.0
    %3875 = vmatpush1.msra.mxu0 0.0
    %3876 = vmatprep.subr.mxu0 0.0
    %3877 = vmatpush1.msra.mxu0 0.0
    %3878 = vmatprep.subr.mxu0 0.0
    %3879 = vmatpush1.msra.mxu0 0.0
    %3880 = vmatprep.subr.mxu0 0.0
    %3881 = vmatpush1.msra.mxu0 0.0
    %3882 = vmatprep.subr.mxu0 0.0
    %3883 = vmatpush1.msra.mxu0 0.0
    %3884 = vmatprep.subr.mxu0 0.0
    %3885 = vmatpush1.msra.mxu0 0.0
    %3886 = vmatprep.subr.mxu0 0.0
    %3887 = vmatpush1.msra.mxu0 0.0
    %3888 = vmatprep.subr.mxu0 0.0
    %3889 = vmatpush1.msra.mxu0 0.0
    %3890 = vmatprep.subr.mxu0 0.0
    %3891 = vmatpush1.msra.mxu0 0.0
    %3892 = vmatprep.subr.mxu0 0.0
    %3893 = vmatpush1.msra.mxu0 0.0
    %3894 = vmatprep.subr.mxu0 0.0
    %3895 = vmatpush1.msra.mxu0 0.0
    %3896 = vmatprep.subr.mxu0 0.0
    %3897 = vmatpush1.msra.mxu0 0.0
    %3898 = vmatprep.subr.mxu0 0.0
    %3899 = vmatpush1.msra.mxu0 0.0
    %3900 = vmatprep.subr.mxu0 0.0
    %3901 = vmatpush1.msra.mxu0 0.0
    %3902 = vmatprep.subr.mxu0 0.0
    %3903 = vmatpush1.msra.mxu0 0.0
    %3904 = vmatprep.mubr.f32.mxu0 0.0
    %3905 = vmatmul.mubr.f32.gmra.mrb[0].mxu0 %v3388
    %v3906 = vpop.f32.mrb[0].mxu0
    %v3907 = vadd.f32 %v87, %v3906
    %v3908 = vpop.f32.mrb[0].mxu0
    %v3909 = vadd.f32 %v91, %v3908
    %3910 = vdwg.mxu0
    %3911 = vmatprep.subr.mxu0 0.0
    %3912 = vmatpush1.msra.mxu0 %v3794
    %3913 = vmatprep.subr.mxu0 0.0
    %3914 = vmatpush1.msra.mxu0 %v3797
    %3915 = vmatprep.subr.mxu0 0.0
    %3916 = vmatpush1.msra.mxu0 %v3800
    %3917 = vmatprep.subr.mxu0 0.0
    %3918 = vmatpush1.msra.mxu0 %v3803
    %3919 = vmatprep.subr.mxu0 0.0
    %3920 = vmatpush1.msra.mxu0 %v3806
    %3921 = vmatprep.subr.mxu0 0.0
    %3922 = vmatpush1.msra.mxu0 %v3809
    %3923 = vmatprep.subr.mxu0 0.0
    %3924 = vmatpush1.msra.mxu0 %v3812
    %3925 = vmatprep.subr.mxu0 0.0
    %3926 = vmatpush1.msra.mxu0 %v3815
    %3927 = vmatprep.subr.mxu0 0.0
    %3928 = vmatpush1.msra.mxu0 %v3818
    %3929 = vmatprep.subr.mxu0 0.0
    %3930 = vmatpush1.msra.mxu0 %v3821
    %3931 = vmatprep.subr.mxu0 0.0
    %3932 = vmatpush1.msra.mxu0 %v3824
    %3933 = vmatprep.subr.mxu0 0.0
    %3934 = vmatpush1.msra.mxu0 %v3827
    %3935 = vmatprep.subr.mxu0 0.0
    %3936 = vmatpush1.msra.mxu0 %v3830
    %3937 = vmatprep.subr.mxu0 0.0
    %3938 = vmatpush1.msra.mxu0 %v3833
    %3939 = vmatprep.subr.mxu0 0.0
    %3940 = vmatpush1.msra.mxu0 %v3836
    %3941 = vmatprep.subr.mxu0 0.0
    %3942 = vmatpush1.msra.mxu0 %v3839
    %3943 = vmatprep.subr.mxu0 0.0
    %3944 = vmatpush1.msra.mxu0 0.0
    %3945 = vmatprep.subr.mxu0 0.0
    %3946 = vmatpush1.msra.mxu0 0.0
    %3947 = vmatprep.subr.mxu0 0.0
    %3948 = vmatpush1.msra.mxu0 0.0
    %3949 = vmatprep.subr.mxu0 0.0
    %3950 = vmatpush1.msra.mxu0 0.0
    %3951 = vmatprep.subr.mxu0 0.0
    %3952 = vmatpush1.msra.mxu0 0.0
    %3953 = vmatprep.subr.mxu0 0.0
    %3954 = vmatpush1.msra.mxu0 0.0
    %3955 = vmatprep.subr.mxu0 0.0
    %3956 = vmatpush1.msra.mxu0 0.0
    %3957 = vmatprep.subr.mxu0 0.0
    %3958 = vmatpush1.msra.mxu0 0.0
    %3959 = vmatprep.subr.mxu0 0.0
    %3960 = vmatpush1.msra.mxu0 0.0
    %3961 = vmatprep.subr.mxu0 0.0
    %3962 = vmatpush1.msra.mxu0 0.0
    %3963 = vmatprep.subr.mxu0 0.0
    %3964 = vmatpush1.msra.mxu0 0.0
    %3965 = vmatprep.subr.mxu0 0.0
    %3966 = vmatpush1.msra.mxu0 0.0
    %3967 = vmatprep.subr.mxu0 0.0
    %3968 = vmatpush1.msra.mxu0 0.0
    %3969 = vmatprep.subr.mxu0 0.0
    %3970 = vmatpush1.msra.mxu0 0.0
    %3971 = vmatprep.subr.mxu0 0.0
    %3972 = vmatpush1.msra.mxu0 0.0
    %3973 = vmatprep.subr.mxu0 0.0
    %3974 = vmatpush1.msra.mxu0 0.0
    %3975 = vmatprep.mubr.f32.mxu0 0.0
    %3976 = vmatmul.mubr.f32.gmra.mrb[0].mxu0 %v3388
    %v3977 = vpop.f32.mrb[0].mxu0
    %v3978 = vadd.f32 %v95, %v3977
    %v3979 = vpop.f32.mrb[0].mxu0
    %3980 = vdwg.mxu0
    %v3981 = vadd.f32 %v3791, %v3907
    %v3982 = vxor.u32 %v3981, 2147483648
    %v3983 = vmul.f32 %v3982, 1.442695
    %v3984 = vpow.pop %v3983
    %v3985 = vadd.f32 %v3984, 1.0
    %v3986 = vrcp.pop %v3985
    %v3987 = vmul.f32 1.0, %v3986
    %v3989 = vrot.slane %v3791, 2
    %v3991 = vadd.f32 %v3989, %v3909
    %v3992 = vxor.u32 %v3991, 2147483648
    %v3993 = vmul.f32 %v3992, 1.442695
    %v3994 = vpow.pop %v3993
    %v3995 = vadd.f32 %v3994, 1.0
    %v3996 = vrcp.pop %v3995
    %v3997 = vmul.f32 1.0, %v3996
    %v3998 = vmul.f32 %v3987, %v3978
    %v3999 = vrot.slane %v3791, 4
    %v4001 = vadd.f32 %v3999, %v3998
    %v4002 = vtanh.pop %v4001
    %v4003 = vsub.f32 1.0, %v3997
    %v4004 = vmul.f32 %v4003, %v4002
    %v4005 = vmul.f32 %v3997, %v3388
    %v4006 = vadd.f32 %v4004, %v4005
    %v4007 = vld [vmem:[%s266] sm:$0xff]
    %v4008 = vld [vmem:[%s266 + $0x8] sm:$0xff]
    %v4009 = vld [vmem:[%s266 + $0x10] sm:$0xff]
    %v4010 = vld [vmem:[%s266 + $0x18] sm:$0xff]
    %v4011 = vld [vmem:[%s266 + $0x20] sm:$0xff]
    %v4012 = vld [vmem:[%s266 + $0x28] sm:$0xff]
    %v4013 = vld [vmem:[%s266 + $0x30] sm:$0xff]
    %v4014 = vld [vmem:[%s266 + $0x38] sm:$0xff]
    %v4015 = vld [vmem:[%s266 + $0x40] sm:$0xff]
    %v4016 = vld [vmem:[%s266 + $0x48] sm:$0xff]
    %v4017 = vld [vmem:[%s266 + $0x50] sm:$0xff]
    %v4018 = vld [vmem:[%s266 + $0x58] sm:$0xff]
    %v4019 = vld [vmem:[%s266 + $0x60] sm:$0xff]
    %v4020 = vld [vmem:[%s266 + $0x68] sm:$0xff]
    %v4021 = vld [vmem:[%s266 + $0x70] sm:$0xff]
    %v4022 = vld [vmem:[%s266 + $0x78] sm:$0xff]
    %v4023 = vld [vmem:[%s266 + $0x80] sm:$0xff]
    %v4024 = vld [vmem:[%s266 + $0x88] sm:$0xff]
    %v4025 = vld [vmem:[%s266 + $0x90] sm:$0xff]
    %v4026 = vld [vmem:[%s266 + $0x98] sm:$0xff]
    %v4027 = vld [vmem:[%s266 + $0xa0] sm:$0xff]
    %v4028 = vld [vmem:[%s266 + $0xa8] sm:$0xff]
    %v4029 = vld [vmem:[%s266 + $0xb0] sm:$0xff]
    %v4030 = vld [vmem:[%s266 + $0xb8] sm:$0xff]
    %v4031 = vld [vmem:[%s266 + $0xc0] sm:$0xff]
    %v4032 = vld [vmem:[%s266 + $0xc8] sm:$0xff]
    %v4033 = vld [vmem:[%s266 + $0xd0] sm:$0xff]
    %v4034 = vld [vmem:[%s266 + $0xd8] sm:$0xff]
    %v4035 = vld [vmem:[%s266 + $0xe0] sm:$0xff]
    %v4036 = vld [vmem:[%s266 + $0xe8] sm:$0xff]
    %v4037 = vld [vmem:[%s266 + $0xf0] sm:$0xff]
    %v4038 = vld [vmem:[%s266 + $0xf8] sm:$0xff]
    %v4039 = vld [vmem:[%s266 + $0x100] sm:$0xff]
    %v4040 = vld [vmem:[%s266 + $0x108] sm:$0xff]
    %v4041 = vld [vmem:[%s266 + $0x110] sm:$0xff]
    %v4042 = vld [vmem:[%s266 + $0x118] sm:$0xff]
    %v4043 = vld [vmem:[%s266 + $0x120] sm:$0xff]
    %v4044 = vld [vmem:[%s266 + $0x128] sm:$0xff]
    %v4045 = vld [vmem:[%s266 + $0x130] sm:$0xff]
    %v4046 = vld [vmem:[%s266 + $0x138] sm:$0xff]
    %v4047 = vld [vmem:[%s266 + $0x140] sm:$0xff]
    %v4048 = vld [vmem:[%s266 + $0x148] sm:$0xff]
    %v4049 = vld [vmem:[%s266 + $0x150] sm:$0xff]
    %v4050 = vld [vmem:[%s266 + $0x158] sm:$0xff]
    %v4051 = vld [vmem:[%s266 + $0x160] sm:$0xff]
    %v4052 = vld [vmem:[%s266 + $0x168] sm:$0xff]
    %v4053 = vld [vmem:[%s266 + $0x170] sm:$0xff]
    %v4054 = vld [vmem:[%s266 + $0x178] sm:$0xff]
    %4055 = vmatprep.subr.mxu0 %v4008
    %4056 = vmatpush1.msra.mxu0 %v4007
    %4057 = vmatprep.subr.mxu0 %v4011
    %4058 = vmatpush1.msra.mxu0 %v4010
    %4059 = vmatprep.subr.mxu0 %v4014
    %4060 = vmatpush1.msra.mxu0 %v4013
    %4061 = vmatprep.subr.mxu0 %v4017
    %4062 = vmatpush1.msra.mxu0 %v4016
    %4063 = vmatprep.subr.mxu0 %v4020
    %4064 = vmatpush1.msra.mxu0 %v4019
    %4065 = vmatprep.subr.mxu0 %v4023
    %4066 = vmatpush1.msra.mxu0 %v4022
    %4067 = vmatprep.subr.mxu0 %v4026
    %4068 = vmatpush1.msra.mxu0 %v4025
    %4069 = vmatprep.subr.mxu0 %v4029
    %4070 = vmatpush1.msra.mxu0 %v4028
    %4071 = vmatprep.subr.mxu0 %v4032
    %4072 = vmatpush1.msra.mxu0 %v4031
    %4073 = vmatprep.subr.mxu0 %v4035
    %4074 = vmatpush1.msra.mxu0 %v4034
    %4075 = vmatprep.subr.mxu0 %v4038
    %4076 = vmatpush1.msra.mxu0 %v4037
    %4077 = vmatprep.subr.mxu0 %v4041
    %4078 = vmatpush1.msra.mxu0 %v4040
    %4079 = vmatprep.subr.mxu0 %v4044
    %4080 = vmatpush1.msra.mxu0 %v4043
    %4081 = vmatprep.subr.mxu0 %v4047
    %4082 = vmatpush1.msra.mxu0 %v4046
    %4083 = vmatprep.subr.mxu0 %v4050
    %4084 = vmatpush1.msra.mxu0 %v4049
    %4085 = vmatprep.subr.mxu0 %v4053
    %4086 = vmatpush1.msra.mxu0 %v4052
    %4087 = vmatprep.subr.mxu0 0.0
    %4088 = vmatpush1.msra.mxu0 0.0
    %4089 = vmatprep.subr.mxu0 0.0
    %4090 = vmatpush1.msra.mxu0 0.0
    %4091 = vmatprep.subr.mxu0 0.0
    %4092 = vmatpush1.msra.mxu0 0.0
    %4093 = vmatprep.subr.mxu0 0.0
    %4094 = vmatpush1.msra.mxu0 0.0
    %4095 = vmatprep.subr.mxu0 0.0
    %4096 = vmatpush1.msra.mxu0 0.0
    %4097 = vmatprep.subr.mxu0 0.0
    %4098 = vmatpush1.msra.mxu0 0.0
    %4099 = vmatprep.subr.mxu0 0.0
    %4100 = vmatpush1.msra.mxu0 0.0
    %4101 = vmatprep.subr.mxu0 0.0
    %4102 = vmatpush1.msra.mxu0 0.0
    %4103 = vmatprep.subr.mxu0 0.0
    %4104 = vmatpush1.msra.mxu0 0.0
    %4105 = vmatprep.subr.mxu0 0.0
    %4106 = vmatpush1.msra.mxu0 0.0
    %4107 = vmatprep.subr.mxu0 0.0
    %4108 = vmatpush1.msra.mxu0 0.0
    %4109 = vmatprep.subr.mxu0 0.0
    %4110 = vmatpush1.msra.mxu0 0.0
    %4111 = vmatprep.subr.mxu0 0.0
    %4112 = vmatpush1.msra.mxu0 0.0
    %4113 = vmatprep.subr.mxu0 0.0
    %4114 = vmatpush1.msra.mxu0 0.0
    %4115 = vmatprep.subr.mxu0 0.0
    %4116 = vmatpush1.msra.mxu0 0.0
    %4117 = vmatprep.subr.mxu0 0.0
    %4118 = vmatpush1.msra.mxu0 0.0
    %4119 = vmatprep.mubr.f32.mxu0 0.0
    %4120 = vmatmul.mubr.f32.gmra.mrb[0].mxu0 %v4006
    %v4121 = vpop.f32.mrb[0].mxu0
    %v4122 = vadd.f32 %v319, %v4121
    %v4123 = vpop.f32.mrb[0].mxu0
    %v4124 = vadd.f32 %v323, %v4123
    %4125 = vdwg.mxu0
    %4126 = vmatprep.subr.mxu0 0.0
    %4127 = vmatpush1.msra.mxu0 %v4009
    %4128 = vmatprep.subr.mxu0 0.0
    %4129 = vmatpush1.msra.mxu0 %v4012
    %4130 = vmatprep.subr.mxu0 0.0
    %4131 = vmatpush1.msra.mxu0 %v4015
    %4132 = vmatprep.subr.mxu0 0.0
    %4133 = vmatpush1.msra.mxu0 %v4018
    %4134 = vmatprep.subr.mxu0 0.0
    %4135 = vmatpush1.msra.mxu0 %v4021
    %4136 = vmatprep.subr.mxu0 0.0
    %4137 = vmatpush1.msra.mxu0 %v4024
    %4138 = vmatprep.subr.mxu0 0.0
    %4139 = vmatpush1.msra.mxu0 %v4027
    %4140 = vmatprep.subr.mxu0 0.0
    %4141 = vmatpush1.msra.mxu0 %v4030
    %4142 = vmatprep.subr.mxu0 0.0
    %4143 = vmatpush1.msra.mxu0 %v4033
    %4144 = vmatprep.subr.mxu0 0.0
    %4145 = vmatpush1.msra.mxu0 %v4036
    %4146 = vmatprep.subr.mxu0 0.0
    %4147 = vmatpush1.msra.mxu0 %v4039
    %4148 = vmatprep.subr.mxu0 0.0
    %4149 = vmatpush1.msra.mxu0 %v4042
    %4150 = vmatprep.subr.mxu0 0.0
    %4151 = vmatpush1.msra.mxu0 %v4045
    %4152 = vmatprep.subr.mxu0 0.0
    %4153 = vmatpush1.msra.mxu0 %v4048
    %4154 = vmatprep.subr.mxu0 0.0
    %4155 = vmatpush1.msra.mxu0 %v4051
    %4156 = vmatprep.subr.mxu0 0.0
    %4157 = vmatpush1.msra.mxu0 %v4054
    %4158 = vmatprep.subr.mxu0 0.0
    %4159 = vmatpush1.msra.mxu0 0.0
    %4160 = vmatprep.subr.mxu0 0.0
    %4161 = vmatpush1.msra.mxu0 0.0
    %4162 = vmatprep.subr.mxu0 0.0
    %4163 = vmatpush1.msra.mxu0 0.0
    %4164 = vmatprep.subr.mxu0 0.0
    %4165 = vmatpush1.msra.mxu0 0.0
    %4166 = vmatprep.subr.mxu0 0.0
    %4167 = vmatpush1.msra.mxu0 0.0
    %4168 = vmatprep.subr.mxu0 0.0
    %4169 = vmatpush1.msra.mxu0 0.0
    %4170 = vmatprep.subr.mxu0 0.0
    %4171 = vmatpush1.msra.mxu0 0.0
    %4172 = vmatprep.subr.mxu0 0.0
    %4173 = vmatpush1.msra.mxu0 0.0
    %4174 = vmatprep.subr.mxu0 0.0
    %4175 = vmatpush1.msra.mxu0 0.0
    %4176 = vmatprep.subr.mxu0 0.0
    %4177 = vmatpush1.msra.mxu0 0.0
    %4178 = vmatprep.subr.mxu0 0.0
    %4179 = vmatpush1.msra.mxu0 0.0
    %4180 = vmatprep.subr.mxu0 0.0
    %4181 = vmatpush1.msra.mxu0 0.0
    %4182 = vmatprep.subr.mxu0 0.0
    %4183 = vmatpush1.msra.mxu0 0.0
    %4184 = vmatprep.subr.mxu0 0.0
    %4185 = vmatpush1.msra.mxu0 0.0
    %4186 = vmatprep.subr.mxu0 0.0
    %4187 = vmatpush1.msra.mxu0 0.0
    %4188 = vmatprep.subr.mxu0 0.0
    %4189 = vmatpush1.msra.mxu0 0.0
    %4190 = vmatprep.mubr.f32.mxu0 0.0
    %4191 = vmatmul.mubr.f32.gmra.mrb[0].mxu0 %v4006
    %v4192 = vpop.f32.mrb[0].mxu0
    %v4193 = vadd.f32 %v327, %v4192
    %v4194 = vpop.f32.mrb[0].mxu0
    %4195 = vdwg.mxu0
    %v4196 = vld [vmem:[%s472] sm:$0xff]
    %v4197 = vld [vmem:[%s472 + $0x8] sm:$0xff]
    %v4198 = vld [vmem:[%s472 + $0x10] sm:$0xff]
    %v4199 = vld [vmem:[%s472 + $0x18] sm:$0xff]
    %v4200 = vld [vmem:[%s472 + $0x20] sm:$0xff]
    %v4201 = vld [vmem:[%s472 + $0x28] sm:$0xff]
    %v4202 = vld [vmem:[%s472 + $0x30] sm:$0xff]
    %v4203 = vld [vmem:[%s472 + $0x38] sm:$0xff]
    %v4204 = vld [vmem:[%s472 + $0x40] sm:$0xff]
    %v4205 = vld [vmem:[%s472 + $0x48] sm:$0xff]
    %v4206 = vld [vmem:[%s472 + $0x50] sm:$0xff]
    %v4207 = vld [vmem:[%s472 + $0x58] sm:$0xff]
    %v4208 = vld [vmem:[%s472 + $0x60] sm:$0xff]
    %v4209 = vld [vmem:[%s472 + $0x68] sm:$0xff]
    %v4210 = vld [vmem:[%s472 + $0x70] sm:$0xff]
    %v4211 = vld [vmem:[%s472 + $0x78] sm:$0xff]
    %v4212 = vld [vmem:[%s472 + $0x80] sm:$0xff]
    %v4213 = vld [vmem:[%s472 + $0x88] sm:$0xff]
    %v4214 = vld [vmem:[%s472 + $0x90] sm:$0xff]
    %v4215 = vld [vmem:[%s472 + $0x98] sm:$0xff]
    %v4216 = vld [vmem:[%s472 + $0xa0] sm:$0xff]
    %v4217 = vld [vmem:[%s472 + $0xa8] sm:$0xff]
    %v4218 = vld [vmem:[%s472 + $0xb0] sm:$0xff]
    %v4219 = vld [vmem:[%s472 + $0xb8] sm:$0xff]
    %v4220 = vld [vmem:[%s472 + $0xc0] sm:$0xff]
    %v4221 = vld [vmem:[%s472 + $0xc8] sm:$0xff]
    %v4222 = vld [vmem:[%s472 + $0xd0] sm:$0xff]
    %v4223 = vld [vmem:[%s472 + $0xd8] sm:$0xff]
    %v4224 = vld [vmem:[%s472 + $0xe0] sm:$0xff]
    %v4225 = vld [vmem:[%s472 + $0xe8] sm:$0xff]
    %v4226 = vld [vmem:[%s472 + $0xf0] sm:$0xff]
    %v4227 = vld [vmem:[%s472 + $0xf8] sm:$0xff]
    %v4228 = vld [vmem:[%s472 + $0x100] sm:$0xff]
    %v4229 = vld [vmem:[%s472 + $0x108] sm:$0xff]
    %v4230 = vld [vmem:[%s472 + $0x110] sm:$0xff]
    %v4231 = vld [vmem:[%s472 + $0x118] sm:$0xff]
    %v4232 = vld [vmem:[%s472 + $0x120] sm:$0xff]
    %v4233 = vld [vmem:[%s472 + $0x128] sm:$0xff]
    %v4234 = vld [vmem:[%s472 + $0x130] sm:$0xff]
    %v4235 = vld [vmem:[%s472 + $0x138] sm:$0xff]
    %v4236 = vld [vmem:[%s472 + $0x140] sm:$0xff]
    %v4237 = vld [vmem:[%s472 + $0x148] sm:$0xff]
    %v4238 = vld [vmem:[%s472 + $0x150] sm:$0xff]
    %v4239 = vld [vmem:[%s472 + $0x158] sm:$0xff]
    %v4240 = vld [vmem:[%s472 + $0x160] sm:$0xff]
    %v4241 = vld [vmem:[%s472 + $0x168] sm:$0xff]
    %v4242 = vld [vmem:[%s472 + $0x170] sm:$0xff]
    %v4243 = vld [vmem:[%s472 + $0x178] sm:$0xff]
    %4244 = vmatprep.subr.mxu0 %v4197
    %4245 = vmatpush1.msra.mxu0 %v4196
    %4246 = vmatprep.subr.mxu0 %v4200
    %4247 = vmatpush1.msra.mxu0 %v4199
    %4248 = vmatprep.subr.mxu0 %v4203
    %4249 = vmatpush1.msra.mxu0 %v4202
    %4250 = vmatprep.subr.mxu0 %v4206
    %4251 = vmatpush1.msra.mxu0 %v4205
    %4252 = vmatprep.subr.mxu0 %v4209
    %4253 = vmatpush1.msra.mxu0 %v4208
    %4254 = vmatprep.subr.mxu0 %v4212
    %4255 = vmatpush1.msra.mxu0 %v4211
    %4256 = vmatprep.subr.mxu0 %v4215
    %4257 = vmatpush1.msra.mxu0 %v4214
    %4258 = vmatprep.subr.mxu0 %v4218
    %4259 = vmatpush1.msra.mxu0 %v4217
    %4260 = vmatprep.subr.mxu0 %v4221
    %4261 = vmatpush1.msra.mxu0 %v4220
    %4262 = vmatprep.subr.mxu0 %v4224
    %4263 = vmatpush1.msra.mxu0 %v4223
    %4264 = vmatprep.subr.mxu0 %v4227
    %4265 = vmatpush1.msra.mxu0 %v4226
    %4266 = vmatprep.subr.mxu0 %v4230
    %4267 = vmatpush1.msra.mxu0 %v4229
    %4268 = vmatprep.subr.mxu0 %v4233
    %4269 = vmatpush1.msra.mxu0 %v4232
    %4270 = vmatprep.subr.mxu0 %v4236
    %4271 = vmatpush1.msra.mxu0 %v4235
    %4272 = vmatprep.subr.mxu0 %v4239
    %4273 = vmatpush1.msra.mxu0 %v4238
    %4274 = vmatprep.subr.mxu0 %v4242
    %4275 = vmatpush1.msra.mxu0 %v4241
    %4276 = vmatprep.subr.mxu0 0.0
    %4277 = vmatpush1.msra.mxu0 0.0
    %4278 = vmatprep.subr.mxu0 0.0
    %4279 = vmatpush1.msra.mxu0 0.0
    %4280 = vmatprep.subr.mxu0 0.0
    %4281 = vmatpush1.msra.mxu0 0.0
    %4282 = vmatprep.subr.mxu0 0.0
    %4283 = vmatpush1.msra.mxu0 0.0
    %4284 = vmatprep.subr.mxu0 0.0
    %4285 = vmatpush1.msra.mxu0 0.0
    %4286 = vmatprep.subr.mxu0 0.0
    %4287 = vmatpush1.msra.mxu0 0.0
    %4288 = vmatprep.subr.mxu0 0.0
    %4289 = vmatpush1.msra.mxu0 0.0
    %4290 = vmatprep.subr.mxu0 0.0
    %4291 = vmatpush1.msra.mxu0 0.0
    %4292 = vmatprep.subr.mxu0 0.0
    %4293 = vmatpush1.msra.mxu0 0.0
    %4294 = vmatprep.subr.mxu0 0.0
    %4295 = vmatpush1.msra.mxu0 0.0
    %4296 = vmatprep.subr.mxu0 0.0
    %4297 = vmatpush1.msra.mxu0 0.0
    %4298 = vmatprep.subr.mxu0 0.0
    %4299 = vmatpush1.msra.mxu0 0.0
    %4300 = vmatprep.subr.mxu0 0.0
    %4301 = vmatpush1.msra.mxu0 0.0
    %4302 = vmatprep.subr.mxu0 0.0
    %4303 = vmatpush1.msra.mxu0 0.0
    %4304 = vmatprep.subr.mxu0 0.0
    %4305 = vmatpush1.msra.mxu0 0.0
    %4306 = vmatprep.subr.mxu0 0.0
    %4307 = vmatpush1.msra.mxu0 0.0
    %4308 = vmatprep.mubr.f32.mxu0 0.0
    %4309 = vmatmul.mubr.f32.gmra.mrb[0].mxu0 %v3787
    %v4310 = vpop.f32.mrb[0].mxu0
    %v4311 = vadd.f32 %v525, %v4310
    %v4312 = vpop.f32.mrb[0].mxu0
    %v4313 = vadd.f32 %v529, %v4312
    %4314 = vdwg.mxu0
    %4315 = vmatprep.subr.mxu0 0.0
    %4316 = vmatpush1.msra.mxu0 %v4198
    %4317 = vmatprep.subr.mxu0 0.0
    %4318 = vmatpush1.msra.mxu0 %v4201
    %4319 = vmatprep.subr.mxu0 0.0
    %4320 = vmatpush1.msra.mxu0 %v4204
    %4321 = vmatprep.subr.mxu0 0.0
    %4322 = vmatpush1.msra.mxu0 %v4207
    %4323 = vmatprep.subr.mxu0 0.0
    %4324 = vmatpush1.msra.mxu0 %v4210
    %4325 = vmatprep.subr.mxu0 0.0
    %4326 = vmatpush1.msra.mxu0 %v4213
    %4327 = vmatprep.subr.mxu0 0.0
    %4328 = vmatpush1.msra.mxu0 %v4216
    %4329 = vmatprep.subr.mxu0 0.0
    %4330 = vmatpush1.msra.mxu0 %v4219
    %4331 = vmatprep.subr.mxu0 0.0
    %4332 = vmatpush1.msra.mxu0 %v4222
    %4333 = vmatprep.subr.mxu0 0.0
    %4334 = vmatpush1.msra.mxu0 %v4225
    %4335 = vmatprep.subr.mxu0 0.0
    %4336 = vmatpush1.msra.mxu0 %v4228
    %4337 = vmatprep.subr.mxu0 0.0
    %4338 = vmatpush1.msra.mxu0 %v4231
    %4339 = vmatprep.subr.mxu0 0.0
    %4340 = vmatpush1.msra.mxu0 %v4234
    %4341 = vmatprep.subr.mxu0 0.0
    %4342 = vmatpush1.msra.mxu0 %v4237
    %4343 = vmatprep.subr.mxu0 0.0
    %4344 = vmatpush1.msra.mxu0 %v4240
    %4345 = vmatprep.subr.mxu0 0.0
    %4346 = vmatpush1.msra.mxu0 %v4243
    %4347 = vmatprep.subr.mxu0 0.0
    %4348 = vmatpush1.msra.mxu0 0.0
    %4349 = vmatprep.subr.mxu0 0.0
    %4350 = vmatpush1.msra.mxu0 0.0
    %4351 = vmatprep.subr.mxu0 0.0
    %4352 = vmatpush1.msra.mxu0 0.0
    %4353 = vmatprep.subr.mxu0 0.0
    %4354 = vmatpush1.msra.mxu0 0.0
    %4355 = vmatprep.subr.mxu0 0.0
    %4356 = vmatpush1.msra.mxu0 0.0
    %4357 = vmatprep.subr.mxu0 0.0
    %4358 = vmatpush1.msra.mxu0 0.0
    %4359 = vmatprep.subr.mxu0 0.0
    %4360 = vmatpush1.msra.mxu0 0.0
    %4361 = vmatprep.subr.mxu0 0.0
    %4362 = vmatpush1.msra.mxu0 0.0
    %4363 = vmatprep.subr.mxu0 0.0
    %4364 = vmatpush1.msra.mxu0 0.0
    %4365 = vmatprep.subr.mxu0 0.0
    %4366 = vmatpush1.msra.mxu0 0.0
    %4367 = vmatprep.subr.mxu0 0.0
    %4368 = vmatpush1.msra.mxu0 0.0
    %4369 = vmatprep.subr.mxu0 0.0
    %4370 = vmatpush1.msra.mxu0 0.0
    %4371 = vmatprep.subr.mxu0 0.0
    %4372 = vmatpush1.msra.mxu0 0.0
    %4373 = vmatprep.subr.mxu0 0.0
    %4374 = vmatpush1.msra.mxu0 0.0
    %4375 = vmatprep.subr.mxu0 0.0
    %4376 = vmatpush1.msra.mxu0 0.0
    %4377 = vmatprep.subr.mxu0 0.0
    %4378 = vmatpush1.msra.mxu0 0.0
    %4379 = vmatprep.mubr.f32.mxu0 0.0
    %4380 = vmatmul.mubr.f32.gmra.mrb[0].mxu0 %v3787
    %v4381 = vpop.f32.mrb[0].mxu0
    %v4382 = vadd.f32 %v533, %v4381
    %v4383 = vpop.f32.mrb[0].mxu0
    %4384 = vdwg.mxu0
    %v4385 = vadd.f32 %v4122, %v4311
    %v4386 = vxor.u32 %v4385, 2147483648
    %v4387 = vmul.f32 %v4386, 1.442695
    %v4388 = vpow.pop %v4387
    %v4389 = vadd.f32 %v4388, 1.0
    %v4390 = vrcp.pop %v4389
    %v4391 = vmul.f32 1.0, %v4390
    %v4392 = vadd.f32 %v4124, %v4313
    %v4393 = vxor.u32 %v4392, 2147483648
    %v4394 = vmul.f32 %v4393, 1.442695
    %v4395 = vpow.pop %v4394
    %v4396 = vadd.f32 %v4395, 1.0
    %v4397 = vrcp.pop %v4396
    %v4398 = vmul.f32 1.0, %v4397
    %v4399 = vmul.f32 %v4391, %v4382
    %v4400 = vadd.f32 %v4193, %v4399
    %v4401 = vtanh.pop %v4400
    %v4402 = vsub.f32 1.0, %v4398
    %v4403 = vmul.f32 %v4402, %v4401
    %v4404 = vmul.f32 %v4398, %v3787
    %v4405 = vadd.f32 %v4403, %v4404
    %s4406 = scalar_lea.vmem %s6, 12
    %4407 = vst [vmem:[%s4406] sm:$0x3] %v4405
    %s4408 = scalar_lea.vmem %s0, 42
    %v4409 = vld [vmem:[%s4408] sm:$0x3f]
    %v4410 = vld [vmem:[%s2] sm:$0xff]
    %v4411 = vld [vmem:[%s2 + $0x8] sm:$0xff]
    %v4412 = vld [vmem:[%s2 + $0x10] sm:$0xff]
    %v4413 = vld [vmem:[%s2 + $0x18] sm:$0xff]
    %v4414 = vld [vmem:[%s2 + $0x20] sm:$0xff]
    %v4415 = vld [vmem:[%s2 + $0x28] sm:$0xff]
    %v4416 = vld [vmem:[%s2 + $0x30] sm:$0xff]
    %v4417 = vld [vmem:[%s2 + $0x38] sm:$0xff]
    %v4418 = vld [vmem:[%s2 + $0x40] sm:$0xff]
    %v4419 = vld [vmem:[%s2 + $0x48] sm:$0xff]
    %v4420 = vld [vmem:[%s2 + $0x50] sm:$0xff]
    %v4421 = vld [vmem:[%s2 + $0x58] sm:$0xff]
    %v4422 = vld [vmem:[%s2 + $0x60] sm:$0xff]
    %v4423 = vld [vmem:[%s2 + $0x68] sm:$0xff]
    %v4424 = vld [vmem:[%s2 + $0x70] sm:$0xff]
    %v4425 = vld [vmem:[%s2 + $0x78] sm:$0xff]
    %v4426 = vld [vmem:[%s2 + $0x80] sm:$0xff]
    %v4427 = vld [vmem:[%s2 + $0x88] sm:$0xff]
    %v4428 = vld [vmem:[%s2 + $0x90] sm:$0xff]
    %v4429 = vld [vmem:[%s2 + $0x98] sm:$0xff]
    %v4430 = vld [vmem:[%s2 + $0xa0] sm:$0xff]
    %v4431 = vld [vmem:[%s2 + $0xa8] sm:$0xff]
    %v4432 = vld [vmem:[%s2 + $0xb0] sm:$0xff]
    %v4433 = vld [vmem:[%s2 + $0xb8] sm:$0xff]
    %v4434 = vld [vmem:[%s2 + $0xc0] sm:$0xff]
    %v4435 = vld [vmem:[%s2 + $0xc8] sm:$0xff]
    %v4436 = vld [vmem:[%s2 + $0xd0] sm:$0xff]
    %v4437 = vld [vmem:[%s2 + $0xd8] sm:$0xff]
    %v4438 = vld [vmem:[%s2 + $0xe0] sm:$0xff]
    %v4439 = vld [vmem:[%s2 + $0xe8] sm:$0xff]
    %v4440 = vld [vmem:[%s2 + $0xf0] sm:$0xff]
    %v4441 = vld [vmem:[%s2 + $0xf8] sm:$0xff]
    %v4442 = vld [vmem:[%s2 + $0x100] sm:$0xff]
    %v4443 = vld [vmem:[%s2 + $0x108] sm:$0xff]
    %v4444 = vld [vmem:[%s2 + $0x110] sm:$0xff]
    %v4445 = vld [vmem:[%s2 + $0x118] sm:$0xff]
    %v4446 = vld [vmem:[%s2 + $0x120] sm:$0xff]
    %v4447 = vld [vmem:[%s2 + $0x128] sm:$0xff]
    %v4448 = vld [vmem:[%s2 + $0x130] sm:$0xff]
    %v4449 = vld [vmem:[%s2 + $0x138] sm:$0xff]
    %v4450 = vld [vmem:[%s2 + $0x140] sm:$0xff]
    %v4451 = vld [vmem:[%s2 + $0x148] sm:$0xff]
    %v4452 = vld [vmem:[%s2 + $0x150] sm:$0xff]
    %v4453 = vld [vmem:[%s2 + $0x158] sm:$0xff]
    %v4454 = vld [vmem:[%s2 + $0x160] sm:$0xff]
    %v4455 = vld [vmem:[%s2 + $0x168] sm:$0xff]
    %v4456 = vld [vmem:[%s2 + $0x170] sm:$0xff]
    %v4457 = vld [vmem:[%s2 + $0x178] sm:$0xff]
    %4458 = vmatprep.subr.mxu0 %v4411
    %4459 = vmatpush1.msra.mxu0 %v4410
    %4460 = vmatprep.subr.mxu0 %v4414
    %4461 = vmatpush1.msra.mxu0 %v4413
    %4462 = vmatprep.subr.mxu0 %v4417
    %4463 = vmatpush1.msra.mxu0 %v4416
    %4464 = vmatprep.subr.mxu0 %v4420
    %4465 = vmatpush1.msra.mxu0 %v4419
    %4466 = vmatprep.subr.mxu0 %v4423
    %4467 = vmatpush1.msra.mxu0 %v4422
    %4468 = vmatprep.subr.mxu0 %v4426
    %4469 = vmatpush1.msra.mxu0 %v4425
    %4470 = vmatprep.subr.mxu0 %v4429
    %4471 = vmatpush1.msra.mxu0 %v4428
    %4472 = vmatprep.subr.mxu0 %v4432
    %4473 = vmatpush1.msra.mxu0 %v4431
    %4474 = vmatprep.subr.mxu0 %v4435
    %4475 = vmatpush1.msra.mxu0 %v4434
    %4476 = vmatprep.subr.mxu0 %v4438
    %4477 = vmatpush1.msra.mxu0 %v4437
    %4478 = vmatprep.subr.mxu0 %v4441
    %4479 = vmatpush1.msra.mxu0 %v4440
    %4480 = vmatprep.subr.mxu0 %v4444
    %4481 = vmatpush1.msra.mxu0 %v4443
    %4482 = vmatprep.subr.mxu0 %v4447
    %4483 = vmatpush1.msra.mxu0 %v4446
    %4484 = vmatprep.subr.mxu0 %v4450
    %4485 = vmatpush1.msra.mxu0 %v4449
    %4486 = vmatprep.subr.mxu0 %v4453
    %4487 = vmatpush1.msra.mxu0 %v4452
    %4488 = vmatprep.subr.mxu0 %v4456
    %4489 = vmatpush1.msra.mxu0 %v4455
    %4490 = vmatprep.subr.mxu0 0.0
    %4491 = vmatpush1.msra.mxu0 0.0
    %4492 = vmatprep.subr.mxu0 0.0
    %4493 = vmatpush1.msra.mxu0 0.0
    %4494 = vmatprep.subr.mxu0 0.0
    %4495 = vmatpush1.msra.mxu0 0.0
    %4496 = vmatprep.subr.mxu0 0.0
    %4497 = vmatpush1.msra.mxu0 0.0
    %4498 = vmatprep.subr.mxu0 0.0
    %4499 = vmatpush1.msra.mxu0 0.0
    %4500 = vmatprep.subr.mxu0 0.0
    %4501 = vmatpush1.msra.mxu0 0.0
    %4502 = vmatprep.subr.mxu0 0.0
    %4503 = vmatpush1.msra.mxu0 0.0
    %4504 = vmatprep.subr.mxu0 0.0
    %4505 = vmatpush1.msra.mxu0 0.0
    %4506 = vmatprep.subr.mxu0 0.0
    %4507 = vmatpush1.msra.mxu0 0.0
    %4508 = vmatprep.subr.mxu0 0.0
    %4509 = vmatpush1.msra.mxu0 0.0
    %4510 = vmatprep.subr.mxu0 0.0
    %4511 = vmatpush1.msra.mxu0 0.0
    %4512 = vmatprep.subr.mxu0 0.0
    %4513 = vmatpush1.msra.mxu0 0.0
    %4514 = vmatprep.subr.mxu0 0.0
    %4515 = vmatpush1.msra.mxu0 0.0
    %4516 = vmatprep.subr.mxu0 0.0
    %4517 = vmatpush1.msra.mxu0 0.0
    %4518 = vmatprep.subr.mxu0 0.0
    %4519 = vmatpush1.msra.mxu0 0.0
    %4520 = vmatprep.subr.mxu0 0.0
    %4521 = vmatpush1.msra.mxu0 0.0
    %4522 = vmatprep.mubr.f32.mxu0 0.0
    %4523 = vmatmul.mubr.f32.gmra.mrb[0].mxu0 %v4006
    %v4524 = vpop.f32.mrb[0].mxu0
    %v4525 = vadd.f32 %v87, %v4524
    %v4526 = vpop.f32.mrb[0].mxu0
    %v4527 = vadd.f32 %v91, %v4526
    %4528 = vdwg.mxu0
    %4529 = vmatprep.subr.mxu0 0.0
    %4530 = vmatpush1.msra.mxu0 %v4412
    %4531 = vmatprep.subr.mxu0 0.0
    %4532 = vmatpush1.msra.mxu0 %v4415
    %4533 = vmatprep.subr.mxu0 0.0
    %4534 = vmatpush1.msra.mxu0 %v4418
    %4535 = vmatprep.subr.mxu0 0.0
    %4536 = vmatpush1.msra.mxu0 %v4421
    %4537 = vmatprep.subr.mxu0 0.0
    %4538 = vmatpush1.msra.mxu0 %v4424
    %4539 = vmatprep.subr.mxu0 0.0
    %4540 = vmatpush1.msra.mxu0 %v4427
    %4541 = vmatprep.subr.mxu0 0.0
    %4542 = vmatpush1.msra.mxu0 %v4430
    %4543 = vmatprep.subr.mxu0 0.0
    %4544 = vmatpush1.msra.mxu0 %v4433
    %4545 = vmatprep.subr.mxu0 0.0
    %4546 = vmatpush1.msra.mxu0 %v4436
    %4547 = vmatprep.subr.mxu0 0.0
    %4548 = vmatpush1.msra.mxu0 %v4439
    %4549 = vmatprep.subr.mxu0 0.0
    %4550 = vmatpush1.msra.mxu0 %v4442
    %4551 = vmatprep.subr.mxu0 0.0
    %4552 = vmatpush1.msra.mxu0 %v4445
    %4553 = vmatprep.subr.mxu0 0.0
    %4554 = vmatpush1.msra.mxu0 %v4448
    %4555 = vmatprep.subr.mxu0 0.0
    %4556 = vmatpush1.msra.mxu0 %v4451
    %4557 = vmatprep.subr.mxu0 0.0
    %4558 = vmatpush1.msra.mxu0 %v4454
    %4559 = vmatprep.subr.mxu0 0.0
    %4560 = vmatpush1.msra.mxu0 %v4457
    %4561 = vmatprep.subr.mxu0 0.0
    %4562 = vmatpush1.msra.mxu0 0.0
    %4563 = vmatprep.subr.mxu0 0.0
    %4564 = vmatpush1.msra.mxu0 0.0
    %4565 = vmatprep.subr.mxu0 0.0
    %4566 = vmatpush1.msra.mxu0 0.0
    %4567 = vmatprep.subr.mxu0 0.0
    %4568 = vmatpush1.msra.mxu0 0.0
    %4569 = vmatprep.subr.mxu0 0.0
    %4570 = vmatpush1.msra.mxu0 0.0
    %4571 = vmatprep.subr.mxu0 0.0
    %4572 = vmatpush1.msra.mxu0 0.0
    %4573 = vmatprep.subr.mxu0 0.0
    %4574 = vmatpush1.msra.mxu0 0.0
    %4575 = vmatprep.subr.mxu0 0.0
    %4576 = vmatpush1.msra.mxu0 0.0
    %4577 = vmatprep.subr.mxu0 0.0
    %4578 = vmatpush1.msra.mxu0 0.0
    %4579 = vmatprep.subr.mxu0 0.0
    %4580 = vmatpush1.msra.mxu0 0.0
    %4581 = vmatprep.subr.mxu0 0.0
    %4582 = vmatpush1.msra.mxu0 0.0
    %4583 = vmatprep.subr.mxu0 0.0
    %4584 = vmatpush1.msra.mxu0 0.0
    %4585 = vmatprep.subr.mxu0 0.0
    %4586 = vmatpush1.msra.mxu0 0.0
    %4587 = vmatprep.subr.mxu0 0.0
    %4588 = vmatpush1.msra.mxu0 0.0
    %4589 = vmatprep.subr.mxu0 0.0
    %4590 = vmatpush1.msra.mxu0 0.0
    %4591 = vmatprep.subr.mxu0 0.0
    %4592 = vmatpush1.msra.mxu0 0.0
    %4593 = vmatprep.mubr.f32.mxu0 0.0
    %4594 = vmatmul.mubr.f32.gmra.mrb[0].mxu0 %v4006
    %v4595 = vpop.f32.mrb[0].mxu0
    %v4596 = vadd.f32 %v95, %v4595
    %v4597 = vpop.f32.mrb[0].mxu0
    %4598 = vdwg.mxu0
    %v4599 = vadd.f32 %v4409, %v4525
    %v4600 = vxor.u32 %v4599, 2147483648
    %v4601 = vmul.f32 %v4600, 1.442695
    %v4602 = vpow.pop %v4601
    %v4603 = vadd.f32 %v4602, 1.0
    %v4604 = vrcp.pop %v4603
    %v4605 = vmul.f32 1.0, %v4604
    %v4607 = vrot.slane %v4409, 2
    %v4609 = vadd.f32 %v4607, %v4527
    %v4610 = vxor.u32 %v4609, 2147483648
    %v4611 = vmul.f32 %v4610, 1.442695
    %v4612 = vpow.pop %v4611
    %v4613 = vadd.f32 %v4612, 1.0
    %v4614 = vrcp.pop %v4613
    %v4615 = vmul.f32 1.0, %v4614
    %v4616 = vmul.f32 %v4605, %v4596
    %v4617 = vrot.slane %v4409, 4
    %v4619 = vadd.f32 %v4617, %v4616
    %v4620 = vtanh.pop %v4619
    %v4621 = vsub.f32 1.0, %v4615
    %v4622 = vmul.f32 %v4621, %v4620
    %v4623 = vmul.f32 %v4615, %v4006
    %v4624 = vadd.f32 %v4622, %v4623
    %v4625 = vld [vmem:[%s266] sm:$0xff]
    %v4626 = vld [vmem:[%s266 + $0x8] sm:$0xff]
    %v4627 = vld [vmem:[%s266 + $0x10] sm:$0xff]
    %v4628 = vld [vmem:[%s266 + $0x18] sm:$0xff]
    %v4629 = vld [vmem:[%s266 + $0x20] sm:$0xff]
    %v4630 = vld [vmem:[%s266 + $0x28] sm:$0xff]
    %v4631 = vld [vmem:[%s266 + $0x30] sm:$0xff]
    %v4632 = vld [vmem:[%s266 + $0x38] sm:$0xff]
    %v4633 = vld [vmem:[%s266 + $0x40] sm:$0xff]
    %v4634 = vld [vmem:[%s266 + $0x48] sm:$0xff]
    %v4635 = vld [vmem:[%s266 + $0x50] sm:$0xff]
    %v4636 = vld [vmem:[%s266 + $0x58] sm:$0xff]
    %v4637 = vld [vmem:[%s266 + $0x60] sm:$0xff]
    %v4638 = vld [vmem:[%s266 + $0x68] sm:$0xff]
    %v4639 = vld [vmem:[%s266 + $0x70] sm:$0xff]
    %v4640 = vld [vmem:[%s266 + $0x78] sm:$0xff]
    %v4641 = vld [vmem:[%s266 + $0x80] sm:$0xff]
    %v4642 = vld [vmem:[%s266 + $0x88] sm:$0xff]
    %v4643 = vld [vmem:[%s266 + $0x90] sm:$0xff]
    %v4644 = vld [vmem:[%s266 + $0x98] sm:$0xff]
    %v4645 = vld [vmem:[%s266 + $0xa0] sm:$0xff]
    %v4646 = vld [vmem:[%s266 + $0xa8] sm:$0xff]
    %v4647 = vld [vmem:[%s266 + $0xb0] sm:$0xff]
    %v4648 = vld [vmem:[%s266 + $0xb8] sm:$0xff]
    %v4649 = vld [vmem:[%s266 + $0xc0] sm:$0xff]
    %v4650 = vld [vmem:[%s266 + $0xc8] sm:$0xff]
    %v4651 = vld [vmem:[%s266 + $0xd0] sm:$0xff]
    %v4652 = vld [vmem:[%s266 + $0xd8] sm:$0xff]
    %v4653 = vld [vmem:[%s266 + $0xe0] sm:$0xff]
    %v4654 = vld [vmem:[%s266 + $0xe8] sm:$0xff]
    %v4655 = vld [vmem:[%s266 + $0xf0] sm:$0xff]
    %v4656 = vld [vmem:[%s266 + $0xf8] sm:$0xff]
    %v4657 = vld [vmem:[%s266 + $0x100] sm:$0xff]
    %v4658 = vld [vmem:[%s266 + $0x108] sm:$0xff]
    %v4659 = vld [vmem:[%s266 + $0x110] sm:$0xff]
    %v4660 = vld [vmem:[%s266 + $0x118] sm:$0xff]
    %v4661 = vld [vmem:[%s266 + $0x120] sm:$0xff]
    %v4662 = vld [vmem:[%s266 + $0x128] sm:$0xff]
    %v4663 = vld [vmem:[%s266 + $0x130] sm:$0xff]
    %v4664 = vld [vmem:[%s266 + $0x138] sm:$0xff]
    %v4665 = vld [vmem:[%s266 + $0x140] sm:$0xff]
    %v4666 = vld [vmem:[%s266 + $0x148] sm:$0xff]
    %v4667 = vld [vmem:[%s266 + $0x150] sm:$0xff]
    %v4668 = vld [vmem:[%s266 + $0x158] sm:$0xff]
    %v4669 = vld [vmem:[%s266 + $0x160] sm:$0xff]
    %v4670 = vld [vmem:[%s266 + $0x168] sm:$0xff]
    %v4671 = vld [vmem:[%s266 + $0x170] sm:$0xff]
    %v4672 = vld [vmem:[%s266 + $0x178] sm:$0xff]
    %4673 = vmatprep.subr.mxu0 %v4626
    %4674 = vmatpush1.msra.mxu0 %v4625
    %4675 = vmatprep.subr.mxu0 %v4629
    %4676 = vmatpush1.msra.mxu0 %v4628
    %4677 = vmatprep.subr.mxu0 %v4632
    %4678 = vmatpush1.msra.mxu0 %v4631
    %4679 = vmatprep.subr.mxu0 %v4635
    %4680 = vmatpush1.msra.mxu0 %v4634
    %4681 = vmatprep.subr.mxu0 %v4638
    %4682 = vmatpush1.msra.mxu0 %v4637
    %4683 = vmatprep.subr.mxu0 %v4641
    %4684 = vmatpush1.msra.mxu0 %v4640
    %4685 = vmatprep.subr.mxu0 %v4644
    %4686 = vmatpush1.msra.mxu0 %v4643
    %4687 = vmatprep.subr.mxu0 %v4647
    %4688 = vmatpush1.msra.mxu0 %v4646
    %4689 = vmatprep.subr.mxu0 %v4650
    %4690 = vmatpush1.msra.mxu0 %v4649
    %4691 = vmatprep.subr.mxu0 %v4653
    %4692 = vmatpush1.msra.mxu0 %v4652
    %4693 = vmatprep.subr.mxu0 %v4656
    %4694 = vmatpush1.msra.mxu0 %v4655
    %4695 = vmatprep.subr.mxu0 %v4659
    %4696 = vmatpush1.msra.mxu0 %v4658
    %4697 = vmatprep.subr.mxu0 %v4662
    %4698 = vmatpush1.msra.mxu0 %v4661
    %4699 = vmatprep.subr.mxu0 %v4665
    %4700 = vmatpush1.msra.mxu0 %v4664
    %4701 = vmatprep.subr.mxu0 %v4668
    %4702 = vmatpush1.msra.mxu0 %v4667
    %4703 = vmatprep.subr.mxu0 %v4671
    %4704 = vmatpush1.msra.mxu0 %v4670
    %4705 = vmatprep.subr.mxu0 0.0
    %4706 = vmatpush1.msra.mxu0 0.0
    %4707 = vmatprep.subr.mxu0 0.0
    %4708 = vmatpush1.msra.mxu0 0.0
    %4709 = vmatprep.subr.mxu0 0.0
    %4710 = vmatpush1.msra.mxu0 0.0
    %4711 = vmatprep.subr.mxu0 0.0
    %4712 = vmatpush1.msra.mxu0 0.0
    %4713 = vmatprep.subr.mxu0 0.0
    %4714 = vmatpush1.msra.mxu0 0.0
    %4715 = vmatprep.subr.mxu0 0.0
    %4716 = vmatpush1.msra.mxu0 0.0
    %4717 = vmatprep.subr.mxu0 0.0
    %4718 = vmatpush1.msra.mxu0 0.0
    %4719 = vmatprep.subr.mxu0 0.0
    %4720 = vmatpush1.msra.mxu0 0.0
    %4721 = vmatprep.subr.mxu0 0.0
    %4722 = vmatpush1.msra.mxu0 0.0
    %4723 = vmatprep.subr.mxu0 0.0
    %4724 = vmatpush1.msra.mxu0 0.0
    %4725 = vmatprep.subr.mxu0 0.0
    %4726 = vmatpush1.msra.mxu0 0.0
    %4727 = vmatprep.subr.mxu0 0.0
    %4728 = vmatpush1.msra.mxu0 0.0
    %4729 = vmatprep.subr.mxu0 0.0
    %4730 = vmatpush1.msra.mxu0 0.0
    %4731 = vmatprep.subr.mxu0 0.0
    %4732 = vmatpush1.msra.mxu0 0.0
    %4733 = vmatprep.subr.mxu0 0.0
    %4734 = vmatpush1.msra.mxu0 0.0
    %4735 = vmatprep.subr.mxu0 0.0
    %4736 = vmatpush1.msra.mxu0 0.0
    %4737 = vmatprep.mubr.f32.mxu0 0.0
    %4738 = vmatmul.mubr.f32.gmra.mrb[0].mxu0 %v4624
    %v4739 = vpop.f32.mrb[0].mxu0
    %v4740 = vadd.f32 %v319, %v4739
    %v4741 = vpop.f32.mrb[0].mxu0
    %v4742 = vadd.f32 %v323, %v4741
    %4743 = vdwg.mxu0
    %4744 = vmatprep.subr.mxu0 0.0
    %4745 = vmatpush1.msra.mxu0 %v4627
    %4746 = vmatprep.subr.mxu0 0.0
    %4747 = vmatpush1.msra.mxu0 %v4630
    %4748 = vmatprep.subr.mxu0 0.0
    %4749 = vmatpush1.msra.mxu0 %v4633
    %4750 = vmatprep.subr.mxu0 0.0
    %4751 = vmatpush1.msra.mxu0 %v4636
    %4752 = vmatprep.subr.mxu0 0.0
    %4753 = vmatpush1.msra.mxu0 %v4639
    %4754 = vmatprep.subr.mxu0 0.0
    %4755 = vmatpush1.msra.mxu0 %v4642
    %4756 = vmatprep.subr.mxu0 0.0
    %4757 = vmatpush1.msra.mxu0 %v4645
    %4758 = vmatprep.subr.mxu0 0.0
    %4759 = vmatpush1.msra.mxu0 %v4648
    %4760 = vmatprep.subr.mxu0 0.0
    %4761 = vmatpush1.msra.mxu0 %v4651
    %4762 = vmatprep.subr.mxu0 0.0
    %4763 = vmatpush1.msra.mxu0 %v4654
    %4764 = vmatprep.subr.mxu0 0.0
    %4765 = vmatpush1.msra.mxu0 %v4657
    %4766 = vmatprep.subr.mxu0 0.0
    %4767 = vmatpush1.msra.mxu0 %v4660
    %4768 = vmatprep.subr.mxu0 0.0
    %4769 = vmatpush1.msra.mxu0 %v4663
    %4770 = vmatprep.subr.mxu0 0.0
    %4771 = vmatpush1.msra.mxu0 %v4666
    %4772 = vmatprep.subr.mxu0 0.0
    %4773 = vmatpush1.msra.mxu0 %v4669
    %4774 = vmatprep.subr.mxu0 0.0
    %4775 = vmatpush1.msra.mxu0 %v4672
    %4776 = vmatprep.subr.mxu0 0.0
    %4777 = vmatpush1.msra.mxu0 0.0
    %4778 = vmatprep.subr.mxu0 0.0
    %4779 = vmatpush1.msra.mxu0 0.0
    %4780 = vmatprep.subr.mxu0 0.0
    %4781 = vmatpush1.msra.mxu0 0.0
    %4782 = vmatprep.subr.mxu0 0.0
    %4783 = vmatpush1.msra.mxu0 0.0
    %4784 = vmatprep.subr.mxu0 0.0
    %4785 = vmatpush1.msra.mxu0 0.0
    %4786 = vmatprep.subr.mxu0 0.0
    %4787 = vmatpush1.msra.mxu0 0.0
    %4788 = vmatprep.subr.mxu0 0.0
    %4789 = vmatpush1.msra.mxu0 0.0
    %4790 = vmatprep.subr.mxu0 0.0
    %4791 = vmatpush1.msra.mxu0 0.0
    %4792 = vmatprep.subr.mxu0 0.0
    %4793 = vmatpush1.msra.mxu0 0.0
    %4794 = vmatprep.subr.mxu0 0.0
    %4795 = vmatpush1.msra.mxu0 0.0
    %4796 = vmatprep.subr.mxu0 0.0
    %4797 = vmatpush1.msra.mxu0 0.0
    %4798 = vmatprep.subr.mxu0 0.0
    %4799 = vmatpush1.msra.mxu0 0.0
    %4800 = vmatprep.subr.mxu0 0.0
    %4801 = vmatpush1.msra.mxu0 0.0
    %4802 = vmatprep.subr.mxu0 0.0
    %4803 = vmatpush1.msra.mxu0 0.0
    %4804 = vmatprep.subr.mxu0 0.0
    %4805 = vmatpush1.msra.mxu0 0.0
    %4806 = vmatprep.subr.mxu0 0.0
    %4807 = vmatpush1.msra.mxu0 0.0
    %4808 = vmatprep.mubr.f32.mxu0 0.0
    %4809 = vmatmul.mubr.f32.gmra.mrb[0].mxu0 %v4624
    %v4810 = vpop.f32.mrb[0].mxu0
    %v4811 = vadd.f32 %v327, %v4810
    %v4812 = vpop.f32.mrb[0].mxu0
    %4813 = vdwg.mxu0
    %v4814 = vld [vmem:[%s472] sm:$0xff]
    %v4815 = vld [vmem:[%s472 + $0x8] sm:$0xff]
    %v4816 = vld [vmem:[%s472 + $0x10] sm:$0xff]
    %v4817 = vld [vmem:[%s472 + $0x18] sm:$0xff]
    %v4818 = vld [vmem:[%s472 + $0x20] sm:$0xff]
    %v4819 = vld [vmem:[%s472 + $0x28] sm:$0xff]
    %v4820 = vld [vmem:[%s472 + $0x30] sm:$0xff]
    %v4821 = vld [vmem:[%s472 + $0x38] sm:$0xff]
    %v4822 = vld [vmem:[%s472 + $0x40] sm:$0xff]
    %v4823 = vld [vmem:[%s472 + $0x48] sm:$0xff]
    %v4824 = vld [vmem:[%s472 + $0x50] sm:$0xff]
    %v4825 = vld [vmem:[%s472 + $0x58] sm:$0xff]
    %v4826 = vld [vmem:[%s472 + $0x60] sm:$0xff]
    %v4827 = vld [vmem:[%s472 + $0x68] sm:$0xff]
    %v4828 = vld [vmem:[%s472 + $0x70] sm:$0xff]
    %v4829 = vld [vmem:[%s472 + $0x78] sm:$0xff]
    %v4830 = vld [vmem:[%s472 + $0x80] sm:$0xff]
    %v4831 = vld [vmem:[%s472 + $0x88] sm:$0xff]
    %v4832 = vld [vmem:[%s472 + $0x90] sm:$0xff]
    %v4833 = vld [vmem:[%s472 + $0x98] sm:$0xff]
    %v4834 = vld [vmem:[%s472 + $0xa0] sm:$0xff]
    %v4835 = vld [vmem:[%s472 + $0xa8] sm:$0xff]
    %v4836 = vld [vmem:[%s472 + $0xb0] sm:$0xff]
    %v4837 = vld [vmem:[%s472 + $0xb8] sm:$0xff]
    %v4838 = vld [vmem:[%s472 + $0xc0] sm:$0xff]
    %v4839 = vld [vmem:[%s472 + $0xc8] sm:$0xff]
    %v4840 = vld [vmem:[%s472 + $0xd0] sm:$0xff]
    %v4841 = vld [vmem:[%s472 + $0xd8] sm:$0xff]
    %v4842 = vld [vmem:[%s472 + $0xe0] sm:$0xff]
    %v4843 = vld [vmem:[%s472 + $0xe8] sm:$0xff]
    %v4844 = vld [vmem:[%s472 + $0xf0] sm:$0xff]
    %v4845 = vld [vmem:[%s472 + $0xf8] sm:$0xff]
    %v4846 = vld [vmem:[%s472 + $0x100] sm:$0xff]
    %v4847 = vld [vmem:[%s472 + $0x108] sm:$0xff]
    %v4848 = vld [vmem:[%s472 + $0x110] sm:$0xff]
    %v4849 = vld [vmem:[%s472 + $0x118] sm:$0xff]
    %v4850 = vld [vmem:[%s472 + $0x120] sm:$0xff]
    %v4851 = vld [vmem:[%s472 + $0x128] sm:$0xff]
    %v4852 = vld [vmem:[%s472 + $0x130] sm:$0xff]
    %v4853 = vld [vmem:[%s472 + $0x138] sm:$0xff]
    %v4854 = vld [vmem:[%s472 + $0x140] sm:$0xff]
    %v4855 = vld [vmem:[%s472 + $0x148] sm:$0xff]
    %v4856 = vld [vmem:[%s472 + $0x150] sm:$0xff]
    %v4857 = vld [vmem:[%s472 + $0x158] sm:$0xff]
    %v4858 = vld [vmem:[%s472 + $0x160] sm:$0xff]
    %v4859 = vld [vmem:[%s472 + $0x168] sm:$0xff]
    %v4860 = vld [vmem:[%s472 + $0x170] sm:$0xff]
    %v4861 = vld [vmem:[%s472 + $0x178] sm:$0xff]
    %4862 = vmatprep.subr.mxu0 %v4815
    %4863 = vmatpush1.msra.mxu0 %v4814
    %4864 = vmatprep.subr.mxu0 %v4818
    %4865 = vmatpush1.msra.mxu0 %v4817
    %4866 = vmatprep.subr.mxu0 %v4821
    %4867 = vmatpush1.msra.mxu0 %v4820
    %4868 = vmatprep.subr.mxu0 %v4824
    %4869 = vmatpush1.msra.mxu0 %v4823
    %4870 = vmatprep.subr.mxu0 %v4827
    %4871 = vmatpush1.msra.mxu0 %v4826
    %4872 = vmatprep.subr.mxu0 %v4830
    %4873 = vmatpush1.msra.mxu0 %v4829
    %4874 = vmatprep.subr.mxu0 %v4833
    %4875 = vmatpush1.msra.mxu0 %v4832
    %4876 = vmatprep.subr.mxu0 %v4836
    %4877 = vmatpush1.msra.mxu0 %v4835
    %4878 = vmatprep.subr.mxu0 %v4839
    %4879 = vmatpush1.msra.mxu0 %v4838
    %4880 = vmatprep.subr.mxu0 %v4842
    %4881 = vmatpush1.msra.mxu0 %v4841
    %4882 = vmatprep.subr.mxu0 %v4845
    %4883 = vmatpush1.msra.mxu0 %v4844
    %4884 = vmatprep.subr.mxu0 %v4848
    %4885 = vmatpush1.msra.mxu0 %v4847
    %4886 = vmatprep.subr.mxu0 %v4851
    %4887 = vmatpush1.msra.mxu0 %v4850
    %4888 = vmatprep.subr.mxu0 %v4854
    %4889 = vmatpush1.msra.mxu0 %v4853
    %4890 = vmatprep.subr.mxu0 %v4857
    %4891 = vmatpush1.msra.mxu0 %v4856
    %4892 = vmatprep.subr.mxu0 %v4860
    %4893 = vmatpush1.msra.mxu0 %v4859
    %4894 = vmatprep.subr.mxu0 0.0
    %4895 = vmatpush1.msra.mxu0 0.0
    %4896 = vmatprep.subr.mxu0 0.0
    %4897 = vmatpush1.msra.mxu0 0.0
    %4898 = vmatprep.subr.mxu0 0.0
    %4899 = vmatpush1.msra.mxu0 0.0
    %4900 = vmatprep.subr.mxu0 0.0
    %4901 = vmatpush1.msra.mxu0 0.0
    %4902 = vmatprep.subr.mxu0 0.0
    %4903 = vmatpush1.msra.mxu0 0.0
    %4904 = vmatprep.subr.mxu0 0.0
    %4905 = vmatpush1.msra.mxu0 0.0
    %4906 = vmatprep.subr.mxu0 0.0
    %4907 = vmatpush1.msra.mxu0 0.0
    %4908 = vmatprep.subr.mxu0 0.0
    %4909 = vmatpush1.msra.mxu0 0.0
    %4910 = vmatprep.subr.mxu0 0.0
    %4911 = vmatpush1.msra.mxu0 0.0
    %4912 = vmatprep.subr.mxu0 0.0
    %4913 = vmatpush1.msra.mxu0 0.0
    %4914 = vmatprep.subr.mxu0 0.0
    %4915 = vmatpush1.msra.mxu0 0.0
    %4916 = vmatprep.subr.mxu0 0.0
    %4917 = vmatpush1.msra.mxu0 0.0
    %4918 = vmatprep.subr.mxu0 0.0
    %4919 = vmatpush1.msra.mxu0 0.0
    %4920 = vmatprep.subr.mxu0 0.0
    %4921 = vmatpush1.msra.mxu0 0.0
    %4922 = vmatprep.subr.mxu0 0.0
    %4923 = vmatpush1.msra.mxu0 0.0
    %4924 = vmatprep.subr.mxu0 0.0
    %4925 = vmatpush1.msra.mxu0 0.0
    %4926 = vmatprep.mubr.f32.mxu0 0.0
    %4927 = vmatmul.mubr.f32.gmra.mrb[0].mxu0 %v4405
    %v4928 = vpop.f32.mrb[0].mxu0
    %v4929 = vadd.f32 %v525, %v4928
    %v4930 = vpop.f32.mrb[0].mxu0
    %v4931 = vadd.f32 %v529, %v4930
    %4932 = vdwg.mxu0
    %4933 = vmatprep.subr.mxu0 0.0
    %4934 = vmatpush1.msra.mxu0 %v4816
    %4935 = vmatprep.subr.mxu0 0.0
    %4936 = vmatpush1.msra.mxu0 %v4819
    %4937 = vmatprep.subr.mxu0 0.0
    %4938 = vmatpush1.msra.mxu0 %v4822
    %4939 = vmatprep.subr.mxu0 0.0
    %4940 = vmatpush1.msra.mxu0 %v4825
    %4941 = vmatprep.subr.mxu0 0.0
    %4942 = vmatpush1.msra.mxu0 %v4828
    %4943 = vmatprep.subr.mxu0 0.0
    %4944 = vmatpush1.msra.mxu0 %v4831
    %4945 = vmatprep.subr.mxu0 0.0
    %4946 = vmatpush1.msra.mxu0 %v4834
    %4947 = vmatprep.subr.mxu0 0.0
    %4948 = vmatpush1.msra.mxu0 %v4837
    %4949 = vmatprep.subr.mxu0 0.0
    %4950 = vmatpush1.msra.mxu0 %v4840
    %4951 = vmatprep.subr.mxu0 0.0
    %4952 = vmatpush1.msra.mxu0 %v4843
    %4953 = vmatprep.subr.mxu0 0.0
    %4954 = vmatpush1.msra.mxu0 %v4846
    %4955 = vmatprep.subr.mxu0 0.0
    %4956 = vmatpush1.msra.mxu0 %v4849
    %4957 = vmatprep.subr.mxu0 0.0
    %4958 = vmatpush1.msra.mxu0 %v4852
    %4959 = vmatprep.subr.mxu0 0.0
    %4960 = vmatpush1.msra.mxu0 %v4855
    %4961 = vmatprep.subr.mxu0 0.0
    %4962 = vmatpush1.msra.mxu0 %v4858
    %4963 = vmatprep.subr.mxu0 0.0
    %4964 = vmatpush1.msra.mxu0 %v4861
    %4965 = vmatprep.subr.mxu0 0.0
    %4966 = vmatpush1.msra.mxu0 0.0
    %4967 = vmatprep.subr.mxu0 0.0
    %4968 = vmatpush1.msra.mxu0 0.0
    %4969 = vmatprep.subr.mxu0 0.0
    %4970 = vmatpush1.msra.mxu0 0.0
    %4971 = vmatprep.subr.mxu0 0.0
    %4972 = vmatpush1.msra.mxu0 0.0
    %4973 = vmatprep.subr.mxu0 0.0
    %4974 = vmatpush1.msra.mxu0 0.0
    %4975 = vmatprep.subr.mxu0 0.0
    %4976 = vmatpush1.msra.mxu0 0.0
    %4977 = vmatprep.subr.mxu0 0.0
    %4978 = vmatpush1.msra.mxu0 0.0
    %4979 = vmatprep.subr.mxu0 0.0
    %4980 = vmatpush1.msra.mxu0 0.0
    %4981 = vmatprep.subr.mxu0 0.0
    %4982 = vmatpush1.msra.mxu0 0.0
    %4983 = vmatprep.subr.mxu0 0.0
    %4984 = vmatpush1.msra.mxu0 0.0
    %4985 = vmatprep.subr.mxu0 0.0
    %4986 = vmatpush1.msra.mxu0 0.0
    %4987 = vmatprep.subr.mxu0 0.0
    %4988 = vmatpush1.msra.mxu0 0.0
    %4989 = vmatprep.subr.mxu0 0.0
    %4990 = vmatpush1.msra.mxu0 0.0
    %4991 = vmatprep.subr.mxu0 0.0
    %4992 = vmatpush1.msra.mxu0 0.0
    %4993 = vmatprep.subr.mxu0 0.0
    %4994 = vmatpush1.msra.mxu0 0.0
    %4995 = vmatprep.subr.mxu0 0.0
    %4996 = vmatpush1.msra.mxu0 0.0
    %4997 = vmatprep.mubr.f32.mxu0 0.0
    %4998 = vmatmul.mubr.f32.gmra.mrb[0].mxu0 %v4405
    %v4999 = vpop.f32.mrb[0].mxu0
    %v5000 = vadd.f32 %v533, %v4999
    %v5001 = vpop.f32.mrb[0].mxu0
    %5002 = vdwg.mxu0
    %v5003 = vadd.f32 %v4740, %v4929
    %v5004 = vxor.u32 %v5003, 2147483648
    %v5005 = vmul.f32 %v5004, 1.442695
    %v5006 = vpow.pop %v5005
    %v5007 = vadd.f32 %v5006, 1.0
    %v5008 = vrcp.pop %v5007
    %v5009 = vmul.f32 1.0, %v5008
    %v5010 = vadd.f32 %v4742, %v4931
    %v5011 = vxor.u32 %v5010, 2147483648
    %v5012 = vmul.f32 %v5011, 1.442695
    %v5013 = vpow.pop %v5012
    %v5014 = vadd.f32 %v5013, 1.0
    %v5015 = vrcp.pop %v5014
    %v5016 = vmul.f32 1.0, %v5015
    %v5017 = vmul.f32 %v5009, %v5000
    %v5018 = vadd.f32 %v4811, %v5017
    %v5019 = vtanh.pop %v5018
    %v5020 = vsub.f32 1.0, %v5016
    %v5021 = vmul.f32 %v5020, %v5019
    %v5022 = vmul.f32 %v5016, %v4405
    %v5023 = vadd.f32 %v5021, %v5022
    %s5024 = scalar_lea.vmem %s6, 14
    %5025 = vst [vmem:[%s5024] sm:$0x3] %v5023
    %5026 = vst [vmem:[#allocation2] sm:$0x3] %v4624
    %s5027 = scalar_lea.vmem [#allocation2], 2
    %5028 = vst [vmem:[%s5027] sm:$0x3] %v5023
    // Predicated region
    $region26: #{recipe_rnn_forward.1} parent=1 // pred_check
      _
    $region27: #{recipe_rnn_forward.1} parent=1 // pred_check_branch
      %5030 = sbr.rel (0) target = $region29
    $region28: #{recipe_rnn_forward.1} parent=1 // pred_region
      _
    $region29: #{recipe_rnn_forward.1} parent=1 // pred_fallthru
      _
    // Predicated region
    $region30: #{recipe_rnn_forward.1} parent=1 // pred_check
      _
    $region31: #{recipe_rnn_forward.1} parent=1 // pred_check_branch
      %5032 = sbr.rel (0) target = $region33
    $region32: #{recipe_rnn_forward.1} parent=1 // pred_region
      %s5034 = ssub.s32 64, 64
      %5035 = vsyncadd [#allocation3], %s5034
      %s5036 = sshll.u32 [#allocation2], 4
      %s5037 = int_to_ptr.vmem [resolvable:$true] %s5036
      %5042 = dma.vmem_to_hbm [thread:$0]  %s5037, 64, %s7, [#allocation3], 32, 32, 2
    $region33: #{recipe_rnn_forward.1} parent=1 // pred_fallthru
      _
    // Predicated region
    $region34: #{recipe_rnn_forward.1} parent=1 // pred_check
      _
    $region35: #{recipe_rnn_forward.1} parent=1 // pred_check_branch
      %5044 = sbr.rel (0) target = $region37
    $region36: #{recipe_rnn_forward.1} parent=1 // pred_region
      _
    $region37: #{recipe_rnn_forward.1} parent=1 // pred_fallthru
      _
    // Predicated region
    $region38: #{recipe_rnn_forward.1} parent=1 // pred_check
      _
    $region39: #{recipe_rnn_forward.1} parent=1 // pred_check_branch
      %5046 = sbr.rel (0) target = $region41
    $region40: #{recipe_rnn_forward.1} parent=1 // pred_region
      %5047 = dma.done [#allocation3], 64
    $region41: #{recipe_rnn_forward.1} parent=1 // pred_fallthru
      _
    %5048 = vsyncpa [#allocation3], 1

</llo_original>
